<compile_context>
chip_gen: v7x
topology: tpu7x:2x2x1
jax: 0.10.0
libtpu: 0.0.40
codegen_flags: <defaults>
</compile_context>

<pallas_src>
import numpy as np
import jax
import jax.numpy as jnp
from jax.experimental import pallas as pl
from jax.experimental.pallas import tpu as pltpu

# ----------------------------- configuration --------------------------------
B = 2              # batch
L = 8              # token sequence length
D = 768            # hidden_size (bert-base)
NH = 8             # slf_attn heads
DK = 64
DV = 64
NUM_LABELS = 4
VOCAB = 128        # tile-friendly synthetic vocab for the BertModel stand-in
PAD_N = 128        # classifier output padded to one full lane tile
EPS_EMB = 1e-12    # BertModel embedding LayerNorm eps
EPS_ATTN = 1e-6    # MultiHeadAttention LayerNorm eps


def _layernorm(x, gamma, beta, eps):
    mu = jnp.mean(x, axis=-1, keepdims=True)
    var = jnp.mean((x - mu) ** 2, axis=-1, keepdims=True)
    return (x - mu) * jax.lax.rsqrt(var + eps) * gamma + beta


# ------------------------------ fused kernel ---------------------------------
def bert_fused_kernel(ids_ref, tok_ref, pos_ref, g0_ref, b0_ref,
                      wqkv_ref, wo_ref, g1_ref, b1_ref,
                      wl_ref, bl_ref, o_ref):
    """One batch element per grid step: embedding stand-in -> 8-head self-attention
    (residual + LayerNorm) -> seq-sum -> ReLU -> padded Linear head."""
    # ---- BertModel stand-in: token one-hot @ table + position emb + LayerNorm ----
    # TODO(synk): the pretrained 12-layer BertModel encoder is replaced by a
    # deterministic token+position embedding + LayerNorm (checkpoint loads are
    # disallowed). `mask` is consumed only by the real BertModel, so it is unused here;
    # the reference call slf_attn(embs, embs, embs) passes no mask, so no masking there.
    ids = ids_ref[0]                                                     # (L, 1) int32
    onehot = (jax.lax.broadcasted_iota(jnp.int32, (L, VOCAB), 1) == ids)
    emb = jnp.dot(onehot.astype(jnp.bfloat16), tok_ref[...],
                  preferred_element_type=jnp.float32)                    # (L, D)
    emb = _layernorm(emb + pos_ref[...], g0_ref[...], b0_ref[...], EPS_EMB)

    # ---- slf_attn = MultiHeadAttention(8, 768, 64, 64), dropout=eval identity ----
    xb = emb.astype(jnp.bfloat16)
    qkv = jnp.dot(xb, wqkv_ref[...], preferred_element_type=jnp.float32)  # (L, 3*NH*DK)
    ctx_heads = []
    for h in range(NH):                       # statically unrolled — no per-head grid steps
        qh = qkv[:, h * DK:(h + 1) * DK]                                  # scale folded in Wq
        kh = qkv[:, NH * DK + h * DK: NH * DK + (h + 1) * DK]
        vh = qkv[:, 2 * NH * DK + h * DV: 2 * NH * DK + (h + 1) * DV]
        s = jnp.dot(qh, kh.T, preferred_element_type=jnp.float32)         # (L, L)
        s = s - jnp.max(s, axis=-1, keepdims=True)
        p = jnp.exp(s)
        a = p * pl.reciprocal(jnp.sum(p, axis=-1, keepdims=True), approx=True)
        ctx_heads.append(jnp.dot(a, vh, preferred_element_type=jnp.float32))
    ctx = jnp.concatenate(ctx_heads, axis=-1).astype(jnp.bfloat16)        # (L, NH*DV)
    attn_out = jnp.dot(ctx, wo_ref[...], preferred_element_type=jnp.float32)  # (L, D)
    y = _layernorm(attn_out + emb, g1_ref[...], b1_ref[...], EPS_ATTN)    # residual + LN

    # ---- head: sum over sequence, dropout(eval)=id, ReLU, Linear (lane-padded) ----
    hn = jnp.maximum(jnp.sum(y, axis=0, keepdims=True), 0.0)              # (1, D)
    o_ref[0] = jnp.dot(hn, wl_ref[...],
                       preferred_element_type=jnp.float32) + bl_ref[...]  # (1, PAD_N)


# ------------------------------ wrapper --------------------------------------
def bert_forward(ids, tok_emb, pos_emb, ln0_g, ln0_b,
                 wqkv, wo, ln1_g, ln1_b, w_lin_p, b_lin_p):
    out = pl.pallas_call(
        bert_fused_kernel,
        out_shape=jax.ShapeDtypeStruct((B, 1, PAD_N), jnp.float32),
        grid=(B,),
        in_specs=[
            pl.BlockSpec((1, L, 1), lambda b: (b, 0, 0)),        # token ids
            pl.BlockSpec((VOCAB, D), lambda b: (0, 0)),          # token embedding table (bf16)
            pl.BlockSpec((L, D), lambda b: (0, 0)),              # position embedding
            pl.BlockSpec((1, D), lambda b: (0, 0)),              # embedding LN gamma
            pl.BlockSpec((1, D), lambda b: (0, 0)),              # embedding LN beta
            pl.BlockSpec((D, 3 * NH * DK), lambda b: (0, 0)),    # packed Wq|Wk|Wv (bf16)
            pl.BlockSpec((NH * DV, D), lambda b: (0, 0)),        # Wo (bf16)
            pl.BlockSpec((1, D), lambda b: (0, 0)),              # attn LN gamma
            pl.BlockSpec((1, D), lambda b: (0, 0)),              # attn LN beta
            pl.BlockSpec((D, PAD_N), lambda b: (0, 0)),          # classifier W (padded)
            pl.BlockSpec((1, PAD_N), lambda b: (0, 0)),          # classifier b (padded)
        ],
        out_specs=pl.BlockSpec((1, 1, PAD_N), lambda b: (b, 0, 0)),
        compiler_params=pltpu.CompilerParams(dimension_semantics=("parallel",)),
    )(ids, tok_emb, pos_emb, ln0_g, ln0_b, wqkv, wo, ln1_g, ln1_b, w_lin_p, b_lin_p)
    return out[:, 0, :NUM_LABELS]                                 # (B, num_labels)


# ------------------------------ param helpers --------------------------------
def xavier_normal(key, shape, fan_in, fan_out, gain=1.0):
    std = gain * np.sqrt(2.0 / (fan_in + fan_out))
    return (std * jax.random.normal(key, shape)).astype(jnp.float32)


# ---------------------------------- main --------------------------------------
if __name__ == "__main__":
    keys = jax.random.split(jax.random.PRNGKey(0), 12)

    # BertModel stand-in embedding tables (see TODO in kernel)
    tok_emb = (0.02 * jax.random.normal(keys[0], (VOCAB, D))).astype(jnp.bfloat16)
    pos_emb = (0.02 * jax.random.normal(keys[1], (L, D))).astype(jnp.float32)
    ln0_g = jnp.ones((1, D), jnp.float32)
    ln0_b = jnp.zeros((1, D), jnp.float32)

    # MultiHeadAttention(8, 768, 64, 64): xavier_normal (gain('sigmoid')=1.0),
    # bias-free projections; 1/sqrt(d_k) folded into Wq; packed into one block.
    wq = xavier_normal(keys[2], (D, NH * DK), D, NH * DK) / np.sqrt(DK)
    wk = xavier_normal(keys[3], (D, NH * DK), D, NH * DK)
    wv = xavier_normal(keys[4], (D, NH * DV), D, NH * DV)
    wqkv = jnp.concatenate([wq, wk, wv], axis=1).astype(jnp.bfloat16)   # (768, 1536)
    wo = xavier_normal(keys[5], (NH * DV, D), NH * DV, D).astype(jnp.bfloat16)
    ln1_g = jnp.ones((1, D), jnp.float32)
    ln1_b = jnp.zeros((1, D), jnp.float32)

    # classifier Linear(768, num_labels), zero-padded to a full 128-lane tile
    w_lin = xavier_normal(keys[6], (D, NUM_LABELS), D, NUM_LABELS)
    w_lin_p = jnp.zeros((D, PAD_N), jnp.float32).at[:, :NUM_LABELS].set(w_lin)
    b_lin_p = jnp.zeros((1, PAD_N), jnp.float32)

    # ---------------- inputs ----------------
    inputs = jax.random.randint(keys[7], (B, L), 0, VOCAB, dtype=jnp.int32)
    ids = inputs.reshape(B, L, 1)                         # lane-trivial id block per batch
    mask = jnp.ones((B, L), jnp.float32)                  # consumed only by real BertModel
    lens = jnp.full((B,), L, jnp.int32)                   # unused by forward
    labels = jnp.zeros((B,), jnp.int32)                   # unused by forward

    # ---------------- forward (single fused Pallas kernel) ----------------
    logits = bert_forward(ids, tok_emb, pos_emb, ln0_g, ln0_b,
                          wqkv, wo, ln1_g, ln1_b, w_lin_p, b_lin_p)

    jax.block_until_ready(logits)
    assert logits.shape == (B, NUM_LABELS)
    print("KERNEL_OK")
</pallas_src>

<mosaic_0001>
module attributes {stable_mosaic.version = 11 : i64} {
  func.func @bert_fused_kernel(%arg0: i32, %arg1: memref<1x8x1xi32, #tpu.memory_space<vmem>>, %arg2: memref<128x768xbf16, #tpu.memory_space<vmem>>, %arg3: memref<8x768xf32, #tpu.memory_space<vmem>>, %arg4: memref<1x768xf32, #tpu.memory_space<vmem>>, %arg5: memref<1x768xf32, #tpu.memory_space<vmem>>, %arg6: memref<768x1536xbf16, #tpu.memory_space<vmem>>, %arg7: memref<512x768xbf16, #tpu.memory_space<vmem>>, %arg8: memref<1x768xf32, #tpu.memory_space<vmem>>, %arg9: memref<1x768xf32, #tpu.memory_space<vmem>>, %arg10: memref<768x128xf32, #tpu.memory_space<vmem>>, %arg11: memref<1x128xf32, #tpu.memory_space<vmem>>, %arg12: memref<1x1x128xf32, #tpu.memory_space<vmem>>) attributes {dimension_semantics = [#tpu.dimension_semantics<parallel>], iteration_bounds = array<i64: 2>, scalar_prefetch = 0 : i64, scratch_operands = 0 : i64, tpu.core_type = #tpu.core_type<tc>, window_params = [{transform_indices = @transform_0, window_bounds = array<i64: 1, 8, 1>}, {pipeline_mode = #tpu.pipeline_mode<synchronous>, transform_indices = @transform_1, window_bounds = array<i64: 128, 768>}, {pipeline_mode = #tpu.pipeline_mode<synchronous>, transform_indices = @transform_2, window_bounds = array<i64: 8, 768>}, {pipeline_mode = #tpu.pipeline_mode<synchronous>, transform_indices = @transform_3, window_bounds = array<i64: 1, 768>}, {pipeline_mode = #tpu.pipeline_mode<synchronous>, transform_indices = @transform_4, window_bounds = array<i64: 1, 768>}, {pipeline_mode = #tpu.pipeline_mode<synchronous>, transform_indices = @transform_5, window_bounds = array<i64: 768, 1536>}, {pipeline_mode = #tpu.pipeline_mode<synchronous>, transform_indices = @transform_6, window_bounds = array<i64: 512, 768>}, {pipeline_mode = #tpu.pipeline_mode<synchronous>, transform_indices = @transform_7, window_bounds = array<i64: 1, 768>}, {pipeline_mode = #tpu.pipeline_mode<synchronous>, transform_indices = @transform_8, window_bounds = array<i64: 1, 768>}, {pipeline_mode = #tpu.pipeline_mode<synchronous>, transform_indices = @transform_9, window_bounds = array<i64: 768, 128>}, {pipeline_mode = #tpu.pipeline_mode<synchronous>, transform_indices = @transform_10, window_bounds = array<i64: 1, 128>}, {transform_indices = @transform_11, window_bounds = array<i64: 1, 1, 128>}]} {
    %c0 = arith.constant 0 : index
    %c0_0 = arith.constant 0 : index
    %c0_1 = arith.constant 0 : index
    %0 = vector.load %arg1[%c0, %c0_0, %c0_1] : memref<1x8x1xi32, #tpu.memory_space<vmem>>, vector<1x8x1xi32>
    %1 = vector.shape_cast %0 : vector<1x8x1xi32> to vector<8x1xi32>
    %2 = tpu.iota {dimensions = array<i32: 1>} : vector<8x128xi32>
    %3 = vector.broadcast %1 : vector<8x1xi32> to vector<8x128xi32>
    %4 = arith.cmpi eq, %2, %3 : vector<8x128xi32>
    %5 = arith.extui %4 : vector<8x128xi1> to vector<8x128xi32>
    %6 = arith.sitofp %5 : vector<8x128xi32> to vector<8x128xf32>
    %7 = arith.truncf %6 : vector<8x128xf32> to vector<8x128xbf16>
    %c0_2 = arith.constant 0 : index
    %c0_3 = arith.constant 0 : index
    %8 = vector.load %arg2[%c0_2, %c0_3] : memref<128x768xbf16, #tpu.memory_space<vmem>>, vector<128x768xbf16>
    %cst = arith.constant dense<0.000000e+00> : vector<8x768xf32>
    %9 = tpu.matmul %7, %8, %cst {dimension_numbers = #tpu.dot_dimension_numbers<[1], [0], [0], [1], [0, 0, 1, 1], [], []>} : vector<8x128xbf16>, vector<128x768xbf16>, vector<8x768xf32> -> vector<8x768xf32>
    %c0_4 = arith.constant 0 : index
    %c0_5 = arith.constant 0 : index
    %10 = vector.load %arg3[%c0_4, %c0_5] : memref<8x768xf32, #tpu.memory_space<vmem>>, vector<8x768xf32>
    %11 = arith.addf %9, %10 : vector<8x768xf32>
    %c0_6 = arith.constant 0 : index
    %c0_7 = arith.constant 0 : index
    %12 = vector.load %arg4[%c0_6, %c0_7] : memref<1x768xf32, #tpu.memory_space<vmem>>, vector<1x768xf32>
    %c0_8 = arith.constant 0 : index
    %c0_9 = arith.constant 0 : index
    %13 = vector.load %arg5[%c0_8, %c0_9] : memref<1x768xf32, #tpu.memory_space<vmem>>, vector<1x768xf32>
    %cst_10 = arith.constant dense<0.000000e+00> : vector<8xf32>
    %14 = vector.multi_reduction <add>, %11, %cst_10 [1] : vector<8x768xf32> to vector<8xf32>
    %15 = vector.shape_cast %14 : vector<8xf32> to vector<8x1xf32>
    %cst_11 = arith.constant 7.680000e+02 : f32
    %16 = vector.broadcast %cst_11 : f32 to vector<8x1xf32>
    %17 = arith.divf %15, %16 : vector<8x1xf32>
    %18 = vector.broadcast %17 : vector<8x1xf32> to vector<8x768xf32>
    %19 = arith.subf %11, %18 : vector<8x768xf32>
    %20 = arith.mulf %19, %19 : vector<8x768xf32>
    %cst_12 = arith.constant dense<0.000000e+00> : vector<8xf32>
    %21 = vector.multi_reduction <add>, %20, %cst_12 [1] : vector<8x768xf32> to vector<8xf32>
    %22 = vector.shape_cast %21 : vector<8xf32> to vector<8x1xf32>
    %cst_13 = arith.constant 7.680000e+02 : f32
    %23 = vector.broadcast %cst_13 : f32 to vector<8x1xf32>
    %24 = arith.divf %22, %23 : vector<8x1xf32>
    %25 = vector.broadcast %17 : vector<8x1xf32> to vector<8x768xf32>
    %26 = arith.subf %11, %25 : vector<8x768xf32>
    %cst_14 = arith.constant 9.99999996E-13 : f32
    %27 = vector.broadcast %cst_14 : f32 to vector<8x1xf32>
    %28 = arith.addf %24, %27 : vector<8x1xf32>
    %29 = math.rsqrt %28 : vector<8x1xf32>
    %30 = vector.broadcast %29 : vector<8x1xf32> to vector<8x768xf32>
    %31 = arith.mulf %26, %30 : vector<8x768xf32>
    %32 = vector.broadcast %12 : vector<1x768xf32> to vector<8x768xf32>
    %33 = arith.mulf %31, %32 : vector<8x768xf32>
    %34 = vector.broadcast %13 : vector<1x768xf32> to vector<8x768xf32>
    %35 = arith.addf %33, %34 : vector<8x768xf32>
    %36 = arith.truncf %35 : vector<8x768xf32> to vector<8x768xbf16>
    %c0_15 = arith.constant 0 : index
    %c0_16 = arith.constant 0 : index
    %37 = vector.load %arg6[%c0_15, %c0_16] : memref<768x1536xbf16, #tpu.memory_space<vmem>>, vector<768x1536xbf16>
    %cst_17 = arith.constant dense<0.000000e+00> : vector<8x1536xf32>
    %38 = tpu.matmul %36, %37, %cst_17 {dimension_numbers = #tpu.dot_dimension_numbers<[1], [0], [0], [1], [0, 0, 1, 1], [], []>} : vector<8x768xbf16>, vector<768x1536xbf16>, vector<8x1536xf32> -> vector<8x1536xf32>
    %39 = vector.extract_strided_slice %38 {offsets = [0, 0], sizes = [8, 64], strides = [1, 1]} : vector<8x1536xf32> to vector<8x64xf32>
    %40 = vector.extract_strided_slice %38 {offsets = [0, 512], sizes = [8, 64], strides = [1, 1]} : vector<8x1536xf32> to vector<8x64xf32>
    %41 = vector.extract_strided_slice %38 {offsets = [0, 1024], sizes = [8, 64], strides = [1, 1]} : vector<8x1536xf32> to vector<8x64xf32>
    %42 = tpu.transpose %40, [1, 0] : vector<8x64xf32> -> vector<64x8xf32>
    %cst_18 = arith.constant dense<0.000000e+00> : vector<8x8xf32>
    %43 = tpu.matmul %39, %42, %cst_18 {dimension_numbers = #tpu.dot_dimension_numbers<[1], [0], [0], [1], [0, 0, 1, 1], [], []>} : vector<8x64xf32>, vector<64x8xf32>, vector<8x8xf32> -> vector<8x8xf32>
    %cst_19 = arith.constant dense<0xFF800000> : vector<8xf32>
    %44 = vector.multi_reduction <maximumf>, %43, %cst_19 [1] : vector<8x8xf32> to vector<8xf32>
    %45 = vector.shape_cast %44 : vector<8xf32> to vector<8x1xf32>
    %46 = vector.broadcast %45 : vector<8x1xf32> to vector<8x8xf32>
    %47 = arith.subf %43, %46 : vector<8x8xf32>
    %48 = math.exp %47 : vector<8x8xf32>
    %cst_20 = arith.constant dense<0.000000e+00> : vector<8xf32>
    %49 = vector.multi_reduction <add>, %48, %cst_20 [1] : vector<8x8xf32> to vector<8xf32>
    %50 = vector.shape_cast %49 : vector<8xf32> to vector<8x1xf32>
    %51 = tpu.reciprocal %50 {approx = true} : vector<8x1xf32> -> vector<8x1xf32>
    %52 = vector.broadcast %51 : vector<8x1xf32> to vector<8x8xf32>
    %53 = arith.mulf %48, %52 : vector<8x8xf32>
    %cst_21 = arith.constant dense<0.000000e+00> : vector<8x64xf32>
    %54 = tpu.matmul %53, %41, %cst_21 {dimension_numbers = #tpu.dot_dimension_numbers<[1], [0], [0], [1], [0, 0, 1, 1], [], []>} : vector<8x8xf32>, vector<8x64xf32>, vector<8x64xf32> -> vector<8x64xf32>
    %55 = vector.extract_strided_slice %38 {offsets = [0, 64], sizes = [8, 64], strides = [1, 1]} : vector<8x1536xf32> to vector<8x64xf32>
    %56 = vector.extract_strided_slice %38 {offsets = [0, 576], sizes = [8, 64], strides = [1, 1]} : vector<8x1536xf32> to vector<8x64xf32>
    %57 = vector.extract_strided_slice %38 {offsets = [0, 1088], sizes = [8, 64], strides = [1, 1]} : vector<8x1536xf32> to vector<8x64xf32>
    %58 = tpu.transpose %56, [1, 0] : vector<8x64xf32> -> vector<64x8xf32>
    %cst_22 = arith.constant dense<0.000000e+00> : vector<8x8xf32>
    %59 = tpu.matmul %55, %58, %cst_22 {dimension_numbers = #tpu.dot_dimension_numbers<[1], [0], [0], [1], [0, 0, 1, 1], [], []>} : vector<8x64xf32>, vector<64x8xf32>, vector<8x8xf32> -> vector<8x8xf32>
    %cst_23 = arith.constant dense<0xFF800000> : vector<8xf32>
    %60 = vector.multi_reduction <maximumf>, %59, %cst_23 [1] : vector<8x8xf32> to vector<8xf32>
    %61 = vector.shape_cast %60 : vector<8xf32> to vector<8x1xf32>
    %62 = vector.broadcast %61 : vector<8x1xf32> to vector<8x8xf32>
    %63 = arith.subf %59, %62 : vector<8x8xf32>
    %64 = math.exp %63 : vector<8x8xf32>
    %cst_24 = arith.constant dense<0.000000e+00> : vector<8xf32>
    %65 = vector.multi_reduction <add>, %64, %cst_24 [1] : vector<8x8xf32> to vector<8xf32>
    %66 = vector.shape_cast %65 : vector<8xf32> to vector<8x1xf32>
    %67 = tpu.reciprocal %66 {approx = true} : vector<8x1xf32> -> vector<8x1xf32>
    %68 = vector.broadcast %67 : vector<8x1xf32> to vector<8x8xf32>
    %69 = arith.mulf %64, %68 : vector<8x8xf32>
    %cst_25 = arith.constant dense<0.000000e+00> : vector<8x64xf32>
    %70 = tpu.matmul %69, %57, %cst_25 {dimension_numbers = #tpu.dot_dimension_numbers<[1], [0], [0], [1], [0, 0, 1, 1], [], []>} : vector<8x8xf32>, vector<8x64xf32>, vector<8x64xf32> -> vector<8x64xf32>
    %71 = vector.extract_strided_slice %38 {offsets = [0, 128], sizes = [8, 64], strides = [1, 1]} : vector<8x1536xf32> to vector<8x64xf32>
    %72 = vector.extract_strided_slice %38 {offsets = [0, 640], sizes = [8, 64], strides = [1, 1]} : vector<8x1536xf32> to vector<8x64xf32>
    %73 = vector.extract_strided_slice %38 {offsets = [0, 1152], sizes = [8, 64], strides = [1, 1]} : vector<8x1536xf32> to vector<8x64xf32>
    %74 = tpu.transpose %72, [1, 0] : vector<8x64xf32> -> vector<64x8xf32>
    %cst_26 = arith.constant dense<0.000000e+00> : vector<8x8xf32>
    %75 = tpu.matmul %71, %74, %cst_26 {dimension_numbers = #tpu.dot_dimension_numbers<[1], [0], [0], [1], [0, 0, 1, 1], [], []>} : vector<8x64xf32>, vector<64x8xf32>, vector<8x8xf32> -> vector<8x8xf32>
    %cst_27 = arith.constant dense<0xFF800000> : vector<8xf32>
    %76 = vector.multi_reduction <maximumf>, %75, %cst_27 [1] : vector<8x8xf32> to vector<8xf32>
    %77 = vector.shape_cast %76 : vector<8xf32> to vector<8x1xf32>
    %78 = vector.broadcast %77 : vector<8x1xf32> to vector<8x8xf32>
    %79 = arith.subf %75, %78 : vector<8x8xf32>
    %80 = math.exp %79 : vector<8x8xf32>
    %cst_28 = arith.constant dense<0.000000e+00> : vector<8xf32>
    %81 = vector.multi_reduction <add>, %80, %cst_28 [1] : vector<8x8xf32> to vector<8xf32>
    %82 = vector.shape_cast %81 : vector<8xf32> to vector<8x1xf32>
    %83 = tpu.reciprocal %82 {approx = true} : vector<8x1xf32> -> vector<8x1xf32>
    %84 = vector.broadcast %83 : vector<8x1xf32> to vector<8x8xf32>
    %85 = arith.mulf %80, %84 : vector<8x8xf32>
    %cst_29 = arith.constant dense<0.000000e+00> : vector<8x64xf32>
    %86 = tpu.matmul %85, %73, %cst_29 {dimension_numbers = #tpu.dot_dimension_numbers<[1], [0], [0], [1], [0, 0, 1, 1], [], []>} : vector<8x8xf32>, vector<8x64xf32>, vector<8x64xf32> -> vector<8x64xf32>
    %87 = vector.extract_strided_slice %38 {offsets = [0, 192], sizes = [8, 64], strides = [1, 1]} : vector<8x1536xf32> to vector<8x64xf32>
    %88 = vector.extract_strided_slice %38 {offsets = [0, 704], sizes = [8, 64], strides = [1, 1]} : vector<8x1536xf32> to vector<8x64xf32>
    %89 = vector.extract_strided_slice %38 {offsets = [0, 1216], sizes = [8, 64], strides = [1, 1]} : vector<8x1536xf32> to vector<8x64xf32>
    %90 = tpu.transpose %88, [1, 0] : vector<8x64xf32> -> vector<64x8xf32>
    %cst_30 = arith.constant dense<0.000000e+00> : vector<8x8xf32>
    %91 = tpu.matmul %87, %90, %cst_30 {dimension_numbers = #tpu.dot_dimension_numbers<[1], [0], [0], [1], [0, 0, 1, 1], [], []>} : vector<8x64xf32>, vector<64x8xf32>, vector<8x8xf32> -> vector<8x8xf32>
    %cst_31 = arith.constant dense<0xFF800000> : vector<8xf32>
    %92 = vector.multi_reduction <maximumf>, %91, %cst_31 [1] : vector<8x8xf32> to vector<8xf32>
    %93 = vector.shape_cast %92 : vector<8xf32> to vector<8x1xf32>
    %94 = vector.broadcast %93 : vector<8x1xf32> to vector<8x8xf32>
    %95 = arith.subf %91, %94 : vector<8x8xf32>
    %96 = math.exp %95 : vector<8x8xf32>
    %cst_32 = arith.constant dense<0.000000e+00> : vector<8xf32>
    %97 = vector.multi_reduction <add>, %96, %cst_32 [1] : vector<8x8xf32> to vector<8xf32>
    %98 = vector.shape_cast %97 : vector<8xf32> to vector<8x1xf32>
    %99 = tpu.reciprocal %98 {approx = true} : vector<8x1xf32> -> vector<8x1xf32>
    %100 = vector.broadcast %99 : vector<8x1xf32> to vector<8x8xf32>
    %101 = arith.mulf %96, %100 : vector<8x8xf32>
    %cst_33 = arith.constant dense<0.000000e+00> : vector<8x64xf32>
    %102 = tpu.matmul %101, %89, %cst_33 {dimension_numbers = #tpu.dot_dimension_numbers<[1], [0], [0], [1], [0, 0, 1, 1], [], []>} : vector<8x8xf32>, vector<8x64xf32>, vector<8x64xf32> -> vector<8x64xf32>
    %103 = vector.extract_strided_slice %38 {offsets = [0, 256], sizes = [8, 64], strides = [1, 1]} : vector<8x1536xf32> to vector<8x64xf32>
    %104 = vector.extract_strided_slice %38 {offsets = [0, 768], sizes = [8, 64], strides = [1, 1]} : vector<8x1536xf32> to vector<8x64xf32>
    %105 = vector.extract_strided_slice %38 {offsets = [0, 1280], sizes = [8, 64], strides = [1, 1]} : vector<8x1536xf32> to vector<8x64xf32>
    %106 = tpu.transpose %104, [1, 0] : vector<8x64xf32> -> vector<64x8xf32>
    %cst_34 = arith.constant dense<0.000000e+00> : vector<8x8xf32>
    %107 = tpu.matmul %103, %106, %cst_34 {dimension_numbers = #tpu.dot_dimension_numbers<[1], [0], [0], [1], [0, 0, 1, 1], [], []>} : vector<8x64xf32>, vector<64x8xf32>, vector<8x8xf32> -> vector<8x8xf32>
    %cst_35 = arith.constant dense<0xFF800000> : vector<8xf32>
    %108 = vector.multi_reduction <maximumf>, %107, %cst_35 [1] : vector<8x8xf32> to vector<8xf32>
    %109 = vector.shape_cast %108 : vector<8xf32> to vector<8x1xf32>
    %110 = vector.broadcast %109 : vector<8x1xf32> to vector<8x8xf32>
    %111 = arith.subf %107, %110 : vector<8x8xf32>
    %112 = math.exp %111 : vector<8x8xf32>
    %cst_36 = arith.constant dense<0.000000e+00> : vector<8xf32>
    %113 = vector.multi_reduction <add>, %112, %cst_36 [1] : vector<8x8xf32> to vector<8xf32>
    %114 = vector.shape_cast %113 : vector<8xf32> to vector<8x1xf32>
    %115 = tpu.reciprocal %114 {approx = true} : vector<8x1xf32> -> vector<8x1xf32>
    %116 = vector.broadcast %115 : vector<8x1xf32> to vector<8x8xf32>
    %117 = arith.mulf %112, %116 : vector<8x8xf32>
    %cst_37 = arith.constant dense<0.000000e+00> : vector<8x64xf32>
    %118 = tpu.matmul %117, %105, %cst_37 {dimension_numbers = #tpu.dot_dimension_numbers<[1], [0], [0], [1], [0, 0, 1, 1], [], []>} : vector<8x8xf32>, vector<8x64xf32>, vector<8x64xf32> -> vector<8x64xf32>
    %119 = vector.extract_strided_slice %38 {offsets = [0, 320], sizes = [8, 64], strides = [1, 1]} : vector<8x1536xf32> to vector<8x64xf32>
    %120 = vector.extract_strided_slice %38 {offsets = [0, 832], sizes = [8, 64], strides = [1, 1]} : vector<8x1536xf32> to vector<8x64xf32>
    %121 = vector.extract_strided_slice %38 {offsets = [0, 1344], sizes = [8, 64], strides = [1, 1]} : vector<8x1536xf32> to vector<8x64xf32>
    %122 = tpu.transpose %120, [1, 0] : vector<8x64xf32> -> vector<64x8xf32>
    %cst_38 = arith.constant dense<0.000000e+00> : vector<8x8xf32>
    %123 = tpu.matmul %119, %122, %cst_38 {dimension_numbers = #tpu.dot_dimension_numbers<[1], [0], [0], [1], [0, 0, 1, 1], [], []>} : vector<8x64xf32>, vector<64x8xf32>, vector<8x8xf32> -> vector<8x8xf32>
    %cst_39 = arith.constant dense<0xFF800000> : vector<8xf32>
    %124 = vector.multi_reduction <maximumf>, %123, %cst_39 [1] : vector<8x8xf32> to vector<8xf32>
    %125 = vector.shape_cast %124 : vector<8xf32> to vector<8x1xf32>
    %126 = vector.broadcast %125 : vector<8x1xf32> to vector<8x8xf32>
    %127 = arith.subf %123, %126 : vector<8x8xf32>
    %128 = math.exp %127 : vector<8x8xf32>
    %cst_40 = arith.constant dense<0.000000e+00> : vector<8xf32>
    %129 = vector.multi_reduction <add>, %128, %cst_40 [1] : vector<8x8xf32> to vector<8xf32>
    %130 = vector.shape_cast %129 : vector<8xf32> to vector<8x1xf32>
    %131 = tpu.reciprocal %130 {approx = true} : vector<8x1xf32> -> vector<8x1xf32>
    %132 = vector.broadcast %131 : vector<8x1xf32> to vector<8x8xf32>
    %133 = arith.mulf %128, %132 : vector<8x8xf32>
    %cst_41 = arith.constant dense<0.000000e+00> : vector<8x64xf32>
    %134 = tpu.matmul %133, %121, %cst_41 {dimension_numbers = #tpu.dot_dimension_numbers<[1], [0], [0], [1], [0, 0, 1, 1], [], []>} : vector<8x8xf32>, vector<8x64xf32>, vector<8x64xf32> -> vector<8x64xf32>
    %135 = vector.extract_strided_slice %38 {offsets = [0, 384], sizes = [8, 64], strides = [1, 1]} : vector<8x1536xf32> to vector<8x64xf32>
    %136 = vector.extract_strided_slice %38 {offsets = [0, 896], sizes = [8, 64], strides = [1, 1]} : vector<8x1536xf32> to vector<8x64xf32>
    %137 = vector.extract_strided_slice %38 {offsets = [0, 1408], sizes = [8, 64], strides = [1, 1]} : vector<8x1536xf32> to vector<8x64xf32>
    %138 = tpu.transpose %136, [1, 0] : vector<8x64xf32> -> vector<64x8xf32>
    %cst_42 = arith.constant dense<0.000000e+00> : vector<8x8xf32>
    %139 = tpu.matmul %135, %138, %cst_42 {dimension_numbers = #tpu.dot_dimension_numbers<[1], [0], [0], [1], [0, 0, 1, 1], [], []>} : vector<8x64xf32>, vector<64x8xf32>, vector<8x8xf32> -> vector<8x8xf32>
    %cst_43 = arith.constant dense<0xFF800000> : vector<8xf32>
    %140 = vector.multi_reduction <maximumf>, %139, %cst_43 [1] : vector<8x8xf32> to vector<8xf32>
    %141 = vector.shape_cast %140 : vector<8xf32> to vector<8x1xf32>
    %142 = vector.broadcast %141 : vector<8x1xf32> to vector<8x8xf32>
    %143 = arith.subf %139, %142 : vector<8x8xf32>
    %144 = math.exp %143 : vector<8x8xf32>
    %cst_44 = arith.constant dense<0.000000e+00> : vector<8xf32>
    %145 = vector.multi_reduction <add>, %144, %cst_44 [1] : vector<8x8xf32> to vector<8xf32>
    %146 = vector.shape_cast %145 : vector<8xf32> to vector<8x1xf32>
    %147 = tpu.reciprocal %146 {approx = true} : vector<8x1xf32> -> vector<8x1xf32>
    %148 = vector.broadcast %147 : vector<8x1xf32> to vector<8x8xf32>
    %149 = arith.mulf %144, %148 : vector<8x8xf32>
    %cst_45 = arith.constant dense<0.000000e+00> : vector<8x64xf32>
    %150 = tpu.matmul %149, %137, %cst_45 {dimension_numbers = #tpu.dot_dimension_numbers<[1], [0], [0], [1], [0, 0, 1, 1], [], []>} : vector<8x8xf32>, vector<8x64xf32>, vector<8x64xf32> -> vector<8x64xf32>
    %151 = vector.extract_strided_slice %38 {offsets = [0, 448], sizes = [8, 64], strides = [1, 1]} : vector<8x1536xf32> to vector<8x64xf32>
    %152 = vector.extract_strided_slice %38 {offsets = [0, 960], sizes = [8, 64], strides = [1, 1]} : vector<8x1536xf32> to vector<8x64xf32>
    %153 = vector.extract_strided_slice %38 {offsets = [0, 1472], sizes = [8, 64], strides = [1, 1]} : vector<8x1536xf32> to vector<8x64xf32>
    %154 = tpu.transpose %152, [1, 0] : vector<8x64xf32> -> vector<64x8xf32>
    %cst_46 = arith.constant dense<0.000000e+00> : vector<8x8xf32>
    %155 = tpu.matmul %151, %154, %cst_46 {dimension_numbers = #tpu.dot_dimension_numbers<[1], [0], [0], [1], [0, 0, 1, 1], [], []>} : vector<8x64xf32>, vector<64x8xf32>, vector<8x8xf32> -> vector<8x8xf32>
    %cst_47 = arith.constant dense<0xFF800000> : vector<8xf32>
    %156 = vector.multi_reduction <maximumf>, %155, %cst_47 [1] : vector<8x8xf32> to vector<8xf32>
    %157 = vector.shape_cast %156 : vector<8xf32> to vector<8x1xf32>
    %158 = vector.broadcast %157 : vector<8x1xf32> to vector<8x8xf32>
    %159 = arith.subf %155, %158 : vector<8x8xf32>
    %160 = math.exp %159 : vector<8x8xf32>
    %cst_48 = arith.constant dense<0.000000e+00> : vector<8xf32>
    %161 = vector.multi_reduction <add>, %160, %cst_48 [1] : vector<8x8xf32> to vector<8xf32>
    %162 = vector.shape_cast %161 : vector<8xf32> to vector<8x1xf32>
    %163 = tpu.reciprocal %162 {approx = true} : vector<8x1xf32> -> vector<8x1xf32>
    %164 = vector.broadcast %163 : vector<8x1xf32> to vector<8x8xf32>
    %165 = arith.mulf %160, %164 : vector<8x8xf32>
    %cst_49 = arith.constant dense<0.000000e+00> : vector<8x64xf32>
    %166 = tpu.matmul %165, %153, %cst_49 {dimension_numbers = #tpu.dot_dimension_numbers<[1], [0], [0], [1], [0, 0, 1, 1], [], []>} : vector<8x8xf32>, vector<8x64xf32>, vector<8x64xf32> -> vector<8x64xf32>
    %167 = tpu.concatenate %54, %70, %86, %102, %118, %134, %150, %166 in 1 : vector<8x64xf32>, vector<8x64xf32>, vector<8x64xf32>, vector<8x64xf32>, vector<8x64xf32>, vector<8x64xf32>, vector<8x64xf32>, vector<8x64xf32> -> vector<8x512xf32>
    %168 = arith.truncf %167 : vector<8x512xf32> to vector<8x512xbf16>
    %c0_50 = arith.constant 0 : index
    %c0_51 = arith.constant 0 : index
    %169 = vector.load %arg7[%c0_50, %c0_51] : memref<512x768xbf16, #tpu.memory_space<vmem>>, vector<512x768xbf16>
    %cst_52 = arith.constant dense<0.000000e+00> : vector<8x768xf32>
    %170 = tpu.matmul %168, %169, %cst_52 {dimension_numbers = #tpu.dot_dimension_numbers<[1], [0], [0], [1], [0, 0, 1, 1], [], []>} : vector<8x512xbf16>, vector<512x768xbf16>, vector<8x768xf32> -> vector<8x768xf32>
    %171 = arith.addf %170, %35 : vector<8x768xf32>
    %c0_53 = arith.constant 0 : index
    %c0_54 = arith.constant 0 : index
    %172 = vector.load %arg8[%c0_53, %c0_54] : memref<1x768xf32, #tpu.memory_space<vmem>>, vector<1x768xf32>
    %c0_55 = arith.constant 0 : index
    %c0_56 = arith.constant 0 : index
    %173 = vector.load %arg9[%c0_55, %c0_56] : memref<1x768xf32, #tpu.memory_space<vmem>>, vector<1x768xf32>
    %cst_57 = arith.constant dense<0.000000e+00> : vector<8xf32>
    %174 = vector.multi_reduction <add>, %171, %cst_57 [1] : vector<8x768xf32> to vector<8xf32>
    %175 = vector.shape_cast %174 : vector<8xf32> to vector<8x1xf32>
    %cst_58 = arith.constant 7.680000e+02 : f32
    %176 = vector.broadcast %cst_58 : f32 to vector<8x1xf32>
    %177 = arith.divf %175, %176 : vector<8x1xf32>
    %178 = vector.broadcast %177 : vector<8x1xf32> to vector<8x768xf32>
    %179 = arith.subf %171, %178 : vector<8x768xf32>
    %180 = arith.mulf %179, %179 : vector<8x768xf32>
    %cst_59 = arith.constant dense<0.000000e+00> : vector<8xf32>
    %181 = vector.multi_reduction <add>, %180, %cst_59 [1] : vector<8x768xf32> to vector<8xf32>
    %182 = vector.shape_cast %181 : vector<8xf32> to vector<8x1xf32>
    %cst_60 = arith.constant 7.680000e+02 : f32
    %183 = vector.broadcast %cst_60 : f32 to vector<8x1xf32>
    %184 = arith.divf %182, %183 : vector<8x1xf32>
    %185 = vector.broadcast %177 : vector<8x1xf32> to vector<8x768xf32>
    %186 = arith.subf %171, %185 : vector<8x768xf32>
    %cst_61 = arith.constant 9.99999997E-7 : f32
    %187 = vector.broadcast %cst_61 : f32 to vector<8x1xf32>
    %188 = arith.addf %184, %187 : vector<8x1xf32>
    %189 = math.rsqrt %188 : vector<8x1xf32>
    %190 = vector.broadcast %189 : vector<8x1xf32> to vector<8x768xf32>
    %191 = arith.mulf %186, %190 : vector<8x768xf32>
    %192 = vector.broadcast %172 : vector<1x768xf32> to vector<8x768xf32>
    %193 = arith.mulf %191, %192 : vector<8x768xf32>
    %194 = vector.broadcast %173 : vector<1x768xf32> to vector<8x768xf32>
    %195 = arith.addf %193, %194 : vector<8x768xf32>
    %cst_62 = arith.constant dense<0.000000e+00> : vector<768xf32>
    %196 = vector.multi_reduction <add>, %195, %cst_62 [0] : vector<8x768xf32> to vector<768xf32>
    %197 = vector.shape_cast %196 : vector<768xf32> to vector<1x768xf32>
    %cst_63 = arith.constant 0.000000e+00 : f32
    %198 = vector.broadcast %cst_63 : f32 to vector<1x768xf32>
    %199 = arith.maximumf %197, %198 : vector<1x768xf32>
    %c0_64 = arith.constant 0 : index
    %c0_65 = arith.constant 0 : index
    %200 = vector.load %arg10[%c0_64, %c0_65] : memref<768x128xf32, #tpu.memory_space<vmem>>, vector<768x128xf32>
    %cst_66 = arith.constant dense<0.000000e+00> : vector<1x128xf32>
    %201 = tpu.matmul %199, %200, %cst_66 {dimension_numbers = #tpu.dot_dimension_numbers<[1], [0], [0], [1], [0, 0, 1, 1], [], []>} : vector<1x768xf32>, vector<768x128xf32>, vector<1x128xf32> -> vector<1x128xf32>
    %c0_67 = arith.constant 0 : index
    %c0_68 = arith.constant 0 : index
    %202 = vector.load %arg11[%c0_67, %c0_68] : memref<1x128xf32, #tpu.memory_space<vmem>>, vector<1x128xf32>
    %203 = arith.addf %201, %202 : vector<1x128xf32>
    %c0_69 = arith.constant 0 : index
    %c0_70 = arith.constant 0 : index
    %c0_71 = arith.constant 0 : index
    %204 = vector.load %arg12[%c0_69, %c0_70, %c0_71] : memref<1x1x128xf32, #tpu.memory_space<vmem>>, vector<1x1x128xf32>
    %205 = vector.shape_cast %204 : vector<1x1x128xf32> to vector<1x128xf32>
    %206 = vector.shape_cast %203 : vector<1x128xf32> to vector<1x1x128xf32>
    tpu.vector_store %arg12[%c0_69, %c0_70, %c0_71], %206 {strides = array<i32>} : memref<1x1x128xf32, #tpu.memory_space<vmem>>, vector<1x1x128xf32>,
    return
  }
  func.func @transform_0(%arg0: i32) -> (i32, i32, i32) {
    %c0_i32 = arith.constant 0 : i32
    %c0_i32_0 = arith.constant 0 : i32
    %c0_i32_1 = arith.constant 0 : i32
    return %arg0, %c0_i32, %c0_i32_0 : i32, i32, i32
  }
  func.func @transform_1(%arg0: i32) -> (i32, i32) {
    %c0_i32 = arith.constant 0 : i32
    %c0_i32_0 = arith.constant 0 : i32
    %c0_i32_1 = arith.constant 0 : i32
    return %c0_i32, %c0_i32_0 : i32, i32
  }
  func.func @transform_2(%arg0: i32) -> (i32, i32) {
    %c0_i32 = arith.constant 0 : i32
    %c0_i32_0 = arith.constant 0 : i32
    %c0_i32_1 = arith.constant 0 : i32
    return %c0_i32, %c0_i32_0 : i32, i32
  }
  func.func @transform_3(%arg0: i32) -> (i32, i32) {
    %c0_i32 = arith.constant 0 : i32
    %c0_i32_0 = arith.constant 0 : i32
    %c0_i32_1 = arith.constant 0 : i32
    return %c0_i32, %c0_i32_0 : i32, i32
  }
  func.func @transform_4(%arg0: i32) -> (i32, i32) {
    %c0_i32 = arith.constant 0 : i32
    %c0_i32_0 = arith.constant 0 : i32
    %c0_i32_1 = arith.constant 0 : i32
    return %c0_i32, %c0_i32_0 : i32, i32
  }
  func.func @transform_5(%arg0: i32) -> (i32, i32) {
    %c0_i32 = arith.constant 0 : i32
    %c0_i32_0 = arith.constant 0 : i32
    %c0_i32_1 = arith.constant 0 : i32
    return %c0_i32, %c0_i32_0 : i32, i32
  }
  func.func @transform_6(%arg0: i32) -> (i32, i32) {
    %c0_i32 = arith.constant 0 : i32
    %c0_i32_0 = arith.constant 0 : i32
    %c0_i32_1 = arith.constant 0 : i32
    return %c0_i32, %c0_i32_0 : i32, i32
  }
  func.func @transform_7(%arg0: i32) -> (i32, i32) {
    %c0_i32 = arith.constant 0 : i32
    %c0_i32_0 = arith.constant 0 : i32
    %c0_i32_1 = arith.constant 0 : i32
    return %c0_i32, %c0_i32_0 : i32, i32
  }
  func.func @transform_8(%arg0: i32) -> (i32, i32) {
    %c0_i32 = arith.constant 0 : i32
    %c0_i32_0 = arith.constant 0 : i32
    %c0_i32_1 = arith.constant 0 : i32
    return %c0_i32, %c0_i32_0 : i32, i32
  }
  func.func @transform_9(%arg0: i32) -> (i32, i32) {
    %c0_i32 = arith.constant 0 : i32
    %c0_i32_0 = arith.constant 0 : i32
    %c0_i32_1 = arith.constant 0 : i32
    return %c0_i32, %c0_i32_0 : i32, i32
  }
  func.func @transform_10(%arg0: i32) -> (i32, i32) {
    %c0_i32 = arith.constant 0 : i32
    %c0_i32_0 = arith.constant 0 : i32
    %c0_i32_1 = arith.constant 0 : i32
    return %c0_i32, %c0_i32_0 : i32, i32
  }
  func.func @transform_11(%arg0: i32) -> (i32, i32, i32) {
    %c0_i32 = arith.constant 0 : i32
    %c0_i32_0 = arith.constant 0 : i32
    %c0_i32_1 = arith.constant 0 : i32
    return %arg0, %c0_i32, %c0_i32_0 : i32, i32, i32
  }
}

</mosaic_0001>

<llo_original>
// kernel: tpu_custom_call.1
$region0: #{tpu_custom_call.1}
  #allocation0 [shape = 'u32[]', space=smem, size = 0x4, offset = 0x4, fixed_abs, tag = 'smem constant byte address 0x4 - core index']
  #allocation1 [shape = 'u32[144,128]{1,0:T(1,128)}', space=vmem, size = 0x12000, scoped, tag = 'internal scratch']
  %s0 = inlined_call_operand.vmem [shape: s32[2,8,1], index: 0, kind: input, shape index: {}]
  %s1 = inlined_call_operand.hbm [shape: bf16[128,768], index: 1, kind: input, shape index: {}]
  %s2 = inlined_call_operand.hbm [shape: f32[8,768], index: 2, kind: input, shape index: {}]
  %s3 = inlined_call_operand.hbm [shape: f32[1,768], index: 3, kind: input, shape index: {}]
  %s4 = inlined_call_operand.hbm [shape: f32[1,768], index: 4, kind: input, shape index: {}]
  %s5 = inlined_call_operand.hbm [shape: bf16[768,1536], index: 5, kind: input, shape index: {}]
  %s6 = inlined_call_operand.hbm [shape: bf16[512,768], index: 6, kind: input, shape index: {}]
  %s7 = inlined_call_operand.hbm [shape: f32[1,768], index: 7, kind: input, shape index: {}]
  %s8 = inlined_call_operand.hbm [shape: f32[1,768], index: 8, kind: input, shape index: {}]
  %s9 = inlined_call_operand.hbm [shape: f32[768,128], index: 9, kind: input, shape index: {}]
  %s10 = inlined_call_operand.hbm [shape: f32[1,128], index: 10, kind: input, shape index: {}]
  %s11 = inlined_call_operand.hbm [shape: f32[2,1,128], index: 11, kind: output, shape index: {}]
  %s12 = sld [smem:[#allocation0]]
  $region117: #{tpu_custom_call.1} parent=0
    _
  %s14 = ssub.s32 1, %s12
  %s15 = scalar_select 0, %s14, %s12
  $region1: #{tpu_custom_call.1} parent=0
    #allocation2 [shape = 'u8[196608]{0}', space=vmem, size = 0x30000, scoped, tag = 'input window, operand 1, single buffered']
    #allocation3 [shape = 's32[2]{0}', space=sflag, size = 0x8, scoped, tag = 'scoped memory for tpu_custom_call.1']
    #allocation4 [shape = 's32[2]{0}', space=sflag, size = 0x8, scoped, tag = 'scoped memory for tpu_custom_call.1']
    #allocation5 [shape = 'u8[24576]{0}', space=vmem, size = 0x6000, scoped, tag = 'input window, operand 2, single buffered']
    #allocation6 [shape = 's32[1]{0}', space=sflag, size = 0x4, scoped, tag = 'scoped memory for tpu_custom_call.1']
    #allocation7 [shape = 'u8[3072]{0}', space=vmem, size = 0xc00, scoped, tag = 'input window, operand 3, single buffered']
    #allocation8 [shape = 'u8[3072]{0}', space=vmem, size = 0xc00, scoped, tag = 'input window, operand 4, single buffered']
    #allocation9 [shape = 's32[1]{0}', space=sflag, size = 0x4, scoped, tag = 'scoped memory for tpu_custom_call.1']
    #allocation10 [shape = 'u8[2359296]{0}', space=vmem, size = 0x240000, scoped, tag = 'input window, operand 5, single buffered']
    #allocation11 [shape = 'u8[786432]{0}', space=vmem, size = 0xc0000, scoped, tag = 'input window, operand 6, single buffered']
    #allocation12 [shape = 's32[1]{0}', space=sflag, size = 0x4, scoped, tag = 'scoped memory for tpu_custom_call.1']
    #allocation13 [shape = 'u8[3072]{0}', space=vmem, size = 0xc00, scoped, tag = 'input window, operand 7, single buffered']
    #allocation14 [shape = 'u8[3072]{0}', space=vmem, size = 0xc00, scoped, tag = 'input window, operand 8, single buffered']
    #allocation15 [shape = 's32[1]{0}', space=sflag, size = 0x4, scoped, tag = 'scoped memory for tpu_custom_call.1']
    #allocation16 [shape = 'u8[393216]{0}', space=vmem, size = 0x60000, scoped, tag = 'input window, operand 9, single buffered']
    #allocation17 [shape = 'u8[512]{0}', space=vmem, size = 0x400, scoped, tag = 'input window, operand 10, single buffered']
    #allocation18 [shape = 's32[1]{0}', space=sflag, size = 0x4, scoped, tag = 'scoped memory for tpu_custom_call.1']
    #allocation19 [shape = 'u8[1024]{0}', space=vmem, size = 0x400, scoped, tag = 'output window, operand 0']
    %16 = vsyncpa [#allocation3], 0
    %17 = vsyncpa [#allocation6], 0
    %18 = vsyncpa [#allocation9], 0
    %19 = vsyncpa [#allocation12], 0
    %20 = vsyncpa [#allocation15], 0
    %21 = vsyncpa [#allocation18], 0
    %22 = vsyncpa [#allocation4], 0
    %s23 = scalar_lea.sflag [#allocation4], 1
    %24 = vsyncpa %s23, 0
    loop: start=0, step=1, limit=4
    $region2: #{tpu_custom_call.1} parent=1 // loop_pre_header
      _
    $region3: #{tpu_custom_call.1} parent=1 // loop_header
      %s26 = sphi 0, %s30
      %p27 = scmp.ge.s32.totalorder %s26, 4
      %s36 = sphi 0, %s38
      %s39 = sphi 0, %s36
      %s40 = sphi 0, %s39
      %s56 = sphi 0, %s40
      %s60 = sphi 0, %s60
      %s62 = sphi 0, %s60
      %s63 = sphi 0, %s62
      %s77 = sphi 0, %s63
      %s81 = sphi 0, %s81
      %s83 = sphi 0, %s81
      %s84 = sphi 0, %s83
      %s98 = sphi 0, %s84
      %s102 = sphi 0, %s102
      %s104 = sphi 0, %s102
      %s105 = sphi 0, %s104
      %s119 = sphi 0, %s105
      %s123 = sphi 0, %s123
      %s125 = sphi 0, %s123
      %s126 = sphi 0, %s125
      %s140 = sphi 0, %s126
      %s144 = sphi 0, %s144
      %s146 = sphi 0, %s144
      %s147 = sphi 0, %s146
      %s161 = sphi 0, %s147
      %s165 = sphi 0, %s165
      %s167 = sphi 0, %s165
      %s168 = sphi 0, %s167
      %s182 = sphi 0, %s168
      %s186 = sphi 0, %s186
      %s188 = sphi 0, %s186
      %s189 = sphi 0, %s188
      %s203 = sphi 0, %s189
      %s207 = sphi 0, %s207
      %s209 = sphi 0, %s207
      %s210 = sphi 0, %s209
      %s224 = sphi 0, %s210
      %s228 = sphi 0, %s228
      %s230 = sphi 0, %s228
      %s231 = sphi 0, %s230
      %s245 = sphi 0, %s231
      %s249 = sphi 0, %s249
      %s251 = sphi 0, %s249
      %s252 = sphi 0, %s251
      %s266 = sphi 0, %s252
      %s272 = sphi 0, %s274
      %s275 = sphi 0, %s272
      %s276 = sphi 0, %s275
      %s292 = sphi 0, %s276
    $region4: #{tpu_custom_call.1} parent=1 // loop_header_branch
      %29 = sbr.rel (%p27) target = $region8
    $region5: #{tpu_custom_call.1} parent=1 // loop_body
      %s31 = ssub.s32 %s26, 1
      %s32 = ssub.s32 %s26, 2
      %s33 = sadd.s32 %s26, 1
      %s34 = ssub.s32 %s26, %s33
      %p35 = scmp.eq.s32.totalorder %s34, 0
      %s37 = sadd.s32 %s36, 1
      %s38 = scalar_select %p35, %s36, %s37
      %p41 = pneg %p35
      %p42 = scmp.eq.s32.totalorder %s26, 1
      %p43 = por %p41, %p42
      %p44 = scmp.ne.s32.totalorder %s36, %s39
      %p45 = scmp.eq.s32.totalorder %s26, 0
      %p46 = por %p44, %p45
      %p47 = scmp.ne.s32.totalorder %s36, %s39
      %p48 = scmp.eq.s32.totalorder %s31, 1
      %p49 = por %p47, %p48
      %p50 = scmp.ne.s32.totalorder %s39, %s40
      %p51 = scmp.eq.s32.totalorder %s31, 0
      %p52 = por %p50, %p51
      %p53 = scmp.ne.s32.totalorder %s39, %s40
      %p54 = scmp.eq.s32.totalorder %s32, 1
      %p55 = por %p53, %p54
      %p57 = scmp.ne.s32.totalorder %s40, %s56
      %p58 = scmp.eq.s32.totalorder %s32, 0
      %p59 = por %p57, %p58
      %s61 = sadd.s32 %s60, 1
      %p64 = scmp.eq.s32.totalorder %s26, 1
      %p65 = scmp.ne.s32.totalorder %s60, %s62
      %p66 = scmp.eq.s32.totalorder %s26, 0
      %p67 = por %p65, %p66
      %p68 = scmp.ne.s32.totalorder %s60, %s62
      %p69 = scmp.eq.s32.totalorder %s31, 1
      %p70 = por %p68, %p69
      %p71 = scmp.ne.s32.totalorder %s62, %s63
      %p72 = scmp.eq.s32.totalorder %s31, 0
      %p73 = por %p71, %p72
      %p74 = scmp.ne.s32.totalorder %s62, %s63
      %p75 = scmp.eq.s32.totalorder %s32, 1
      %p76 = por %p74, %p75
      %p78 = scmp.ne.s32.totalorder %s63, %s77
      %p79 = scmp.eq.s32.totalorder %s32, 0
      %p80 = por %p78, %p79
      %s82 = sadd.s32 %s81, 1
      %p85 = scmp.eq.s32.totalorder %s26, 1
      %p86 = scmp.ne.s32.totalorder %s81, %s83
      %p87 = scmp.eq.s32.totalorder %s26, 0
      %p88 = por %p86, %p87
      %p89 = scmp.ne.s32.totalorder %s81, %s83
      %p90 = scmp.eq.s32.totalorder %s31, 1
      %p91 = por %p89, %p90
      %p92 = scmp.ne.s32.totalorder %s83, %s84
      %p93 = scmp.eq.s32.totalorder %s31, 0
      %p94 = por %p92, %p93
      %p95 = scmp.ne.s32.totalorder %s83, %s84
      %p96 = scmp.eq.s32.totalorder %s32, 1
      %p97 = por %p95, %p96
      %p99 = scmp.ne.s32.totalorder %s84, %s98
      %p100 = scmp.eq.s32.totalorder %s32, 0
      %p101 = por %p99, %p100
      %s103 = sadd.s32 %s102, 1
      %p106 = scmp.eq.s32.totalorder %s26, 1
      %p107 = scmp.ne.s32.totalorder %s102, %s104
      %p108 = scmp.eq.s32.totalorder %s26, 0
      %p109 = por %p107, %p108
      %p110 = scmp.ne.s32.totalorder %s102, %s104
      %p111 = scmp.eq.s32.totalorder %s31, 1
      %p112 = por %p110, %p111
      %p113 = scmp.ne.s32.totalorder %s104, %s105
      %p114 = scmp.eq.s32.totalorder %s31, 0
      %p115 = por %p113, %p114
      %p116 = scmp.ne.s32.totalorder %s104, %s105
      %p117 = scmp.eq.s32.totalorder %s32, 1
      %p118 = por %p116, %p117
      %p120 = scmp.ne.s32.totalorder %s105, %s119
      %p121 = scmp.eq.s32.totalorder %s32, 0
      %p122 = por %p120, %p121
      %s124 = sadd.s32 %s123, 1
      %p127 = scmp.eq.s32.totalorder %s26, 1
      %p128 = scmp.ne.s32.totalorder %s123, %s125
      %p129 = scmp.eq.s32.totalorder %s26, 0
      %p130 = por %p128, %p129
      %p131 = scmp.ne.s32.totalorder %s123, %s125
      %p132 = scmp.eq.s32.totalorder %s31, 1
      %p133 = por %p131, %p132
      %p134 = scmp.ne.s32.totalorder %s125, %s126
      %p135 = scmp.eq.s32.totalorder %s31, 0
      %p136 = por %p134, %p135
      %p137 = scmp.ne.s32.totalorder %s125, %s126
      %p138 = scmp.eq.s32.totalorder %s32, 1
      %p139 = por %p137, %p138
      %p141 = scmp.ne.s32.totalorder %s126, %s140
      %p142 = scmp.eq.s32.totalorder %s32, 0
      %p143 = por %p141, %p142
      %s145 = sadd.s32 %s144, 1
      %p148 = scmp.eq.s32.totalorder %s26, 1
      %p149 = scmp.ne.s32.totalorder %s144, %s146
      %p150 = scmp.eq.s32.totalorder %s26, 0
      %p151 = por %p149, %p150
      %p152 = scmp.ne.s32.totalorder %s144, %s146
      %p153 = scmp.eq.s32.totalorder %s31, 1
      %p154 = por %p152, %p153
      %p155 = scmp.ne.s32.totalorder %s146, %s147
      %p156 = scmp.eq.s32.totalorder %s31, 0
      %p157 = por %p155, %p156
      %p158 = scmp.ne.s32.totalorder %s146, %s147
      %p159 = scmp.eq.s32.totalorder %s32, 1
      %p160 = por %p158, %p159
      %p162 = scmp.ne.s32.totalorder %s147, %s161
      %p163 = scmp.eq.s32.totalorder %s32, 0
      %p164 = por %p162, %p163
      %s166 = sadd.s32 %s165, 1
      %p169 = scmp.eq.s32.totalorder %s26, 1
      %p170 = scmp.ne.s32.totalorder %s165, %s167
      %p171 = scmp.eq.s32.totalorder %s26, 0
      %p172 = por %p170, %p171
      %p173 = scmp.ne.s32.totalorder %s165, %s167
      %p174 = scmp.eq.s32.totalorder %s31, 1
      %p175 = por %p173, %p174
      %p176 = scmp.ne.s32.totalorder %s167, %s168
      %p177 = scmp.eq.s32.totalorder %s31, 0
      %p178 = por %p176, %p177
      %p179 = scmp.ne.s32.totalorder %s167, %s168
      %p180 = scmp.eq.s32.totalorder %s32, 1
      %p181 = por %p179, %p180
      %p183 = scmp.ne.s32.totalorder %s168, %s182
      %p184 = scmp.eq.s32.totalorder %s32, 0
      %p185 = por %p183, %p184
      %s187 = sadd.s32 %s186, 1
      %p190 = scmp.eq.s32.totalorder %s26, 1
      %p191 = scmp.ne.s32.totalorder %s186, %s188
      %p192 = scmp.eq.s32.totalorder %s26, 0
      %p193 = por %p191, %p192
      %p194 = scmp.ne.s32.totalorder %s186, %s188
      %p195 = scmp.eq.s32.totalorder %s31, 1
      %p196 = por %p194, %p195
      %p197 = scmp.ne.s32.totalorder %s188, %s189
      %p198 = scmp.eq.s32.totalorder %s31, 0
      %p199 = por %p197, %p198
      %p200 = scmp.ne.s32.totalorder %s188, %s189
      %p201 = scmp.eq.s32.totalorder %s32, 1
      %p202 = por %p200, %p201
      %p204 = scmp.ne.s32.totalorder %s189, %s203
      %p205 = scmp.eq.s32.totalorder %s32, 0
      %p206 = por %p204, %p205
      %s208 = sadd.s32 %s207, 1
      %p211 = scmp.eq.s32.totalorder %s26, 1
      %p212 = scmp.ne.s32.totalorder %s207, %s209
      %p213 = scmp.eq.s32.totalorder %s26, 0
      %p214 = por %p212, %p213
      %p215 = scmp.ne.s32.totalorder %s207, %s209
      %p216 = scmp.eq.s32.totalorder %s31, 1
      %p217 = por %p215, %p216
      %p218 = scmp.ne.s32.totalorder %s209, %s210
      %p219 = scmp.eq.s32.totalorder %s31, 0
      %p220 = por %p218, %p219
      %p221 = scmp.ne.s32.totalorder %s209, %s210
      %p222 = scmp.eq.s32.totalorder %s32, 1
      %p223 = por %p221, %p222
      %p225 = scmp.ne.s32.totalorder %s210, %s224
      %p226 = scmp.eq.s32.totalorder %s32, 0
      %p227 = por %p225, %p226
      %s229 = sadd.s32 %s228, 1
      %p232 = scmp.eq.s32.totalorder %s26, 1
      %p233 = scmp.ne.s32.totalorder %s228, %s230
      %p234 = scmp.eq.s32.totalorder %s26, 0
      %p235 = por %p233, %p234
      %p236 = scmp.ne.s32.totalorder %s228, %s230
      %p237 = scmp.eq.s32.totalorder %s31, 1
      %p238 = por %p236, %p237
      %p239 = scmp.ne.s32.totalorder %s230, %s231
      %p240 = scmp.eq.s32.totalorder %s31, 0
      %p241 = por %p239, %p240
      %p242 = scmp.ne.s32.totalorder %s230, %s231
      %p243 = scmp.eq.s32.totalorder %s32, 1
      %p244 = por %p242, %p243
      %p246 = scmp.ne.s32.totalorder %s231, %s245
      %p247 = scmp.eq.s32.totalorder %s32, 0
      %p248 = por %p246, %p247
      %s250 = sadd.s32 %s249, 1
      %p253 = scmp.eq.s32.totalorder %s26, 1
      %p254 = scmp.ne.s32.totalorder %s249, %s251
      %p255 = scmp.eq.s32.totalorder %s26, 0
      %p256 = por %p254, %p255
      %p257 = scmp.ne.s32.totalorder %s249, %s251
      %p258 = scmp.eq.s32.totalorder %s31, 1
      %p259 = por %p257, %p258
      %p260 = scmp.ne.s32.totalorder %s251, %s252
      %p261 = scmp.eq.s32.totalorder %s31, 0
      %p262 = por %p260, %p261
      %p263 = scmp.ne.s32.totalorder %s251, %s252
      %p264 = scmp.eq.s32.totalorder %s32, 1
      %p265 = por %p263, %p264
      %p267 = scmp.ne.s32.totalorder %s252, %s266
      %p268 = scmp.eq.s32.totalorder %s32, 0
      %p269 = por %p267, %p268
      %s270 = ssub.s32 %s26, %s33
      %p271 = scmp.eq.s32.totalorder %s270, 0
      %s273 = sadd.s32 %s272, 1
      %s274 = scalar_select %p271, %s272, %s273
      %p277 = pneg %p271
      %p278 = scmp.eq.s32.totalorder %s26, 1
      %p279 = por %p277, %p278
      %p280 = scmp.ne.s32.totalorder %s272, %s275
      %p281 = scmp.eq.s32.totalorder %s26, 0
      %p282 = por %p280, %p281
      %p283 = scmp.ne.s32.totalorder %s272, %s275
      %p284 = scmp.eq.s32.totalorder %s31, 1
      %p285 = por %p283, %p284
      %p286 = scmp.ne.s32.totalorder %s275, %s276
      %p287 = scmp.eq.s32.totalorder %s31, 0
      %p288 = por %p286, %p287
      %p289 = scmp.ne.s32.totalorder %s275, %s276
      %p290 = scmp.eq.s32.totalorder %s32, 1
      %p291 = por %p289, %p290
      %p293 = scmp.ne.s32.totalorder %s276, %s292
      %p294 = scmp.eq.s32.totalorder %s32, 0
      %p295 = por %p293, %p294
      %p296 = scmp.le.s32.totalorder 1, %s26
      %p297 = scmp.lt.s32.totalorder %s26, 3
      %p298 = pnand %p296, %p297
      %p299 = pneg %p298
      // Predicated region
      $region9: #{tpu_custom_call.1} parent=5 // pred_check
        _
      $region10: #{tpu_custom_call.1} parent=5 // pred_check_branch
        %301 = sbr.rel (%p298) target = $region12
      $region11: #{tpu_custom_call.1} parent=5 // pred_region
        %s302 = ssub.s32 %s26, 1
        // Predicated region
        $region13: #{tpu_custom_call.1} parent=11 // pred_check
          %p303 = pneg %p73
        $region14: #{tpu_custom_call.1} parent=11 // pred_check_branch
          %305 = sbr.rel (%p303) target = $region16
        $region15: #{tpu_custom_call.1} parent=11 // pred_region
          %s307 = ssub.s32 6144, 6144
          %308 = vsyncadd [#allocation3], %s307
          %s309 = sshll.u32 [#allocation2], 4
          %s310 = int_to_ptr.vmem [resolvable:$true] %s309
          %315 = dma.hbm_to_vmem [thread:$0]  %s1, 6144, %s310, [#allocation3], 384, 384, 24
        $region16: #{tpu_custom_call.1} parent=11 // pred_fallthru
          _
        // Predicated region
        $region17: #{tpu_custom_call.1} parent=11 // pred_check
          %p316 = pneg %p94
        $region18: #{tpu_custom_call.1} parent=11 // pred_check_branch
          %318 = sbr.rel (%p316) target = $region20
        $region19: #{tpu_custom_call.1} parent=11 // pred_region
          %s320 = ssub.s32 768, 768
          %321 = vsyncadd [#allocation6], %s320
          %s323 = sshll.u32 [#allocation5], 4
          %s324 = int_to_ptr.vmem [resolvable:$true] %s323
          %326 = dma.hbm_to_vmem [thread:$0]  %s2, 768, %s324, [#allocation6]
        $region20: #{tpu_custom_call.1} parent=11 // pred_fallthru
          _
        // Predicated region
        $region21: #{tpu_custom_call.1} parent=11 // pred_check
          %p327 = pneg %p115
        $region22: #{tpu_custom_call.1} parent=11 // pred_check_branch
          %329 = sbr.rel (%p327) target = $region24
        $region23: #{tpu_custom_call.1} parent=11 // pred_region
          %s331 = ssub.s32 96, 96
          %332 = vsyncadd [#allocation6], %s331
          %s334 = sshll.u32 [#allocation7], 4
          %s335 = int_to_ptr.vmem [resolvable:$true] %s334
          %337 = dma.hbm_to_vmem [thread:$0]  %s3, 96, %s335, [#allocation6]
        $region24: #{tpu_custom_call.1} parent=11 // pred_fallthru
          _
        // Predicated region
        $region25: #{tpu_custom_call.1} parent=11 // pred_check
          %p338 = pneg %p136
        $region26: #{tpu_custom_call.1} parent=11 // pred_check_branch
          %340 = sbr.rel (%p338) target = $region28
        $region27: #{tpu_custom_call.1} parent=11 // pred_region
          %s342 = ssub.s32 96, 96
          %343 = vsyncadd [#allocation9], %s342
          %s345 = sshll.u32 [#allocation8], 4
          %s346 = int_to_ptr.vmem [resolvable:$true] %s345
          %348 = dma.hbm_to_vmem [thread:$0]  %s4, 96, %s346, [#allocation9]
        $region28: #{tpu_custom_call.1} parent=11 // pred_fallthru
          _
        // Predicated region
        $region29: #{tpu_custom_call.1} parent=11 // pred_check
          %p349 = pneg %p157
        $region30: #{tpu_custom_call.1} parent=11 // pred_check_branch
          %351 = sbr.rel (%p349) target = $region32
        $region31: #{tpu_custom_call.1} parent=11 // pred_region
          %s353 = ssub.s32 73728, 73728
          %354 = vsyncadd [#allocation9], %s353
          %s355 = sshll.u32 [#allocation10], 4
          %s356 = int_to_ptr.vmem [resolvable:$true] %s355
          %361 = dma.hbm_to_vmem [thread:$0]  %s5, 73728, %s356, [#allocation9], 768, 768, 48
        $region32: #{tpu_custom_call.1} parent=11 // pred_fallthru
          _
        // Predicated region
        $region33: #{tpu_custom_call.1} parent=11 // pred_check
          %p362 = pneg %p178
        $region34: #{tpu_custom_call.1} parent=11 // pred_check_branch
          %364 = sbr.rel (%p362) target = $region36
        $region35: #{tpu_custom_call.1} parent=11 // pred_region
          %s366 = ssub.s32 24576, 24576
          %367 = vsyncadd [#allocation12], %s366
          %s368 = sshll.u32 [#allocation11], 4
          %s369 = int_to_ptr.vmem [resolvable:$true] %s368
          %374 = dma.hbm_to_vmem [thread:$0]  %s6, 24576, %s369, [#allocation12], 384, 384, 24
        $region36: #{tpu_custom_call.1} parent=11 // pred_fallthru
          _
        // Predicated region
        $region37: #{tpu_custom_call.1} parent=11 // pred_check
          %p375 = pneg %p199
        $region38: #{tpu_custom_call.1} parent=11 // pred_check_branch
          %377 = sbr.rel (%p375) target = $region40
        $region39: #{tpu_custom_call.1} parent=11 // pred_region
          %s379 = ssub.s32 96, 96
          %380 = vsyncadd [#allocation12], %s379
          %s382 = sshll.u32 [#allocation13], 4
          %s383 = int_to_ptr.vmem [resolvable:$true] %s382
          %385 = dma.hbm_to_vmem [thread:$0]  %s7, 96, %s383, [#allocation12]
        $region40: #{tpu_custom_call.1} parent=11 // pred_fallthru
          _
        // Predicated region
        $region41: #{tpu_custom_call.1} parent=11 // pred_check
          %p386 = pneg %p220
        $region42: #{tpu_custom_call.1} parent=11 // pred_check_branch
          %388 = sbr.rel (%p386) target = $region44
        $region43: #{tpu_custom_call.1} parent=11 // pred_region
          %s390 = ssub.s32 96, 96
          %391 = vsyncadd [#allocation15], %s390
          %s393 = sshll.u32 [#allocation14], 4
          %s394 = int_to_ptr.vmem [resolvable:$true] %s393
          %396 = dma.hbm_to_vmem [thread:$0]  %s8, 96, %s394, [#allocation15]
        $region44: #{tpu_custom_call.1} parent=11 // pred_fallthru
          _
        // Predicated region
        $region45: #{tpu_custom_call.1} parent=11 // pred_check
          %p397 = pneg %p241
        $region46: #{tpu_custom_call.1} parent=11 // pred_check_branch
          %399 = sbr.rel (%p397) target = $region48
        $region47: #{tpu_custom_call.1} parent=11 // pred_region
          %s401 = ssub.s32 12288, 12288
          %402 = vsyncadd [#allocation15], %s401
          %s403 = sshll.u32 [#allocation16], 4
          %s404 = int_to_ptr.vmem [resolvable:$true] %s403
          %409 = dma.hbm_to_vmem [thread:$0]  %s9, 12288, %s404, [#allocation15], 128, 128, 8
        $region48: #{tpu_custom_call.1} parent=11 // pred_fallthru
          _
        // Predicated region
        $region49: #{tpu_custom_call.1} parent=11 // pred_check
          %p410 = pneg %p262
        $region50: #{tpu_custom_call.1} parent=11 // pred_check_branch
          %412 = sbr.rel (%p410) target = $region52
        $region51: #{tpu_custom_call.1} parent=11 // pred_region
          %s414 = ssub.s32 16, 16
          %415 = vsyncadd [#allocation18], %s414
          %s417 = sshll.u32 [#allocation17], 4
          %s418 = int_to_ptr.vmem [resolvable:$true] %s417
          %420 = dma.hbm_to_vmem [thread:$0]  %s10, 16, %s418, [#allocation18]
        $region52: #{tpu_custom_call.1} parent=11 // pred_fallthru
          _
      $region12: #{tpu_custom_call.1} parent=5 // pred_fallthru
        _
      %p421 = scmp.lt.s32.totalorder %s26, 2
      // Predicated region
      $region53: #{tpu_custom_call.1} parent=5 // pred_check
        %p422 = pneg %p421
      $region54: #{tpu_custom_call.1} parent=5 // pred_check_branch
        %424 = sbr.rel (%p422) target = $region56
      $region55: #{tpu_custom_call.1} parent=5 // pred_region
        // Predicated region
        $region57: #{tpu_custom_call.1} parent=55 // pred_check
          %p425 = pneg %p46
        $region58: #{tpu_custom_call.1} parent=55 // pred_check_branch
          %427 = sbr.rel (%p425) target = $region60
        $region59: #{tpu_custom_call.1} parent=55 // pred_region
          %p428 = scmp.lt.s32.totalorder %s26, 1
          %s429 = scalar_select %p428, %s26, 1
          %s430 = smul.addr %s429, 8
          %s431 = scalar_lea.vmem %s0, %s430
        $region60: #{tpu_custom_call.1} parent=55 // pred_fallthru
          _
      $region56: #{tpu_custom_call.1} parent=5 // pred_fallthru
        _
      %p432 = scmp.le.s32.totalorder 1, %s26
      %p433 = scmp.lt.s32.totalorder %s26, 3
      %p434 = pnand %p432, %p433
      %p435 = pneg %p434
      // Predicated region
      $region61: #{tpu_custom_call.1} parent=5 // pred_check
        _
      $region62: #{tpu_custom_call.1} parent=5 // pred_check_branch
        %437 = sbr.rel (%p434) target = $region64
      $region63: #{tpu_custom_call.1} parent=5 // pred_region
        %s438 = ssub.s32 %s26, 1
        // Predicated region
        $region65: #{tpu_custom_call.1} parent=63 // pred_check
          %p439 = pneg %p73
        $region66: #{tpu_custom_call.1} parent=63 // pred_check_branch
          %441 = sbr.rel (%p439) target = $region68
        $region67: #{tpu_custom_call.1} parent=63 // pred_region
          %442 = dma.done [#allocation3], 6144
        $region68: #{tpu_custom_call.1} parent=63 // pred_fallthru
          _
        // Predicated region
        $region69: #{tpu_custom_call.1} parent=63 // pred_check
          %p443 = pneg %p94
        $region70: #{tpu_custom_call.1} parent=63 // pred_check_branch
          %445 = sbr.rel (%p443) target = $region72
        $region71: #{tpu_custom_call.1} parent=63 // pred_region
          %446 = dma.done [#allocation6], 768
        $region72: #{tpu_custom_call.1} parent=63 // pred_fallthru
          _
        // Predicated region
        $region73: #{tpu_custom_call.1} parent=63 // pred_check
          %p447 = pneg %p115
        $region74: #{tpu_custom_call.1} parent=63 // pred_check_branch
          %449 = sbr.rel (%p447) target = $region76
        $region75: #{tpu_custom_call.1} parent=63 // pred_region
          %450 = dma.done [#allocation6], 96
        $region76: #{tpu_custom_call.1} parent=63 // pred_fallthru
          _
        // Predicated region
        $region77: #{tpu_custom_call.1} parent=63 // pred_check
          %p451 = pneg %p136
        $region78: #{tpu_custom_call.1} parent=63 // pred_check_branch
          %453 = sbr.rel (%p451) target = $region80
        $region79: #{tpu_custom_call.1} parent=63 // pred_region
          %454 = dma.done [#allocation9], 96
        $region80: #{tpu_custom_call.1} parent=63 // pred_fallthru
          _
        // Predicated region
        $region81: #{tpu_custom_call.1} parent=63 // pred_check
          %p455 = pneg %p157
        $region82: #{tpu_custom_call.1} parent=63 // pred_check_branch
          %457 = sbr.rel (%p455) target = $region84
        $region83: #{tpu_custom_call.1} parent=63 // pred_region
          %458 = dma.done [#allocation9], 73728
        $region84: #{tpu_custom_call.1} parent=63 // pred_fallthru
          _
        // Predicated region
        $region85: #{tpu_custom_call.1} parent=63 // pred_check
          %p459 = pneg %p178
        $region86: #{tpu_custom_call.1} parent=63 // pred_check_branch
          %461 = sbr.rel (%p459) target = $region88
        $region87: #{tpu_custom_call.1} parent=63 // pred_region
          %462 = dma.done [#allocation12], 24576
        $region88: #{tpu_custom_call.1} parent=63 // pred_fallthru
          _
        // Predicated region
        $region89: #{tpu_custom_call.1} parent=63 // pred_check
          %p463 = pneg %p199
        $region90: #{tpu_custom_call.1} parent=63 // pred_check_branch
          %465 = sbr.rel (%p463) target = $region92
        $region91: #{tpu_custom_call.1} parent=63 // pred_region
          %466 = dma.done [#allocation12], 96
        $region92: #{tpu_custom_call.1} parent=63 // pred_fallthru
          _
        // Predicated region
        $region93: #{tpu_custom_call.1} parent=63 // pred_check
          %p467 = pneg %p220
        $region94: #{tpu_custom_call.1} parent=63 // pred_check_branch
          %469 = sbr.rel (%p467) target = $region96
        $region95: #{tpu_custom_call.1} parent=63 // pred_region
          %470 = dma.done [#allocation15], 96
        $region96: #{tpu_custom_call.1} parent=63 // pred_fallthru
          _
        // Predicated region
        $region97: #{tpu_custom_call.1} parent=63 // pred_check
          %p471 = pneg %p241
        $region98: #{tpu_custom_call.1} parent=63 // pred_check_branch
          %473 = sbr.rel (%p471) target = $region100
        $region99: #{tpu_custom_call.1} parent=63 // pred_region
          %474 = dma.done [#allocation15], 12288
        $region100: #{tpu_custom_call.1} parent=63 // pred_fallthru
          _
        // Predicated region
        $region101: #{tpu_custom_call.1} parent=63 // pred_check
          %p475 = pneg %p262
        $region102: #{tpu_custom_call.1} parent=63 // pred_check_branch
          %477 = sbr.rel (%p475) target = $region104
        $region103: #{tpu_custom_call.1} parent=63 // pred_region
          %478 = dma.done [#allocation18], 16
        $region104: #{tpu_custom_call.1} parent=63 // pred_fallthru
          _
        %p479 = scmp.lt.s32.totalorder %s31, 1
        %s480 = scalar_select %p479, %s31, 1
        %s481 = smul.addr %s480, 8
        %s482 = scalar_lea.vmem %s0, %s481
        %p483 = pneg %p52
        %p484 = pneg %p49
        %p485 = pneg %p73
        %p486 = pneg %p70
        %p487 = pneg %p94
        %p488 = pneg %p91
        %p489 = pneg %p115
        %p490 = pneg %p112
        %p491 = pneg %p136
        %p492 = pneg %p133
        %p493 = pneg %p157
        %p494 = pneg %p154
        %p495 = pneg %p178
        %p496 = pneg %p175
        %p497 = pneg %p199
        %p498 = pneg %p196
        %p499 = pneg %p220
        %p500 = pneg %p217
        %p501 = pneg %p241
        %p502 = pneg %p238
        %p503 = pneg %p262
        %p504 = pneg %p259
        %p505 = pneg %p288
        %p506 = pneg %p285
        %s507 = sand.u32 %s275, 1
        %s508 = scalar_lea.sflag [#allocation4], %s507
        %s509 = sand.u32 %s275, 1
        %s510 = scalar_lea.vmem [#allocation19], %s509
        %p511 = scmp.lt.s32.totalorder %s31, 1
        %s512 = scalar_select %p511, %s31, 1
        %s513 = smul.addr %s512, 8
        %s514 = scalar_lea.vmem %s0, %s513
        %v516 = vld [vmem:[%s514] sm:$0xff]
        %v517 = vlaneseq
        %v518 = vand.u32 %v517, 127
        %519 = vset.pattern.permute.xlu0 0
        %520 = vperm.xlu0 %519, %v516
        %v521 = vpop.permute.xlu0 %520
        %vm522 = vcmp.eq.s32.totalorder %v518, %v521
        %v523 = vsel %vm522, 1, 0
        %v524 = vcvt.s32.f32 %v523
        %v525 = vpack.c.bf16 %v524, %v524
        %v526 = vld [vmem:[#allocation2] sm:$0xff]
        %v527 = vld [vmem:[#allocation2 + $0x8] sm:$0xff]
        %v528 = vld [vmem:[#allocation2 + $0x10] sm:$0xff]
        %v529 = vld [vmem:[#allocation2 + $0x18] sm:$0xff]
        %v530 = vld [vmem:[#allocation2 + $0x20] sm:$0xff]
        %v531 = vld [vmem:[#allocation2 + $0x28] sm:$0xff]
        %v532 = vld [vmem:[#allocation2 + $0x30] sm:$0xff]
        %v533 = vld [vmem:[#allocation2 + $0x38] sm:$0xff]
        %v534 = vld [vmem:[#allocation2 + $0x40] sm:$0xff]
        %v535 = vld [vmem:[#allocation2 + $0x48] sm:$0xff]
        %v536 = vld [vmem:[#allocation2 + $0x50] sm:$0xff]
        %v537 = vld [vmem:[#allocation2 + $0x58] sm:$0xff]
        %v538 = vld [vmem:[#allocation2 + $0x60] sm:$0xff]
        %v539 = vld [vmem:[#allocation2 + $0x68] sm:$0xff]
        %v540 = vld [vmem:[#allocation2 + $0x70] sm:$0xff]
        %v541 = vld [vmem:[#allocation2 + $0x78] sm:$0xff]
        %v542 = vld [vmem:[#allocation2 + $0x80] sm:$0xff]
        %v543 = vld [vmem:[#allocation2 + $0x88] sm:$0xff]
        %v544 = vld [vmem:[#allocation2 + $0x90] sm:$0xff]
        %v545 = vld [vmem:[#allocation2 + $0x98] sm:$0xff]
        %v546 = vld [vmem:[#allocation2 + $0xa0] sm:$0xff]
        %v547 = vld [vmem:[#allocation2 + $0xa8] sm:$0xff]
        %v548 = vld [vmem:[#allocation2 + $0xb0] sm:$0xff]
        %v549 = vld [vmem:[#allocation2 + $0xb8] sm:$0xff]
        %v550 = vld [vmem:[#allocation2 + $0xc0] sm:$0xff]
        %v551 = vld [vmem:[#allocation2 + $0xc8] sm:$0xff]
        %v552 = vld [vmem:[#allocation2 + $0xd0] sm:$0xff]
        %v553 = vld [vmem:[#allocation2 + $0xd8] sm:$0xff]
        %v554 = vld [vmem:[#allocation2 + $0xe0] sm:$0xff]
        %v555 = vld [vmem:[#allocation2 + $0xe8] sm:$0xff]
        %v556 = vld [vmem:[#allocation2 + $0xf0] sm:$0xff]
        %v557 = vld [vmem:[#allocation2 + $0xf8] sm:$0xff]
        %v558 = vld [vmem:[#allocation2 + $0x100] sm:$0xff]
        %v559 = vld [vmem:[#allocation2 + $0x108] sm:$0xff]
        %v560 = vld [vmem:[#allocation2 + $0x110] sm:$0xff]
        %v561 = vld [vmem:[#allocation2 + $0x118] sm:$0xff]
        %v562 = vld [vmem:[#allocation2 + $0x120] sm:$0xff]
        %v563 = vld [vmem:[#allocation2 + $0x128] sm:$0xff]
        %v564 = vld [vmem:[#allocation2 + $0x130] sm:$0xff]
        %v565 = vld [vmem:[#allocation2 + $0x138] sm:$0xff]
        %v566 = vld [vmem:[#allocation2 + $0x140] sm:$0xff]
        %v567 = vld [vmem:[#allocation2 + $0x148] sm:$0xff]
        %v568 = vld [vmem:[#allocation2 + $0x150] sm:$0xff]
        %v569 = vld [vmem:[#allocation2 + $0x158] sm:$0xff]
        %v570 = vld [vmem:[#allocation2 + $0x160] sm:$0xff]
        %v571 = vld [vmem:[#allocation2 + $0x168] sm:$0xff]
        %v572 = vld [vmem:[#allocation2 + $0x170] sm:$0xff]
        %v573 = vld [vmem:[#allocation2 + $0x178] sm:$0xff]
        %v574 = vld [vmem:[#allocation5] sm:$0xff]
        %v575 = vld [vmem:[#allocation5 + $0x8] sm:$0xff]
        %v576 = vld [vmem:[#allocation5 + $0x10] sm:$0xff]
        %v577 = vld [vmem:[#allocation5 + $0x18] sm:$0xff]
        %v578 = vld [vmem:[#allocation5 + $0x20] sm:$0xff]
        %v579 = vld [vmem:[#allocation5 + $0x28] sm:$0xff]
        %v628 = vunpack.c.l.b16 %v526
        %v629 = vunpack.c.h.b16 %v526
        %v630 = vunpack.c.l.b16 %v527
        %v631 = vunpack.c.h.b16 %v527
        %v632 = vunpack.c.l.b16 %v528
        %v633 = vunpack.c.h.b16 %v528
        %v634 = vunpack.c.l.b16 %v529
        %v635 = vunpack.c.h.b16 %v529
        %v636 = vunpack.c.l.b16 %v530
        %v637 = vunpack.c.h.b16 %v530
        %v638 = vunpack.c.l.b16 %v531
        %v639 = vunpack.c.h.b16 %v531
        %v640 = vunpack.c.l.b16 %v532
        %v641 = vunpack.c.h.b16 %v532
        %v642 = vunpack.c.l.b16 %v533
        %v643 = vunpack.c.h.b16 %v533
        %v644 = vunpack.c.l.b16 %v534
        %v645 = vunpack.c.h.b16 %v534
        %v646 = vunpack.c.l.b16 %v535
        %v647 = vunpack.c.h.b16 %v535
        %v648 = vunpack.c.l.b16 %v536
        %v649 = vunpack.c.h.b16 %v536
        %v650 = vunpack.c.l.b16 %v537
        %v651 = vunpack.c.h.b16 %v537
        %v652 = vunpack.c.l.b16 %v538
        %v653 = vunpack.c.h.b16 %v538
        %v654 = vunpack.c.l.b16 %v539
        %v655 = vunpack.c.h.b16 %v539
        %v656 = vunpack.c.l.b16 %v540
        %v657 = vunpack.c.h.b16 %v540
        %v658 = vunpack.c.l.b16 %v541
        %v659 = vunpack.c.h.b16 %v541
        %v660 = vunpack.c.l.b16 %v542
        %v661 = vunpack.c.h.b16 %v542
        %v662 = vunpack.c.l.b16 %v543
        %v663 = vunpack.c.h.b16 %v543
        %v664 = vunpack.c.l.b16 %v544
        %v665 = vunpack.c.h.b16 %v544
        %v666 = vunpack.c.l.b16 %v545
        %v667 = vunpack.c.h.b16 %v545
        %v668 = vunpack.c.l.b16 %v546
        %v669 = vunpack.c.h.b16 %v546
        %v670 = vunpack.c.l.b16 %v547
        %v671 = vunpack.c.h.b16 %v547
        %v672 = vunpack.c.l.b16 %v548
        %v673 = vunpack.c.h.b16 %v548
        %v674 = vunpack.c.l.b16 %v549
        %v675 = vunpack.c.h.b16 %v549
        %v676 = vunpack.c.l.b16 %v550
        %v677 = vunpack.c.h.b16 %v550
        %v678 = vunpack.c.l.b16 %v551
        %v679 = vunpack.c.h.b16 %v551
        %v680 = vunpack.c.l.b16 %v552
        %v681 = vunpack.c.h.b16 %v552
        %v682 = vunpack.c.l.b16 %v553
        %v683 = vunpack.c.h.b16 %v553
        %v684 = vunpack.c.l.b16 %v554
        %v685 = vunpack.c.h.b16 %v554
        %v686 = vunpack.c.l.b16 %v555
        %v687 = vunpack.c.h.b16 %v555
        %v688 = vunpack.c.l.b16 %v556
        %v689 = vunpack.c.h.b16 %v556
        %v690 = vunpack.c.l.b16 %v557
        %v691 = vunpack.c.h.b16 %v557
        %v692 = vunpack.c.l.b16 %v558
        %v693 = vunpack.c.h.b16 %v558
        %v694 = vunpack.c.l.b16 %v559
        %v695 = vunpack.c.h.b16 %v559
        %v696 = vunpack.c.l.b16 %v560
        %v697 = vunpack.c.h.b16 %v560
        %v698 = vunpack.c.l.b16 %v561
        %v699 = vunpack.c.h.b16 %v561
        %v700 = vunpack.c.l.b16 %v562
        %v701 = vunpack.c.h.b16 %v562
        %v702 = vunpack.c.l.b16 %v563
        %v703 = vunpack.c.h.b16 %v563
        %v704 = vunpack.c.l.b16 %v564
        %v705 = vunpack.c.h.b16 %v564
        %v706 = vunpack.c.l.b16 %v565
        %v707 = vunpack.c.h.b16 %v565
        %v708 = vunpack.c.l.b16 %v566
        %v709 = vunpack.c.h.b16 %v566
        %v710 = vunpack.c.l.b16 %v567
        %v711 = vunpack.c.h.b16 %v567
        %v712 = vunpack.c.l.b16 %v568
        %v713 = vunpack.c.h.b16 %v568
        %v714 = vunpack.c.l.b16 %v569
        %v715 = vunpack.c.h.b16 %v569
        %v716 = vunpack.c.l.b16 %v570
        %v717 = vunpack.c.h.b16 %v570
        %v718 = vunpack.c.l.b16 %v571
        %v719 = vunpack.c.h.b16 %v571
        %v720 = vunpack.c.l.b16 %v572
        %v721 = vunpack.c.h.b16 %v572
        %v722 = vunpack.c.l.b16 %v573
        %v723 = vunpack.c.h.b16 %v573
        %v724 = vpack.c.b16 %v634, %v628
        %v725 = vpack.c.b16 %v635, %v629
        %v726 = vpack.c.b16 %v636, %v630
        %v727 = vpack.c.b16 %v637, %v631
        %v728 = vpack.c.b16 %v638, %v632
        %v729 = vpack.c.b16 %v639, %v633
        %v730 = vpack.c.b16 %v646, %v640
        %v731 = vpack.c.b16 %v647, %v641
        %v732 = vpack.c.b16 %v648, %v642
        %v733 = vpack.c.b16 %v649, %v643
        %v734 = vpack.c.b16 %v650, %v644
        %v735 = vpack.c.b16 %v651, %v645
        %v736 = vpack.c.b16 %v658, %v652
        %v737 = vpack.c.b16 %v659, %v653
        %v738 = vpack.c.b16 %v660, %v654
        %v739 = vpack.c.b16 %v661, %v655
        %v740 = vpack.c.b16 %v662, %v656
        %v741 = vpack.c.b16 %v663, %v657
        %v742 = vpack.c.b16 %v670, %v664
        %v743 = vpack.c.b16 %v671, %v665
        %v744 = vpack.c.b16 %v672, %v666
        %v745 = vpack.c.b16 %v673, %v667
        %v746 = vpack.c.b16 %v674, %v668
        %v747 = vpack.c.b16 %v675, %v669
        %v748 = vpack.c.b16 %v682, %v676
        %v749 = vpack.c.b16 %v683, %v677
        %v750 = vpack.c.b16 %v684, %v678
        %v751 = vpack.c.b16 %v685, %v679
        %v752 = vpack.c.b16 %v686, %v680
        %v753 = vpack.c.b16 %v687, %v681
        %v754 = vpack.c.b16 %v694, %v688
        %v755 = vpack.c.b16 %v695, %v689
        %v756 = vpack.c.b16 %v696, %v690
        %v757 = vpack.c.b16 %v697, %v691
        %v758 = vpack.c.b16 %v698, %v692
        %v759 = vpack.c.b16 %v699, %v693
        %v760 = vpack.c.b16 %v706, %v700
        %v761 = vpack.c.b16 %v707, %v701
        %v762 = vpack.c.b16 %v708, %v702
        %v763 = vpack.c.b16 %v709, %v703
        %v764 = vpack.c.b16 %v710, %v704
        %v765 = vpack.c.b16 %v711, %v705
        %v766 = vpack.c.b16 %v718, %v712
        %v767 = vpack.c.b16 %v719, %v713
        %v768 = vpack.c.b16 %v720, %v714
        %v769 = vpack.c.b16 %v721, %v715
        %v770 = vpack.c.b16 %v722, %v716
        %v771 = vpack.c.b16 %v723, %v717
        %820 = vmatprep.subr.bf16.mxu0 %v725
        %821 = vmatpush1.bf16.msra.mxu0 %v724
        %822 = vmatprep.subr.bf16.mxu0 %v731
        %823 = vmatpush1.bf16.msra.mxu0 %v730
        %824 = vmatprep.subr.bf16.mxu0 %v737
        %825 = vmatpush1.bf16.msra.mxu0 %v736
        %826 = vmatprep.subr.bf16.mxu0 %v743
        %827 = vmatpush1.bf16.msra.mxu0 %v742
        %828 = vmatprep.subr.bf16.mxu0 %v749
        %829 = vmatpush1.bf16.msra.mxu0 %v748
        %830 = vmatprep.subr.bf16.mxu0 %v755
        %831 = vmatpush1.bf16.msra.mxu0 %v754
        %832 = vmatprep.subr.bf16.mxu0 %v761
        %833 = vmatpush1.bf16.msra.mxu0 %v760
        %834 = vmatprep.subr.bf16.mxu0 %v767
        %835 = vmatpush1.bf16.msra.mxu0 %v766
        %836 = vmatprep.subr.bf16.mxu0 0
        %837 = vmatpush1.bf16.msra.mxu0 0
        %838 = vmatprep.subr.bf16.mxu0 0
        %839 = vmatpush1.bf16.msra.mxu0 0
        %840 = vmatprep.subr.bf16.mxu0 0
        %841 = vmatpush1.bf16.msra.mxu0 0
        %842 = vmatprep.subr.bf16.mxu0 0
        %843 = vmatpush1.bf16.msra.mxu0 0
        %844 = vmatprep.subr.bf16.mxu0 0
        %845 = vmatpush1.bf16.msra.mxu0 0
        %846 = vmatprep.subr.bf16.mxu0 0
        %847 = vmatpush1.bf16.msra.mxu0 0
        %848 = vmatprep.subr.bf16.mxu0 0
        %849 = vmatpush1.bf16.msra.mxu0 0
        %850 = vmatprep.subr.bf16.mxu0 0
        %851 = vmatpush1.bf16.msra.mxu0 0
        %852 = vmatprep.mubr.bf16.mxu0 0
        %853 = vmatmul.mubr.bf16.gmra.mrb[0].mxu0 %v525
        %v854 = vpop.f32.mrb[0].mxu0
        %v855 = vadd.f32 %v574, %v854
        %v856 = vpop.f32.mrb[0].mxu0
        %v857 = vadd.f32 %v575, %v856
        %v858 = vpop.f32.mrb[0].mxu0
        %v859 = vpop.f32.mrb[0].mxu0
        %860 = vdwg.mxu0
        %861 = vmatprep.subr.bf16.mxu0 %v727
        %862 = vmatpush1.bf16.msra.mxu0 %v726
        %863 = vmatprep.subr.bf16.mxu0 %v733
        %864 = vmatpush1.bf16.msra.mxu0 %v732
        %865 = vmatprep.subr.bf16.mxu0 %v739
        %866 = vmatpush1.bf16.msra.mxu0 %v738
        %867 = vmatprep.subr.bf16.mxu0 %v745
        %868 = vmatpush1.bf16.msra.mxu0 %v744
        %869 = vmatprep.subr.bf16.mxu0 %v751
        %870 = vmatpush1.bf16.msra.mxu0 %v750
        %871 = vmatprep.subr.bf16.mxu0 %v757
        %872 = vmatpush1.bf16.msra.mxu0 %v756
        %873 = vmatprep.subr.bf16.mxu0 %v763
        %874 = vmatpush1.bf16.msra.mxu0 %v762
        %875 = vmatprep.subr.bf16.mxu0 %v769
        %876 = vmatpush1.bf16.msra.mxu0 %v768
        %877 = vmatprep.subr.bf16.mxu0 0
        %878 = vmatpush1.bf16.msra.mxu0 0
        %879 = vmatprep.subr.bf16.mxu0 0
        %880 = vmatpush1.bf16.msra.mxu0 0
        %881 = vmatprep.subr.bf16.mxu0 0
        %882 = vmatpush1.bf16.msra.mxu0 0
        %883 = vmatprep.subr.bf16.mxu0 0
        %884 = vmatpush1.bf16.msra.mxu0 0
        %885 = vmatprep.subr.bf16.mxu0 0
        %886 = vmatpush1.bf16.msra.mxu0 0
        %887 = vmatprep.subr.bf16.mxu0 0
        %888 = vmatpush1.bf16.msra.mxu0 0
        %889 = vmatprep.subr.bf16.mxu0 0
        %890 = vmatpush1.bf16.msra.mxu0 0
        %891 = vmatprep.subr.bf16.mxu0 0
        %892 = vmatpush1.bf16.msra.mxu0 0
        %893 = vmatprep.mubr.bf16.mxu0 0
        %894 = vmatmul.mubr.bf16.gmra.mrb[0].mxu0 %v525
        %v895 = vpop.f32.mrb[0].mxu0
        %v896 = vadd.f32 %v576, %v895
        %v897 = vpop.f32.mrb[0].mxu0
        %v898 = vadd.f32 %v577, %v897
        %v899 = vpop.f32.mrb[0].mxu0
        %v900 = vpop.f32.mrb[0].mxu0
        %901 = vdwg.mxu0
        %902 = vmatprep.subr.bf16.mxu0 %v729
        %903 = vmatpush1.bf16.msra.mxu0 %v728
        %904 = vmatprep.subr.bf16.mxu0 %v735
        %905 = vmatpush1.bf16.msra.mxu0 %v734
        %906 = vmatprep.subr.bf16.mxu0 %v741
        %907 = vmatpush1.bf16.msra.mxu0 %v740
        %908 = vmatprep.subr.bf16.mxu0 %v747
        %909 = vmatpush1.bf16.msra.mxu0 %v746
        %910 = vmatprep.subr.bf16.mxu0 %v753
        %911 = vmatpush1.bf16.msra.mxu0 %v752
        %912 = vmatprep.subr.bf16.mxu0 %v759
        %913 = vmatpush1.bf16.msra.mxu0 %v758
        %914 = vmatprep.subr.bf16.mxu0 %v765
        %915 = vmatpush1.bf16.msra.mxu0 %v764
        %916 = vmatprep.subr.bf16.mxu0 %v771
        %917 = vmatpush1.bf16.msra.mxu0 %v770
        %918 = vmatprep.subr.bf16.mxu0 0
        %919 = vmatpush1.bf16.msra.mxu0 0
        %920 = vmatprep.subr.bf16.mxu0 0
        %921 = vmatpush1.bf16.msra.mxu0 0
        %922 = vmatprep.subr.bf16.mxu0 0
        %923 = vmatpush1.bf16.msra.mxu0 0
        %924 = vmatprep.subr.bf16.mxu0 0
        %925 = vmatpush1.bf16.msra.mxu0 0
        %926 = vmatprep.subr.bf16.mxu0 0
        %927 = vmatpush1.bf16.msra.mxu0 0
        %928 = vmatprep.subr.bf16.mxu0 0
        %929 = vmatpush1.bf16.msra.mxu0 0
        %930 = vmatprep.subr.bf16.mxu0 0
        %931 = vmatpush1.bf16.msra.mxu0 0
        %932 = vmatprep.subr.bf16.mxu0 0
        %933 = vmatpush1.bf16.msra.mxu0 0
        %934 = vmatprep.mubr.bf16.mxu0 0
        %935 = vmatmul.mubr.bf16.gmra.mrb[0].mxu0 %v525
        %v936 = vpop.f32.mrb[0].mxu0
        %v937 = vadd.f32 %v578, %v936
        %v938 = vpop.f32.mrb[0].mxu0
        %v939 = vadd.f32 %v579, %v938
        %v940 = vpop.f32.mrb[0].mxu0
        %v941 = vpop.f32.mrb[0].mxu0
        %942 = vdwg.mxu0
        %v943 = vld [vmem:[#allocation7] sm:$0x3f]
        %v944 = vld [vmem:[#allocation8] sm:$0x3f]
        %v945 = vadd.f32 %v855, %v857
        %v946 = vadd.f32 %v945, %v896
        %v947 = vadd.f32 %v946, %v898
        %v948 = vadd.f32 %v947, %v937
        %v949 = vadd.f32 %v948, %v939
        %950 = vadd.xlane.f32.xlu0 %v949
        %v951 = vpop.xlane.xlu0 %950
        %v952 = vrcp.pop 768.0
        %v953 = vmul.f32 %v951, %v952
        %v954 = vsub.f32 %v855, %v953
        %v955 = vsub.f32 %v857, %v953
        %v956 = vsub.f32 %v896, %v953
        %v957 = vsub.f32 %v898, %v953
        %v958 = vsub.f32 %v937, %v953
        %v959 = vsub.f32 %v939, %v953
        %v960 = vmul.f32 %v954, %v954
        %v961 = vmul.f32 %v955, %v955
        %v962 = vmul.f32 %v956, %v956
        %v963 = vmul.f32 %v957, %v957
        %v964 = vmul.f32 %v958, %v958
        %v965 = vmul.f32 %v959, %v959
        %v966 = vadd.f32 %v960, %v961
        %v967 = vadd.f32 %v966, %v962
        %v968 = vadd.f32 %v967, %v963
        %v969 = vadd.f32 %v968, %v964
        %v970 = vadd.f32 %v969, %v965
        %971 = vadd.xlane.f32.xlu0 %v970
        %v972 = vpop.xlane.xlu0 %971
        %v973 = vmul.f32 %v972, %v952
        %v974 = vadd.f32 %v973, 1e-12
        %v975 = vrsqrt.pop %v974
        %v976 = vmul.f32 %v954, %v975
        %v977 = vmul.f32 %v955, %v975
        %v978 = vmul.f32 %v956, %v975
        %v979 = vmul.f32 %v957, %v975
        %v980 = vmul.f32 %v958, %v975
        %v981 = vmul.f32 %v959, %v975
        %v983 = vlaneseq
        %v984 = vshrl.u32 %v983, 7
        %v985 = vsub.s32 0, %v984
        %v986 = vrot.slane %v943, %v985
        %v987 = vlaneseq
        %v988 = vshrl.u32 %v987, 7
        %v989 = vsub.s32 1, %v988
        %v990 = vrot.slane %v943, %v989
        %v991 = vlaneseq
        %v992 = vshrl.u32 %v991, 7
        %v993 = vsub.s32 2, %v992
        %v994 = vrot.slane %v943, %v993
        %v995 = vlaneseq
        %v996 = vshrl.u32 %v995, 7
        %v997 = vsub.s32 3, %v996
        %v998 = vrot.slane %v943, %v997
        %v999 = vlaneseq
        %v1000 = vshrl.u32 %v999, 7
        %v1001 = vsub.s32 4, %v1000
        %v1002 = vrot.slane %v943, %v1001
        %v1003 = vlaneseq
        %v1004 = vshrl.u32 %v1003, 7
        %v1005 = vsub.s32 5, %v1004
        %v1006 = vrot.slane %v943, %v1005
        %v1013 = vmul.f32 %v976, %v986
        %v1014 = vmul.f32 %v977, %v990
        %v1015 = vmul.f32 %v978, %v994
        %v1016 = vmul.f32 %v979, %v998
        %v1017 = vmul.f32 %v980, %v1002
        %v1018 = vmul.f32 %v981, %v1006
        %v1020 = vlaneseq
        %v1021 = vshrl.u32 %v1020, 7
        %v1022 = vsub.s32 0, %v1021
        %v1023 = vrot.slane %v944, %v1022
        %v1024 = vlaneseq
        %v1025 = vshrl.u32 %v1024, 7
        %v1026 = vsub.s32 1, %v1025
        %v1027 = vrot.slane %v944, %v1026
        %v1028 = vlaneseq
        %v1029 = vshrl.u32 %v1028, 7
        %v1030 = vsub.s32 2, %v1029
        %v1031 = vrot.slane %v944, %v1030
        %v1032 = vlaneseq
        %v1033 = vshrl.u32 %v1032, 7
        %v1034 = vsub.s32 3, %v1033
        %v1035 = vrot.slane %v944, %v1034
        %v1036 = vlaneseq
        %v1037 = vshrl.u32 %v1036, 7
        %v1038 = vsub.s32 4, %v1037
        %v1039 = vrot.slane %v944, %v1038
        %v1040 = vlaneseq
        %v1041 = vshrl.u32 %v1040, 7
        %v1042 = vsub.s32 5, %v1041
        %v1043 = vrot.slane %v944, %v1042
        %v1050 = vadd.f32 %v1013, %v1023
        %v1051 = vadd.f32 %v1014, %v1027
        %v1052 = vadd.f32 %v1015, %v1031
        %v1053 = vadd.f32 %v1016, %v1035
        %v1054 = vadd.f32 %v1017, %v1039
        %v1055 = vadd.f32 %v1018, %v1043
        %v1056 = vpack.c.bf16 %v1050, %v1050
        %v1057 = vpack.c.bf16 %v1051, %v1051
        %v1058 = vpack.c.bf16 %v1052, %v1052
        %v1059 = vpack.c.bf16 %v1053, %v1053
        %v1060 = vpack.c.bf16 %v1054, %v1054
        %v1061 = vpack.c.bf16 %v1055, %v1055
        %v1062 = vld [vmem:[#allocation10] sm:$0xff]
        %v1063 = vld [vmem:[#allocation10 + $0x8] sm:$0xff]
        %v1064 = vld [vmem:[#allocation10 + $0x10] sm:$0xff]
        %v1065 = vld [vmem:[#allocation10 + $0x18] sm:$0xff]
        %v1066 = vld [vmem:[#allocation10 + $0x20] sm:$0xff]
        %v1067 = vld [vmem:[#allocation10 + $0x28] sm:$0xff]
        %v1068 = vld [vmem:[#allocation10 + $0x30] sm:$0xff]
        %v1069 = vld [vmem:[#allocation10 + $0x38] sm:$0xff]
        %v1070 = vld [vmem:[#allocation10 + $0x40] sm:$0xff]
        %v1071 = vld [vmem:[#allocation10 + $0x48] sm:$0xff]
        %v1072 = vld [vmem:[#allocation10 + $0x50] sm:$0xff]
        %v1073 = vld [vmem:[#allocation10 + $0x58] sm:$0xff]
        %v1074 = vld [vmem:[#allocation10 + $0x60] sm:$0xff]
        %v1075 = vld [vmem:[#allocation10 + $0x68] sm:$0xff]
        %v1076 = vld [vmem:[#allocation10 + $0x70] sm:$0xff]
        %v1077 = vld [vmem:[#allocation10 + $0x78] sm:$0xff]
        %v1078 = vld [vmem:[#allocation10 + $0x80] sm:$0xff]
        %v1079 = vld [vmem:[#allocation10 + $0x88] sm:$0xff]
        %v1080 = vld [vmem:[#allocation10 + $0x90] sm:$0xff]
        %v1081 = vld [vmem:[#allocation10 + $0x98] sm:$0xff]
        %v1082 = vld [vmem:[#allocation10 + $0xa0] sm:$0xff]
        %v1083 = vld [vmem:[#allocation10 + $0xa8] sm:$0xff]
        %v1084 = vld [vmem:[#allocation10 + $0xb0] sm:$0xff]
        %v1085 = vld [vmem:[#allocation10 + $0xb8] sm:$0xff]
        %v1086 = vld [vmem:[#allocation10 + $0xc0] sm:$0xff]
        %v1087 = vld [vmem:[#allocation10 + $0xc8] sm:$0xff]
        %v1088 = vld [vmem:[#allocation10 + $0xd0] sm:$0xff]
        %v1089 = vld [vmem:[#allocation10 + $0xd8] sm:$0xff]
        %v1090 = vld [vmem:[#allocation10 + $0xe0] sm:$0xff]
        %v1091 = vld [vmem:[#allocation10 + $0xe8] sm:$0xff]
        %v1092 = vld [vmem:[#allocation10 + $0xf0] sm:$0xff]
        %v1093 = vld [vmem:[#allocation10 + $0xf8] sm:$0xff]
        %v1094 = vld [vmem:[#allocation10 + $0x100] sm:$0xff]
        %v1095 = vld [vmem:[#allocation10 + $0x108] sm:$0xff]
        %v1096 = vld [vmem:[#allocation10 + $0x110] sm:$0xff]
        %v1097 = vld [vmem:[#allocation10 + $0x118] sm:$0xff]
        %v1098 = vld [vmem:[#allocation10 + $0x120] sm:$0xff]
        %v1099 = vld [vmem:[#allocation10 + $0x128] sm:$0xff]
        %v1100 = vld [vmem:[#allocation10 + $0x130] sm:$0xff]
        %v1101 = vld [vmem:[#allocation10 + $0x138] sm:$0xff]
        %v1102 = vld [vmem:[#allocation10 + $0x140] sm:$0xff]
        %v1103 = vld [vmem:[#allocation10 + $0x148] sm:$0xff]
        %v1104 = vld [vmem:[#allocation10 + $0x150] sm:$0xff]
        %v1105 = vld [vmem:[#allocation10 + $0x158] sm:$0xff]
        %v1106 = vld [vmem:[#allocation10 + $0x160] sm:$0xff]
        %v1107 = vld [vmem:[#allocation10 + $0x168] sm:$0xff]
        %v1108 = vld [vmem:[#allocation10 + $0x170] sm:$0xff]
        %v1109 = vld [vmem:[#allocation10 + $0x178] sm:$0xff]
        %v1110 = vld [vmem:[#allocation10 + $0x180] sm:$0xff]
        %v1111 = vld [vmem:[#allocation10 + $0x188] sm:$0xff]
        %v1112 = vld [vmem:[#allocation10 + $0x190] sm:$0xff]
        %v1113 = vld [vmem:[#allocation10 + $0x198] sm:$0xff]
        %v1114 = vld [vmem:[#allocation10 + $0x1a0] sm:$0xff]
        %v1115 = vld [vmem:[#allocation10 + $0x1a8] sm:$0xff]
        %v1116 = vld [vmem:[#allocation10 + $0x1b0] sm:$0xff]
        %v1117 = vld [vmem:[#allocation10 + $0x1b8] sm:$0xff]
        %v1118 = vld [vmem:[#allocation10 + $0x1c0] sm:$0xff]
        %v1119 = vld [vmem:[#allocation10 + $0x1c8] sm:$0xff]
        %v1120 = vld [vmem:[#allocation10 + $0x1d0] sm:$0xff]
        %v1121 = vld [vmem:[#allocation10 + $0x1d8] sm:$0xff]
        %v1122 = vld [vmem:[#allocation10 + $0x1e0] sm:$0xff]
        %v1123 = vld [vmem:[#allocation10 + $0x1e8] sm:$0xff]
        %v1124 = vld [vmem:[#allocation10 + $0x1f0] sm:$0xff]
        %v1125 = vld [vmem:[#allocation10 + $0x1f8] sm:$0xff]
        %v1126 = vld [vmem:[#allocation10 + $0x200] sm:$0xff]
        %v1127 = vld [vmem:[#allocation10 + $0x208] sm:$0xff]
        %v1128 = vld [vmem:[#allocation10 + $0x210] sm:$0xff]
        %v1129 = vld [vmem:[#allocation10 + $0x218] sm:$0xff]
        %v1130 = vld [vmem:[#allocation10 + $0x220] sm:$0xff]
        %v1131 = vld [vmem:[#allocation10 + $0x228] sm:$0xff]
        %v1132 = vld [vmem:[#allocation10 + $0x230] sm:$0xff]
        %v1133 = vld [vmem:[#allocation10 + $0x238] sm:$0xff]
        %v1134 = vld [vmem:[#allocation10 + $0x240] sm:$0xff]
        %v1135 = vld [vmem:[#allocation10 + $0x248] sm:$0xff]
        %v1136 = vld [vmem:[#allocation10 + $0x250] sm:$0xff]
        %v1137 = vld [vmem:[#allocation10 + $0x258] sm:$0xff]
        %v1138 = vld [vmem:[#allocation10 + $0x260] sm:$0xff]
        %v1139 = vld [vmem:[#allocation10 + $0x268] sm:$0xff]
        %v1140 = vld [vmem:[#allocation10 + $0x270] sm:$0xff]
        %v1141 = vld [vmem:[#allocation10 + $0x278] sm:$0xff]
        %v1142 = vld [vmem:[#allocation10 + $0x280] sm:$0xff]
        %v1143 = vld [vmem:[#allocation10 + $0x288] sm:$0xff]
        %v1144 = vld [vmem:[#allocation10 + $0x290] sm:$0xff]
        %v1145 = vld [vmem:[#allocation10 + $0x298] sm:$0xff]
        %v1146 = vld [vmem:[#allocation10 + $0x2a0] sm:$0xff]
        %v1147 = vld [vmem:[#allocation10 + $0x2a8] sm:$0xff]
        %v1148 = vld [vmem:[#allocation10 + $0x2b0] sm:$0xff]
        %v1149 = vld [vmem:[#allocation10 + $0x2b8] sm:$0xff]
        %v1150 = vld [vmem:[#allocation10 + $0x2c0] sm:$0xff]
        %v1151 = vld [vmem:[#allocation10 + $0x2c8] sm:$0xff]
        %v1152 = vld [vmem:[#allocation10 + $0x2d0] sm:$0xff]
        %v1153 = vld [vmem:[#allocation10 + $0x2d8] sm:$0xff]
        %v1154 = vld [vmem:[#allocation10 + $0x2e0] sm:$0xff]
        %v1155 = vld [vmem:[#allocation10 + $0x2e8] sm:$0xff]
        %v1156 = vld [vmem:[#allocation10 + $0x2f0] sm:$0xff]
        %v1157 = vld [vmem:[#allocation10 + $0x2f8] sm:$0xff]
        %v1158 = vld [vmem:[#allocation10 + $0x300] sm:$0xff]
        %v1159 = vld [vmem:[#allocation10 + $0x308] sm:$0xff]
        %v1160 = vld [vmem:[#allocation10 + $0x310] sm:$0xff]
        %v1161 = vld [vmem:[#allocation10 + $0x318] sm:$0xff]
        %v1162 = vld [vmem:[#allocation10 + $0x320] sm:$0xff]
        %v1163 = vld [vmem:[#allocation10 + $0x328] sm:$0xff]
        %v1164 = vld [vmem:[#allocation10 + $0x330] sm:$0xff]
        %v1165 = vld [vmem:[#allocation10 + $0x338] sm:$0xff]
        %v1166 = vld [vmem:[#allocation10 + $0x340] sm:$0xff]
        %v1167 = vld [vmem:[#allocation10 + $0x348] sm:$0xff]
        %v1168 = vld [vmem:[#allocation10 + $0x350] sm:$0xff]
        %v1169 = vld [vmem:[#allocation10 + $0x358] sm:$0xff]
        %v1170 = vld [vmem:[#allocation10 + $0x360] sm:$0xff]
        %v1171 = vld [vmem:[#allocation10 + $0x368] sm:$0xff]
        %v1172 = vld [vmem:[#allocation10 + $0x370] sm:$0xff]
        %v1173 = vld [vmem:[#allocation10 + $0x378] sm:$0xff]
        %v1174 = vld [vmem:[#allocation10 + $0x380] sm:$0xff]
        %v1175 = vld [vmem:[#allocation10 + $0x388] sm:$0xff]
        %v1176 = vld [vmem:[#allocation10 + $0x390] sm:$0xff]
        %v1177 = vld [vmem:[#allocation10 + $0x398] sm:$0xff]
        %v1178 = vld [vmem:[#allocation10 + $0x3a0] sm:$0xff]
        %v1179 = vld [vmem:[#allocation10 + $0x3a8] sm:$0xff]
        %v1180 = vld [vmem:[#allocation10 + $0x3b0] sm:$0xff]
        %v1181 = vld [vmem:[#allocation10 + $0x3b8] sm:$0xff]
        %v1182 = vld [vmem:[#allocation10 + $0x3c0] sm:$0xff]
        %v1183 = vld [vmem:[#allocation10 + $0x3c8] sm:$0xff]
        %v1184 = vld [vmem:[#allocation10 + $0x3d0] sm:$0xff]
        %v1185 = vld [vmem:[#allocation10 + $0x3d8] sm:$0xff]
        %v1186 = vld [vmem:[#allocation10 + $0x3e0] sm:$0xff]
        %v1187 = vld [vmem:[#allocation10 + $0x3e8] sm:$0xff]
        %v1188 = vld [vmem:[#allocation10 + $0x3f0] sm:$0xff]
        %v1189 = vld [vmem:[#allocation10 + $0x3f8] sm:$0xff]
        %v1190 = vld [vmem:[#allocation10 + $0x400] sm:$0xff]
        %v1191 = vld [vmem:[#allocation10 + $0x408] sm:$0xff]
        %v1192 = vld [vmem:[#allocation10 + $0x410] sm:$0xff]
        %v1193 = vld [vmem:[#allocation10 + $0x418] sm:$0xff]
        %v1194 = vld [vmem:[#allocation10 + $0x420] sm:$0xff]
        %v1195 = vld [vmem:[#allocation10 + $0x428] sm:$0xff]
        %v1196 = vld [vmem:[#allocation10 + $0x430] sm:$0xff]
        %v1197 = vld [vmem:[#allocation10 + $0x438] sm:$0xff]
        %v1198 = vld [vmem:[#allocation10 + $0x440] sm:$0xff]
        %v1199 = vld [vmem:[#allocation10 + $0x448] sm:$0xff]
        %v1200 = vld [vmem:[#allocation10 + $0x450] sm:$0xff]
        %v1201 = vld [vmem:[#allocation10 + $0x458] sm:$0xff]
        %v1202 = vld [vmem:[#allocation10 + $0x460] sm:$0xff]
        %v1203 = vld [vmem:[#allocation10 + $0x468] sm:$0xff]
        %v1204 = vld [vmem:[#allocation10 + $0x470] sm:$0xff]
        %v1205 = vld [vmem:[#allocation10 + $0x478] sm:$0xff]
        %v1206 = vld [vmem:[#allocation10 + $0x480] sm:$0xff]
        %v1207 = vld [vmem:[#allocation10 + $0x488] sm:$0xff]
        %v1208 = vld [vmem:[#allocation10 + $0x490] sm:$0xff]
        %v1209 = vld [vmem:[#allocation10 + $0x498] sm:$0xff]
        %v1210 = vld [vmem:[#allocation10 + $0x4a0] sm:$0xff]
        %v1211 = vld [vmem:[#allocation10 + $0x4a8] sm:$0xff]
        %v1212 = vld [vmem:[#allocation10 + $0x4b0] sm:$0xff]
        %v1213 = vld [vmem:[#allocation10 + $0x4b8] sm:$0xff]
        %v1214 = vld [vmem:[#allocation10 + $0x4c0] sm:$0xff]
        %v1215 = vld [vmem:[#allocation10 + $0x4c8] sm:$0xff]
        %v1216 = vld [vmem:[#allocation10 + $0x4d0] sm:$0xff]
        %v1217 = vld [vmem:[#allocation10 + $0x4d8] sm:$0xff]
        %v1218 = vld [vmem:[#allocation10 + $0x4e0] sm:$0xff]
        %v1219 = vld [vmem:[#allocation10 + $0x4e8] sm:$0xff]
        %v1220 = vld [vmem:[#allocation10 + $0x4f0] sm:$0xff]
        %v1221 = vld [vmem:[#allocation10 + $0x4f8] sm:$0xff]
        %v1222 = vld [vmem:[#allocation10 + $0x500] sm:$0xff]
        %v1223 = vld [vmem:[#allocation10 + $0x508] sm:$0xff]
        %v1224 = vld [vmem:[#allocation10 + $0x510] sm:$0xff]
        %v1225 = vld [vmem:[#allocation10 + $0x518] sm:$0xff]
        %v1226 = vld [vmem:[#allocation10 + $0x520] sm:$0xff]
        %v1227 = vld [vmem:[#allocation10 + $0x528] sm:$0xff]
        %v1228 = vld [vmem:[#allocation10 + $0x530] sm:$0xff]
        %v1229 = vld [vmem:[#allocation10 + $0x538] sm:$0xff]
        %v1230 = vld [vmem:[#allocation10 + $0x540] sm:$0xff]
        %v1231 = vld [vmem:[#allocation10 + $0x548] sm:$0xff]
        %v1232 = vld [vmem:[#allocation10 + $0x550] sm:$0xff]
        %v1233 = vld [vmem:[#allocation10 + $0x558] sm:$0xff]
        %v1234 = vld [vmem:[#allocation10 + $0x560] sm:$0xff]
        %v1235 = vld [vmem:[#allocation10 + $0x568] sm:$0xff]
        %v1236 = vld [vmem:[#allocation10 + $0x570] sm:$0xff]
        %v1237 = vld [vmem:[#allocation10 + $0x578] sm:$0xff]
        %v1238 = vld [vmem:[#allocation10 + $0x580] sm:$0xff]
        %v1239 = vld [vmem:[#allocation10 + $0x588] sm:$0xff]
        %v1240 = vld [vmem:[#allocation10 + $0x590] sm:$0xff]
        %v1241 = vld [vmem:[#allocation10 + $0x598] sm:$0xff]
        %v1242 = vld [vmem:[#allocation10 + $0x5a0] sm:$0xff]
        %v1243 = vld [vmem:[#allocation10 + $0x5a8] sm:$0xff]
        %v1244 = vld [vmem:[#allocation10 + $0x5b0] sm:$0xff]
        %v1245 = vld [vmem:[#allocation10 + $0x5b8] sm:$0xff]
        %v1246 = vld [vmem:[#allocation10 + $0x5c0] sm:$0xff]
        %v1247 = vld [vmem:[#allocation10 + $0x5c8] sm:$0xff]
        %v1248 = vld [vmem:[#allocation10 + $0x5d0] sm:$0xff]
        %v1249 = vld [vmem:[#allocation10 + $0x5d8] sm:$0xff]
        %v1250 = vld [vmem:[#allocation10 + $0x5e0] sm:$0xff]
        %v1251 = vld [vmem:[#allocation10 + $0x5e8] sm:$0xff]
        %v1252 = vld [vmem:[#allocation10 + $0x5f0] sm:$0xff]
        %v1253 = vld [vmem:[#allocation10 + $0x5f8] sm:$0xff]
        %v1254 = vld [vmem:[#allocation10 + $0x600] sm:$0xff]
        %v1255 = vld [vmem:[#allocation10 + $0x608] sm:$0xff]
        %v1256 = vld [vmem:[#allocation10 + $0x610] sm:$0xff]
        %v1257 = vld [vmem:[#allocation10 + $0x618] sm:$0xff]
        %v1258 = vld [vmem:[#allocation10 + $0x620] sm:$0xff]
        %v1259 = vld [vmem:[#allocation10 + $0x628] sm:$0xff]
        %v1260 = vld [vmem:[#allocation10 + $0x630] sm:$0xff]
        %v1261 = vld [vmem:[#allocation10 + $0x638] sm:$0xff]
        %v1262 = vld [vmem:[#allocation10 + $0x640] sm:$0xff]
        %v1263 = vld [vmem:[#allocation10 + $0x648] sm:$0xff]
        %v1264 = vld [vmem:[#allocation10 + $0x650] sm:$0xff]
        %v1265 = vld [vmem:[#allocation10 + $0x658] sm:$0xff]
        %v1266 = vld [vmem:[#allocation10 + $0x660] sm:$0xff]
        %v1267 = vld [vmem:[#allocation10 + $0x668] sm:$0xff]
        %v1268 = vld [vmem:[#allocation10 + $0x670] sm:$0xff]
        %v1269 = vld [vmem:[#allocation10 + $0x678] sm:$0xff]
        %v1270 = vld [vmem:[#allocation10 + $0x680] sm:$0xff]
        %v1271 = vld [vmem:[#allocation10 + $0x688] sm:$0xff]
        %v1272 = vld [vmem:[#allocation10 + $0x690] sm:$0xff]
        %v1273 = vld [vmem:[#allocation10 + $0x698] sm:$0xff]
        %v1274 = vld [vmem:[#allocation10 + $0x6a0] sm:$0xff]
        %v1275 = vld [vmem:[#allocation10 + $0x6a8] sm:$0xff]
        %v1276 = vld [vmem:[#allocation10 + $0x6b0] sm:$0xff]
        %v1277 = vld [vmem:[#allocation10 + $0x6b8] sm:$0xff]
        %v1278 = vld [vmem:[#allocation10 + $0x6c0] sm:$0xff]
        %v1279 = vld [vmem:[#allocation10 + $0x6c8] sm:$0xff]
        %v1280 = vld [vmem:[#allocation10 + $0x6d0] sm:$0xff]
        %v1281 = vld [vmem:[#allocation10 + $0x6d8] sm:$0xff]
        %v1282 = vld [vmem:[#allocation10 + $0x6e0] sm:$0xff]
        %v1283 = vld [vmem:[#allocation10 + $0x6e8] sm:$0xff]
        %v1284 = vld [vmem:[#allocation10 + $0x6f0] sm:$0xff]
        %v1285 = vld [vmem:[#allocation10 + $0x6f8] sm:$0xff]
        %v1286 = vld [vmem:[#allocation10 + $0x700] sm:$0xff]
        %v1287 = vld [vmem:[#allocation10 + $0x708] sm:$0xff]
        %v1288 = vld [vmem:[#allocation10 + $0x710] sm:$0xff]
        %v1289 = vld [vmem:[#allocation10 + $0x718] sm:$0xff]
        %v1290 = vld [vmem:[#allocation10 + $0x720] sm:$0xff]
        %v1291 = vld [vmem:[#allocation10 + $0x728] sm:$0xff]
        %v1292 = vld [vmem:[#allocation10 + $0x730] sm:$0xff]
        %v1293 = vld [vmem:[#allocation10 + $0x738] sm:$0xff]
        %v1294 = vld [vmem:[#allocation10 + $0x740] sm:$0xff]
        %v1295 = vld [vmem:[#allocation10 + $0x748] sm:$0xff]
        %v1296 = vld [vmem:[#allocation10 + $0x750] sm:$0xff]
        %v1297 = vld [vmem:[#allocation10 + $0x758] sm:$0xff]
        %v1298 = vld [vmem:[#allocation10 + $0x760] sm:$0xff]
        %v1299 = vld [vmem:[#allocation10 + $0x768] sm:$0xff]
        %v1300 = vld [vmem:[#allocation10 + $0x770] sm:$0xff]
        %v1301 = vld [vmem:[#allocation10 + $0x778] sm:$0xff]
        %v1302 = vld [vmem:[#allocation10 + $0x780] sm:$0xff]
        %v1303 = vld [vmem:[#allocation10 + $0x788] sm:$0xff]
        %v1304 = vld [vmem:[#allocation10 + $0x790] sm:$0xff]
        %v1305 = vld [vmem:[#allocation10 + $0x798] sm:$0xff]
        %v1306 = vld [vmem:[#allocation10 + $0x7a0] sm:$0xff]
        %v1307 = vld [vmem:[#allocation10 + $0x7a8] sm:$0xff]
        %v1308 = vld [vmem:[#allocation10 + $0x7b0] sm:$0xff]
        %v1309 = vld [vmem:[#allocation10 + $0x7b8] sm:$0xff]
        %v1310 = vld [vmem:[#allocation10 + $0x7c0] sm:$0xff]
        %v1311 = vld [vmem:[#allocation10 + $0x7c8] sm:$0xff]
        %v1312 = vld [vmem:[#allocation10 + $0x7d0] sm:$0xff]
        %v1313 = vld [vmem:[#allocation10 + $0x7d8] sm:$0xff]
        %v1314 = vld [vmem:[#allocation10 + $0x7e0] sm:$0xff]
        %v1315 = vld [vmem:[#allocation10 + $0x7e8] sm:$0xff]
        %v1316 = vld [vmem:[#allocation10 + $0x7f0] sm:$0xff]
        %v1317 = vld [vmem:[#allocation10 + $0x7f8] sm:$0xff]
        %v1318 = vld [vmem:[#allocation10 + $0x800] sm:$0xff]
        %v1319 = vld [vmem:[#allocation10 + $0x808] sm:$0xff]
        %v1320 = vld [vmem:[#allocation10 + $0x810] sm:$0xff]
        %v1321 = vld [vmem:[#allocation10 + $0x818] sm:$0xff]
        %v1322 = vld [vmem:[#allocation10 + $0x820] sm:$0xff]
        %v1323 = vld [vmem:[#allocation10 + $0x828] sm:$0xff]
        %v1324 = vld [vmem:[#allocation10 + $0x830] sm:$0xff]
        %v1325 = vld [vmem:[#allocation10 + $0x838] sm:$0xff]
        %v1326 = vld [vmem:[#allocation10 + $0x840] sm:$0xff]
        %v1327 = vld [vmem:[#allocation10 + $0x848] sm:$0xff]
        %v1328 = vld [vmem:[#allocation10 + $0x850] sm:$0xff]
        %v1329 = vld [vmem:[#allocation10 + $0x858] sm:$0xff]
        %v1330 = vld [vmem:[#allocation10 + $0x860] sm:$0xff]
        %v1331 = vld [vmem:[#allocation10 + $0x868] sm:$0xff]
        %v1332 = vld [vmem:[#allocation10 + $0x870] sm:$0xff]
        %v1333 = vld [vmem:[#allocation10 + $0x878] sm:$0xff]
        %v1334 = vld [vmem:[#allocation10 + $0x880] sm:$0xff]
        %v1335 = vld [vmem:[#allocation10 + $0x888] sm:$0xff]
        %v1336 = vld [vmem:[#allocation10 + $0x890] sm:$0xff]
        %v1337 = vld [vmem:[#allocation10 + $0x898] sm:$0xff]
        %v1338 = vld [vmem:[#allocation10 + $0x8a0] sm:$0xff]
        %v1339 = vld [vmem:[#allocation10 + $0x8a8] sm:$0xff]
        %v1340 = vld [vmem:[#allocation10 + $0x8b0] sm:$0xff]
        %v1341 = vld [vmem:[#allocation10 + $0x8b8] sm:$0xff]
        %v1342 = vld [vmem:[#allocation10 + $0x8c0] sm:$0xff]
        %v1343 = vld [vmem:[#allocation10 + $0x8c8] sm:$0xff]
        %v1344 = vld [vmem:[#allocation10 + $0x8d0] sm:$0xff]
        %v1345 = vld [vmem:[#allocation10 + $0x8d8] sm:$0xff]
        %v1346 = vld [vmem:[#allocation10 + $0x8e0] sm:$0xff]
        %v1347 = vld [vmem:[#allocation10 + $0x8e8] sm:$0xff]
        %v1348 = vld [vmem:[#allocation10 + $0x8f0] sm:$0xff]
        %v1349 = vld [vmem:[#allocation10 + $0x8f8] sm:$0xff]
        %v1350 = vld [vmem:[#allocation10 + $0x900] sm:$0xff]
        %v1351 = vld [vmem:[#allocation10 + $0x908] sm:$0xff]
        %v1352 = vld [vmem:[#allocation10 + $0x910] sm:$0xff]
        %v1353 = vld [vmem:[#allocation10 + $0x918] sm:$0xff]
        %v1354 = vld [vmem:[#allocation10 + $0x920] sm:$0xff]
        %v1355 = vld [vmem:[#allocation10 + $0x928] sm:$0xff]
        %v1356 = vld [vmem:[#allocation10 + $0x930] sm:$0xff]
        %v1357 = vld [vmem:[#allocation10 + $0x938] sm:$0xff]
        %v1358 = vld [vmem:[#allocation10 + $0x940] sm:$0xff]
        %v1359 = vld [vmem:[#allocation10 + $0x948] sm:$0xff]
        %v1360 = vld [vmem:[#allocation10 + $0x950] sm:$0xff]
        %v1361 = vld [vmem:[#allocation10 + $0x958] sm:$0xff]
        %v1362 = vld [vmem:[#allocation10 + $0x960] sm:$0xff]
        %v1363 = vld [vmem:[#allocation10 + $0x968] sm:$0xff]
        %v1364 = vld [vmem:[#allocation10 + $0x970] sm:$0xff]
        %v1365 = vld [vmem:[#allocation10 + $0x978] sm:$0xff]
        %v1366 = vld [vmem:[#allocation10 + $0x980] sm:$0xff]
        %v1367 = vld [vmem:[#allocation10 + $0x988] sm:$0xff]
        %v1368 = vld [vmem:[#allocation10 + $0x990] sm:$0xff]
        %v1369 = vld [vmem:[#allocation10 + $0x998] sm:$0xff]
        %v1370 = vld [vmem:[#allocation10 + $0x9a0] sm:$0xff]
        %v1371 = vld [vmem:[#allocation10 + $0x9a8] sm:$0xff]
        %v1372 = vld [vmem:[#allocation10 + $0x9b0] sm:$0xff]
        %v1373 = vld [vmem:[#allocation10 + $0x9b8] sm:$0xff]
        %v1374 = vld [vmem:[#allocation10 + $0x9c0] sm:$0xff]
        %v1375 = vld [vmem:[#allocation10 + $0x9c8] sm:$0xff]
        %v1376 = vld [vmem:[#allocation10 + $0x9d0] sm:$0xff]
        %v1377 = vld [vmem:[#allocation10 + $0x9d8] sm:$0xff]
        %v1378 = vld [vmem:[#allocation10 + $0x9e0] sm:$0xff]
        %v1379 = vld [vmem:[#allocation10 + $0x9e8] sm:$0xff]
        %v1380 = vld [vmem:[#allocation10 + $0x9f0] sm:$0xff]
        %v1381 = vld [vmem:[#allocation10 + $0x9f8] sm:$0xff]
        %v1382 = vld [vmem:[#allocation10 + $0xa00] sm:$0xff]
        %v1383 = vld [vmem:[#allocation10 + $0xa08] sm:$0xff]
        %v1384 = vld [vmem:[#allocation10 + $0xa10] sm:$0xff]
        %v1385 = vld [vmem:[#allocation10 + $0xa18] sm:$0xff]
        %v1386 = vld [vmem:[#allocation10 + $0xa20] sm:$0xff]
        %v1387 = vld [vmem:[#allocation10 + $0xa28] sm:$0xff]
        %v1388 = vld [vmem:[#allocation10 + $0xa30] sm:$0xff]
        %v1389 = vld [vmem:[#allocation10 + $0xa38] sm:$0xff]
        %v1390 = vld [vmem:[#allocation10 + $0xa40] sm:$0xff]
        %v1391 = vld [vmem:[#allocation10 + $0xa48] sm:$0xff]
        %v1392 = vld [vmem:[#allocation10 + $0xa50] sm:$0xff]
        %v1393 = vld [vmem:[#allocation10 + $0xa58] sm:$0xff]
        %v1394 = vld [vmem:[#allocation10 + $0xa60] sm:$0xff]
        %v1395 = vld [vmem:[#allocation10 + $0xa68] sm:$0xff]
        %v1396 = vld [vmem:[#allocation10 + $0xa70] sm:$0xff]
        %v1397 = vld [vmem:[#allocation10 + $0xa78] sm:$0xff]
        %v1398 = vld [vmem:[#allocation10 + $0xa80] sm:$0xff]
        %v1399 = vld [vmem:[#allocation10 + $0xa88] sm:$0xff]
        %v1400 = vld [vmem:[#allocation10 + $0xa90] sm:$0xff]
        %v1401 = vld [vmem:[#allocation10 + $0xa98] sm:$0xff]
        %v1402 = vld [vmem:[#allocation10 + $0xaa0] sm:$0xff]
        %v1403 = vld [vmem:[#allocation10 + $0xaa8] sm:$0xff]
        %v1404 = vld [vmem:[#allocation10 + $0xab0] sm:$0xff]
        %v1405 = vld [vmem:[#allocation10 + $0xab8] sm:$0xff]
        %v1406 = vld [vmem:[#allocation10 + $0xac0] sm:$0xff]
        %v1407 = vld [vmem:[#allocation10 + $0xac8] sm:$0xff]
        %v1408 = vld [vmem:[#allocation10 + $0xad0] sm:$0xff]
        %v1409 = vld [vmem:[#allocation10 + $0xad8] sm:$0xff]
        %v1410 = vld [vmem:[#allocation10 + $0xae0] sm:$0xff]
        %v1411 = vld [vmem:[#allocation10 + $0xae8] sm:$0xff]
        %v1412 = vld [vmem:[#allocation10 + $0xaf0] sm:$0xff]
        %v1413 = vld [vmem:[#allocation10 + $0xaf8] sm:$0xff]
        %v1414 = vld [vmem:[#allocation10 + $0xb00] sm:$0xff]
        %v1415 = vld [vmem:[#allocation10 + $0xb08] sm:$0xff]
        %v1416 = vld [vmem:[#allocation10 + $0xb10] sm:$0xff]
        %v1417 = vld [vmem:[#allocation10 + $0xb18] sm:$0xff]
        %v1418 = vld [vmem:[#allocation10 + $0xb20] sm:$0xff]
        %v1419 = vld [vmem:[#allocation10 + $0xb28] sm:$0xff]
        %v1420 = vld [vmem:[#allocation10 + $0xb30] sm:$0xff]
        %v1421 = vld [vmem:[#allocation10 + $0xb38] sm:$0xff]
        %v1422 = vld [vmem:[#allocation10 + $0xb40] sm:$0xff]
        %v1423 = vld [vmem:[#allocation10 + $0xb48] sm:$0xff]
        %v1424 = vld [vmem:[#allocation10 + $0xb50] sm:$0xff]
        %v1425 = vld [vmem:[#allocation10 + $0xb58] sm:$0xff]
        %v1426 = vld [vmem:[#allocation10 + $0xb60] sm:$0xff]
        %v1427 = vld [vmem:[#allocation10 + $0xb68] sm:$0xff]
        %v1428 = vld [vmem:[#allocation10 + $0xb70] sm:$0xff]
        %v1429 = vld [vmem:[#allocation10 + $0xb78] sm:$0xff]
        %v1430 = vld [vmem:[#allocation10 + $0xb80] sm:$0xff]
        %v1431 = vld [vmem:[#allocation10 + $0xb88] sm:$0xff]
        %v1432 = vld [vmem:[#allocation10 + $0xb90] sm:$0xff]
        %v1433 = vld [vmem:[#allocation10 + $0xb98] sm:$0xff]
        %v1434 = vld [vmem:[#allocation10 + $0xba0] sm:$0xff]
        %v1435 = vld [vmem:[#allocation10 + $0xba8] sm:$0xff]
        %v1436 = vld [vmem:[#allocation10 + $0xbb0] sm:$0xff]
        %v1437 = vld [vmem:[#allocation10 + $0xbb8] sm:$0xff]
        %v1438 = vld [vmem:[#allocation10 + $0xbc0] sm:$0xff]
        %v1439 = vld [vmem:[#allocation10 + $0xbc8] sm:$0xff]
        %v1440 = vld [vmem:[#allocation10 + $0xbd0] sm:$0xff]
        %v1441 = vld [vmem:[#allocation10 + $0xbd8] sm:$0xff]
        %v1442 = vld [vmem:[#allocation10 + $0xbe0] sm:$0xff]
        %v1443 = vld [vmem:[#allocation10 + $0xbe8] sm:$0xff]
        %v1444 = vld [vmem:[#allocation10 + $0xbf0] sm:$0xff]
        %v1445 = vld [vmem:[#allocation10 + $0xbf8] sm:$0xff]
        %v1446 = vld [vmem:[#allocation10 + $0xc00] sm:$0xff]
        %v1447 = vld [vmem:[#allocation10 + $0xc08] sm:$0xff]
        %v1448 = vld [vmem:[#allocation10 + $0xc10] sm:$0xff]
        %v1449 = vld [vmem:[#allocation10 + $0xc18] sm:$0xff]
        %v1450 = vld [vmem:[#allocation10 + $0xc20] sm:$0xff]
        %v1451 = vld [vmem:[#allocation10 + $0xc28] sm:$0xff]
        %v1452 = vld [vmem:[#allocation10 + $0xc30] sm:$0xff]
        %v1453 = vld [vmem:[#allocation10 + $0xc38] sm:$0xff]
        %v1454 = vld [vmem:[#allocation10 + $0xc40] sm:$0xff]
        %v1455 = vld [vmem:[#allocation10 + $0xc48] sm:$0xff]
        %v1456 = vld [vmem:[#allocation10 + $0xc50] sm:$0xff]
        %v1457 = vld [vmem:[#allocation10 + $0xc58] sm:$0xff]
        %v1458 = vld [vmem:[#allocation10 + $0xc60] sm:$0xff]
        %v1459 = vld [vmem:[#allocation10 + $0xc68] sm:$0xff]
        %v1460 = vld [vmem:[#allocation10 + $0xc70] sm:$0xff]
        %v1461 = vld [vmem:[#allocation10 + $0xc78] sm:$0xff]
        %v1462 = vld [vmem:[#allocation10 + $0xc80] sm:$0xff]
        %v1463 = vld [vmem:[#allocation10 + $0xc88] sm:$0xff]
        %v1464 = vld [vmem:[#allocation10 + $0xc90] sm:$0xff]
        %v1465 = vld [vmem:[#allocation10 + $0xc98] sm:$0xff]
        %v1466 = vld [vmem:[#allocation10 + $0xca0] sm:$0xff]
        %v1467 = vld [vmem:[#allocation10 + $0xca8] sm:$0xff]
        %v1468 = vld [vmem:[#allocation10 + $0xcb0] sm:$0xff]
        %v1469 = vld [vmem:[#allocation10 + $0xcb8] sm:$0xff]
        %v1470 = vld [vmem:[#allocation10 + $0xcc0] sm:$0xff]
        %v1471 = vld [vmem:[#allocation10 + $0xcc8] sm:$0xff]
        %v1472 = vld [vmem:[#allocation10 + $0xcd0] sm:$0xff]
        %v1473 = vld [vmem:[#allocation10 + $0xcd8] sm:$0xff]
        %v1474 = vld [vmem:[#allocation10 + $0xce0] sm:$0xff]
        %v1475 = vld [vmem:[#allocation10 + $0xce8] sm:$0xff]
        %v1476 = vld [vmem:[#allocation10 + $0xcf0] sm:$0xff]
        %v1477 = vld [vmem:[#allocation10 + $0xcf8] sm:$0xff]
        %v1478 = vld [vmem:[#allocation10 + $0xd00] sm:$0xff]
        %v1479 = vld [vmem:[#allocation10 + $0xd08] sm:$0xff]
        %v1480 = vld [vmem:[#allocation10 + $0xd10] sm:$0xff]
        %v1481 = vld [vmem:[#allocation10 + $0xd18] sm:$0xff]
        %v1482 = vld [vmem:[#allocation10 + $0xd20] sm:$0xff]
        %v1483 = vld [vmem:[#allocation10 + $0xd28] sm:$0xff]
        %v1484 = vld [vmem:[#allocation10 + $0xd30] sm:$0xff]
        %v1485 = vld [vmem:[#allocation10 + $0xd38] sm:$0xff]
        %v1486 = vld [vmem:[#allocation10 + $0xd40] sm:$0xff]
        %v1487 = vld [vmem:[#allocation10 + $0xd48] sm:$0xff]
        %v1488 = vld [vmem:[#allocation10 + $0xd50] sm:$0xff]
        %v1489 = vld [vmem:[#allocation10 + $0xd58] sm:$0xff]
        %v1490 = vld [vmem:[#allocation10 + $0xd60] sm:$0xff]
        %v1491 = vld [vmem:[#allocation10 + $0xd68] sm:$0xff]
        %v1492 = vld [vmem:[#allocation10 + $0xd70] sm:$0xff]
        %v1493 = vld [vmem:[#allocation10 + $0xd78] sm:$0xff]
        %v1494 = vld [vmem:[#allocation10 + $0xd80] sm:$0xff]
        %v1495 = vld [vmem:[#allocation10 + $0xd88] sm:$0xff]
        %v1496 = vld [vmem:[#allocation10 + $0xd90] sm:$0xff]
        %v1497 = vld [vmem:[#allocation10 + $0xd98] sm:$0xff]
        %v1498 = vld [vmem:[#allocation10 + $0xda0] sm:$0xff]
        %v1499 = vld [vmem:[#allocation10 + $0xda8] sm:$0xff]
        %v1500 = vld [vmem:[#allocation10 + $0xdb0] sm:$0xff]
        %v1501 = vld [vmem:[#allocation10 + $0xdb8] sm:$0xff]
        %v1502 = vld [vmem:[#allocation10 + $0xdc0] sm:$0xff]
        %v1503 = vld [vmem:[#allocation10 + $0xdc8] sm:$0xff]
        %v1504 = vld [vmem:[#allocation10 + $0xdd0] sm:$0xff]
        %v1505 = vld [vmem:[#allocation10 + $0xdd8] sm:$0xff]
        %v1506 = vld [vmem:[#allocation10 + $0xde0] sm:$0xff]
        %v1507 = vld [vmem:[#allocation10 + $0xde8] sm:$0xff]
        %v1508 = vld [vmem:[#allocation10 + $0xdf0] sm:$0xff]
        %v1509 = vld [vmem:[#allocation10 + $0xdf8] sm:$0xff]
        %v1510 = vld [vmem:[#allocation10 + $0xe00] sm:$0xff]
        %v1511 = vld [vmem:[#allocation10 + $0xe08] sm:$0xff]
        %v1512 = vld [vmem:[#allocation10 + $0xe10] sm:$0xff]
        %v1513 = vld [vmem:[#allocation10 + $0xe18] sm:$0xff]
        %v1514 = vld [vmem:[#allocation10 + $0xe20] sm:$0xff]
        %v1515 = vld [vmem:[#allocation10 + $0xe28] sm:$0xff]
        %v1516 = vld [vmem:[#allocation10 + $0xe30] sm:$0xff]
        %v1517 = vld [vmem:[#allocation10 + $0xe38] sm:$0xff]
        %v1518 = vld [vmem:[#allocation10 + $0xe40] sm:$0xff]
        %v1519 = vld [vmem:[#allocation10 + $0xe48] sm:$0xff]
        %v1520 = vld [vmem:[#allocation10 + $0xe50] sm:$0xff]
        %v1521 = vld [vmem:[#allocation10 + $0xe58] sm:$0xff]
        %v1522 = vld [vmem:[#allocation10 + $0xe60] sm:$0xff]
        %v1523 = vld [vmem:[#allocation10 + $0xe68] sm:$0xff]
        %v1524 = vld [vmem:[#allocation10 + $0xe70] sm:$0xff]
        %v1525 = vld [vmem:[#allocation10 + $0xe78] sm:$0xff]
        %v1526 = vld [vmem:[#allocation10 + $0xe80] sm:$0xff]
        %v1527 = vld [vmem:[#allocation10 + $0xe88] sm:$0xff]
        %v1528 = vld [vmem:[#allocation10 + $0xe90] sm:$0xff]
        %v1529 = vld [vmem:[#allocation10 + $0xe98] sm:$0xff]
        %v1530 = vld [vmem:[#allocation10 + $0xea0] sm:$0xff]
        %v1531 = vld [vmem:[#allocation10 + $0xea8] sm:$0xff]
        %v1532 = vld [vmem:[#allocation10 + $0xeb0] sm:$0xff]
        %v1533 = vld [vmem:[#allocation10 + $0xeb8] sm:$0xff]
        %v1534 = vld [vmem:[#allocation10 + $0xec0] sm:$0xff]
        %v1535 = vld [vmem:[#allocation10 + $0xec8] sm:$0xff]
        %v1536 = vld [vmem:[#allocation10 + $0xed0] sm:$0xff]
        %v1537 = vld [vmem:[#allocation10 + $0xed8] sm:$0xff]
        %v1538 = vld [vmem:[#allocation10 + $0xee0] sm:$0xff]
        %v1539 = vld [vmem:[#allocation10 + $0xee8] sm:$0xff]
        %v1540 = vld [vmem:[#allocation10 + $0xef0] sm:$0xff]
        %v1541 = vld [vmem:[#allocation10 + $0xef8] sm:$0xff]
        %v1542 = vld [vmem:[#allocation10 + $0xf00] sm:$0xff]
        %v1543 = vld [vmem:[#allocation10 + $0xf08] sm:$0xff]
        %v1544 = vld [vmem:[#allocation10 + $0xf10] sm:$0xff]
        %v1545 = vld [vmem:[#allocation10 + $0xf18] sm:$0xff]
        %v1546 = vld [vmem:[#allocation10 + $0xf20] sm:$0xff]
        %v1547 = vld [vmem:[#allocation10 + $0xf28] sm:$0xff]
        %v1548 = vld [vmem:[#allocation10 + $0xf30] sm:$0xff]
        %v1549 = vld [vmem:[#allocation10 + $0xf38] sm:$0xff]
        %v1550 = vld [vmem:[#allocation10 + $0xf40] sm:$0xff]
        %v1551 = vld [vmem:[#allocation10 + $0xf48] sm:$0xff]
        %v1552 = vld [vmem:[#allocation10 + $0xf50] sm:$0xff]
        %v1553 = vld [vmem:[#allocation10 + $0xf58] sm:$0xff]
        %v1554 = vld [vmem:[#allocation10 + $0xf60] sm:$0xff]
        %v1555 = vld [vmem:[#allocation10 + $0xf68] sm:$0xff]
        %v1556 = vld [vmem:[#allocation10 + $0xf70] sm:$0xff]
        %v1557 = vld [vmem:[#allocation10 + $0xf78] sm:$0xff]
        %v1558 = vld [vmem:[#allocation10 + $0xf80] sm:$0xff]
        %v1559 = vld [vmem:[#allocation10 + $0xf88] sm:$0xff]
        %v1560 = vld [vmem:[#allocation10 + $0xf90] sm:$0xff]
        %v1561 = vld [vmem:[#allocation10 + $0xf98] sm:$0xff]
        %v1562 = vld [vmem:[#allocation10 + $0xfa0] sm:$0xff]
        %v1563 = vld [vmem:[#allocation10 + $0xfa8] sm:$0xff]
        %v1564 = vld [vmem:[#allocation10 + $0xfb0] sm:$0xff]
        %v1565 = vld [vmem:[#allocation10 + $0xfb8] sm:$0xff]
        %v1566 = vld [vmem:[#allocation10 + $0xfc0] sm:$0xff]
        %v1567 = vld [vmem:[#allocation10 + $0xfc8] sm:$0xff]
        %v1568 = vld [vmem:[#allocation10 + $0xfd0] sm:$0xff]
        %v1569 = vld [vmem:[#allocation10 + $0xfd8] sm:$0xff]
        %v1570 = vld [vmem:[#allocation10 + $0xfe0] sm:$0xff]
        %v1571 = vld [vmem:[#allocation10 + $0xfe8] sm:$0xff]
        %v1572 = vld [vmem:[#allocation10 + $0xff0] sm:$0xff]
        %v1573 = vld [vmem:[#allocation10 + $0xff8] sm:$0xff]
        %v1574 = vld [vmem:[#allocation10 + $0x1000] sm:$0xff]
        %v1575 = vld [vmem:[#allocation10 + $0x1008] sm:$0xff]
        %v1576 = vld [vmem:[#allocation10 + $0x1010] sm:$0xff]
        %v1577 = vld [vmem:[#allocation10 + $0x1018] sm:$0xff]
        %v1578 = vld [vmem:[#allocation10 + $0x1020] sm:$0xff]
        %v1579 = vld [vmem:[#allocation10 + $0x1028] sm:$0xff]
        %v1580 = vld [vmem:[#allocation10 + $0x1030] sm:$0xff]
        %v1581 = vld [vmem:[#allocation10 + $0x1038] sm:$0xff]
        %v1582 = vld [vmem:[#allocation10 + $0x1040] sm:$0xff]
        %v1583 = vld [vmem:[#allocation10 + $0x1048] sm:$0xff]
        %v1584 = vld [vmem:[#allocation10 + $0x1050] sm:$0xff]
        %v1585 = vld [vmem:[#allocation10 + $0x1058] sm:$0xff]
        %v1586 = vld [vmem:[#allocation10 + $0x1060] sm:$0xff]
        %v1587 = vld [vmem:[#allocation10 + $0x1068] sm:$0xff]
        %v1588 = vld [vmem:[#allocation10 + $0x1070] sm:$0xff]
        %v1589 = vld [vmem:[#allocation10 + $0x1078] sm:$0xff]
        %v1590 = vld [vmem:[#allocation10 + $0x1080] sm:$0xff]
        %v1591 = vld [vmem:[#allocation10 + $0x1088] sm:$0xff]
        %v1592 = vld [vmem:[#allocation10 + $0x1090] sm:$0xff]
        %v1593 = vld [vmem:[#allocation10 + $0x1098] sm:$0xff]
        %v1594 = vld [vmem:[#allocation10 + $0x10a0] sm:$0xff]
        %v1595 = vld [vmem:[#allocation10 + $0x10a8] sm:$0xff]
        %v1596 = vld [vmem:[#allocation10 + $0x10b0] sm:$0xff]
        %v1597 = vld [vmem:[#allocation10 + $0x10b8] sm:$0xff]
        %v1598 = vld [vmem:[#allocation10 + $0x10c0] sm:$0xff]
        %v1599 = vld [vmem:[#allocation10 + $0x10c8] sm:$0xff]
        %v1600 = vld [vmem:[#allocation10 + $0x10d0] sm:$0xff]
        %v1601 = vld [vmem:[#allocation10 + $0x10d8] sm:$0xff]
        %v1602 = vld [vmem:[#allocation10 + $0x10e0] sm:$0xff]
        %v1603 = vld [vmem:[#allocation10 + $0x10e8] sm:$0xff]
        %v1604 = vld [vmem:[#allocation10 + $0x10f0] sm:$0xff]
        %v1605 = vld [vmem:[#allocation10 + $0x10f8] sm:$0xff]
        %v1606 = vld [vmem:[#allocation10 + $0x1100] sm:$0xff]
        %v1607 = vld [vmem:[#allocation10 + $0x1108] sm:$0xff]
        %v1608 = vld [vmem:[#allocation10 + $0x1110] sm:$0xff]
        %v1609 = vld [vmem:[#allocation10 + $0x1118] sm:$0xff]
        %v1610 = vld [vmem:[#allocation10 + $0x1120] sm:$0xff]
        %v1611 = vld [vmem:[#allocation10 + $0x1128] sm:$0xff]
        %v1612 = vld [vmem:[#allocation10 + $0x1130] sm:$0xff]
        %v1613 = vld [vmem:[#allocation10 + $0x1138] sm:$0xff]
        %v1614 = vld [vmem:[#allocation10 + $0x1140] sm:$0xff]
        %v1615 = vld [vmem:[#allocation10 + $0x1148] sm:$0xff]
        %v1616 = vld [vmem:[#allocation10 + $0x1150] sm:$0xff]
        %v1617 = vld [vmem:[#allocation10 + $0x1158] sm:$0xff]
        %v1618 = vld [vmem:[#allocation10 + $0x1160] sm:$0xff]
        %v1619 = vld [vmem:[#allocation10 + $0x1168] sm:$0xff]
        %v1620 = vld [vmem:[#allocation10 + $0x1170] sm:$0xff]
        %v1621 = vld [vmem:[#allocation10 + $0x1178] sm:$0xff]
        %v1622 = vld [vmem:[#allocation10 + $0x1180] sm:$0xff]
        %v1623 = vld [vmem:[#allocation10 + $0x1188] sm:$0xff]
        %v1624 = vld [vmem:[#allocation10 + $0x1190] sm:$0xff]
        %v1625 = vld [vmem:[#allocation10 + $0x1198] sm:$0xff]
        %v1626 = vld [vmem:[#allocation10 + $0x11a0] sm:$0xff]
        %v1627 = vld [vmem:[#allocation10 + $0x11a8] sm:$0xff]
        %v1628 = vld [vmem:[#allocation10 + $0x11b0] sm:$0xff]
        %v1629 = vld [vmem:[#allocation10 + $0x11b8] sm:$0xff]
        %v1630 = vld [vmem:[#allocation10 + $0x11c0] sm:$0xff]
        %v1631 = vld [vmem:[#allocation10 + $0x11c8] sm:$0xff]
        %v1632 = vld [vmem:[#allocation10 + $0x11d0] sm:$0xff]
        %v1633 = vld [vmem:[#allocation10 + $0x11d8] sm:$0xff]
        %v1634 = vld [vmem:[#allocation10 + $0x11e0] sm:$0xff]
        %v1635 = vld [vmem:[#allocation10 + $0x11e8] sm:$0xff]
        %v1636 = vld [vmem:[#allocation10 + $0x11f0] sm:$0xff]
        %v1637 = vld [vmem:[#allocation10 + $0x11f8] sm:$0xff]
        %v2214 = vunpack.c.l.b16 %v1062
        %v2215 = vunpack.c.h.b16 %v1062
        %v2216 = vunpack.c.l.b16 %v1063
        %v2217 = vunpack.c.h.b16 %v1063
        %v2218 = vunpack.c.l.b16 %v1064
        %v2219 = vunpack.c.h.b16 %v1064
        %v2220 = vunpack.c.l.b16 %v1065
        %v2221 = vunpack.c.h.b16 %v1065
        %v2222 = vunpack.c.l.b16 %v1066
        %v2223 = vunpack.c.h.b16 %v1066
        %v2224 = vunpack.c.l.b16 %v1067
        %v2225 = vunpack.c.h.b16 %v1067
        %v2226 = vunpack.c.l.b16 %v1068
        %v2227 = vunpack.c.h.b16 %v1068
        %v2228 = vunpack.c.l.b16 %v1069
        %v2229 = vunpack.c.h.b16 %v1069
        %v2230 = vunpack.c.l.b16 %v1070
        %v2231 = vunpack.c.h.b16 %v1070
        %v2232 = vunpack.c.l.b16 %v1071
        %v2233 = vunpack.c.h.b16 %v1071
        %v2234 = vunpack.c.l.b16 %v1072
        %v2235 = vunpack.c.h.b16 %v1072
        %v2236 = vunpack.c.l.b16 %v1073
        %v2237 = vunpack.c.h.b16 %v1073
        %v2238 = vunpack.c.l.b16 %v1074
        %v2239 = vunpack.c.h.b16 %v1074
        %v2240 = vunpack.c.l.b16 %v1075
        %v2241 = vunpack.c.h.b16 %v1075
        %v2242 = vunpack.c.l.b16 %v1076
        %v2243 = vunpack.c.h.b16 %v1076
        %v2244 = vunpack.c.l.b16 %v1077
        %v2245 = vunpack.c.h.b16 %v1077
        %v2246 = vunpack.c.l.b16 %v1078
        %v2247 = vunpack.c.h.b16 %v1078
        %v2248 = vunpack.c.l.b16 %v1079
        %v2249 = vunpack.c.h.b16 %v1079
        %v2250 = vunpack.c.l.b16 %v1080
        %v2251 = vunpack.c.h.b16 %v1080
        %v2252 = vunpack.c.l.b16 %v1081
        %v2253 = vunpack.c.h.b16 %v1081
        %v2254 = vunpack.c.l.b16 %v1082
        %v2255 = vunpack.c.h.b16 %v1082
        %v2256 = vunpack.c.l.b16 %v1083
        %v2257 = vunpack.c.h.b16 %v1083
        %v2258 = vunpack.c.l.b16 %v1084
        %v2259 = vunpack.c.h.b16 %v1084
        %v2260 = vunpack.c.l.b16 %v1085
        %v2261 = vunpack.c.h.b16 %v1085
        %v2262 = vunpack.c.l.b16 %v1086
        %v2263 = vunpack.c.h.b16 %v1086
        %v2264 = vunpack.c.l.b16 %v1087
        %v2265 = vunpack.c.h.b16 %v1087
        %v2266 = vunpack.c.l.b16 %v1088
        %v2267 = vunpack.c.h.b16 %v1088
        %v2268 = vunpack.c.l.b16 %v1089
        %v2269 = vunpack.c.h.b16 %v1089
        %v2270 = vunpack.c.l.b16 %v1090
        %v2271 = vunpack.c.h.b16 %v1090
        %v2272 = vunpack.c.l.b16 %v1091
        %v2273 = vunpack.c.h.b16 %v1091
        %v2274 = vunpack.c.l.b16 %v1092
        %v2275 = vunpack.c.h.b16 %v1092
        %v2276 = vunpack.c.l.b16 %v1093
        %v2277 = vunpack.c.h.b16 %v1093
        %v2278 = vunpack.c.l.b16 %v1094
        %v2279 = vunpack.c.h.b16 %v1094
        %v2280 = vunpack.c.l.b16 %v1095
        %v2281 = vunpack.c.h.b16 %v1095
        %v2282 = vunpack.c.l.b16 %v1096
        %v2283 = vunpack.c.h.b16 %v1096
        %v2284 = vunpack.c.l.b16 %v1097
        %v2285 = vunpack.c.h.b16 %v1097
        %v2286 = vunpack.c.l.b16 %v1098
        %v2287 = vunpack.c.h.b16 %v1098
        %v2288 = vunpack.c.l.b16 %v1099
        %v2289 = vunpack.c.h.b16 %v1099
        %v2290 = vunpack.c.l.b16 %v1100
        %v2291 = vunpack.c.h.b16 %v1100
        %v2292 = vunpack.c.l.b16 %v1101
        %v2293 = vunpack.c.h.b16 %v1101
        %v2294 = vunpack.c.l.b16 %v1102
        %v2295 = vunpack.c.h.b16 %v1102
        %v2296 = vunpack.c.l.b16 %v1103
        %v2297 = vunpack.c.h.b16 %v1103
        %v2298 = vunpack.c.l.b16 %v1104
        %v2299 = vunpack.c.h.b16 %v1104
        %v2300 = vunpack.c.l.b16 %v1105
        %v2301 = vunpack.c.h.b16 %v1105
        %v2302 = vunpack.c.l.b16 %v1106
        %v2303 = vunpack.c.h.b16 %v1106
        %v2304 = vunpack.c.l.b16 %v1107
        %v2305 = vunpack.c.h.b16 %v1107
        %v2306 = vunpack.c.l.b16 %v1108
        %v2307 = vunpack.c.h.b16 %v1108
        %v2308 = vunpack.c.l.b16 %v1109
        %v2309 = vunpack.c.h.b16 %v1109
        %v2310 = vunpack.c.l.b16 %v1110
        %v2311 = vunpack.c.h.b16 %v1110
        %v2312 = vunpack.c.l.b16 %v1111
        %v2313 = vunpack.c.h.b16 %v1111
        %v2314 = vunpack.c.l.b16 %v1112
        %v2315 = vunpack.c.h.b16 %v1112
        %v2316 = vunpack.c.l.b16 %v1113
        %v2317 = vunpack.c.h.b16 %v1113
        %v2318 = vunpack.c.l.b16 %v1114
        %v2319 = vunpack.c.h.b16 %v1114
        %v2320 = vunpack.c.l.b16 %v1115
        %v2321 = vunpack.c.h.b16 %v1115
        %v2322 = vunpack.c.l.b16 %v1116
        %v2323 = vunpack.c.h.b16 %v1116
        %v2324 = vunpack.c.l.b16 %v1117
        %v2325 = vunpack.c.h.b16 %v1117
        %v2326 = vunpack.c.l.b16 %v1118
        %v2327 = vunpack.c.h.b16 %v1118
        %v2328 = vunpack.c.l.b16 %v1119
        %v2329 = vunpack.c.h.b16 %v1119
        %v2330 = vunpack.c.l.b16 %v1120
        %v2331 = vunpack.c.h.b16 %v1120
        %v2332 = vunpack.c.l.b16 %v1121
        %v2333 = vunpack.c.h.b16 %v1121
        %v2334 = vunpack.c.l.b16 %v1122
        %v2335 = vunpack.c.h.b16 %v1122
        %v2336 = vunpack.c.l.b16 %v1123
        %v2337 = vunpack.c.h.b16 %v1123
        %v2338 = vunpack.c.l.b16 %v1124
        %v2339 = vunpack.c.h.b16 %v1124
        %v2340 = vunpack.c.l.b16 %v1125
        %v2341 = vunpack.c.h.b16 %v1125
        %v2342 = vunpack.c.l.b16 %v1126
        %v2343 = vunpack.c.h.b16 %v1126
        %v2344 = vunpack.c.l.b16 %v1127
        %v2345 = vunpack.c.h.b16 %v1127
        %v2346 = vunpack.c.l.b16 %v1128
        %v2347 = vunpack.c.h.b16 %v1128
        %v2348 = vunpack.c.l.b16 %v1129
        %v2349 = vunpack.c.h.b16 %v1129
        %v2350 = vunpack.c.l.b16 %v1130
        %v2351 = vunpack.c.h.b16 %v1130
        %v2352 = vunpack.c.l.b16 %v1131
        %v2353 = vunpack.c.h.b16 %v1131
        %v2354 = vunpack.c.l.b16 %v1132
        %v2355 = vunpack.c.h.b16 %v1132
        %v2356 = vunpack.c.l.b16 %v1133
        %v2357 = vunpack.c.h.b16 %v1133
        %v2358 = vunpack.c.l.b16 %v1134
        %v2359 = vunpack.c.h.b16 %v1134
        %v2360 = vunpack.c.l.b16 %v1135
        %v2361 = vunpack.c.h.b16 %v1135
        %v2362 = vunpack.c.l.b16 %v1136
        %v2363 = vunpack.c.h.b16 %v1136
        %v2364 = vunpack.c.l.b16 %v1137
        %v2365 = vunpack.c.h.b16 %v1137
        %v2366 = vunpack.c.l.b16 %v1138
        %v2367 = vunpack.c.h.b16 %v1138
        %v2368 = vunpack.c.l.b16 %v1139
        %v2369 = vunpack.c.h.b16 %v1139
        %v2370 = vunpack.c.l.b16 %v1140
        %v2371 = vunpack.c.h.b16 %v1140
        %v2372 = vunpack.c.l.b16 %v1141
        %v2373 = vunpack.c.h.b16 %v1141
        %v2374 = vunpack.c.l.b16 %v1142
        %v2375 = vunpack.c.h.b16 %v1142
        %v2376 = vunpack.c.l.b16 %v1143
        %v2377 = vunpack.c.h.b16 %v1143
        %v2378 = vunpack.c.l.b16 %v1144
        %v2379 = vunpack.c.h.b16 %v1144
        %v2380 = vunpack.c.l.b16 %v1145
        %v2381 = vunpack.c.h.b16 %v1145
        %v2382 = vunpack.c.l.b16 %v1146
        %v2383 = vunpack.c.h.b16 %v1146
        %v2384 = vunpack.c.l.b16 %v1147
        %v2385 = vunpack.c.h.b16 %v1147
        %v2386 = vunpack.c.l.b16 %v1148
        %v2387 = vunpack.c.h.b16 %v1148
        %v2388 = vunpack.c.l.b16 %v1149
        %v2389 = vunpack.c.h.b16 %v1149
        %v2390 = vunpack.c.l.b16 %v1150
        %v2391 = vunpack.c.h.b16 %v1150
        %v2392 = vunpack.c.l.b16 %v1151
        %v2393 = vunpack.c.h.b16 %v1151
        %v2394 = vunpack.c.l.b16 %v1152
        %v2395 = vunpack.c.h.b16 %v1152
        %v2396 = vunpack.c.l.b16 %v1153
        %v2397 = vunpack.c.h.b16 %v1153
        %v2398 = vunpack.c.l.b16 %v1154
        %v2399 = vunpack.c.h.b16 %v1154
        %v2400 = vunpack.c.l.b16 %v1155
        %v2401 = vunpack.c.h.b16 %v1155
        %v2402 = vunpack.c.l.b16 %v1156
        %v2403 = vunpack.c.h.b16 %v1156
        %v2404 = vunpack.c.l.b16 %v1157
        %v2405 = vunpack.c.h.b16 %v1157
        %v2406 = vunpack.c.l.b16 %v1158
        %v2407 = vunpack.c.h.b16 %v1158
        %v2408 = vunpack.c.l.b16 %v1159
        %v2409 = vunpack.c.h.b16 %v1159
        %v2410 = vunpack.c.l.b16 %v1160
        %v2411 = vunpack.c.h.b16 %v1160
        %v2412 = vunpack.c.l.b16 %v1161
        %v2413 = vunpack.c.h.b16 %v1161
        %v2414 = vunpack.c.l.b16 %v1162
        %v2415 = vunpack.c.h.b16 %v1162
        %v2416 = vunpack.c.l.b16 %v1163
        %v2417 = vunpack.c.h.b16 %v1163
        %v2418 = vunpack.c.l.b16 %v1164
        %v2419 = vunpack.c.h.b16 %v1164
        %v2420 = vunpack.c.l.b16 %v1165
        %v2421 = vunpack.c.h.b16 %v1165
        %v2422 = vunpack.c.l.b16 %v1166
        %v2423 = vunpack.c.h.b16 %v1166
        %v2424 = vunpack.c.l.b16 %v1167
        %v2425 = vunpack.c.h.b16 %v1167
        %v2426 = vunpack.c.l.b16 %v1168
        %v2427 = vunpack.c.h.b16 %v1168
        %v2428 = vunpack.c.l.b16 %v1169
        %v2429 = vunpack.c.h.b16 %v1169
        %v2430 = vunpack.c.l.b16 %v1170
        %v2431 = vunpack.c.h.b16 %v1170
        %v2432 = vunpack.c.l.b16 %v1171
        %v2433 = vunpack.c.h.b16 %v1171
        %v2434 = vunpack.c.l.b16 %v1172
        %v2435 = vunpack.c.h.b16 %v1172
        %v2436 = vunpack.c.l.b16 %v1173
        %v2437 = vunpack.c.h.b16 %v1173
        %v2438 = vunpack.c.l.b16 %v1174
        %v2439 = vunpack.c.h.b16 %v1174
        %v2440 = vunpack.c.l.b16 %v1175
        %v2441 = vunpack.c.h.b16 %v1175
        %v2442 = vunpack.c.l.b16 %v1176
        %v2443 = vunpack.c.h.b16 %v1176
        %v2444 = vunpack.c.l.b16 %v1177
        %v2445 = vunpack.c.h.b16 %v1177
        %v2446 = vunpack.c.l.b16 %v1178
        %v2447 = vunpack.c.h.b16 %v1178
        %v2448 = vunpack.c.l.b16 %v1179
        %v2449 = vunpack.c.h.b16 %v1179
        %v2450 = vunpack.c.l.b16 %v1180
        %v2451 = vunpack.c.h.b16 %v1180
        %v2452 = vunpack.c.l.b16 %v1181
        %v2453 = vunpack.c.h.b16 %v1181
        %v2454 = vunpack.c.l.b16 %v1182
        %v2455 = vunpack.c.h.b16 %v1182
        %v2456 = vunpack.c.l.b16 %v1183
        %v2457 = vunpack.c.h.b16 %v1183
        %v2458 = vunpack.c.l.b16 %v1184
        %v2459 = vunpack.c.h.b16 %v1184
        %v2460 = vunpack.c.l.b16 %v1185
        %v2461 = vunpack.c.h.b16 %v1185
        %v2462 = vunpack.c.l.b16 %v1186
        %v2463 = vunpack.c.h.b16 %v1186
        %v2464 = vunpack.c.l.b16 %v1187
        %v2465 = vunpack.c.h.b16 %v1187
        %v2466 = vunpack.c.l.b16 %v1188
        %v2467 = vunpack.c.h.b16 %v1188
        %v2468 = vunpack.c.l.b16 %v1189
        %v2469 = vunpack.c.h.b16 %v1189
        %v2470 = vunpack.c.l.b16 %v1190
        %v2471 = vunpack.c.h.b16 %v1190
        %v2472 = vunpack.c.l.b16 %v1191
        %v2473 = vunpack.c.h.b16 %v1191
        %v2474 = vunpack.c.l.b16 %v1192
        %v2475 = vunpack.c.h.b16 %v1192
        %v2476 = vunpack.c.l.b16 %v1193
        %v2477 = vunpack.c.h.b16 %v1193
        %v2478 = vunpack.c.l.b16 %v1194
        %v2479 = vunpack.c.h.b16 %v1194
        %v2480 = vunpack.c.l.b16 %v1195
        %v2481 = vunpack.c.h.b16 %v1195
        %v2482 = vunpack.c.l.b16 %v1196
        %v2483 = vunpack.c.h.b16 %v1196
        %v2484 = vunpack.c.l.b16 %v1197
        %v2485 = vunpack.c.h.b16 %v1197
        %v2486 = vunpack.c.l.b16 %v1198
        %v2487 = vunpack.c.h.b16 %v1198
        %v2488 = vunpack.c.l.b16 %v1199
        %v2489 = vunpack.c.h.b16 %v1199
        %v2490 = vunpack.c.l.b16 %v1200
        %v2491 = vunpack.c.h.b16 %v1200
        %v2492 = vunpack.c.l.b16 %v1201
        %v2493 = vunpack.c.h.b16 %v1201
        %v2494 = vunpack.c.l.b16 %v1202
        %v2495 = vunpack.c.h.b16 %v1202
        %v2496 = vunpack.c.l.b16 %v1203
        %v2497 = vunpack.c.h.b16 %v1203
        %v2498 = vunpack.c.l.b16 %v1204
        %v2499 = vunpack.c.h.b16 %v1204
        %v2500 = vunpack.c.l.b16 %v1205
        %v2501 = vunpack.c.h.b16 %v1205
        %v2502 = vunpack.c.l.b16 %v1206
        %v2503 = vunpack.c.h.b16 %v1206
        %v2504 = vunpack.c.l.b16 %v1207
        %v2505 = vunpack.c.h.b16 %v1207
        %v2506 = vunpack.c.l.b16 %v1208
        %v2507 = vunpack.c.h.b16 %v1208
        %v2508 = vunpack.c.l.b16 %v1209
        %v2509 = vunpack.c.h.b16 %v1209
        %v2510 = vunpack.c.l.b16 %v1210
        %v2511 = vunpack.c.h.b16 %v1210
        %v2512 = vunpack.c.l.b16 %v1211
        %v2513 = vunpack.c.h.b16 %v1211
        %v2514 = vunpack.c.l.b16 %v1212
        %v2515 = vunpack.c.h.b16 %v1212
        %v2516 = vunpack.c.l.b16 %v1213
        %v2517 = vunpack.c.h.b16 %v1213
        %v2518 = vunpack.c.l.b16 %v1214
        %v2519 = vunpack.c.h.b16 %v1214
        %v2520 = vunpack.c.l.b16 %v1215
        %v2521 = vunpack.c.h.b16 %v1215
        %v2522 = vunpack.c.l.b16 %v1216
        %v2523 = vunpack.c.h.b16 %v1216
        %v2524 = vunpack.c.l.b16 %v1217
        %v2525 = vunpack.c.h.b16 %v1217
        %v2526 = vunpack.c.l.b16 %v1218
        %v2527 = vunpack.c.h.b16 %v1218
        %v2528 = vunpack.c.l.b16 %v1219
        %v2529 = vunpack.c.h.b16 %v1219
        %v2530 = vunpack.c.l.b16 %v1220
        %v2531 = vunpack.c.h.b16 %v1220
        %v2532 = vunpack.c.l.b16 %v1221
        %v2533 = vunpack.c.h.b16 %v1221
        %v2534 = vunpack.c.l.b16 %v1222
        %v2535 = vunpack.c.h.b16 %v1222
        %v2536 = vunpack.c.l.b16 %v1223
        %v2537 = vunpack.c.h.b16 %v1223
        %v2538 = vunpack.c.l.b16 %v1224
        %v2539 = vunpack.c.h.b16 %v1224
        %v2540 = vunpack.c.l.b16 %v1225
        %v2541 = vunpack.c.h.b16 %v1225
        %v2542 = vunpack.c.l.b16 %v1226
        %v2543 = vunpack.c.h.b16 %v1226
        %v2544 = vunpack.c.l.b16 %v1227
        %v2545 = vunpack.c.h.b16 %v1227
        %v2546 = vunpack.c.l.b16 %v1228
        %v2547 = vunpack.c.h.b16 %v1228
        %v2548 = vunpack.c.l.b16 %v1229
        %v2549 = vunpack.c.h.b16 %v1229
        %v2550 = vunpack.c.l.b16 %v1230
        %v2551 = vunpack.c.h.b16 %v1230
        %v2552 = vunpack.c.l.b16 %v1231
        %v2553 = vunpack.c.h.b16 %v1231
        %v2554 = vunpack.c.l.b16 %v1232
        %v2555 = vunpack.c.h.b16 %v1232
        %v2556 = vunpack.c.l.b16 %v1233
        %v2557 = vunpack.c.h.b16 %v1233
        %v2558 = vunpack.c.l.b16 %v1234
        %v2559 = vunpack.c.h.b16 %v1234
        %v2560 = vunpack.c.l.b16 %v1235
        %v2561 = vunpack.c.h.b16 %v1235
        %v2562 = vunpack.c.l.b16 %v1236
        %v2563 = vunpack.c.h.b16 %v1236
        %v2564 = vunpack.c.l.b16 %v1237
        %v2565 = vunpack.c.h.b16 %v1237
        %v2566 = vunpack.c.l.b16 %v1238
        %v2567 = vunpack.c.h.b16 %v1238
        %v2568 = vunpack.c.l.b16 %v1239
        %v2569 = vunpack.c.h.b16 %v1239
        %v2570 = vunpack.c.l.b16 %v1240
        %v2571 = vunpack.c.h.b16 %v1240
        %v2572 = vunpack.c.l.b16 %v1241
        %v2573 = vunpack.c.h.b16 %v1241
        %v2574 = vunpack.c.l.b16 %v1242
        %v2575 = vunpack.c.h.b16 %v1242
        %v2576 = vunpack.c.l.b16 %v1243
        %v2577 = vunpack.c.h.b16 %v1243
        %v2578 = vunpack.c.l.b16 %v1244
        %v2579 = vunpack.c.h.b16 %v1244
        %v2580 = vunpack.c.l.b16 %v1245
        %v2581 = vunpack.c.h.b16 %v1245
        %v2582 = vunpack.c.l.b16 %v1246
        %v2583 = vunpack.c.h.b16 %v1246
        %v2584 = vunpack.c.l.b16 %v1247
        %v2585 = vunpack.c.h.b16 %v1247
        %v2586 = vunpack.c.l.b16 %v1248
        %v2587 = vunpack.c.h.b16 %v1248
        %v2588 = vunpack.c.l.b16 %v1249
        %v2589 = vunpack.c.h.b16 %v1249
        %v2590 = vunpack.c.l.b16 %v1250
        %v2591 = vunpack.c.h.b16 %v1250
        %v2592 = vunpack.c.l.b16 %v1251
        %v2593 = vunpack.c.h.b16 %v1251
        %v2594 = vunpack.c.l.b16 %v1252
        %v2595 = vunpack.c.h.b16 %v1252
        %v2596 = vunpack.c.l.b16 %v1253
        %v2597 = vunpack.c.h.b16 %v1253
        %v2598 = vunpack.c.l.b16 %v1254
        %v2599 = vunpack.c.h.b16 %v1254
        %v2600 = vunpack.c.l.b16 %v1255
        %v2601 = vunpack.c.h.b16 %v1255
        %v2602 = vunpack.c.l.b16 %v1256
        %v2603 = vunpack.c.h.b16 %v1256
        %v2604 = vunpack.c.l.b16 %v1257
        %v2605 = vunpack.c.h.b16 %v1257
        %v2606 = vunpack.c.l.b16 %v1258
        %v2607 = vunpack.c.h.b16 %v1258
        %v2608 = vunpack.c.l.b16 %v1259
        %v2609 = vunpack.c.h.b16 %v1259
        %v2610 = vunpack.c.l.b16 %v1260
        %v2611 = vunpack.c.h.b16 %v1260
        %v2612 = vunpack.c.l.b16 %v1261
        %v2613 = vunpack.c.h.b16 %v1261
        %v2614 = vunpack.c.l.b16 %v1262
        %v2615 = vunpack.c.h.b16 %v1262
        %v2616 = vunpack.c.l.b16 %v1263
        %v2617 = vunpack.c.h.b16 %v1263
        %v2618 = vunpack.c.l.b16 %v1264
        %v2619 = vunpack.c.h.b16 %v1264
        %v2620 = vunpack.c.l.b16 %v1265
        %v2621 = vunpack.c.h.b16 %v1265
        %v2622 = vunpack.c.l.b16 %v1266
        %v2623 = vunpack.c.h.b16 %v1266
        %v2624 = vunpack.c.l.b16 %v1267
        %v2625 = vunpack.c.h.b16 %v1267
        %v2626 = vunpack.c.l.b16 %v1268
        %v2627 = vunpack.c.h.b16 %v1268
        %v2628 = vunpack.c.l.b16 %v1269
        %v2629 = vunpack.c.h.b16 %v1269
        %v2630 = vunpack.c.l.b16 %v1270
        %v2631 = vunpack.c.h.b16 %v1270
        %v2632 = vunpack.c.l.b16 %v1271
        %v2633 = vunpack.c.h.b16 %v1271
        %v2634 = vunpack.c.l.b16 %v1272
        %v2635 = vunpack.c.h.b16 %v1272
        %v2636 = vunpack.c.l.b16 %v1273
        %v2637 = vunpack.c.h.b16 %v1273
        %v2638 = vunpack.c.l.b16 %v1274
        %v2639 = vunpack.c.h.b16 %v1274
        %v2640 = vunpack.c.l.b16 %v1275
        %v2641 = vunpack.c.h.b16 %v1275
        %v2642 = vunpack.c.l.b16 %v1276
        %v2643 = vunpack.c.h.b16 %v1276
        %v2644 = vunpack.c.l.b16 %v1277
        %v2645 = vunpack.c.h.b16 %v1277
        %v2646 = vunpack.c.l.b16 %v1278
        %v2647 = vunpack.c.h.b16 %v1278
        %v2648 = vunpack.c.l.b16 %v1279
        %v2649 = vunpack.c.h.b16 %v1279
        %v2650 = vunpack.c.l.b16 %v1280
        %v2651 = vunpack.c.h.b16 %v1280
        %v2652 = vunpack.c.l.b16 %v1281
        %v2653 = vunpack.c.h.b16 %v1281
        %v2654 = vunpack.c.l.b16 %v1282
        %v2655 = vunpack.c.h.b16 %v1282
        %v2656 = vunpack.c.l.b16 %v1283
        %v2657 = vunpack.c.h.b16 %v1283
        %v2658 = vunpack.c.l.b16 %v1284
        %v2659 = vunpack.c.h.b16 %v1284
        %v2660 = vunpack.c.l.b16 %v1285
        %v2661 = vunpack.c.h.b16 %v1285
        %v2662 = vunpack.c.l.b16 %v1286
        %v2663 = vunpack.c.h.b16 %v1286
        %v2664 = vunpack.c.l.b16 %v1287
        %v2665 = vunpack.c.h.b16 %v1287
        %v2666 = vunpack.c.l.b16 %v1288
        %v2667 = vunpack.c.h.b16 %v1288
        %v2668 = vunpack.c.l.b16 %v1289
        %v2669 = vunpack.c.h.b16 %v1289
        %v2670 = vunpack.c.l.b16 %v1290
        %v2671 = vunpack.c.h.b16 %v1290
        %v2672 = vunpack.c.l.b16 %v1291
        %v2673 = vunpack.c.h.b16 %v1291
        %v2674 = vunpack.c.l.b16 %v1292
        %v2675 = vunpack.c.h.b16 %v1292
        %v2676 = vunpack.c.l.b16 %v1293
        %v2677 = vunpack.c.h.b16 %v1293
        %v2678 = vunpack.c.l.b16 %v1294
        %v2679 = vunpack.c.h.b16 %v1294
        %v2680 = vunpack.c.l.b16 %v1295
        %v2681 = vunpack.c.h.b16 %v1295
        %v2682 = vunpack.c.l.b16 %v1296
        %v2683 = vunpack.c.h.b16 %v1296
        %v2684 = vunpack.c.l.b16 %v1297
        %v2685 = vunpack.c.h.b16 %v1297
        %v2686 = vunpack.c.l.b16 %v1298
        %v2687 = vunpack.c.h.b16 %v1298
        %v2688 = vunpack.c.l.b16 %v1299
        %v2689 = vunpack.c.h.b16 %v1299
        %v2690 = vunpack.c.l.b16 %v1300
        %v2691 = vunpack.c.h.b16 %v1300
        %v2692 = vunpack.c.l.b16 %v1301
        %v2693 = vunpack.c.h.b16 %v1301
        %v2694 = vunpack.c.l.b16 %v1302
        %v2695 = vunpack.c.h.b16 %v1302
        %v2696 = vunpack.c.l.b16 %v1303
        %v2697 = vunpack.c.h.b16 %v1303
        %v2698 = vunpack.c.l.b16 %v1304
        %v2699 = vunpack.c.h.b16 %v1304
        %v2700 = vunpack.c.l.b16 %v1305
        %v2701 = vunpack.c.h.b16 %v1305
        %v2702 = vunpack.c.l.b16 %v1306
        %v2703 = vunpack.c.h.b16 %v1306
        %v2704 = vunpack.c.l.b16 %v1307
        %v2705 = vunpack.c.h.b16 %v1307
        %v2706 = vunpack.c.l.b16 %v1308
        %v2707 = vunpack.c.h.b16 %v1308
        %v2708 = vunpack.c.l.b16 %v1309
        %v2709 = vunpack.c.h.b16 %v1309
        %v2710 = vunpack.c.l.b16 %v1310
        %v2711 = vunpack.c.h.b16 %v1310
        %v2712 = vunpack.c.l.b16 %v1311
        %v2713 = vunpack.c.h.b16 %v1311
        %v2714 = vunpack.c.l.b16 %v1312
        %v2715 = vunpack.c.h.b16 %v1312
        %v2716 = vunpack.c.l.b16 %v1313
        %v2717 = vunpack.c.h.b16 %v1313
        %v2718 = vunpack.c.l.b16 %v1314
        %v2719 = vunpack.c.h.b16 %v1314
        %v2720 = vunpack.c.l.b16 %v1315
        %v2721 = vunpack.c.h.b16 %v1315
        %v2722 = vunpack.c.l.b16 %v1316
        %v2723 = vunpack.c.h.b16 %v1316
        %v2724 = vunpack.c.l.b16 %v1317
        %v2725 = vunpack.c.h.b16 %v1317
        %v2726 = vunpack.c.l.b16 %v1318
        %v2727 = vunpack.c.h.b16 %v1318
        %v2728 = vunpack.c.l.b16 %v1319
        %v2729 = vunpack.c.h.b16 %v1319
        %v2730 = vunpack.c.l.b16 %v1320
        %v2731 = vunpack.c.h.b16 %v1320
        %v2732 = vunpack.c.l.b16 %v1321
        %v2733 = vunpack.c.h.b16 %v1321
        %v2734 = vunpack.c.l.b16 %v1322
        %v2735 = vunpack.c.h.b16 %v1322
        %v2736 = vunpack.c.l.b16 %v1323
        %v2737 = vunpack.c.h.b16 %v1323
        %v2738 = vunpack.c.l.b16 %v1324
        %v2739 = vunpack.c.h.b16 %v1324
        %v2740 = vunpack.c.l.b16 %v1325
        %v2741 = vunpack.c.h.b16 %v1325
        %v2742 = vunpack.c.l.b16 %v1326
        %v2743 = vunpack.c.h.b16 %v1326
        %v2744 = vunpack.c.l.b16 %v1327
        %v2745 = vunpack.c.h.b16 %v1327
        %v2746 = vunpack.c.l.b16 %v1328
        %v2747 = vunpack.c.h.b16 %v1328
        %v2748 = vunpack.c.l.b16 %v1329
        %v2749 = vunpack.c.h.b16 %v1329
        %v2750 = vunpack.c.l.b16 %v1330
        %v2751 = vunpack.c.h.b16 %v1330
        %v2752 = vunpack.c.l.b16 %v1331
        %v2753 = vunpack.c.h.b16 %v1331
        %v2754 = vunpack.c.l.b16 %v1332
        %v2755 = vunpack.c.h.b16 %v1332
        %v2756 = vunpack.c.l.b16 %v1333
        %v2757 = vunpack.c.h.b16 %v1333
        %v2758 = vunpack.c.l.b16 %v1334
        %v2759 = vunpack.c.h.b16 %v1334
        %v2760 = vunpack.c.l.b16 %v1335
        %v2761 = vunpack.c.h.b16 %v1335
        %v2762 = vunpack.c.l.b16 %v1336
        %v2763 = vunpack.c.h.b16 %v1336
        %v2764 = vunpack.c.l.b16 %v1337
        %v2765 = vunpack.c.h.b16 %v1337
        %v2766 = vunpack.c.l.b16 %v1338
        %v2767 = vunpack.c.h.b16 %v1338
        %v2768 = vunpack.c.l.b16 %v1339
        %v2769 = vunpack.c.h.b16 %v1339
        %v2770 = vunpack.c.l.b16 %v1340
        %v2771 = vunpack.c.h.b16 %v1340
        %v2772 = vunpack.c.l.b16 %v1341
        %v2773 = vunpack.c.h.b16 %v1341
        %v2774 = vunpack.c.l.b16 %v1342
        %v2775 = vunpack.c.h.b16 %v1342
        %v2776 = vunpack.c.l.b16 %v1343
        %v2777 = vunpack.c.h.b16 %v1343
        %v2778 = vunpack.c.l.b16 %v1344
        %v2779 = vunpack.c.h.b16 %v1344
        %v2780 = vunpack.c.l.b16 %v1345
        %v2781 = vunpack.c.h.b16 %v1345
        %v2782 = vunpack.c.l.b16 %v1346
        %v2783 = vunpack.c.h.b16 %v1346
        %v2784 = vunpack.c.l.b16 %v1347
        %v2785 = vunpack.c.h.b16 %v1347
        %v2786 = vunpack.c.l.b16 %v1348
        %v2787 = vunpack.c.h.b16 %v1348
        %v2788 = vunpack.c.l.b16 %v1349
        %v2789 = vunpack.c.h.b16 %v1349
        %v2790 = vunpack.c.l.b16 %v1350
        %v2791 = vunpack.c.h.b16 %v1350
        %v2792 = vunpack.c.l.b16 %v1351
        %v2793 = vunpack.c.h.b16 %v1351
        %v2794 = vunpack.c.l.b16 %v1352
        %v2795 = vunpack.c.h.b16 %v1352
        %v2796 = vunpack.c.l.b16 %v1353
        %v2797 = vunpack.c.h.b16 %v1353
        %v2798 = vunpack.c.l.b16 %v1354
        %v2799 = vunpack.c.h.b16 %v1354
        %v2800 = vunpack.c.l.b16 %v1355
        %v2801 = vunpack.c.h.b16 %v1355
        %v2802 = vunpack.c.l.b16 %v1356
        %v2803 = vunpack.c.h.b16 %v1356
        %v2804 = vunpack.c.l.b16 %v1357
        %v2805 = vunpack.c.h.b16 %v1357
        %v2806 = vunpack.c.l.b16 %v1358
        %v2807 = vunpack.c.h.b16 %v1358
        %v2808 = vunpack.c.l.b16 %v1359
        %v2809 = vunpack.c.h.b16 %v1359
        %v2810 = vunpack.c.l.b16 %v1360
        %v2811 = vunpack.c.h.b16 %v1360
        %v2812 = vunpack.c.l.b16 %v1361
        %v2813 = vunpack.c.h.b16 %v1361
        %v2814 = vunpack.c.l.b16 %v1362
        %v2815 = vunpack.c.h.b16 %v1362
        %v2816 = vunpack.c.l.b16 %v1363
        %v2817 = vunpack.c.h.b16 %v1363
        %v2818 = vunpack.c.l.b16 %v1364
        %v2819 = vunpack.c.h.b16 %v1364
        %v2820 = vunpack.c.l.b16 %v1365
        %v2821 = vunpack.c.h.b16 %v1365
        %v2822 = vunpack.c.l.b16 %v1366
        %v2823 = vunpack.c.h.b16 %v1366
        %v2824 = vunpack.c.l.b16 %v1367
        %v2825 = vunpack.c.h.b16 %v1367
        %v2826 = vunpack.c.l.b16 %v1368
        %v2827 = vunpack.c.h.b16 %v1368
        %v2828 = vunpack.c.l.b16 %v1369
        %v2829 = vunpack.c.h.b16 %v1369
        %v2830 = vunpack.c.l.b16 %v1370
        %v2831 = vunpack.c.h.b16 %v1370
        %v2832 = vunpack.c.l.b16 %v1371
        %v2833 = vunpack.c.h.b16 %v1371
        %v2834 = vunpack.c.l.b16 %v1372
        %v2835 = vunpack.c.h.b16 %v1372
        %v2836 = vunpack.c.l.b16 %v1373
        %v2837 = vunpack.c.h.b16 %v1373
        %v2838 = vunpack.c.l.b16 %v1374
        %v2839 = vunpack.c.h.b16 %v1374
        %v2840 = vunpack.c.l.b16 %v1375
        %v2841 = vunpack.c.h.b16 %v1375
        %v2842 = vunpack.c.l.b16 %v1376
        %v2843 = vunpack.c.h.b16 %v1376
        %v2844 = vunpack.c.l.b16 %v1377
        %v2845 = vunpack.c.h.b16 %v1377
        %v2846 = vunpack.c.l.b16 %v1378
        %v2847 = vunpack.c.h.b16 %v1378
        %v2848 = vunpack.c.l.b16 %v1379
        %v2849 = vunpack.c.h.b16 %v1379
        %v2850 = vunpack.c.l.b16 %v1380
        %v2851 = vunpack.c.h.b16 %v1380
        %v2852 = vunpack.c.l.b16 %v1381
        %v2853 = vunpack.c.h.b16 %v1381
        %v2854 = vunpack.c.l.b16 %v1382
        %v2855 = vunpack.c.h.b16 %v1382
        %v2856 = vunpack.c.l.b16 %v1383
        %v2857 = vunpack.c.h.b16 %v1383
        %v2858 = vunpack.c.l.b16 %v1384
        %v2859 = vunpack.c.h.b16 %v1384
        %v2860 = vunpack.c.l.b16 %v1385
        %v2861 = vunpack.c.h.b16 %v1385
        %v2862 = vunpack.c.l.b16 %v1386
        %v2863 = vunpack.c.h.b16 %v1386
        %v2864 = vunpack.c.l.b16 %v1387
        %v2865 = vunpack.c.h.b16 %v1387
        %v2866 = vunpack.c.l.b16 %v1388
        %v2867 = vunpack.c.h.b16 %v1388
        %v2868 = vunpack.c.l.b16 %v1389
        %v2869 = vunpack.c.h.b16 %v1389
        %v2870 = vunpack.c.l.b16 %v1390
        %v2871 = vunpack.c.h.b16 %v1390
        %v2872 = vunpack.c.l.b16 %v1391
        %v2873 = vunpack.c.h.b16 %v1391
        %v2874 = vunpack.c.l.b16 %v1392
        %v2875 = vunpack.c.h.b16 %v1392
        %v2876 = vunpack.c.l.b16 %v1393
        %v2877 = vunpack.c.h.b16 %v1393
        %v2878 = vunpack.c.l.b16 %v1394
        %v2879 = vunpack.c.h.b16 %v1394
        %v2880 = vunpack.c.l.b16 %v1395
        %v2881 = vunpack.c.h.b16 %v1395
        %v2882 = vunpack.c.l.b16 %v1396
        %v2883 = vunpack.c.h.b16 %v1396
        %v2884 = vunpack.c.l.b16 %v1397
        %v2885 = vunpack.c.h.b16 %v1397
        %v2886 = vunpack.c.l.b16 %v1398
        %v2887 = vunpack.c.h.b16 %v1398
        %v2888 = vunpack.c.l.b16 %v1399
        %v2889 = vunpack.c.h.b16 %v1399
        %v2890 = vunpack.c.l.b16 %v1400
        %v2891 = vunpack.c.h.b16 %v1400
        %v2892 = vunpack.c.l.b16 %v1401
        %v2893 = vunpack.c.h.b16 %v1401
        %v2894 = vunpack.c.l.b16 %v1402
        %v2895 = vunpack.c.h.b16 %v1402
        %v2896 = vunpack.c.l.b16 %v1403
        %v2897 = vunpack.c.h.b16 %v1403
        %v2898 = vunpack.c.l.b16 %v1404
        %v2899 = vunpack.c.h.b16 %v1404
        %v2900 = vunpack.c.l.b16 %v1405
        %v2901 = vunpack.c.h.b16 %v1405
        %v2902 = vunpack.c.l.b16 %v1406
        %v2903 = vunpack.c.h.b16 %v1406
        %v2904 = vunpack.c.l.b16 %v1407
        %v2905 = vunpack.c.h.b16 %v1407
        %v2906 = vunpack.c.l.b16 %v1408
        %v2907 = vunpack.c.h.b16 %v1408
        %v2908 = vunpack.c.l.b16 %v1409
        %v2909 = vunpack.c.h.b16 %v1409
        %v2910 = vunpack.c.l.b16 %v1410
        %v2911 = vunpack.c.h.b16 %v1410
        %v2912 = vunpack.c.l.b16 %v1411
        %v2913 = vunpack.c.h.b16 %v1411
        %v2914 = vunpack.c.l.b16 %v1412
        %v2915 = vunpack.c.h.b16 %v1412
        %v2916 = vunpack.c.l.b16 %v1413
        %v2917 = vunpack.c.h.b16 %v1413
        %v2918 = vunpack.c.l.b16 %v1414
        %v2919 = vunpack.c.h.b16 %v1414
        %v2920 = vunpack.c.l.b16 %v1415
        %v2921 = vunpack.c.h.b16 %v1415
        %v2922 = vunpack.c.l.b16 %v1416
        %v2923 = vunpack.c.h.b16 %v1416
        %v2924 = vunpack.c.l.b16 %v1417
        %v2925 = vunpack.c.h.b16 %v1417
        %v2926 = vunpack.c.l.b16 %v1418
        %v2927 = vunpack.c.h.b16 %v1418
        %v2928 = vunpack.c.l.b16 %v1419
        %v2929 = vunpack.c.h.b16 %v1419
        %v2930 = vunpack.c.l.b16 %v1420
        %v2931 = vunpack.c.h.b16 %v1420
        %v2932 = vunpack.c.l.b16 %v1421
        %v2933 = vunpack.c.h.b16 %v1421
        %v2934 = vunpack.c.l.b16 %v1422
        %v2935 = vunpack.c.h.b16 %v1422
        %v2936 = vunpack.c.l.b16 %v1423
        %v2937 = vunpack.c.h.b16 %v1423
        %v2938 = vunpack.c.l.b16 %v1424
        %v2939 = vunpack.c.h.b16 %v1424
        %v2940 = vunpack.c.l.b16 %v1425
        %v2941 = vunpack.c.h.b16 %v1425
        %v2942 = vunpack.c.l.b16 %v1426
        %v2943 = vunpack.c.h.b16 %v1426
        %v2944 = vunpack.c.l.b16 %v1427
        %v2945 = vunpack.c.h.b16 %v1427
        %v2946 = vunpack.c.l.b16 %v1428
        %v2947 = vunpack.c.h.b16 %v1428
        %v2948 = vunpack.c.l.b16 %v1429
        %v2949 = vunpack.c.h.b16 %v1429
        %v2950 = vunpack.c.l.b16 %v1430
        %v2951 = vunpack.c.h.b16 %v1430
        %v2952 = vunpack.c.l.b16 %v1431
        %v2953 = vunpack.c.h.b16 %v1431
        %v2954 = vunpack.c.l.b16 %v1432
        %v2955 = vunpack.c.h.b16 %v1432
        %v2956 = vunpack.c.l.b16 %v1433
        %v2957 = vunpack.c.h.b16 %v1433
        %v2958 = vunpack.c.l.b16 %v1434
        %v2959 = vunpack.c.h.b16 %v1434
        %v2960 = vunpack.c.l.b16 %v1435
        %v2961 = vunpack.c.h.b16 %v1435
        %v2962 = vunpack.c.l.b16 %v1436
        %v2963 = vunpack.c.h.b16 %v1436
        %v2964 = vunpack.c.l.b16 %v1437
        %v2965 = vunpack.c.h.b16 %v1437
        %v2966 = vunpack.c.l.b16 %v1438
        %v2967 = vunpack.c.h.b16 %v1438
        %v2968 = vunpack.c.l.b16 %v1439
        %v2969 = vunpack.c.h.b16 %v1439
        %v2970 = vunpack.c.l.b16 %v1440
        %v2971 = vunpack.c.h.b16 %v1440
        %v2972 = vunpack.c.l.b16 %v1441
        %v2973 = vunpack.c.h.b16 %v1441
        %v2974 = vunpack.c.l.b16 %v1442
        %v2975 = vunpack.c.h.b16 %v1442
        %v2976 = vunpack.c.l.b16 %v1443
        %v2977 = vunpack.c.h.b16 %v1443
        %v2978 = vunpack.c.l.b16 %v1444
        %v2979 = vunpack.c.h.b16 %v1444
        %v2980 = vunpack.c.l.b16 %v1445
        %v2981 = vunpack.c.h.b16 %v1445
        %v2982 = vunpack.c.l.b16 %v1446
        %v2983 = vunpack.c.h.b16 %v1446
        %v2984 = vunpack.c.l.b16 %v1447
        %v2985 = vunpack.c.h.b16 %v1447
        %v2986 = vunpack.c.l.b16 %v1448
        %v2987 = vunpack.c.h.b16 %v1448
        %v2988 = vunpack.c.l.b16 %v1449
        %v2989 = vunpack.c.h.b16 %v1449
        %v2990 = vunpack.c.l.b16 %v1450
        %v2991 = vunpack.c.h.b16 %v1450
        %v2992 = vunpack.c.l.b16 %v1451
        %v2993 = vunpack.c.h.b16 %v1451
        %v2994 = vunpack.c.l.b16 %v1452
        %v2995 = vunpack.c.h.b16 %v1452
        %v2996 = vunpack.c.l.b16 %v1453
        %v2997 = vunpack.c.h.b16 %v1453
        %v2998 = vunpack.c.l.b16 %v1454
        %v2999 = vunpack.c.h.b16 %v1454
        %v3000 = vunpack.c.l.b16 %v1455
        %v3001 = vunpack.c.h.b16 %v1455
        %v3002 = vunpack.c.l.b16 %v1456
        %v3003 = vunpack.c.h.b16 %v1456
        %v3004 = vunpack.c.l.b16 %v1457
        %v3005 = vunpack.c.h.b16 %v1457
        %v3006 = vunpack.c.l.b16 %v1458
        %v3007 = vunpack.c.h.b16 %v1458
        %v3008 = vunpack.c.l.b16 %v1459
        %v3009 = vunpack.c.h.b16 %v1459
        %v3010 = vunpack.c.l.b16 %v1460
        %v3011 = vunpack.c.h.b16 %v1460
        %v3012 = vunpack.c.l.b16 %v1461
        %v3013 = vunpack.c.h.b16 %v1461
        %v3014 = vunpack.c.l.b16 %v1462
        %v3015 = vunpack.c.h.b16 %v1462
        %v3016 = vunpack.c.l.b16 %v1463
        %v3017 = vunpack.c.h.b16 %v1463
        %v3018 = vunpack.c.l.b16 %v1464
        %v3019 = vunpack.c.h.b16 %v1464
        %v3020 = vunpack.c.l.b16 %v1465
        %v3021 = vunpack.c.h.b16 %v1465
        %v3022 = vunpack.c.l.b16 %v1466
        %v3023 = vunpack.c.h.b16 %v1466
        %v3024 = vunpack.c.l.b16 %v1467
        %v3025 = vunpack.c.h.b16 %v1467
        %v3026 = vunpack.c.l.b16 %v1468
        %v3027 = vunpack.c.h.b16 %v1468
        %v3028 = vunpack.c.l.b16 %v1469
        %v3029 = vunpack.c.h.b16 %v1469
        %v3030 = vunpack.c.l.b16 %v1470
        %v3031 = vunpack.c.h.b16 %v1470
        %v3032 = vunpack.c.l.b16 %v1471
        %v3033 = vunpack.c.h.b16 %v1471
        %v3034 = vunpack.c.l.b16 %v1472
        %v3035 = vunpack.c.h.b16 %v1472
        %v3036 = vunpack.c.l.b16 %v1473
        %v3037 = vunpack.c.h.b16 %v1473
        %v3038 = vunpack.c.l.b16 %v1474
        %v3039 = vunpack.c.h.b16 %v1474
        %v3040 = vunpack.c.l.b16 %v1475
        %v3041 = vunpack.c.h.b16 %v1475
        %v3042 = vunpack.c.l.b16 %v1476
        %v3043 = vunpack.c.h.b16 %v1476
        %v3044 = vunpack.c.l.b16 %v1477
        %v3045 = vunpack.c.h.b16 %v1477
        %v3046 = vunpack.c.l.b16 %v1478
        %v3047 = vunpack.c.h.b16 %v1478
        %v3048 = vunpack.c.l.b16 %v1479
        %v3049 = vunpack.c.h.b16 %v1479
        %v3050 = vunpack.c.l.b16 %v1480
        %v3051 = vunpack.c.h.b16 %v1480
        %v3052 = vunpack.c.l.b16 %v1481
        %v3053 = vunpack.c.h.b16 %v1481
        %v3054 = vunpack.c.l.b16 %v1482
        %v3055 = vunpack.c.h.b16 %v1482
        %v3056 = vunpack.c.l.b16 %v1483
        %v3057 = vunpack.c.h.b16 %v1483
        %v3058 = vunpack.c.l.b16 %v1484
        %v3059 = vunpack.c.h.b16 %v1484
        %v3060 = vunpack.c.l.b16 %v1485
        %v3061 = vunpack.c.h.b16 %v1485
        %v3062 = vunpack.c.l.b16 %v1486
        %v3063 = vunpack.c.h.b16 %v1486
        %v3064 = vunpack.c.l.b16 %v1487
        %v3065 = vunpack.c.h.b16 %v1487
        %v3066 = vunpack.c.l.b16 %v1488
        %v3067 = vunpack.c.h.b16 %v1488
        %v3068 = vunpack.c.l.b16 %v1489
        %v3069 = vunpack.c.h.b16 %v1489
        %v3070 = vunpack.c.l.b16 %v1490
        %v3071 = vunpack.c.h.b16 %v1490
        %v3072 = vunpack.c.l.b16 %v1491
        %v3073 = vunpack.c.h.b16 %v1491
        %v3074 = vunpack.c.l.b16 %v1492
        %v3075 = vunpack.c.h.b16 %v1492
        %v3076 = vunpack.c.l.b16 %v1493
        %v3077 = vunpack.c.h.b16 %v1493
        %v3078 = vunpack.c.l.b16 %v1494
        %v3079 = vunpack.c.h.b16 %v1494
        %v3080 = vunpack.c.l.b16 %v1495
        %v3081 = vunpack.c.h.b16 %v1495
        %v3082 = vunpack.c.l.b16 %v1496
        %v3083 = vunpack.c.h.b16 %v1496
        %v3084 = vunpack.c.l.b16 %v1497
        %v3085 = vunpack.c.h.b16 %v1497
        %v3086 = vunpack.c.l.b16 %v1498
        %v3087 = vunpack.c.h.b16 %v1498
        %v3088 = vunpack.c.l.b16 %v1499
        %v3089 = vunpack.c.h.b16 %v1499
        %v3090 = vunpack.c.l.b16 %v1500
        %v3091 = vunpack.c.h.b16 %v1500
        %v3092 = vunpack.c.l.b16 %v1501
        %v3093 = vunpack.c.h.b16 %v1501
        %v3094 = vunpack.c.l.b16 %v1502
        %v3095 = vunpack.c.h.b16 %v1502
        %v3096 = vunpack.c.l.b16 %v1503
        %v3097 = vunpack.c.h.b16 %v1503
        %v3098 = vunpack.c.l.b16 %v1504
        %v3099 = vunpack.c.h.b16 %v1504
        %v3100 = vunpack.c.l.b16 %v1505
        %v3101 = vunpack.c.h.b16 %v1505
        %v3102 = vunpack.c.l.b16 %v1506
        %v3103 = vunpack.c.h.b16 %v1506
        %v3104 = vunpack.c.l.b16 %v1507
        %v3105 = vunpack.c.h.b16 %v1507
        %v3106 = vunpack.c.l.b16 %v1508
        %v3107 = vunpack.c.h.b16 %v1508
        %v3108 = vunpack.c.l.b16 %v1509
        %v3109 = vunpack.c.h.b16 %v1509
        %v3110 = vunpack.c.l.b16 %v1510
        %v3111 = vunpack.c.h.b16 %v1510
        %v3112 = vunpack.c.l.b16 %v1511
        %v3113 = vunpack.c.h.b16 %v1511
        %v3114 = vunpack.c.l.b16 %v1512
        %v3115 = vunpack.c.h.b16 %v1512
        %v3116 = vunpack.c.l.b16 %v1513
        %v3117 = vunpack.c.h.b16 %v1513
        %v3118 = vunpack.c.l.b16 %v1514
        %v3119 = vunpack.c.h.b16 %v1514
        %v3120 = vunpack.c.l.b16 %v1515
        %v3121 = vunpack.c.h.b16 %v1515
        %v3122 = vunpack.c.l.b16 %v1516
        %v3123 = vunpack.c.h.b16 %v1516
        %v3124 = vunpack.c.l.b16 %v1517
        %v3125 = vunpack.c.h.b16 %v1517
        %v3126 = vunpack.c.l.b16 %v1518
        %v3127 = vunpack.c.h.b16 %v1518
        %v3128 = vunpack.c.l.b16 %v1519
        %v3129 = vunpack.c.h.b16 %v1519
        %v3130 = vunpack.c.l.b16 %v1520
        %v3131 = vunpack.c.h.b16 %v1520
        %v3132 = vunpack.c.l.b16 %v1521
        %v3133 = vunpack.c.h.b16 %v1521
        %v3134 = vunpack.c.l.b16 %v1522
        %v3135 = vunpack.c.h.b16 %v1522
        %v3136 = vunpack.c.l.b16 %v1523
        %v3137 = vunpack.c.h.b16 %v1523
        %v3138 = vunpack.c.l.b16 %v1524
        %v3139 = vunpack.c.h.b16 %v1524
        %v3140 = vunpack.c.l.b16 %v1525
        %v3141 = vunpack.c.h.b16 %v1525
        %v3142 = vunpack.c.l.b16 %v1526
        %v3143 = vunpack.c.h.b16 %v1526
        %v3144 = vunpack.c.l.b16 %v1527
        %v3145 = vunpack.c.h.b16 %v1527
        %v3146 = vunpack.c.l.b16 %v1528
        %v3147 = vunpack.c.h.b16 %v1528
        %v3148 = vunpack.c.l.b16 %v1529
        %v3149 = vunpack.c.h.b16 %v1529
        %v3150 = vunpack.c.l.b16 %v1530
        %v3151 = vunpack.c.h.b16 %v1530
        %v3152 = vunpack.c.l.b16 %v1531
        %v3153 = vunpack.c.h.b16 %v1531
        %v3154 = vunpack.c.l.b16 %v1532
        %v3155 = vunpack.c.h.b16 %v1532
        %v3156 = vunpack.c.l.b16 %v1533
        %v3157 = vunpack.c.h.b16 %v1533
        %v3158 = vunpack.c.l.b16 %v1534
        %v3159 = vunpack.c.h.b16 %v1534
        %v3160 = vunpack.c.l.b16 %v1535
        %v3161 = vunpack.c.h.b16 %v1535
        %v3162 = vunpack.c.l.b16 %v1536
        %v3163 = vunpack.c.h.b16 %v1536
        %v3164 = vunpack.c.l.b16 %v1537
        %v3165 = vunpack.c.h.b16 %v1537
        %v3166 = vunpack.c.l.b16 %v1538
        %v3167 = vunpack.c.h.b16 %v1538
        %v3168 = vunpack.c.l.b16 %v1539
        %v3169 = vunpack.c.h.b16 %v1539
        %v3170 = vunpack.c.l.b16 %v1540
        %v3171 = vunpack.c.h.b16 %v1540
        %v3172 = vunpack.c.l.b16 %v1541
        %v3173 = vunpack.c.h.b16 %v1541
        %v3174 = vunpack.c.l.b16 %v1542
        %v3175 = vunpack.c.h.b16 %v1542
        %v3176 = vunpack.c.l.b16 %v1543
        %v3177 = vunpack.c.h.b16 %v1543
        %v3178 = vunpack.c.l.b16 %v1544
        %v3179 = vunpack.c.h.b16 %v1544
        %v3180 = vunpack.c.l.b16 %v1545
        %v3181 = vunpack.c.h.b16 %v1545
        %v3182 = vunpack.c.l.b16 %v1546
        %v3183 = vunpack.c.h.b16 %v1546
        %v3184 = vunpack.c.l.b16 %v1547
        %v3185 = vunpack.c.h.b16 %v1547
        %v3186 = vunpack.c.l.b16 %v1548
        %v3187 = vunpack.c.h.b16 %v1548
        %v3188 = vunpack.c.l.b16 %v1549
        %v3189 = vunpack.c.h.b16 %v1549
        %v3190 = vunpack.c.l.b16 %v1550
        %v3191 = vunpack.c.h.b16 %v1550
        %v3192 = vunpack.c.l.b16 %v1551
        %v3193 = vunpack.c.h.b16 %v1551
        %v3194 = vunpack.c.l.b16 %v1552
        %v3195 = vunpack.c.h.b16 %v1552
        %v3196 = vunpack.c.l.b16 %v1553
        %v3197 = vunpack.c.h.b16 %v1553
        %v3198 = vunpack.c.l.b16 %v1554
        %v3199 = vunpack.c.h.b16 %v1554
        %v3200 = vunpack.c.l.b16 %v1555
        %v3201 = vunpack.c.h.b16 %v1555
        %v3202 = vunpack.c.l.b16 %v1556
        %v3203 = vunpack.c.h.b16 %v1556
        %v3204 = vunpack.c.l.b16 %v1557
        %v3205 = vunpack.c.h.b16 %v1557
        %v3206 = vunpack.c.l.b16 %v1558
        %v3207 = vunpack.c.h.b16 %v1558
        %v3208 = vunpack.c.l.b16 %v1559
        %v3209 = vunpack.c.h.b16 %v1559
        %v3210 = vunpack.c.l.b16 %v1560
        %v3211 = vunpack.c.h.b16 %v1560
        %v3212 = vunpack.c.l.b16 %v1561
        %v3213 = vunpack.c.h.b16 %v1561
        %v3214 = vunpack.c.l.b16 %v1562
        %v3215 = vunpack.c.h.b16 %v1562
        %v3216 = vunpack.c.l.b16 %v1563
        %v3217 = vunpack.c.h.b16 %v1563
        %v3218 = vunpack.c.l.b16 %v1564
        %v3219 = vunpack.c.h.b16 %v1564
        %v3220 = vunpack.c.l.b16 %v1565
        %v3221 = vunpack.c.h.b16 %v1565
        %v3222 = vunpack.c.l.b16 %v1566
        %v3223 = vunpack.c.h.b16 %v1566
        %v3224 = vunpack.c.l.b16 %v1567
        %v3225 = vunpack.c.h.b16 %v1567
        %v3226 = vunpack.c.l.b16 %v1568
        %v3227 = vunpack.c.h.b16 %v1568
        %v3228 = vunpack.c.l.b16 %v1569
        %v3229 = vunpack.c.h.b16 %v1569
        %v3230 = vunpack.c.l.b16 %v1570
        %v3231 = vunpack.c.h.b16 %v1570
        %v3232 = vunpack.c.l.b16 %v1571
        %v3233 = vunpack.c.h.b16 %v1571
        %v3234 = vunpack.c.l.b16 %v1572
        %v3235 = vunpack.c.h.b16 %v1572
        %v3236 = vunpack.c.l.b16 %v1573
        %v3237 = vunpack.c.h.b16 %v1573
        %v3238 = vunpack.c.l.b16 %v1574
        %v3239 = vunpack.c.h.b16 %v1574
        %v3240 = vunpack.c.l.b16 %v1575
        %v3241 = vunpack.c.h.b16 %v1575
        %v3242 = vunpack.c.l.b16 %v1576
        %v3243 = vunpack.c.h.b16 %v1576
        %v3244 = vunpack.c.l.b16 %v1577
        %v3245 = vunpack.c.h.b16 %v1577
        %v3246 = vunpack.c.l.b16 %v1578
        %v3247 = vunpack.c.h.b16 %v1578
        %v3248 = vunpack.c.l.b16 %v1579
        %v3249 = vunpack.c.h.b16 %v1579
        %v3250 = vunpack.c.l.b16 %v1580
        %v3251 = vunpack.c.h.b16 %v1580
        %v3252 = vunpack.c.l.b16 %v1581
        %v3253 = vunpack.c.h.b16 %v1581
        %v3254 = vunpack.c.l.b16 %v1582
        %v3255 = vunpack.c.h.b16 %v1582
        %v3256 = vunpack.c.l.b16 %v1583
        %v3257 = vunpack.c.h.b16 %v1583
        %v3258 = vunpack.c.l.b16 %v1584
        %v3259 = vunpack.c.h.b16 %v1584
        %v3260 = vunpack.c.l.b16 %v1585
        %v3261 = vunpack.c.h.b16 %v1585
        %v3262 = vunpack.c.l.b16 %v1586
        %v3263 = vunpack.c.h.b16 %v1586
        %v3264 = vunpack.c.l.b16 %v1587
        %v3265 = vunpack.c.h.b16 %v1587
        %v3266 = vunpack.c.l.b16 %v1588
        %v3267 = vunpack.c.h.b16 %v1588
        %v3268 = vunpack.c.l.b16 %v1589
        %v3269 = vunpack.c.h.b16 %v1589
        %v3270 = vunpack.c.l.b16 %v1590
        %v3271 = vunpack.c.h.b16 %v1590
        %v3272 = vunpack.c.l.b16 %v1591
        %v3273 = vunpack.c.h.b16 %v1591
        %v3274 = vunpack.c.l.b16 %v1592
        %v3275 = vunpack.c.h.b16 %v1592
        %v3276 = vunpack.c.l.b16 %v1593
        %v3277 = vunpack.c.h.b16 %v1593
        %v3278 = vunpack.c.l.b16 %v1594
        %v3279 = vunpack.c.h.b16 %v1594
        %v3280 = vunpack.c.l.b16 %v1595
        %v3281 = vunpack.c.h.b16 %v1595
        %v3282 = vunpack.c.l.b16 %v1596
        %v3283 = vunpack.c.h.b16 %v1596
        %v3284 = vunpack.c.l.b16 %v1597
        %v3285 = vunpack.c.h.b16 %v1597
        %v3286 = vunpack.c.l.b16 %v1598
        %v3287 = vunpack.c.h.b16 %v1598
        %v3288 = vunpack.c.l.b16 %v1599
        %v3289 = vunpack.c.h.b16 %v1599
        %v3290 = vunpack.c.l.b16 %v1600
        %v3291 = vunpack.c.h.b16 %v1600
        %v3292 = vunpack.c.l.b16 %v1601
        %v3293 = vunpack.c.h.b16 %v1601
        %v3294 = vunpack.c.l.b16 %v1602
        %v3295 = vunpack.c.h.b16 %v1602
        %v3296 = vunpack.c.l.b16 %v1603
        %v3297 = vunpack.c.h.b16 %v1603
        %v3298 = vunpack.c.l.b16 %v1604
        %v3299 = vunpack.c.h.b16 %v1604
        %v3300 = vunpack.c.l.b16 %v1605
        %v3301 = vunpack.c.h.b16 %v1605
        %v3302 = vunpack.c.l.b16 %v1606
        %v3303 = vunpack.c.h.b16 %v1606
        %v3304 = vunpack.c.l.b16 %v1607
        %v3305 = vunpack.c.h.b16 %v1607
        %v3306 = vunpack.c.l.b16 %v1608
        %v3307 = vunpack.c.h.b16 %v1608
        %v3308 = vunpack.c.l.b16 %v1609
        %v3309 = vunpack.c.h.b16 %v1609
        %v3310 = vunpack.c.l.b16 %v1610
        %v3311 = vunpack.c.h.b16 %v1610
        %v3312 = vunpack.c.l.b16 %v1611
        %v3313 = vunpack.c.h.b16 %v1611
        %v3314 = vunpack.c.l.b16 %v1612
        %v3315 = vunpack.c.h.b16 %v1612
        %v3316 = vunpack.c.l.b16 %v1613
        %v3317 = vunpack.c.h.b16 %v1613
        %v3318 = vunpack.c.l.b16 %v1614
        %v3319 = vunpack.c.h.b16 %v1614
        %v3320 = vunpack.c.l.b16 %v1615
        %v3321 = vunpack.c.h.b16 %v1615
        %v3322 = vunpack.c.l.b16 %v1616
        %v3323 = vunpack.c.h.b16 %v1616
        %v3324 = vunpack.c.l.b16 %v1617
        %v3325 = vunpack.c.h.b16 %v1617
        %v3326 = vunpack.c.l.b16 %v1618
        %v3327 = vunpack.c.h.b16 %v1618
        %v3328 = vunpack.c.l.b16 %v1619
        %v3329 = vunpack.c.h.b16 %v1619
        %v3330 = vunpack.c.l.b16 %v1620
        %v3331 = vunpack.c.h.b16 %v1620
        %v3332 = vunpack.c.l.b16 %v1621
        %v3333 = vunpack.c.h.b16 %v1621
        %v3334 = vunpack.c.l.b16 %v1622
        %v3335 = vunpack.c.h.b16 %v1622
        %v3336 = vunpack.c.l.b16 %v1623
        %v3337 = vunpack.c.h.b16 %v1623
        %v3338 = vunpack.c.l.b16 %v1624
        %v3339 = vunpack.c.h.b16 %v1624
        %v3340 = vunpack.c.l.b16 %v1625
        %v3341 = vunpack.c.h.b16 %v1625
        %v3342 = vunpack.c.l.b16 %v1626
        %v3343 = vunpack.c.h.b16 %v1626
        %v3344 = vunpack.c.l.b16 %v1627
        %v3345 = vunpack.c.h.b16 %v1627
        %v3346 = vunpack.c.l.b16 %v1628
        %v3347 = vunpack.c.h.b16 %v1628
        %v3348 = vunpack.c.l.b16 %v1629
        %v3349 = vunpack.c.h.b16 %v1629
        %v3350 = vunpack.c.l.b16 %v1630
        %v3351 = vunpack.c.h.b16 %v1630
        %v3352 = vunpack.c.l.b16 %v1631
        %v3353 = vunpack.c.h.b16 %v1631
        %v3354 = vunpack.c.l.b16 %v1632
        %v3355 = vunpack.c.h.b16 %v1632
        %v3356 = vunpack.c.l.b16 %v1633
        %v3357 = vunpack.c.h.b16 %v1633
        %v3358 = vunpack.c.l.b16 %v1634
        %v3359 = vunpack.c.h.b16 %v1634
        %v3360 = vunpack.c.l.b16 %v1635
        %v3361 = vunpack.c.h.b16 %v1635
        %v3362 = vunpack.c.l.b16 %v1636
        %v3363 = vunpack.c.h.b16 %v1636
        %v3364 = vunpack.c.l.b16 %v1637
        %v3365 = vunpack.c.h.b16 %v1637
        %v3366 = vpack.c.b16 %v2226, %v2214
        %v3367 = vpack.c.b16 %v2227, %v2215
        %v3368 = vpack.c.b16 %v2228, %v2216
        %v3369 = vpack.c.b16 %v2229, %v2217
        %v3370 = vpack.c.b16 %v2230, %v2218
        %v3371 = vpack.c.b16 %v2231, %v2219
        %v3372 = vpack.c.b16 %v2232, %v2220
        %v3373 = vpack.c.b16 %v2233, %v2221
        %v3374 = vpack.c.b16 %v2234, %v2222
        %v3375 = vpack.c.b16 %v2235, %v2223
        %v3376 = vpack.c.b16 %v2236, %v2224
        %v3377 = vpack.c.b16 %v2237, %v2225
        %v3378 = vpack.c.b16 %v2250, %v2238
        %v3379 = vpack.c.b16 %v2251, %v2239
        %v3380 = vpack.c.b16 %v2252, %v2240
        %v3381 = vpack.c.b16 %v2253, %v2241
        %v3382 = vpack.c.b16 %v2254, %v2242
        %v3383 = vpack.c.b16 %v2255, %v2243
        %v3384 = vpack.c.b16 %v2256, %v2244
        %v3385 = vpack.c.b16 %v2257, %v2245
        %v3386 = vpack.c.b16 %v2258, %v2246
        %v3387 = vpack.c.b16 %v2259, %v2247
        %v3388 = vpack.c.b16 %v2260, %v2248
        %v3389 = vpack.c.b16 %v2261, %v2249
        %v3390 = vpack.c.b16 %v2274, %v2262
        %v3391 = vpack.c.b16 %v2275, %v2263
        %v3392 = vpack.c.b16 %v2276, %v2264
        %v3393 = vpack.c.b16 %v2277, %v2265
        %v3394 = vpack.c.b16 %v2278, %v2266
        %v3395 = vpack.c.b16 %v2279, %v2267
        %v3396 = vpack.c.b16 %v2280, %v2268
        %v3397 = vpack.c.b16 %v2281, %v2269
        %v3398 = vpack.c.b16 %v2282, %v2270
        %v3399 = vpack.c.b16 %v2283, %v2271
        %v3400 = vpack.c.b16 %v2284, %v2272
        %v3401 = vpack.c.b16 %v2285, %v2273
        %v3402 = vpack.c.b16 %v2298, %v2286
        %v3403 = vpack.c.b16 %v2299, %v2287
        %v3404 = vpack.c.b16 %v2300, %v2288
        %v3405 = vpack.c.b16 %v2301, %v2289
        %v3406 = vpack.c.b16 %v2302, %v2290
        %v3407 = vpack.c.b16 %v2303, %v2291
        %v3408 = vpack.c.b16 %v2304, %v2292
        %v3409 = vpack.c.b16 %v2305, %v2293
        %v3410 = vpack.c.b16 %v2306, %v2294
        %v3411 = vpack.c.b16 %v2307, %v2295
        %v3412 = vpack.c.b16 %v2308, %v2296
        %v3413 = vpack.c.b16 %v2309, %v2297
        %v3414 = vpack.c.b16 %v2322, %v2310
        %v3415 = vpack.c.b16 %v2323, %v2311
        %v3416 = vpack.c.b16 %v2324, %v2312
        %v3417 = vpack.c.b16 %v2325, %v2313
        %v3418 = vpack.c.b16 %v2326, %v2314
        %v3419 = vpack.c.b16 %v2327, %v2315
        %v3420 = vpack.c.b16 %v2328, %v2316
        %v3421 = vpack.c.b16 %v2329, %v2317
        %v3422 = vpack.c.b16 %v2330, %v2318
        %v3423 = vpack.c.b16 %v2331, %v2319
        %v3424 = vpack.c.b16 %v2332, %v2320
        %v3425 = vpack.c.b16 %v2333, %v2321
        %v3426 = vpack.c.b16 %v2346, %v2334
        %v3427 = vpack.c.b16 %v2347, %v2335
        %v3428 = vpack.c.b16 %v2348, %v2336
        %v3429 = vpack.c.b16 %v2349, %v2337
        %v3430 = vpack.c.b16 %v2350, %v2338
        %v3431 = vpack.c.b16 %v2351, %v2339
        %v3432 = vpack.c.b16 %v2352, %v2340
        %v3433 = vpack.c.b16 %v2353, %v2341
        %v3434 = vpack.c.b16 %v2354, %v2342
        %v3435 = vpack.c.b16 %v2355, %v2343
        %v3436 = vpack.c.b16 %v2356, %v2344
        %v3437 = vpack.c.b16 %v2357, %v2345
        %v3438 = vpack.c.b16 %v2370, %v2358
        %v3439 = vpack.c.b16 %v2371, %v2359
        %v3440 = vpack.c.b16 %v2372, %v2360
        %v3441 = vpack.c.b16 %v2373, %v2361
        %v3442 = vpack.c.b16 %v2374, %v2362
        %v3443 = vpack.c.b16 %v2375, %v2363
        %v3444 = vpack.c.b16 %v2376, %v2364
        %v3445 = vpack.c.b16 %v2377, %v2365
        %v3446 = vpack.c.b16 %v2378, %v2366
        %v3447 = vpack.c.b16 %v2379, %v2367
        %v3448 = vpack.c.b16 %v2380, %v2368
        %v3449 = vpack.c.b16 %v2381, %v2369
        %v3450 = vpack.c.b16 %v2394, %v2382
        %v3451 = vpack.c.b16 %v2395, %v2383
        %v3452 = vpack.c.b16 %v2396, %v2384
        %v3453 = vpack.c.b16 %v2397, %v2385
        %v3454 = vpack.c.b16 %v2398, %v2386
        %v3455 = vpack.c.b16 %v2399, %v2387
        %v3456 = vpack.c.b16 %v2400, %v2388
        %v3457 = vpack.c.b16 %v2401, %v2389
        %v3458 = vpack.c.b16 %v2402, %v2390
        %v3459 = vpack.c.b16 %v2403, %v2391
        %v3460 = vpack.c.b16 %v2404, %v2392
        %v3461 = vpack.c.b16 %v2405, %v2393
        %v3462 = vpack.c.b16 %v2418, %v2406
        %v3463 = vpack.c.b16 %v2419, %v2407
        %v3464 = vpack.c.b16 %v2420, %v2408
        %v3465 = vpack.c.b16 %v2421, %v2409
        %v3466 = vpack.c.b16 %v2422, %v2410
        %v3467 = vpack.c.b16 %v2423, %v2411
        %v3468 = vpack.c.b16 %v2424, %v2412
        %v3469 = vpack.c.b16 %v2425, %v2413
        %v3470 = vpack.c.b16 %v2426, %v2414
        %v3471 = vpack.c.b16 %v2427, %v2415
        %v3472 = vpack.c.b16 %v2428, %v2416
        %v3473 = vpack.c.b16 %v2429, %v2417
        %v3474 = vpack.c.b16 %v2442, %v2430
        %v3475 = vpack.c.b16 %v2443, %v2431
        %v3476 = vpack.c.b16 %v2444, %v2432
        %v3477 = vpack.c.b16 %v2445, %v2433
        %v3478 = vpack.c.b16 %v2446, %v2434
        %v3479 = vpack.c.b16 %v2447, %v2435
        %v3480 = vpack.c.b16 %v2448, %v2436
        %v3481 = vpack.c.b16 %v2449, %v2437
        %v3482 = vpack.c.b16 %v2450, %v2438
        %v3483 = vpack.c.b16 %v2451, %v2439
        %v3484 = vpack.c.b16 %v2452, %v2440
        %v3485 = vpack.c.b16 %v2453, %v2441
        %v3486 = vpack.c.b16 %v2466, %v2454
        %v3487 = vpack.c.b16 %v2467, %v2455
        %v3488 = vpack.c.b16 %v2468, %v2456
        %v3489 = vpack.c.b16 %v2469, %v2457
        %v3490 = vpack.c.b16 %v2470, %v2458
        %v3491 = vpack.c.b16 %v2471, %v2459
        %v3492 = vpack.c.b16 %v2472, %v2460
        %v3493 = vpack.c.b16 %v2473, %v2461
        %v3494 = vpack.c.b16 %v2474, %v2462
        %v3495 = vpack.c.b16 %v2475, %v2463
        %v3496 = vpack.c.b16 %v2476, %v2464
        %v3497 = vpack.c.b16 %v2477, %v2465
        %v3498 = vpack.c.b16 %v2490, %v2478
        %v3499 = vpack.c.b16 %v2491, %v2479
        %v3500 = vpack.c.b16 %v2492, %v2480
        %v3501 = vpack.c.b16 %v2493, %v2481
        %v3502 = vpack.c.b16 %v2494, %v2482
        %v3503 = vpack.c.b16 %v2495, %v2483
        %v3504 = vpack.c.b16 %v2496, %v2484
        %v3505 = vpack.c.b16 %v2497, %v2485
        %v3506 = vpack.c.b16 %v2498, %v2486
        %v3507 = vpack.c.b16 %v2499, %v2487
        %v3508 = vpack.c.b16 %v2500, %v2488
        %v3509 = vpack.c.b16 %v2501, %v2489
        %v3510 = vpack.c.b16 %v2514, %v2502
        %v3511 = vpack.c.b16 %v2515, %v2503
        %v3512 = vpack.c.b16 %v2516, %v2504
        %v3513 = vpack.c.b16 %v2517, %v2505
        %v3514 = vpack.c.b16 %v2518, %v2506
        %v3515 = vpack.c.b16 %v2519, %v2507
        %v3516 = vpack.c.b16 %v2520, %v2508
        %v3517 = vpack.c.b16 %v2521, %v2509
        %v3518 = vpack.c.b16 %v2522, %v2510
        %v3519 = vpack.c.b16 %v2523, %v2511
        %v3520 = vpack.c.b16 %v2524, %v2512
        %v3521 = vpack.c.b16 %v2525, %v2513
        %v3522 = vpack.c.b16 %v2538, %v2526
        %v3523 = vpack.c.b16 %v2539, %v2527
        %v3524 = vpack.c.b16 %v2540, %v2528
        %v3525 = vpack.c.b16 %v2541, %v2529
        %v3526 = vpack.c.b16 %v2542, %v2530
        %v3527 = vpack.c.b16 %v2543, %v2531
        %v3528 = vpack.c.b16 %v2544, %v2532
        %v3529 = vpack.c.b16 %v2545, %v2533
        %v3530 = vpack.c.b16 %v2546, %v2534
        %v3531 = vpack.c.b16 %v2547, %v2535
        %v3532 = vpack.c.b16 %v2548, %v2536
        %v3533 = vpack.c.b16 %v2549, %v2537
        %v3534 = vpack.c.b16 %v2562, %v2550
        %v3535 = vpack.c.b16 %v2563, %v2551
        %v3536 = vpack.c.b16 %v2564, %v2552
        %v3537 = vpack.c.b16 %v2565, %v2553
        %v3538 = vpack.c.b16 %v2566, %v2554
        %v3539 = vpack.c.b16 %v2567, %v2555
        %v3540 = vpack.c.b16 %v2568, %v2556
        %v3541 = vpack.c.b16 %v2569, %v2557
        %v3542 = vpack.c.b16 %v2570, %v2558
        %v3543 = vpack.c.b16 %v2571, %v2559
        %v3544 = vpack.c.b16 %v2572, %v2560
        %v3545 = vpack.c.b16 %v2573, %v2561
        %v3546 = vpack.c.b16 %v2586, %v2574
        %v3547 = vpack.c.b16 %v2587, %v2575
        %v3548 = vpack.c.b16 %v2588, %v2576
        %v3549 = vpack.c.b16 %v2589, %v2577
        %v3550 = vpack.c.b16 %v2590, %v2578
        %v3551 = vpack.c.b16 %v2591, %v2579
        %v3552 = vpack.c.b16 %v2592, %v2580
        %v3553 = vpack.c.b16 %v2593, %v2581
        %v3554 = vpack.c.b16 %v2594, %v2582
        %v3555 = vpack.c.b16 %v2595, %v2583
        %v3556 = vpack.c.b16 %v2596, %v2584
        %v3557 = vpack.c.b16 %v2597, %v2585
        %v3558 = vpack.c.b16 %v2610, %v2598
        %v3559 = vpack.c.b16 %v2611, %v2599
        %v3560 = vpack.c.b16 %v2612, %v2600
        %v3561 = vpack.c.b16 %v2613, %v2601
        %v3562 = vpack.c.b16 %v2614, %v2602
        %v3563 = vpack.c.b16 %v2615, %v2603
        %v3564 = vpack.c.b16 %v2616, %v2604
        %v3565 = vpack.c.b16 %v2617, %v2605
        %v3566 = vpack.c.b16 %v2618, %v2606
        %v3567 = vpack.c.b16 %v2619, %v2607
        %v3568 = vpack.c.b16 %v2620, %v2608
        %v3569 = vpack.c.b16 %v2621, %v2609
        %v3570 = vpack.c.b16 %v2634, %v2622
        %v3571 = vpack.c.b16 %v2635, %v2623
        %v3572 = vpack.c.b16 %v2636, %v2624
        %v3573 = vpack.c.b16 %v2637, %v2625
        %v3574 = vpack.c.b16 %v2638, %v2626
        %v3575 = vpack.c.b16 %v2639, %v2627
        %v3576 = vpack.c.b16 %v2640, %v2628
        %v3577 = vpack.c.b16 %v2641, %v2629
        %v3578 = vpack.c.b16 %v2642, %v2630
        %v3579 = vpack.c.b16 %v2643, %v2631
        %v3580 = vpack.c.b16 %v2644, %v2632
        %v3581 = vpack.c.b16 %v2645, %v2633
        %v3582 = vpack.c.b16 %v2658, %v2646
        %v3583 = vpack.c.b16 %v2659, %v2647
        %v3584 = vpack.c.b16 %v2660, %v2648
        %v3585 = vpack.c.b16 %v2661, %v2649
        %v3586 = vpack.c.b16 %v2662, %v2650
        %v3587 = vpack.c.b16 %v2663, %v2651
        %v3588 = vpack.c.b16 %v2664, %v2652
        %v3589 = vpack.c.b16 %v2665, %v2653
        %v3590 = vpack.c.b16 %v2666, %v2654
        %v3591 = vpack.c.b16 %v2667, %v2655
        %v3592 = vpack.c.b16 %v2668, %v2656
        %v3593 = vpack.c.b16 %v2669, %v2657
        %v3594 = vpack.c.b16 %v2682, %v2670
        %v3595 = vpack.c.b16 %v2683, %v2671
        %v3596 = vpack.c.b16 %v2684, %v2672
        %v3597 = vpack.c.b16 %v2685, %v2673
        %v3598 = vpack.c.b16 %v2686, %v2674
        %v3599 = vpack.c.b16 %v2687, %v2675
        %v3600 = vpack.c.b16 %v2688, %v2676
        %v3601 = vpack.c.b16 %v2689, %v2677
        %v3602 = vpack.c.b16 %v2690, %v2678
        %v3603 = vpack.c.b16 %v2691, %v2679
        %v3604 = vpack.c.b16 %v2692, %v2680
        %v3605 = vpack.c.b16 %v2693, %v2681
        %v3606 = vpack.c.b16 %v2706, %v2694
        %v3607 = vpack.c.b16 %v2707, %v2695
        %v3608 = vpack.c.b16 %v2708, %v2696
        %v3609 = vpack.c.b16 %v2709, %v2697
        %v3610 = vpack.c.b16 %v2710, %v2698
        %v3611 = vpack.c.b16 %v2711, %v2699
        %v3612 = vpack.c.b16 %v2712, %v2700
        %v3613 = vpack.c.b16 %v2713, %v2701
        %v3614 = vpack.c.b16 %v2714, %v2702
        %v3615 = vpack.c.b16 %v2715, %v2703
        %v3616 = vpack.c.b16 %v2716, %v2704
        %v3617 = vpack.c.b16 %v2717, %v2705
        %v3618 = vpack.c.b16 %v2730, %v2718
        %v3619 = vpack.c.b16 %v2731, %v2719
        %v3620 = vpack.c.b16 %v2732, %v2720
        %v3621 = vpack.c.b16 %v2733, %v2721
        %v3622 = vpack.c.b16 %v2734, %v2722
        %v3623 = vpack.c.b16 %v2735, %v2723
        %v3624 = vpack.c.b16 %v2736, %v2724
        %v3625 = vpack.c.b16 %v2737, %v2725
        %v3626 = vpack.c.b16 %v2738, %v2726
        %v3627 = vpack.c.b16 %v2739, %v2727
        %v3628 = vpack.c.b16 %v2740, %v2728
        %v3629 = vpack.c.b16 %v2741, %v2729
        %v3630 = vpack.c.b16 %v2754, %v2742
        %v3631 = vpack.c.b16 %v2755, %v2743
        %v3632 = vpack.c.b16 %v2756, %v2744
        %v3633 = vpack.c.b16 %v2757, %v2745
        %v3634 = vpack.c.b16 %v2758, %v2746
        %v3635 = vpack.c.b16 %v2759, %v2747
        %v3636 = vpack.c.b16 %v2760, %v2748
        %v3637 = vpack.c.b16 %v2761, %v2749
        %v3638 = vpack.c.b16 %v2762, %v2750
        %v3639 = vpack.c.b16 %v2763, %v2751
        %v3640 = vpack.c.b16 %v2764, %v2752
        %v3641 = vpack.c.b16 %v2765, %v2753
        %v3642 = vpack.c.b16 %v2778, %v2766
        %v3643 = vpack.c.b16 %v2779, %v2767
        %v3644 = vpack.c.b16 %v2780, %v2768
        %v3645 = vpack.c.b16 %v2781, %v2769
        %v3646 = vpack.c.b16 %v2782, %v2770
        %v3647 = vpack.c.b16 %v2783, %v2771
        %v3648 = vpack.c.b16 %v2784, %v2772
        %v3649 = vpack.c.b16 %v2785, %v2773
        %v3650 = vpack.c.b16 %v2786, %v2774
        %v3651 = vpack.c.b16 %v2787, %v2775
        %v3652 = vpack.c.b16 %v2788, %v2776
        %v3653 = vpack.c.b16 %v2789, %v2777
        %v3654 = vpack.c.b16 %v2802, %v2790
        %v3655 = vpack.c.b16 %v2803, %v2791
        %v3656 = vpack.c.b16 %v2804, %v2792
        %v3657 = vpack.c.b16 %v2805, %v2793
        %v3658 = vpack.c.b16 %v2806, %v2794
        %v3659 = vpack.c.b16 %v2807, %v2795
        %v3660 = vpack.c.b16 %v2808, %v2796
        %v3661 = vpack.c.b16 %v2809, %v2797
        %v3662 = vpack.c.b16 %v2810, %v2798
        %v3663 = vpack.c.b16 %v2811, %v2799
        %v3664 = vpack.c.b16 %v2812, %v2800
        %v3665 = vpack.c.b16 %v2813, %v2801
        %v3666 = vpack.c.b16 %v2826, %v2814
        %v3667 = vpack.c.b16 %v2827, %v2815
        %v3668 = vpack.c.b16 %v2828, %v2816
        %v3669 = vpack.c.b16 %v2829, %v2817
        %v3670 = vpack.c.b16 %v2830, %v2818
        %v3671 = vpack.c.b16 %v2831, %v2819
        %v3672 = vpack.c.b16 %v2832, %v2820
        %v3673 = vpack.c.b16 %v2833, %v2821
        %v3674 = vpack.c.b16 %v2834, %v2822
        %v3675 = vpack.c.b16 %v2835, %v2823
        %v3676 = vpack.c.b16 %v2836, %v2824
        %v3677 = vpack.c.b16 %v2837, %v2825
        %v3678 = vpack.c.b16 %v2850, %v2838
        %v3679 = vpack.c.b16 %v2851, %v2839
        %v3680 = vpack.c.b16 %v2852, %v2840
        %v3681 = vpack.c.b16 %v2853, %v2841
        %v3682 = vpack.c.b16 %v2854, %v2842
        %v3683 = vpack.c.b16 %v2855, %v2843
        %v3684 = vpack.c.b16 %v2856, %v2844
        %v3685 = vpack.c.b16 %v2857, %v2845
        %v3686 = vpack.c.b16 %v2858, %v2846
        %v3687 = vpack.c.b16 %v2859, %v2847
        %v3688 = vpack.c.b16 %v2860, %v2848
        %v3689 = vpack.c.b16 %v2861, %v2849
        %v3690 = vpack.c.b16 %v2874, %v2862
        %v3691 = vpack.c.b16 %v2875, %v2863
        %v3692 = vpack.c.b16 %v2876, %v2864
        %v3693 = vpack.c.b16 %v2877, %v2865
        %v3694 = vpack.c.b16 %v2878, %v2866
        %v3695 = vpack.c.b16 %v2879, %v2867
        %v3696 = vpack.c.b16 %v2880, %v2868
        %v3697 = vpack.c.b16 %v2881, %v2869
        %v3698 = vpack.c.b16 %v2882, %v2870
        %v3699 = vpack.c.b16 %v2883, %v2871
        %v3700 = vpack.c.b16 %v2884, %v2872
        %v3701 = vpack.c.b16 %v2885, %v2873
        %v3702 = vpack.c.b16 %v2898, %v2886
        %v3703 = vpack.c.b16 %v2899, %v2887
        %v3704 = vpack.c.b16 %v2900, %v2888
        %v3705 = vpack.c.b16 %v2901, %v2889
        %v3706 = vpack.c.b16 %v2902, %v2890
        %v3707 = vpack.c.b16 %v2903, %v2891
        %v3708 = vpack.c.b16 %v2904, %v2892
        %v3709 = vpack.c.b16 %v2905, %v2893
        %v3710 = vpack.c.b16 %v2906, %v2894
        %v3711 = vpack.c.b16 %v2907, %v2895
        %v3712 = vpack.c.b16 %v2908, %v2896
        %v3713 = vpack.c.b16 %v2909, %v2897
        %v3714 = vpack.c.b16 %v2922, %v2910
        %v3715 = vpack.c.b16 %v2923, %v2911
        %v3716 = vpack.c.b16 %v2924, %v2912
        %v3717 = vpack.c.b16 %v2925, %v2913
        %v3718 = vpack.c.b16 %v2926, %v2914
        %v3719 = vpack.c.b16 %v2927, %v2915
        %v3720 = vpack.c.b16 %v2928, %v2916
        %v3721 = vpack.c.b16 %v2929, %v2917
        %v3722 = vpack.c.b16 %v2930, %v2918
        %v3723 = vpack.c.b16 %v2931, %v2919
        %v3724 = vpack.c.b16 %v2932, %v2920
        %v3725 = vpack.c.b16 %v2933, %v2921
        %v3726 = vpack.c.b16 %v2946, %v2934
        %v3727 = vpack.c.b16 %v2947, %v2935
        %v3728 = vpack.c.b16 %v2948, %v2936
        %v3729 = vpack.c.b16 %v2949, %v2937
        %v3730 = vpack.c.b16 %v2950, %v2938
        %v3731 = vpack.c.b16 %v2951, %v2939
        %v3732 = vpack.c.b16 %v2952, %v2940
        %v3733 = vpack.c.b16 %v2953, %v2941
        %v3734 = vpack.c.b16 %v2954, %v2942
        %v3735 = vpack.c.b16 %v2955, %v2943
        %v3736 = vpack.c.b16 %v2956, %v2944
        %v3737 = vpack.c.b16 %v2957, %v2945
        %v3738 = vpack.c.b16 %v2970, %v2958
        %v3739 = vpack.c.b16 %v2971, %v2959
        %v3740 = vpack.c.b16 %v2972, %v2960
        %v3741 = vpack.c.b16 %v2973, %v2961
        %v3742 = vpack.c.b16 %v2974, %v2962
        %v3743 = vpack.c.b16 %v2975, %v2963
        %v3744 = vpack.c.b16 %v2976, %v2964
        %v3745 = vpack.c.b16 %v2977, %v2965
        %v3746 = vpack.c.b16 %v2978, %v2966
        %v3747 = vpack.c.b16 %v2979, %v2967
        %v3748 = vpack.c.b16 %v2980, %v2968
        %v3749 = vpack.c.b16 %v2981, %v2969
        %v3750 = vpack.c.b16 %v2994, %v2982
        %v3751 = vpack.c.b16 %v2995, %v2983
        %v3752 = vpack.c.b16 %v2996, %v2984
        %v3753 = vpack.c.b16 %v2997, %v2985
        %v3754 = vpack.c.b16 %v2998, %v2986
        %v3755 = vpack.c.b16 %v2999, %v2987
        %v3756 = vpack.c.b16 %v3000, %v2988
        %v3757 = vpack.c.b16 %v3001, %v2989
        %v3758 = vpack.c.b16 %v3002, %v2990
        %v3759 = vpack.c.b16 %v3003, %v2991
        %v3760 = vpack.c.b16 %v3004, %v2992
        %v3761 = vpack.c.b16 %v3005, %v2993
        %v3762 = vpack.c.b16 %v3018, %v3006
        %v3763 = vpack.c.b16 %v3019, %v3007
        %v3764 = vpack.c.b16 %v3020, %v3008
        %v3765 = vpack.c.b16 %v3021, %v3009
        %v3766 = vpack.c.b16 %v3022, %v3010
        %v3767 = vpack.c.b16 %v3023, %v3011
        %v3768 = vpack.c.b16 %v3024, %v3012
        %v3769 = vpack.c.b16 %v3025, %v3013
        %v3770 = vpack.c.b16 %v3026, %v3014
        %v3771 = vpack.c.b16 %v3027, %v3015
        %v3772 = vpack.c.b16 %v3028, %v3016
        %v3773 = vpack.c.b16 %v3029, %v3017
        %v3774 = vpack.c.b16 %v3042, %v3030
        %v3775 = vpack.c.b16 %v3043, %v3031
        %v3776 = vpack.c.b16 %v3044, %v3032
        %v3777 = vpack.c.b16 %v3045, %v3033
        %v3778 = vpack.c.b16 %v3046, %v3034
        %v3779 = vpack.c.b16 %v3047, %v3035
        %v3780 = vpack.c.b16 %v3048, %v3036
        %v3781 = vpack.c.b16 %v3049, %v3037
        %v3782 = vpack.c.b16 %v3050, %v3038
        %v3783 = vpack.c.b16 %v3051, %v3039
        %v3784 = vpack.c.b16 %v3052, %v3040
        %v3785 = vpack.c.b16 %v3053, %v3041
        %v3786 = vpack.c.b16 %v3066, %v3054
        %v3787 = vpack.c.b16 %v3067, %v3055
        %v3788 = vpack.c.b16 %v3068, %v3056
        %v3789 = vpack.c.b16 %v3069, %v3057
        %v3790 = vpack.c.b16 %v3070, %v3058
        %v3791 = vpack.c.b16 %v3071, %v3059
        %v3792 = vpack.c.b16 %v3072, %v3060
        %v3793 = vpack.c.b16 %v3073, %v3061
        %v3794 = vpack.c.b16 %v3074, %v3062
        %v3795 = vpack.c.b16 %v3075, %v3063
        %v3796 = vpack.c.b16 %v3076, %v3064
        %v3797 = vpack.c.b16 %v3077, %v3065
        %v3798 = vpack.c.b16 %v3090, %v3078
        %v3799 = vpack.c.b16 %v3091, %v3079
        %v3800 = vpack.c.b16 %v3092, %v3080
        %v3801 = vpack.c.b16 %v3093, %v3081
        %v3802 = vpack.c.b16 %v3094, %v3082
        %v3803 = vpack.c.b16 %v3095, %v3083
        %v3804 = vpack.c.b16 %v3096, %v3084
        %v3805 = vpack.c.b16 %v3097, %v3085
        %v3806 = vpack.c.b16 %v3098, %v3086
        %v3807 = vpack.c.b16 %v3099, %v3087
        %v3808 = vpack.c.b16 %v3100, %v3088
        %v3809 = vpack.c.b16 %v3101, %v3089
        %v3810 = vpack.c.b16 %v3114, %v3102
        %v3811 = vpack.c.b16 %v3115, %v3103
        %v3812 = vpack.c.b16 %v3116, %v3104
        %v3813 = vpack.c.b16 %v3117, %v3105
        %v3814 = vpack.c.b16 %v3118, %v3106
        %v3815 = vpack.c.b16 %v3119, %v3107
        %v3816 = vpack.c.b16 %v3120, %v3108
        %v3817 = vpack.c.b16 %v3121, %v3109
        %v3818 = vpack.c.b16 %v3122, %v3110
        %v3819 = vpack.c.b16 %v3123, %v3111
        %v3820 = vpack.c.b16 %v3124, %v3112
        %v3821 = vpack.c.b16 %v3125, %v3113
        %v3822 = vpack.c.b16 %v3138, %v3126
        %v3823 = vpack.c.b16 %v3139, %v3127
        %v3824 = vpack.c.b16 %v3140, %v3128
        %v3825 = vpack.c.b16 %v3141, %v3129
        %v3826 = vpack.c.b16 %v3142, %v3130
        %v3827 = vpack.c.b16 %v3143, %v3131
        %v3828 = vpack.c.b16 %v3144, %v3132
        %v3829 = vpack.c.b16 %v3145, %v3133
        %v3830 = vpack.c.b16 %v3146, %v3134
        %v3831 = vpack.c.b16 %v3147, %v3135
        %v3832 = vpack.c.b16 %v3148, %v3136
        %v3833 = vpack.c.b16 %v3149, %v3137
        %v3834 = vpack.c.b16 %v3162, %v3150
        %v3835 = vpack.c.b16 %v3163, %v3151
        %v3836 = vpack.c.b16 %v3164, %v3152
        %v3837 = vpack.c.b16 %v3165, %v3153
        %v3838 = vpack.c.b16 %v3166, %v3154
        %v3839 = vpack.c.b16 %v3167, %v3155
        %v3840 = vpack.c.b16 %v3168, %v3156
        %v3841 = vpack.c.b16 %v3169, %v3157
        %v3842 = vpack.c.b16 %v3170, %v3158
        %v3843 = vpack.c.b16 %v3171, %v3159
        %v3844 = vpack.c.b16 %v3172, %v3160
        %v3845 = vpack.c.b16 %v3173, %v3161
        %v3846 = vpack.c.b16 %v3186, %v3174
        %v3847 = vpack.c.b16 %v3187, %v3175
        %v3848 = vpack.c.b16 %v3188, %v3176
        %v3849 = vpack.c.b16 %v3189, %v3177
        %v3850 = vpack.c.b16 %v3190, %v3178
        %v3851 = vpack.c.b16 %v3191, %v3179
        %v3852 = vpack.c.b16 %v3192, %v3180
        %v3853 = vpack.c.b16 %v3193, %v3181
        %v3854 = vpack.c.b16 %v3194, %v3182
        %v3855 = vpack.c.b16 %v3195, %v3183
        %v3856 = vpack.c.b16 %v3196, %v3184
        %v3857 = vpack.c.b16 %v3197, %v3185
        %v3858 = vpack.c.b16 %v3210, %v3198
        %v3859 = vpack.c.b16 %v3211, %v3199
        %v3860 = vpack.c.b16 %v3212, %v3200
        %v3861 = vpack.c.b16 %v3213, %v3201
        %v3862 = vpack.c.b16 %v3214, %v3202
        %v3863 = vpack.c.b16 %v3215, %v3203
        %v3864 = vpack.c.b16 %v3216, %v3204
        %v3865 = vpack.c.b16 %v3217, %v3205
        %v3866 = vpack.c.b16 %v3218, %v3206
        %v3867 = vpack.c.b16 %v3219, %v3207
        %v3868 = vpack.c.b16 %v3220, %v3208
        %v3869 = vpack.c.b16 %v3221, %v3209
        %v3870 = vpack.c.b16 %v3234, %v3222
        %v3871 = vpack.c.b16 %v3235, %v3223
        %v3872 = vpack.c.b16 %v3236, %v3224
        %v3873 = vpack.c.b16 %v3237, %v3225
        %v3874 = vpack.c.b16 %v3238, %v3226
        %v3875 = vpack.c.b16 %v3239, %v3227
        %v3876 = vpack.c.b16 %v3240, %v3228
        %v3877 = vpack.c.b16 %v3241, %v3229
        %v3878 = vpack.c.b16 %v3242, %v3230
        %v3879 = vpack.c.b16 %v3243, %v3231
        %v3880 = vpack.c.b16 %v3244, %v3232
        %v3881 = vpack.c.b16 %v3245, %v3233
        %v3882 = vpack.c.b16 %v3258, %v3246
        %v3883 = vpack.c.b16 %v3259, %v3247
        %v3884 = vpack.c.b16 %v3260, %v3248
        %v3885 = vpack.c.b16 %v3261, %v3249
        %v3886 = vpack.c.b16 %v3262, %v3250
        %v3887 = vpack.c.b16 %v3263, %v3251
        %v3888 = vpack.c.b16 %v3264, %v3252
        %v3889 = vpack.c.b16 %v3265, %v3253
        %v3890 = vpack.c.b16 %v3266, %v3254
        %v3891 = vpack.c.b16 %v3267, %v3255
        %v3892 = vpack.c.b16 %v3268, %v3256
        %v3893 = vpack.c.b16 %v3269, %v3257
        %v3894 = vpack.c.b16 %v3282, %v3270
        %v3895 = vpack.c.b16 %v3283, %v3271
        %v3896 = vpack.c.b16 %v3284, %v3272
        %v3897 = vpack.c.b16 %v3285, %v3273
        %v3898 = vpack.c.b16 %v3286, %v3274
        %v3899 = vpack.c.b16 %v3287, %v3275
        %v3900 = vpack.c.b16 %v3288, %v3276
        %v3901 = vpack.c.b16 %v3289, %v3277
        %v3902 = vpack.c.b16 %v3290, %v3278
        %v3903 = vpack.c.b16 %v3291, %v3279
        %v3904 = vpack.c.b16 %v3292, %v3280
        %v3905 = vpack.c.b16 %v3293, %v3281
        %v3906 = vpack.c.b16 %v3306, %v3294
        %v3907 = vpack.c.b16 %v3307, %v3295
        %v3908 = vpack.c.b16 %v3308, %v3296
        %v3909 = vpack.c.b16 %v3309, %v3297
        %v3910 = vpack.c.b16 %v3310, %v3298
        %v3911 = vpack.c.b16 %v3311, %v3299
        %v3912 = vpack.c.b16 %v3312, %v3300
        %v3913 = vpack.c.b16 %v3313, %v3301
        %v3914 = vpack.c.b16 %v3314, %v3302
        %v3915 = vpack.c.b16 %v3315, %v3303
        %v3916 = vpack.c.b16 %v3316, %v3304
        %v3917 = vpack.c.b16 %v3317, %v3305
        %v3918 = vpack.c.b16 %v3330, %v3318
        %v3919 = vpack.c.b16 %v3331, %v3319
        %v3920 = vpack.c.b16 %v3332, %v3320
        %v3921 = vpack.c.b16 %v3333, %v3321
        %v3922 = vpack.c.b16 %v3334, %v3322
        %v3923 = vpack.c.b16 %v3335, %v3323
        %v3924 = vpack.c.b16 %v3336, %v3324
        %v3925 = vpack.c.b16 %v3337, %v3325
        %v3926 = vpack.c.b16 %v3338, %v3326
        %v3927 = vpack.c.b16 %v3339, %v3327
        %v3928 = vpack.c.b16 %v3340, %v3328
        %v3929 = vpack.c.b16 %v3341, %v3329
        %v3930 = vpack.c.b16 %v3354, %v3342
        %v3931 = vpack.c.b16 %v3355, %v3343
        %v3932 = vpack.c.b16 %v3356, %v3344
        %v3933 = vpack.c.b16 %v3357, %v3345
        %v3934 = vpack.c.b16 %v3358, %v3346
        %v3935 = vpack.c.b16 %v3359, %v3347
        %v3936 = vpack.c.b16 %v3360, %v3348
        %v3937 = vpack.c.b16 %v3361, %v3349
        %v3938 = vpack.c.b16 %v3362, %v3350
        %v3939 = vpack.c.b16 %v3363, %v3351
        %v3940 = vpack.c.b16 %v3364, %v3352
        %v3941 = vpack.c.b16 %v3365, %v3353
        %4518 = vmatprep.subr.bf16.mxu0 %v3367
        %4519 = vmatpush1.bf16.msra.mxu0 %v3366
        %4520 = vmatprep.subr.bf16.mxu0 %v3379
        %4521 = vmatpush1.bf16.msra.mxu0 %v3378
        %4522 = vmatprep.subr.bf16.mxu0 %v3391
        %4523 = vmatpush1.bf16.msra.mxu0 %v3390
        %4524 = vmatprep.subr.bf16.mxu0 %v3403
        %4525 = vmatpush1.bf16.msra.mxu0 %v3402
        %4526 = vmatprep.subr.bf16.mxu0 %v3415
        %4527 = vmatpush1.bf16.msra.mxu0 %v3414
        %4528 = vmatprep.subr.bf16.mxu0 %v3427
        %4529 = vmatpush1.bf16.msra.mxu0 %v3426
        %4530 = vmatprep.subr.bf16.mxu0 %v3439
        %4531 = vmatpush1.bf16.msra.mxu0 %v3438
        %4532 = vmatprep.subr.bf16.mxu0 %v3451
        %4533 = vmatpush1.bf16.msra.mxu0 %v3450
        %4534 = vmatprep.subr.bf16.mxu0 %v3463
        %4535 = vmatpush1.bf16.msra.mxu0 %v3462
        %4536 = vmatprep.subr.bf16.mxu0 %v3475
        %4537 = vmatpush1.bf16.msra.mxu0 %v3474
        %4538 = vmatprep.subr.bf16.mxu0 %v3487
        %4539 = vmatpush1.bf16.msra.mxu0 %v3486
        %4540 = vmatprep.subr.bf16.mxu0 %v3499
        %4541 = vmatpush1.bf16.msra.mxu0 %v3498
        %4542 = vmatprep.subr.bf16.mxu0 %v3511
        %4543 = vmatpush1.bf16.msra.mxu0 %v3510
        %4544 = vmatprep.subr.bf16.mxu0 %v3523
        %4545 = vmatpush1.bf16.msra.mxu0 %v3522
        %4546 = vmatprep.subr.bf16.mxu0 %v3535
        %4547 = vmatpush1.bf16.msra.mxu0 %v3534
        %4548 = vmatprep.subr.bf16.mxu0 %v3547
        %4549 = vmatpush1.bf16.msra.mxu0 %v3546
        %4550 = vmatprep.mubr.bf16.mxu0 %v1057
        %4551 = vmatmul.mubr.bf16.gmra.mrb[0].mxu0 %v1056
        %v4552 = vpop.f32.mrb[0].mxu0
        %v4553 = vadd.f32 0.0, %v4552
        %v4554 = vpop.f32.mrb[0].mxu0
        %v4555 = vadd.f32 0.0, %v4554
        %v4556 = vpop.f32.mrb[0].mxu0
        %v4557 = vpop.f32.mrb[0].mxu0
        %4558 = vdwg.mxu0
        %4559 = vmatprep.subr.bf16.mxu0 %v3559
        %4560 = vmatpush1.bf16.msra.mxu0 %v3558
        %4561 = vmatprep.subr.bf16.mxu0 %v3571
        %4562 = vmatpush1.bf16.msra.mxu0 %v3570
        %4563 = vmatprep.subr.bf16.mxu0 %v3583
        %4564 = vmatpush1.bf16.msra.mxu0 %v3582
        %4565 = vmatprep.subr.bf16.mxu0 %v3595
        %4566 = vmatpush1.bf16.msra.mxu0 %v3594
        %4567 = vmatprep.subr.bf16.mxu0 %v3607
        %4568 = vmatpush1.bf16.msra.mxu0 %v3606
        %4569 = vmatprep.subr.bf16.mxu0 %v3619
        %4570 = vmatpush1.bf16.msra.mxu0 %v3618
        %4571 = vmatprep.subr.bf16.mxu0 %v3631
        %4572 = vmatpush1.bf16.msra.mxu0 %v3630
        %4573 = vmatprep.subr.bf16.mxu0 %v3643
        %4574 = vmatpush1.bf16.msra.mxu0 %v3642
        %4575 = vmatprep.subr.bf16.mxu0 %v3655
        %4576 = vmatpush1.bf16.msra.mxu0 %v3654
        %4577 = vmatprep.subr.bf16.mxu0 %v3667
        %4578 = vmatpush1.bf16.msra.mxu0 %v3666
        %4579 = vmatprep.subr.bf16.mxu0 %v3679
        %4580 = vmatpush1.bf16.msra.mxu0 %v3678
        %4581 = vmatprep.subr.bf16.mxu0 %v3691
        %4582 = vmatpush1.bf16.msra.mxu0 %v3690
        %4583 = vmatprep.subr.bf16.mxu0 %v3703
        %4584 = vmatpush1.bf16.msra.mxu0 %v3702
        %4585 = vmatprep.subr.bf16.mxu0 %v3715
        %4586 = vmatpush1.bf16.msra.mxu0 %v3714
        %4587 = vmatprep.subr.bf16.mxu0 %v3727
        %4588 = vmatpush1.bf16.msra.mxu0 %v3726
        %4589 = vmatprep.subr.bf16.mxu0 %v3739
        %4590 = vmatpush1.bf16.msra.mxu0 %v3738
        %4591 = vmatprep.mubr.bf16.mxu0 %v1059
        %4592 = vmatmul.mubr.bf16.gmra.mrb[0].mxu0 %v1058
        %v4593 = vpop.f32.mrb[0].mxu0
        %v4594 = vadd.f32 %v4553, %v4593
        %v4595 = vpop.f32.mrb[0].mxu0
        %v4596 = vadd.f32 %v4555, %v4595
        %v4597 = vpop.f32.mrb[0].mxu0
        %v4598 = vpop.f32.mrb[0].mxu0
        %4599 = vdwg.mxu0
        %4600 = vmatprep.subr.bf16.mxu0 %v3751
        %4601 = vmatpush1.bf16.msra.mxu0 %v3750
        %4602 = vmatprep.subr.bf16.mxu0 %v3763
        %4603 = vmatpush1.bf16.msra.mxu0 %v3762
        %4604 = vmatprep.subr.bf16.mxu0 %v3775
        %4605 = vmatpush1.bf16.msra.mxu0 %v3774
        %4606 = vmatprep.subr.bf16.mxu0 %v3787
        %4607 = vmatpush1.bf16.msra.mxu0 %v3786
        %4608 = vmatprep.subr.bf16.mxu0 %v3799
        %4609 = vmatpush1.bf16.msra.mxu0 %v3798
        %4610 = vmatprep.subr.bf16.mxu0 %v3811
        %4611 = vmatpush1.bf16.msra.mxu0 %v3810
        %4612 = vmatprep.subr.bf16.mxu0 %v3823
        %4613 = vmatpush1.bf16.msra.mxu0 %v3822
        %4614 = vmatprep.subr.bf16.mxu0 %v3835
        %4615 = vmatpush1.bf16.msra.mxu0 %v3834
        %4616 = vmatprep.subr.bf16.mxu0 %v3847
        %4617 = vmatpush1.bf16.msra.mxu0 %v3846
        %4618 = vmatprep.subr.bf16.mxu0 %v3859
        %4619 = vmatpush1.bf16.msra.mxu0 %v3858
        %4620 = vmatprep.subr.bf16.mxu0 %v3871
        %4621 = vmatpush1.bf16.msra.mxu0 %v3870
        %4622 = vmatprep.subr.bf16.mxu0 %v3883
        %4623 = vmatpush1.bf16.msra.mxu0 %v3882
        %4624 = vmatprep.subr.bf16.mxu0 %v3895
        %4625 = vmatpush1.bf16.msra.mxu0 %v3894
        %4626 = vmatprep.subr.bf16.mxu0 %v3907
        %4627 = vmatpush1.bf16.msra.mxu0 %v3906
        %4628 = vmatprep.subr.bf16.mxu0 %v3919
        %4629 = vmatpush1.bf16.msra.mxu0 %v3918
        %4630 = vmatprep.subr.bf16.mxu0 %v3931
        %4631 = vmatpush1.bf16.msra.mxu0 %v3930
        %4632 = vmatprep.mubr.bf16.mxu0 %v1061
        %4633 = vmatmul.mubr.bf16.gmra.mrb[0].mxu0 %v1060
        %v4634 = vpop.f32.mrb[0].mxu0
        %v4635 = vadd.f32 %v4594, %v4634
        %v4636 = vpop.f32.mrb[0].mxu0
        %v4637 = vadd.f32 %v4596, %v4636
        %v4638 = vpop.f32.mrb[0].mxu0
        %v4639 = vpop.f32.mrb[0].mxu0
        %4640 = vdwg.mxu0
        %4641 = vmatprep.subr.bf16.mxu0 %v3369
        %4642 = vmatpush1.bf16.msra.mxu0 %v3368
        %4643 = vmatprep.subr.bf16.mxu0 %v3381
        %4644 = vmatpush1.bf16.msra.mxu0 %v3380
        %4645 = vmatprep.subr.bf16.mxu0 %v3393
        %4646 = vmatpush1.bf16.msra.mxu0 %v3392
        %4647 = vmatprep.subr.bf16.mxu0 %v3405
        %4648 = vmatpush1.bf16.msra.mxu0 %v3404
        %4649 = vmatprep.subr.bf16.mxu0 %v3417
        %4650 = vmatpush1.bf16.msra.mxu0 %v3416
        %4651 = vmatprep.subr.bf16.mxu0 %v3429
        %4652 = vmatpush1.bf16.msra.mxu0 %v3428
        %4653 = vmatprep.subr.bf16.mxu0 %v3441
        %4654 = vmatpush1.bf16.msra.mxu0 %v3440
        %4655 = vmatprep.subr.bf16.mxu0 %v3453
        %4656 = vmatpush1.bf16.msra.mxu0 %v3452
        %4657 = vmatprep.subr.bf16.mxu0 %v3465
        %4658 = vmatpush1.bf16.msra.mxu0 %v3464
        %4659 = vmatprep.subr.bf16.mxu0 %v3477
        %4660 = vmatpush1.bf16.msra.mxu0 %v3476
        %4661 = vmatprep.subr.bf16.mxu0 %v3489
        %4662 = vmatpush1.bf16.msra.mxu0 %v3488
        %4663 = vmatprep.subr.bf16.mxu0 %v3501
        %4664 = vmatpush1.bf16.msra.mxu0 %v3500
        %4665 = vmatprep.subr.bf16.mxu0 %v3513
        %4666 = vmatpush1.bf16.msra.mxu0 %v3512
        %4667 = vmatprep.subr.bf16.mxu0 %v3525
        %4668 = vmatpush1.bf16.msra.mxu0 %v3524
        %4669 = vmatprep.subr.bf16.mxu0 %v3537
        %4670 = vmatpush1.bf16.msra.mxu0 %v3536
        %4671 = vmatprep.subr.bf16.mxu0 %v3549
        %4672 = vmatpush1.bf16.msra.mxu0 %v3548
        %4673 = vmatprep.mubr.bf16.mxu0 %v1057
        %4674 = vmatmul.mubr.bf16.gmra.mrb[0].mxu0 %v1056
        %v4675 = vpop.f32.mrb[0].mxu0
        %v4676 = vadd.f32 0.0, %v4675
        %v4677 = vpop.f32.mrb[0].mxu0
        %v4678 = vadd.f32 0.0, %v4677
        %v4679 = vpop.f32.mrb[0].mxu0
        %v4680 = vpop.f32.mrb[0].mxu0
        %4681 = vdwg.mxu0
        %4682 = vmatprep.subr.bf16.mxu0 %v3561
        %4683 = vmatpush1.bf16.msra.mxu0 %v3560
        %4684 = vmatprep.subr.bf16.mxu0 %v3573
        %4685 = vmatpush1.bf16.msra.mxu0 %v3572
        %4686 = vmatprep.subr.bf16.mxu0 %v3585
        %4687 = vmatpush1.bf16.msra.mxu0 %v3584
        %4688 = vmatprep.subr.bf16.mxu0 %v3597
        %4689 = vmatpush1.bf16.msra.mxu0 %v3596
        %4690 = vmatprep.subr.bf16.mxu0 %v3609
        %4691 = vmatpush1.bf16.msra.mxu0 %v3608
        %4692 = vmatprep.subr.bf16.mxu0 %v3621
        %4693 = vmatpush1.bf16.msra.mxu0 %v3620
        %4694 = vmatprep.subr.bf16.mxu0 %v3633
        %4695 = vmatpush1.bf16.msra.mxu0 %v3632
        %4696 = vmatprep.subr.bf16.mxu0 %v3645
        %4697 = vmatpush1.bf16.msra.mxu0 %v3644
        %4698 = vmatprep.subr.bf16.mxu0 %v3657
        %4699 = vmatpush1.bf16.msra.mxu0 %v3656
        %4700 = vmatprep.subr.bf16.mxu0 %v3669
        %4701 = vmatpush1.bf16.msra.mxu0 %v3668
        %4702 = vmatprep.subr.bf16.mxu0 %v3681
        %4703 = vmatpush1.bf16.msra.mxu0 %v3680
        %4704 = vmatprep.subr.bf16.mxu0 %v3693
        %4705 = vmatpush1.bf16.msra.mxu0 %v3692
        %4706 = vmatprep.subr.bf16.mxu0 %v3705
        %4707 = vmatpush1.bf16.msra.mxu0 %v3704
        %4708 = vmatprep.subr.bf16.mxu0 %v3717
        %4709 = vmatpush1.bf16.msra.mxu0 %v3716
        %4710 = vmatprep.subr.bf16.mxu0 %v3729
        %4711 = vmatpush1.bf16.msra.mxu0 %v3728
        %4712 = vmatprep.subr.bf16.mxu0 %v3741
        %4713 = vmatpush1.bf16.msra.mxu0 %v3740
        %4714 = vmatprep.mubr.bf16.mxu0 %v1059
        %4715 = vmatmul.mubr.bf16.gmra.mrb[0].mxu0 %v1058
        %v4716 = vpop.f32.mrb[0].mxu0
        %v4717 = vadd.f32 %v4676, %v4716
        %v4718 = vpop.f32.mrb[0].mxu0
        %v4719 = vadd.f32 %v4678, %v4718
        %v4720 = vpop.f32.mrb[0].mxu0
        %v4721 = vpop.f32.mrb[0].mxu0
        %4722 = vdwg.mxu0
        %4723 = vmatprep.subr.bf16.mxu0 %v3753
        %4724 = vmatpush1.bf16.msra.mxu0 %v3752
        %4725 = vmatprep.subr.bf16.mxu0 %v3765
        %4726 = vmatpush1.bf16.msra.mxu0 %v3764
        %4727 = vmatprep.subr.bf16.mxu0 %v3777
        %4728 = vmatpush1.bf16.msra.mxu0 %v3776
        %4729 = vmatprep.subr.bf16.mxu0 %v3789
        %4730 = vmatpush1.bf16.msra.mxu0 %v3788
        %4731 = vmatprep.subr.bf16.mxu0 %v3801
        %4732 = vmatpush1.bf16.msra.mxu0 %v3800
        %4733 = vmatprep.subr.bf16.mxu0 %v3813
        %4734 = vmatpush1.bf16.msra.mxu0 %v3812
        %4735 = vmatprep.subr.bf16.mxu0 %v3825
        %4736 = vmatpush1.bf16.msra.mxu0 %v3824
        %4737 = vmatprep.subr.bf16.mxu0 %v3837
        %4738 = vmatpush1.bf16.msra.mxu0 %v3836
        %4739 = vmatprep.subr.bf16.mxu0 %v3849
        %4740 = vmatpush1.bf16.msra.mxu0 %v3848
        %4741 = vmatprep.subr.bf16.mxu0 %v3861
        %4742 = vmatpush1.bf16.msra.mxu0 %v3860
        %4743 = vmatprep.subr.bf16.mxu0 %v3873
        %4744 = vmatpush1.bf16.msra.mxu0 %v3872
        %4745 = vmatprep.subr.bf16.mxu0 %v3885
        %4746 = vmatpush1.bf16.msra.mxu0 %v3884
        %4747 = vmatprep.subr.bf16.mxu0 %v3897
        %4748 = vmatpush1.bf16.msra.mxu0 %v3896
        %4749 = vmatprep.subr.bf16.mxu0 %v3909
        %4750 = vmatpush1.bf16.msra.mxu0 %v3908
        %4751 = vmatprep.subr.bf16.mxu0 %v3921
        %4752 = vmatpush1.bf16.msra.mxu0 %v3920
        %4753 = vmatprep.subr.bf16.mxu0 %v3933
        %4754 = vmatpush1.bf16.msra.mxu0 %v3932
        %4755 = vmatprep.mubr.bf16.mxu0 %v1061
        %4756 = vmatmul.mubr.bf16.gmra.mrb[0].mxu0 %v1060
        %v4757 = vpop.f32.mrb[0].mxu0
        %v4758 = vadd.f32 %v4717, %v4757
        %v4759 = vpop.f32.mrb[0].mxu0
        %v4760 = vadd.f32 %v4719, %v4759
        %v4761 = vpop.f32.mrb[0].mxu0
        %v4762 = vpop.f32.mrb[0].mxu0
        %4763 = vdwg.mxu0
        %4764 = vmatprep.subr.bf16.mxu0 %v3371
        %4765 = vmatpush1.bf16.msra.mxu0 %v3370
        %4766 = vmatprep.subr.bf16.mxu0 %v3383
        %4767 = vmatpush1.bf16.msra.mxu0 %v3382
        %4768 = vmatprep.subr.bf16.mxu0 %v3395
        %4769 = vmatpush1.bf16.msra.mxu0 %v3394
        %4770 = vmatprep.subr.bf16.mxu0 %v3407
        %4771 = vmatpush1.bf16.msra.mxu0 %v3406
        %4772 = vmatprep.subr.bf16.mxu0 %v3419
        %4773 = vmatpush1.bf16.msra.mxu0 %v3418
        %4774 = vmatprep.subr.bf16.mxu0 %v3431
        %4775 = vmatpush1.bf16.msra.mxu0 %v3430
        %4776 = vmatprep.subr.bf16.mxu0 %v3443
        %4777 = vmatpush1.bf16.msra.mxu0 %v3442
        %4778 = vmatprep.subr.bf16.mxu0 %v3455
        %4779 = vmatpush1.bf16.msra.mxu0 %v3454
        %4780 = vmatprep.subr.bf16.mxu0 %v3467
        %4781 = vmatpush1.bf16.msra.mxu0 %v3466
        %4782 = vmatprep.subr.bf16.mxu0 %v3479
        %4783 = vmatpush1.bf16.msra.mxu0 %v3478
        %4784 = vmatprep.subr.bf16.mxu0 %v3491
        %4785 = vmatpush1.bf16.msra.mxu0 %v3490
        %4786 = vmatprep.subr.bf16.mxu0 %v3503
        %4787 = vmatpush1.bf16.msra.mxu0 %v3502
        %4788 = vmatprep.subr.bf16.mxu0 %v3515
        %4789 = vmatpush1.bf16.msra.mxu0 %v3514
        %4790 = vmatprep.subr.bf16.mxu0 %v3527
        %4791 = vmatpush1.bf16.msra.mxu0 %v3526
        %4792 = vmatprep.subr.bf16.mxu0 %v3539
        %4793 = vmatpush1.bf16.msra.mxu0 %v3538
        %4794 = vmatprep.subr.bf16.mxu0 %v3551
        %4795 = vmatpush1.bf16.msra.mxu0 %v3550
        %4796 = vmatprep.mubr.bf16.mxu0 %v1057
        %4797 = vmatmul.mubr.bf16.gmra.mrb[0].mxu0 %v1056
        %v4798 = vpop.f32.mrb[0].mxu0
        %v4799 = vadd.f32 0.0, %v4798
        %v4800 = vpop.f32.mrb[0].mxu0
        %v4801 = vadd.f32 0.0, %v4800
        %v4802 = vpop.f32.mrb[0].mxu0
        %v4803 = vpop.f32.mrb[0].mxu0
        %4804 = vdwg.mxu0
        %4805 = vmatprep.subr.bf16.mxu0 %v3563
        %4806 = vmatpush1.bf16.msra.mxu0 %v3562
        %4807 = vmatprep.subr.bf16.mxu0 %v3575
        %4808 = vmatpush1.bf16.msra.mxu0 %v3574
        %4809 = vmatprep.subr.bf16.mxu0 %v3587
        %4810 = vmatpush1.bf16.msra.mxu0 %v3586
        %4811 = vmatprep.subr.bf16.mxu0 %v3599
        %4812 = vmatpush1.bf16.msra.mxu0 %v3598
        %4813 = vmatprep.subr.bf16.mxu0 %v3611
        %4814 = vmatpush1.bf16.msra.mxu0 %v3610
        %4815 = vmatprep.subr.bf16.mxu0 %v3623
        %4816 = vmatpush1.bf16.msra.mxu0 %v3622
        %4817 = vmatprep.subr.bf16.mxu0 %v3635
        %4818 = vmatpush1.bf16.msra.mxu0 %v3634
        %4819 = vmatprep.subr.bf16.mxu0 %v3647
        %4820 = vmatpush1.bf16.msra.mxu0 %v3646
        %4821 = vmatprep.subr.bf16.mxu0 %v3659
        %4822 = vmatpush1.bf16.msra.mxu0 %v3658
        %4823 = vmatprep.subr.bf16.mxu0 %v3671
        %4824 = vmatpush1.bf16.msra.mxu0 %v3670
        %4825 = vmatprep.subr.bf16.mxu0 %v3683
        %4826 = vmatpush1.bf16.msra.mxu0 %v3682
        %4827 = vmatprep.subr.bf16.mxu0 %v3695
        %4828 = vmatpush1.bf16.msra.mxu0 %v3694
        %4829 = vmatprep.subr.bf16.mxu0 %v3707
        %4830 = vmatpush1.bf16.msra.mxu0 %v3706
        %4831 = vmatprep.subr.bf16.mxu0 %v3719
        %4832 = vmatpush1.bf16.msra.mxu0 %v3718
        %4833 = vmatprep.subr.bf16.mxu0 %v3731
        %4834 = vmatpush1.bf16.msra.mxu0 %v3730
        %4835 = vmatprep.subr.bf16.mxu0 %v3743
        %4836 = vmatpush1.bf16.msra.mxu0 %v3742
        %4837 = vmatprep.mubr.bf16.mxu0 %v1059
        %4838 = vmatmul.mubr.bf16.gmra.mrb[0].mxu0 %v1058
        %v4839 = vpop.f32.mrb[0].mxu0
        %v4840 = vadd.f32 %v4799, %v4839
        %v4841 = vpop.f32.mrb[0].mxu0
        %v4842 = vadd.f32 %v4801, %v4841
        %v4843 = vpop.f32.mrb[0].mxu0
        %v4844 = vpop.f32.mrb[0].mxu0
        %4845 = vdwg.mxu0
        %4846 = vmatprep.subr.bf16.mxu0 %v3755
        %4847 = vmatpush1.bf16.msra.mxu0 %v3754
        %4848 = vmatprep.subr.bf16.mxu0 %v3767
        %4849 = vmatpush1.bf16.msra.mxu0 %v3766
        %4850 = vmatprep.subr.bf16.mxu0 %v3779
        %4851 = vmatpush1.bf16.msra.mxu0 %v3778
        %4852 = vmatprep.subr.bf16.mxu0 %v3791
        %4853 = vmatpush1.bf16.msra.mxu0 %v3790
        %4854 = vmatprep.subr.bf16.mxu0 %v3803
        %4855 = vmatpush1.bf16.msra.mxu0 %v3802
        %4856 = vmatprep.subr.bf16.mxu0 %v3815
        %4857 = vmatpush1.bf16.msra.mxu0 %v3814
        %4858 = vmatprep.subr.bf16.mxu0 %v3827
        %4859 = vmatpush1.bf16.msra.mxu0 %v3826
        %4860 = vmatprep.subr.bf16.mxu0 %v3839
        %4861 = vmatpush1.bf16.msra.mxu0 %v3838
        %4862 = vmatprep.subr.bf16.mxu0 %v3851
        %4863 = vmatpush1.bf16.msra.mxu0 %v3850
        %4864 = vmatprep.subr.bf16.mxu0 %v3863
        %4865 = vmatpush1.bf16.msra.mxu0 %v3862
        %4866 = vmatprep.subr.bf16.mxu0 %v3875
        %4867 = vmatpush1.bf16.msra.mxu0 %v3874
        %4868 = vmatprep.subr.bf16.mxu0 %v3887
        %4869 = vmatpush1.bf16.msra.mxu0 %v3886
        %4870 = vmatprep.subr.bf16.mxu0 %v3899
        %4871 = vmatpush1.bf16.msra.mxu0 %v3898
        %4872 = vmatprep.subr.bf16.mxu0 %v3911
        %4873 = vmatpush1.bf16.msra.mxu0 %v3910
        %4874 = vmatprep.subr.bf16.mxu0 %v3923
        %4875 = vmatpush1.bf16.msra.mxu0 %v3922
        %4876 = vmatprep.subr.bf16.mxu0 %v3935
        %4877 = vmatpush1.bf16.msra.mxu0 %v3934
        %4878 = vmatprep.mubr.bf16.mxu0 %v1061
        %4879 = vmatmul.mubr.bf16.gmra.mrb[0].mxu0 %v1060
        %v4880 = vpop.f32.mrb[0].mxu0
        %v4881 = vadd.f32 %v4840, %v4880
        %v4882 = vpop.f32.mrb[0].mxu0
        %v4883 = vadd.f32 %v4842, %v4882
        %v4884 = vpop.f32.mrb[0].mxu0
        %v4885 = vpop.f32.mrb[0].mxu0
        %4886 = vdwg.mxu0
        %4887 = vmatprep.subr.bf16.mxu0 %v3373
        %4888 = vmatpush1.bf16.msra.mxu0 %v3372
        %4889 = vmatprep.subr.bf16.mxu0 %v3385
        %4890 = vmatpush1.bf16.msra.mxu0 %v3384
        %4891 = vmatprep.subr.bf16.mxu0 %v3397
        %4892 = vmatpush1.bf16.msra.mxu0 %v3396
        %4893 = vmatprep.subr.bf16.mxu0 %v3409
        %4894 = vmatpush1.bf16.msra.mxu0 %v3408
        %4895 = vmatprep.subr.bf16.mxu0 %v3421
        %4896 = vmatpush1.bf16.msra.mxu0 %v3420
        %4897 = vmatprep.subr.bf16.mxu0 %v3433
        %4898 = vmatpush1.bf16.msra.mxu0 %v3432
        %4899 = vmatprep.subr.bf16.mxu0 %v3445
        %4900 = vmatpush1.bf16.msra.mxu0 %v3444
        %4901 = vmatprep.subr.bf16.mxu0 %v3457
        %4902 = vmatpush1.bf16.msra.mxu0 %v3456
        %4903 = vmatprep.subr.bf16.mxu0 %v3469
        %4904 = vmatpush1.bf16.msra.mxu0 %v3468
        %4905 = vmatprep.subr.bf16.mxu0 %v3481
        %4906 = vmatpush1.bf16.msra.mxu0 %v3480
        %4907 = vmatprep.subr.bf16.mxu0 %v3493
        %4908 = vmatpush1.bf16.msra.mxu0 %v3492
        %4909 = vmatprep.subr.bf16.mxu0 %v3505
        %4910 = vmatpush1.bf16.msra.mxu0 %v3504
        %4911 = vmatprep.subr.bf16.mxu0 %v3517
        %4912 = vmatpush1.bf16.msra.mxu0 %v3516
        %4913 = vmatprep.subr.bf16.mxu0 %v3529
        %4914 = vmatpush1.bf16.msra.mxu0 %v3528
        %4915 = vmatprep.subr.bf16.mxu0 %v3541
        %4916 = vmatpush1.bf16.msra.mxu0 %v3540
        %4917 = vmatprep.subr.bf16.mxu0 %v3553
        %4918 = vmatpush1.bf16.msra.mxu0 %v3552
        %4919 = vmatprep.mubr.bf16.mxu0 %v1057
        %4920 = vmatmul.mubr.bf16.gmra.mrb[0].mxu0 %v1056
        %v4921 = vpop.f32.mrb[0].mxu0
        %v4922 = vadd.f32 0.0, %v4921
        %v4923 = vpop.f32.mrb[0].mxu0
        %v4924 = vadd.f32 0.0, %v4923
        %v4925 = vpop.f32.mrb[0].mxu0
        %v4926 = vpop.f32.mrb[0].mxu0
        %4927 = vdwg.mxu0
        %4928 = vmatprep.subr.bf16.mxu0 %v3565
        %4929 = vmatpush1.bf16.msra.mxu0 %v3564
        %4930 = vmatprep.subr.bf16.mxu0 %v3577
        %4931 = vmatpush1.bf16.msra.mxu0 %v3576
        %4932 = vmatprep.subr.bf16.mxu0 %v3589
        %4933 = vmatpush1.bf16.msra.mxu0 %v3588
        %4934 = vmatprep.subr.bf16.mxu0 %v3601
        %4935 = vmatpush1.bf16.msra.mxu0 %v3600
        %4936 = vmatprep.subr.bf16.mxu0 %v3613
        %4937 = vmatpush1.bf16.msra.mxu0 %v3612
        %4938 = vmatprep.subr.bf16.mxu0 %v3625
        %4939 = vmatpush1.bf16.msra.mxu0 %v3624
        %4940 = vmatprep.subr.bf16.mxu0 %v3637
        %4941 = vmatpush1.bf16.msra.mxu0 %v3636
        %4942 = vmatprep.subr.bf16.mxu0 %v3649
        %4943 = vmatpush1.bf16.msra.mxu0 %v3648
        %4944 = vmatprep.subr.bf16.mxu0 %v3661
        %4945 = vmatpush1.bf16.msra.mxu0 %v3660
        %4946 = vmatprep.subr.bf16.mxu0 %v3673
        %4947 = vmatpush1.bf16.msra.mxu0 %v3672
        %4948 = vmatprep.subr.bf16.mxu0 %v3685
        %4949 = vmatpush1.bf16.msra.mxu0 %v3684
        %4950 = vmatprep.subr.bf16.mxu0 %v3697
        %4951 = vmatpush1.bf16.msra.mxu0 %v3696
        %4952 = vmatprep.subr.bf16.mxu0 %v3709
        %4953 = vmatpush1.bf16.msra.mxu0 %v3708
        %4954 = vmatprep.subr.bf16.mxu0 %v3721
        %4955 = vmatpush1.bf16.msra.mxu0 %v3720
        %4956 = vmatprep.subr.bf16.mxu0 %v3733
        %4957 = vmatpush1.bf16.msra.mxu0 %v3732
        %4958 = vmatprep.subr.bf16.mxu0 %v3745
        %4959 = vmatpush1.bf16.msra.mxu0 %v3744
        %4960 = vmatprep.mubr.bf16.mxu0 %v1059
        %4961 = vmatmul.mubr.bf16.gmra.mrb[0].mxu0 %v1058
        %v4962 = vpop.f32.mrb[0].mxu0
        %v4963 = vadd.f32 %v4922, %v4962
        %v4964 = vpop.f32.mrb[0].mxu0
        %v4965 = vadd.f32 %v4924, %v4964
        %v4966 = vpop.f32.mrb[0].mxu0
        %v4967 = vpop.f32.mrb[0].mxu0
        %4968 = vdwg.mxu0
        %4969 = vmatprep.subr.bf16.mxu0 %v3757
        %4970 = vmatpush1.bf16.msra.mxu0 %v3756
        %4971 = vmatprep.subr.bf16.mxu0 %v3769
        %4972 = vmatpush1.bf16.msra.mxu0 %v3768
        %4973 = vmatprep.subr.bf16.mxu0 %v3781
        %4974 = vmatpush1.bf16.msra.mxu0 %v3780
        %4975 = vmatprep.subr.bf16.mxu0 %v3793
        %4976 = vmatpush1.bf16.msra.mxu0 %v3792
        %4977 = vmatprep.subr.bf16.mxu0 %v3805
        %4978 = vmatpush1.bf16.msra.mxu0 %v3804
        %4979 = vmatprep.subr.bf16.mxu0 %v3817
        %4980 = vmatpush1.bf16.msra.mxu0 %v3816
        %4981 = vmatprep.subr.bf16.mxu0 %v3829
        %4982 = vmatpush1.bf16.msra.mxu0 %v3828
        %4983 = vmatprep.subr.bf16.mxu0 %v3841
        %4984 = vmatpush1.bf16.msra.mxu0 %v3840
        %4985 = vmatprep.subr.bf16.mxu0 %v3853
        %4986 = vmatpush1.bf16.msra.mxu0 %v3852
        %4987 = vmatprep.subr.bf16.mxu0 %v3865
        %4988 = vmatpush1.bf16.msra.mxu0 %v3864
        %4989 = vmatprep.subr.bf16.mxu0 %v3877
        %4990 = vmatpush1.bf16.msra.mxu0 %v3876
        %4991 = vmatprep.subr.bf16.mxu0 %v3889
        %4992 = vmatpush1.bf16.msra.mxu0 %v3888
        %4993 = vmatprep.subr.bf16.mxu0 %v3901
        %4994 = vmatpush1.bf16.msra.mxu0 %v3900
        %4995 = vmatprep.subr.bf16.mxu0 %v3913
        %4996 = vmatpush1.bf16.msra.mxu0 %v3912
        %4997 = vmatprep.subr.bf16.mxu0 %v3925
        %4998 = vmatpush1.bf16.msra.mxu0 %v3924
        %4999 = vmatprep.subr.bf16.mxu0 %v3937
        %5000 = vmatpush1.bf16.msra.mxu0 %v3936
        %5001 = vmatprep.mubr.bf16.mxu0 %v1061
        %5002 = vmatmul.mubr.bf16.gmra.mrb[0].mxu0 %v1060
        %v5003 = vpop.f32.mrb[0].mxu0
        %v5004 = vadd.f32 %v4963, %v5003
        %v5005 = vpop.f32.mrb[0].mxu0
        %v5006 = vadd.f32 %v4965, %v5005
        %v5007 = vpop.f32.mrb[0].mxu0
        %v5008 = vpop.f32.mrb[0].mxu0
        %5009 = vdwg.mxu0
        %5010 = vmatprep.subr.bf16.mxu0 %v3375
        %5011 = vmatpush1.bf16.msra.mxu0 %v3374
        %5012 = vmatprep.subr.bf16.mxu0 %v3387
        %5013 = vmatpush1.bf16.msra.mxu0 %v3386
        %5014 = vmatprep.subr.bf16.mxu0 %v3399
        %5015 = vmatpush1.bf16.msra.mxu0 %v3398
        %5016 = vmatprep.subr.bf16.mxu0 %v3411
        %5017 = vmatpush1.bf16.msra.mxu0 %v3410
        %5018 = vmatprep.subr.bf16.mxu0 %v3423
        %5019 = vmatpush1.bf16.msra.mxu0 %v3422
        %5020 = vmatprep.subr.bf16.mxu0 %v3435
        %5021 = vmatpush1.bf16.msra.mxu0 %v3434
        %5022 = vmatprep.subr.bf16.mxu0 %v3447
        %5023 = vmatpush1.bf16.msra.mxu0 %v3446
        %5024 = vmatprep.subr.bf16.mxu0 %v3459
        %5025 = vmatpush1.bf16.msra.mxu0 %v3458
        %5026 = vmatprep.subr.bf16.mxu0 %v3471
        %5027 = vmatpush1.bf16.msra.mxu0 %v3470
        %5028 = vmatprep.subr.bf16.mxu0 %v3483
        %5029 = vmatpush1.bf16.msra.mxu0 %v3482
        %5030 = vmatprep.subr.bf16.mxu0 %v3495
        %5031 = vmatpush1.bf16.msra.mxu0 %v3494
        %5032 = vmatprep.subr.bf16.mxu0 %v3507
        %5033 = vmatpush1.bf16.msra.mxu0 %v3506
        %5034 = vmatprep.subr.bf16.mxu0 %v3519
        %5035 = vmatpush1.bf16.msra.mxu0 %v3518
        %5036 = vmatprep.subr.bf16.mxu0 %v3531
        %5037 = vmatpush1.bf16.msra.mxu0 %v3530
        %5038 = vmatprep.subr.bf16.mxu0 %v3543
        %5039 = vmatpush1.bf16.msra.mxu0 %v3542
        %5040 = vmatprep.subr.bf16.mxu0 %v3555
        %5041 = vmatpush1.bf16.msra.mxu0 %v3554
        %5042 = vmatprep.mubr.bf16.mxu0 %v1057
        %5043 = vmatmul.mubr.bf16.gmra.mrb[0].mxu0 %v1056
        %v5044 = vpop.f32.mrb[0].mxu0
        %v5045 = vadd.f32 0.0, %v5044
        %v5046 = vpop.f32.mrb[0].mxu0
        %v5047 = vadd.f32 0.0, %v5046
        %v5048 = vpop.f32.mrb[0].mxu0
        %v5049 = vpop.f32.mrb[0].mxu0
        %5050 = vdwg.mxu0
        %5051 = vmatprep.subr.bf16.mxu0 %v3567
        %5052 = vmatpush1.bf16.msra.mxu0 %v3566
        %5053 = vmatprep.subr.bf16.mxu0 %v3579
        %5054 = vmatpush1.bf16.msra.mxu0 %v3578
        %5055 = vmatprep.subr.bf16.mxu0 %v3591
        %5056 = vmatpush1.bf16.msra.mxu0 %v3590
        %5057 = vmatprep.subr.bf16.mxu0 %v3603
        %5058 = vmatpush1.bf16.msra.mxu0 %v3602
        %5059 = vmatprep.subr.bf16.mxu0 %v3615
        %5060 = vmatpush1.bf16.msra.mxu0 %v3614
        %5061 = vmatprep.subr.bf16.mxu0 %v3627
        %5062 = vmatpush1.bf16.msra.mxu0 %v3626
        %5063 = vmatprep.subr.bf16.mxu0 %v3639
        %5064 = vmatpush1.bf16.msra.mxu0 %v3638
        %5065 = vmatprep.subr.bf16.mxu0 %v3651
        %5066 = vmatpush1.bf16.msra.mxu0 %v3650
        %5067 = vmatprep.subr.bf16.mxu0 %v3663
        %5068 = vmatpush1.bf16.msra.mxu0 %v3662
        %5069 = vmatprep.subr.bf16.mxu0 %v3675
        %5070 = vmatpush1.bf16.msra.mxu0 %v3674
        %5071 = vmatprep.subr.bf16.mxu0 %v3687
        %5072 = vmatpush1.bf16.msra.mxu0 %v3686
        %5073 = vmatprep.subr.bf16.mxu0 %v3699
        %5074 = vmatpush1.bf16.msra.mxu0 %v3698
        %5075 = vmatprep.subr.bf16.mxu0 %v3711
        %5076 = vmatpush1.bf16.msra.mxu0 %v3710
        %5077 = vmatprep.subr.bf16.mxu0 %v3723
        %5078 = vmatpush1.bf16.msra.mxu0 %v3722
        %5079 = vmatprep.subr.bf16.mxu0 %v3735
        %5080 = vmatpush1.bf16.msra.mxu0 %v3734
        %5081 = vmatprep.subr.bf16.mxu0 %v3747
        %5082 = vmatpush1.bf16.msra.mxu0 %v3746
        %5083 = vmatprep.mubr.bf16.mxu0 %v1059
        %5084 = vmatmul.mubr.bf16.gmra.mrb[0].mxu0 %v1058
        %v5085 = vpop.f32.mrb[0].mxu0
        %v5086 = vadd.f32 %v5045, %v5085
        %v5087 = vpop.f32.mrb[0].mxu0
        %v5088 = vadd.f32 %v5047, %v5087
        %v5089 = vpop.f32.mrb[0].mxu0
        %v5090 = vpop.f32.mrb[0].mxu0
        %5091 = vdwg.mxu0
        %5092 = vmatprep.subr.bf16.mxu0 %v3759
        %5093 = vmatpush1.bf16.msra.mxu0 %v3758
        %5094 = vmatprep.subr.bf16.mxu0 %v3771
        %5095 = vmatpush1.bf16.msra.mxu0 %v3770
        %5096 = vmatprep.subr.bf16.mxu0 %v3783
        %5097 = vmatpush1.bf16.msra.mxu0 %v3782
        %5098 = vmatprep.subr.bf16.mxu0 %v3795
        %5099 = vmatpush1.bf16.msra.mxu0 %v3794
        %5100 = vmatprep.subr.bf16.mxu0 %v3807
        %5101 = vmatpush1.bf16.msra.mxu0 %v3806
        %5102 = vmatprep.subr.bf16.mxu0 %v3819
        %5103 = vmatpush1.bf16.msra.mxu0 %v3818
        %5104 = vmatprep.subr.bf16.mxu0 %v3831
        %5105 = vmatpush1.bf16.msra.mxu0 %v3830
        %5106 = vmatprep.subr.bf16.mxu0 %v3843
        %5107 = vmatpush1.bf16.msra.mxu0 %v3842
        %5108 = vmatprep.subr.bf16.mxu0 %v3855
        %5109 = vmatpush1.bf16.msra.mxu0 %v3854
        %5110 = vmatprep.subr.bf16.mxu0 %v3867
        %5111 = vmatpush1.bf16.msra.mxu0 %v3866
        %5112 = vmatprep.subr.bf16.mxu0 %v3879
        %5113 = vmatpush1.bf16.msra.mxu0 %v3878
        %5114 = vmatprep.subr.bf16.mxu0 %v3891
        %5115 = vmatpush1.bf16.msra.mxu0 %v3890
        %5116 = vmatprep.subr.bf16.mxu0 %v3903
        %5117 = vmatpush1.bf16.msra.mxu0 %v3902
        %5118 = vmatprep.subr.bf16.mxu0 %v3915
        %5119 = vmatpush1.bf16.msra.mxu0 %v3914
        %5120 = vmatprep.subr.bf16.mxu0 %v3927
        %5121 = vmatpush1.bf16.msra.mxu0 %v3926
        %5122 = vmatprep.subr.bf16.mxu0 %v3939
        %5123 = vmatpush1.bf16.msra.mxu0 %v3938
        %5124 = vmatprep.mubr.bf16.mxu0 %v1061
        %5125 = vmatmul.mubr.bf16.gmra.mrb[0].mxu0 %v1060
        %v5126 = vpop.f32.mrb[0].mxu0
        %v5127 = vadd.f32 %v5086, %v5126
        %v5128 = vpop.f32.mrb[0].mxu0
        %v5129 = vadd.f32 %v5088, %v5128
        %v5130 = vpop.f32.mrb[0].mxu0
        %v5131 = vpop.f32.mrb[0].mxu0
        %5132 = vdwg.mxu0
        %5133 = vmatprep.subr.bf16.mxu0 %v3377
        %5134 = vmatpush1.bf16.msra.mxu0 %v3376
        %5135 = vmatprep.subr.bf16.mxu0 %v3389
        %5136 = vmatpush1.bf16.msra.mxu0 %v3388
        %5137 = vmatprep.subr.bf16.mxu0 %v3401
        %5138 = vmatpush1.bf16.msra.mxu0 %v3400
        %5139 = vmatprep.subr.bf16.mxu0 %v3413
        %5140 = vmatpush1.bf16.msra.mxu0 %v3412
        %5141 = vmatprep.subr.bf16.mxu0 %v3425
        %5142 = vmatpush1.bf16.msra.mxu0 %v3424
        %5143 = vmatprep.subr.bf16.mxu0 %v3437
        %5144 = vmatpush1.bf16.msra.mxu0 %v3436
        %5145 = vmatprep.subr.bf16.mxu0 %v3449
        %5146 = vmatpush1.bf16.msra.mxu0 %v3448
        %5147 = vmatprep.subr.bf16.mxu0 %v3461
        %5148 = vmatpush1.bf16.msra.mxu0 %v3460
        %5149 = vmatprep.subr.bf16.mxu0 %v3473
        %5150 = vmatpush1.bf16.msra.mxu0 %v3472
        %5151 = vmatprep.subr.bf16.mxu0 %v3485
        %5152 = vmatpush1.bf16.msra.mxu0 %v3484
        %5153 = vmatprep.subr.bf16.mxu0 %v3497
        %5154 = vmatpush1.bf16.msra.mxu0 %v3496
        %5155 = vmatprep.subr.bf16.mxu0 %v3509
        %5156 = vmatpush1.bf16.msra.mxu0 %v3508
        %5157 = vmatprep.subr.bf16.mxu0 %v3521
        %5158 = vmatpush1.bf16.msra.mxu0 %v3520
        %5159 = vmatprep.subr.bf16.mxu0 %v3533
        %5160 = vmatpush1.bf16.msra.mxu0 %v3532
        %5161 = vmatprep.subr.bf16.mxu0 %v3545
        %5162 = vmatpush1.bf16.msra.mxu0 %v3544
        %5163 = vmatprep.subr.bf16.mxu0 %v3557
        %5164 = vmatpush1.bf16.msra.mxu0 %v3556
        %5165 = vmatprep.mubr.bf16.mxu0 %v1057
        %5166 = vmatmul.mubr.bf16.gmra.mrb[0].mxu0 %v1056
        %v5167 = vpop.f32.mrb[0].mxu0
        %v5168 = vadd.f32 0.0, %v5167
        %v5169 = vpop.f32.mrb[0].mxu0
        %v5170 = vadd.f32 0.0, %v5169
        %v5171 = vpop.f32.mrb[0].mxu0
        %v5172 = vpop.f32.mrb[0].mxu0
        %5173 = vdwg.mxu0
        %5174 = vmatprep.subr.bf16.mxu0 %v3569
        %5175 = vmatpush1.bf16.msra.mxu0 %v3568
        %5176 = vmatprep.subr.bf16.mxu0 %v3581
        %5177 = vmatpush1.bf16.msra.mxu0 %v3580
        %5178 = vmatprep.subr.bf16.mxu0 %v3593
        %5179 = vmatpush1.bf16.msra.mxu0 %v3592
        %5180 = vmatprep.subr.bf16.mxu0 %v3605
        %5181 = vmatpush1.bf16.msra.mxu0 %v3604
        %5182 = vmatprep.subr.bf16.mxu0 %v3617
        %5183 = vmatpush1.bf16.msra.mxu0 %v3616
        %5184 = vmatprep.subr.bf16.mxu0 %v3629
        %5185 = vmatpush1.bf16.msra.mxu0 %v3628
        %5186 = vmatprep.subr.bf16.mxu0 %v3641
        %5187 = vmatpush1.bf16.msra.mxu0 %v3640
        %5188 = vmatprep.subr.bf16.mxu0 %v3653
        %5189 = vmatpush1.bf16.msra.mxu0 %v3652
        %5190 = vmatprep.subr.bf16.mxu0 %v3665
        %5191 = vmatpush1.bf16.msra.mxu0 %v3664
        %5192 = vmatprep.subr.bf16.mxu0 %v3677
        %5193 = vmatpush1.bf16.msra.mxu0 %v3676
        %5194 = vmatprep.subr.bf16.mxu0 %v3689
        %5195 = vmatpush1.bf16.msra.mxu0 %v3688
        %5196 = vmatprep.subr.bf16.mxu0 %v3701
        %5197 = vmatpush1.bf16.msra.mxu0 %v3700
        %5198 = vmatprep.subr.bf16.mxu0 %v3713
        %5199 = vmatpush1.bf16.msra.mxu0 %v3712
        %5200 = vmatprep.subr.bf16.mxu0 %v3725
        %5201 = vmatpush1.bf16.msra.mxu0 %v3724
        %5202 = vmatprep.subr.bf16.mxu0 %v3737
        %5203 = vmatpush1.bf16.msra.mxu0 %v3736
        %5204 = vmatprep.subr.bf16.mxu0 %v3749
        %5205 = vmatpush1.bf16.msra.mxu0 %v3748
        %5206 = vmatprep.mubr.bf16.mxu0 %v1059
        %5207 = vmatmul.mubr.bf16.gmra.mrb[0].mxu0 %v1058
        %v5208 = vpop.f32.mrb[0].mxu0
        %v5209 = vadd.f32 %v5168, %v5208
        %v5210 = vpop.f32.mrb[0].mxu0
        %v5211 = vadd.f32 %v5170, %v5210
        %v5212 = vpop.f32.mrb[0].mxu0
        %v5213 = vpop.f32.mrb[0].mxu0
        %5214 = vdwg.mxu0
        %5215 = vmatprep.subr.bf16.mxu0 %v3761
        %5216 = vmatpush1.bf16.msra.mxu0 %v3760
        %5217 = vmatprep.subr.bf16.mxu0 %v3773
        %5218 = vmatpush1.bf16.msra.mxu0 %v3772
        %5219 = vmatprep.subr.bf16.mxu0 %v3785
        %5220 = vmatpush1.bf16.msra.mxu0 %v3784
        %5221 = vmatprep.subr.bf16.mxu0 %v3797
        %5222 = vmatpush1.bf16.msra.mxu0 %v3796
        %5223 = vmatprep.subr.bf16.mxu0 %v3809
        %5224 = vmatpush1.bf16.msra.mxu0 %v3808
        %5225 = vmatprep.subr.bf16.mxu0 %v3821
        %5226 = vmatpush1.bf16.msra.mxu0 %v3820
        %5227 = vmatprep.subr.bf16.mxu0 %v3833
        %5228 = vmatpush1.bf16.msra.mxu0 %v3832
        %5229 = vmatprep.subr.bf16.mxu0 %v3845
        %5230 = vmatpush1.bf16.msra.mxu0 %v3844
        %5231 = vmatprep.subr.bf16.mxu0 %v3857
        %5232 = vmatpush1.bf16.msra.mxu0 %v3856
        %5233 = vmatprep.subr.bf16.mxu0 %v3869
        %5234 = vmatpush1.bf16.msra.mxu0 %v3868
        %5235 = vmatprep.subr.bf16.mxu0 %v3881
        %5236 = vmatpush1.bf16.msra.mxu0 %v3880
        %5237 = vmatprep.subr.bf16.mxu0 %v3893
        %5238 = vmatpush1.bf16.msra.mxu0 %v3892
        %5239 = vmatprep.subr.bf16.mxu0 %v3905
        %5240 = vmatpush1.bf16.msra.mxu0 %v3904
        %5241 = vmatprep.subr.bf16.mxu0 %v3917
        %5242 = vmatpush1.bf16.msra.mxu0 %v3916
        %5243 = vmatprep.subr.bf16.mxu0 %v3929
        %5244 = vmatpush1.bf16.msra.mxu0 %v3928
        %5245 = vmatprep.subr.bf16.mxu0 %v3941
        %5246 = vmatpush1.bf16.msra.mxu0 %v3940
        %5247 = vmatprep.mubr.bf16.mxu0 %v1061
        %5248 = vmatmul.mubr.bf16.gmra.mrb[0].mxu0 %v1060
        %v5249 = vpop.f32.mrb[0].mxu0
        %v5250 = vadd.f32 %v5209, %v5249
        %v5251 = vpop.f32.mrb[0].mxu0
        %v5252 = vadd.f32 %v5211, %v5251
        %v5253 = vpop.f32.mrb[0].mxu0
        %v5254 = vpop.f32.mrb[0].mxu0
        %5255 = vdwg.mxu0
        %vm5256 = vcmask 523264
        %v5258 = vsel %vm5256, %v4635, 0
        %v5261 = vsel %vm5256, %v4881, 0
        %5263 = vmatprep.subr.mxu0 0.0
        %5264 = vmatpush1.xpose.msra.mxu0 %v5261
        %5265 = vmatprep.subr.mxu0 0.0
        %5266 = vmatpush1.xpose.msra.mxu0 0.0
        %5267 = vmatprep.subr.mxu0 0.0
        %5268 = vmatpush1.xpose.msra.mxu0 0.0
        %5269 = vmatprep.subr.mxu0 0.0
        %5270 = vmatpush1.xpose.msra.mxu0 0.0
        %5271 = vmatprep.subr.mxu0 0.0
        %5272 = vmatpush1.xpose.msra.mxu0 0.0
        %5273 = vmatprep.subr.mxu0 0.0
        %5274 = vmatpush1.xpose.msra.mxu0 0.0
        %5275 = vmatprep.subr.mxu0 0.0
        %5276 = vmatpush1.xpose.msra.mxu0 0.0
        %5277 = vmatprep.subr.mxu0 0.0
        %5278 = vmatpush1.xpose.msra.mxu0 0.0
        %5279 = vmatprep.subr.mxu0 0.0
        %5280 = vmatpush1.xpose.msra.mxu0 0.0
        %5281 = vmatprep.subr.mxu0 0.0
        %5282 = vmatpush1.xpose.msra.mxu0 0.0
        %5283 = vmatprep.subr.mxu0 0.0
        %5284 = vmatpush1.xpose.msra.mxu0 0.0
        %5285 = vmatprep.subr.mxu0 0.0
        %5286 = vmatpush1.xpose.msra.mxu0 0.0
        %5287 = vmatprep.subr.mxu0 0.0
        %5288 = vmatpush1.xpose.msra.mxu0 0.0
        %5289 = vmatprep.subr.mxu0 0.0
        %5290 = vmatpush1.xpose.msra.mxu0 0.0
        %5291 = vmatprep.subr.mxu0 0.0
        %5292 = vmatpush1.xpose.msra.mxu0 0.0
        %5293 = vmatprep.subr.mxu0 0.0
        %5294 = vmatpush1.xpose.msra.mxu0 0.0
        %5295 = vmatprep.subr.mxu0 0.0
        %5296 = vmatpush1.xpose.msra.mxu0 0.0
        %5297 = vmatprep.subr.mxu0 0.0
        %5298 = vmatpush1.xpose.msra.mxu0 0.0
        %5299 = vmatprep.subr.mxu0 0.0
        %5300 = vmatpush1.xpose.msra.mxu0 0.0
        %5301 = vmatprep.subr.mxu0 0.0
        %5302 = vmatpush1.xpose.msra.mxu0 0.0
        %5303 = vmatprep.subr.mxu0 0.0
        %5304 = vmatpush1.xpose.msra.mxu0 0.0
        %5305 = vmatprep.subr.mxu0 0.0
        %5306 = vmatpush1.xpose.msra.mxu0 0.0
        %5307 = vmatprep.subr.mxu0 0.0
        %5308 = vmatpush1.xpose.msra.mxu0 0.0
        %5309 = vmatprep.subr.mxu0 0.0
        %5310 = vmatpush1.xpose.msra.mxu0 0.0
        %5311 = vmatprep.subr.mxu0 0.0
        %5312 = vmatpush1.xpose.msra.mxu0 0.0
        %5313 = vmatprep.subr.mxu0 0.0
        %5314 = vmatpush1.xpose.msra.mxu0 0.0
        %5315 = vmatprep.subr.mxu0 0.0
        %5316 = vmatpush1.xpose.msra.mxu0 0.0
        %5317 = vmatprep.subr.mxu0 0.0
        %5318 = vmatpush1.xpose.msra.mxu0 0.0
        %5319 = vmatprep.subr.mxu0 0.0
        %5320 = vmatpush1.xpose.msra.mxu0 0.0
        %5321 = vmatprep.subr.mxu0 0.0
        %5322 = vmatpush1.xpose.msra.mxu0 0.0
        %5323 = vmatprep.subr.mxu0 0.0
        %5324 = vmatpush1.xpose.msra.mxu0 0.0
        %5325 = vmatprep.subr.mxu0 0.0
        %5326 = vmatpush1.xpose.msra.mxu0 0.0
        %5327 = vmatprep.mubr.f32.mxu0 0.0
        %5328 = vmatmul.mubr.f32.gmra.mrb[0].mxu0 %v5258
        %v5329 = vpop.f32.mrb[0].mxu0
        %v5330 = vadd.f32 0.0, %v5329
        %v5331 = vpop.f32.mrb[0].mxu0
        %5332 = vdwg.mxu0
        %vm5333 = vcmask 64512
        %v5334 = vsel %vm5333, %v5330, -inf
        %5335 = vmax.xlane.f32.xlu0 %v5334
        %v5336 = vpop.xlane.xlu0 %5335
        %v5337 = vsub.f32 %v5330, %v5336
        %v5338 = vmul.f32 %v5337, 1.442695
        %v5339 = vpow.pop %v5338
        %v5340 = vsel %vm5333, %v5339, 0.0
        %5341 = vadd.xlane.f32.xlu0 %v5340
        %v5342 = vpop.xlane.xlu0 %5341
        %v5343 = vrcp.pop %v5342
        %v5344 = vmul.f32 %v5339, %v5343
        %v5346 = vsel %vm5333, %v5344, 0
        %5348 = vmatprep.subr.mxu0 0.0
        %5349 = vmatpush1.msra.mxu0 %v5127
        %5350 = vmatprep.subr.mxu0 0.0
        %5351 = vmatpush1.msra.mxu0 0.0
        %5352 = vmatprep.subr.mxu0 0.0
        %5353 = vmatpush1.msra.mxu0 0.0
        %5354 = vmatprep.subr.mxu0 0.0
        %5355 = vmatpush1.msra.mxu0 0.0
        %5356 = vmatprep.subr.mxu0 0.0
        %5357 = vmatpush1.msra.mxu0 0.0
        %5358 = vmatprep.subr.mxu0 0.0
        %5359 = vmatpush1.msra.mxu0 0.0
        %5360 = vmatprep.subr.mxu0 0.0
        %5361 = vmatpush1.msra.mxu0 0.0
        %5362 = vmatprep.subr.mxu0 0.0
        %5363 = vmatpush1.msra.mxu0 0.0
        %5364 = vmatprep.subr.mxu0 0.0
        %5365 = vmatpush1.msra.mxu0 0.0
        %5366 = vmatprep.subr.mxu0 0.0
        %5367 = vmatpush1.msra.mxu0 0.0
        %5368 = vmatprep.subr.mxu0 0.0
        %5369 = vmatpush1.msra.mxu0 0.0
        %5370 = vmatprep.subr.mxu0 0.0
        %5371 = vmatpush1.msra.mxu0 0.0
        %5372 = vmatprep.subr.mxu0 0.0
        %5373 = vmatpush1.msra.mxu0 0.0
        %5374 = vmatprep.subr.mxu0 0.0
        %5375 = vmatpush1.msra.mxu0 0.0
        %5376 = vmatprep.subr.mxu0 0.0
        %5377 = vmatpush1.msra.mxu0 0.0
        %5378 = vmatprep.subr.mxu0 0.0
        %5379 = vmatpush1.msra.mxu0 0.0
        %5380 = vmatprep.subr.mxu0 0.0
        %5381 = vmatpush1.msra.mxu0 0.0
        %5382 = vmatprep.subr.mxu0 0.0
        %5383 = vmatpush1.msra.mxu0 0.0
        %5384 = vmatprep.subr.mxu0 0.0
        %5385 = vmatpush1.msra.mxu0 0.0
        %5386 = vmatprep.subr.mxu0 0.0
        %5387 = vmatpush1.msra.mxu0 0.0
        %5388 = vmatprep.subr.mxu0 0.0
        %5389 = vmatpush1.msra.mxu0 0.0
        %5390 = vmatprep.subr.mxu0 0.0
        %5391 = vmatpush1.msra.mxu0 0.0
        %5392 = vmatprep.subr.mxu0 0.0
        %5393 = vmatpush1.msra.mxu0 0.0
        %5394 = vmatprep.subr.mxu0 0.0
        %5395 = vmatpush1.msra.mxu0 0.0
        %5396 = vmatprep.subr.mxu0 0.0
        %5397 = vmatpush1.msra.mxu0 0.0
        %5398 = vmatprep.subr.mxu0 0.0
        %5399 = vmatpush1.msra.mxu0 0.0
        %5400 = vmatprep.subr.mxu0 0.0
        %5401 = vmatpush1.msra.mxu0 0.0
        %5402 = vmatprep.subr.mxu0 0.0
        %5403 = vmatpush1.msra.mxu0 0.0
        %5404 = vmatprep.subr.mxu0 0.0
        %5405 = vmatpush1.msra.mxu0 0.0
        %5406 = vmatprep.subr.mxu0 0.0
        %5407 = vmatpush1.msra.mxu0 0.0
        %5408 = vmatprep.subr.mxu0 0.0
        %5409 = vmatpush1.msra.mxu0 0.0
        %5410 = vmatprep.subr.mxu0 0.0
        %5411 = vmatpush1.msra.mxu0 0.0
        %5412 = vmatprep.mubr.f32.mxu0 0.0
        %5413 = vmatmul.mubr.f32.gmra.mrb[0].mxu0 %v5346
        %v5414 = vpop.f32.mrb[0].mxu0
        %v5415 = vadd.f32 0.0, %v5414
        %v5416 = vpop.f32.mrb[0].mxu0
        %5417 = vdwg.mxu0
        %5418 = vrot.lane.b32.xlu0 %v4635, 64
        %v5419 = vpop.permute.xlu0 %5418
        %5420 = vrot.lane.b32.xlu0 %v4881, 64
        %v5421 = vpop.permute.xlu0 %5420
        %v5422 = vsel %vm5256, %v5419, 0
        %v5424 = vsel %vm5256, %v5421, 0
        %5426 = vmatprep.subr.mxu0 0.0
        %5427 = vmatpush1.xpose.msra.mxu0 %v5424
        %5428 = vmatprep.subr.mxu0 0.0
        %5429 = vmatpush1.xpose.msra.mxu0 0.0
        %5430 = vmatprep.subr.mxu0 0.0
        %5431 = vmatpush1.xpose.msra.mxu0 0.0
        %5432 = vmatprep.subr.mxu0 0.0
        %5433 = vmatpush1.xpose.msra.mxu0 0.0
        %5434 = vmatprep.subr.mxu0 0.0
        %5435 = vmatpush1.xpose.msra.mxu0 0.0
        %5436 = vmatprep.subr.mxu0 0.0
        %5437 = vmatpush1.xpose.msra.mxu0 0.0
        %5438 = vmatprep.subr.mxu0 0.0
        %5439 = vmatpush1.xpose.msra.mxu0 0.0
        %5440 = vmatprep.subr.mxu0 0.0
        %5441 = vmatpush1.xpose.msra.mxu0 0.0
        %5442 = vmatprep.subr.mxu0 0.0
        %5443 = vmatpush1.xpose.msra.mxu0 0.0
        %5444 = vmatprep.subr.mxu0 0.0
        %5445 = vmatpush1.xpose.msra.mxu0 0.0
        %5446 = vmatprep.subr.mxu0 0.0
        %5447 = vmatpush1.xpose.msra.mxu0 0.0
        %5448 = vmatprep.subr.mxu0 0.0
        %5449 = vmatpush1.xpose.msra.mxu0 0.0
        %5450 = vmatprep.subr.mxu0 0.0
        %5451 = vmatpush1.xpose.msra.mxu0 0.0
        %5452 = vmatprep.subr.mxu0 0.0
        %5453 = vmatpush1.xpose.msra.mxu0 0.0
        %5454 = vmatprep.subr.mxu0 0.0
        %5455 = vmatpush1.xpose.msra.mxu0 0.0
        %5456 = vmatprep.subr.mxu0 0.0
        %5457 = vmatpush1.xpose.msra.mxu0 0.0
        %5458 = vmatprep.subr.mxu0 0.0
        %5459 = vmatpush1.xpose.msra.mxu0 0.0
        %5460 = vmatprep.subr.mxu0 0.0
        %5461 = vmatpush1.xpose.msra.mxu0 0.0
        %5462 = vmatprep.subr.mxu0 0.0
        %5463 = vmatpush1.xpose.msra.mxu0 0.0
        %5464 = vmatprep.subr.mxu0 0.0
        %5465 = vmatpush1.xpose.msra.mxu0 0.0
        %5466 = vmatprep.subr.mxu0 0.0
        %5467 = vmatpush1.xpose.msra.mxu0 0.0
        %5468 = vmatprep.subr.mxu0 0.0
        %5469 = vmatpush1.xpose.msra.mxu0 0.0
        %5470 = vmatprep.subr.mxu0 0.0
        %5471 = vmatpush1.xpose.msra.mxu0 0.0
        %5472 = vmatprep.subr.mxu0 0.0
        %5473 = vmatpush1.xpose.msra.mxu0 0.0
        %5474 = vmatprep.subr.mxu0 0.0
        %5475 = vmatpush1.xpose.msra.mxu0 0.0
        %5476 = vmatprep.subr.mxu0 0.0
        %5477 = vmatpush1.xpose.msra.mxu0 0.0
        %5478 = vmatprep.subr.mxu0 0.0
        %5479 = vmatpush1.xpose.msra.mxu0 0.0
        %5480 = vmatprep.subr.mxu0 0.0
        %5481 = vmatpush1.xpose.msra.mxu0 0.0
        %5482 = vmatprep.subr.mxu0 0.0
        %5483 = vmatpush1.xpose.msra.mxu0 0.0
        %5484 = vmatprep.subr.mxu0 0.0
        %5485 = vmatpush1.xpose.msra.mxu0 0.0
        %5486 = vmatprep.subr.mxu0 0.0
        %5487 = vmatpush1.xpose.msra.mxu0 0.0
        %5488 = vmatprep.subr.mxu0 0.0
        %5489 = vmatpush1.xpose.msra.mxu0 0.0
        %5490 = vmatprep.mubr.f32.mxu0 0.0
        %5491 = vmatmul.mubr.f32.gmra.mrb[0].mxu0 %v5422
        %v5492 = vpop.f32.mrb[0].mxu0
        %v5493 = vadd.f32 0.0, %v5492
        %v5494 = vpop.f32.mrb[0].mxu0
        %5495 = vdwg.mxu0
        %v5496 = vsel %vm5333, %v5493, -inf
        %5497 = vmax.xlane.f32.xlu0 %v5496
        %v5498 = vpop.xlane.xlu0 %5497
        %v5499 = vsub.f32 %v5493, %v5498
        %v5500 = vmul.f32 %v5499, 1.442695
        %v5501 = vpow.pop %v5500
        %v5502 = vsel %vm5333, %v5501, 0.0
        %5503 = vadd.xlane.f32.xlu0 %v5502
        %v5504 = vpop.xlane.xlu0 %5503
        %v5505 = vrcp.pop %v5504
        %v5506 = vmul.f32 %v5501, %v5505
        %5508 = vrot.lane.b32.xlu0 %v5127, 64
        %v5509 = vpop.permute.xlu0 %5508
        %v5512 = vsel %vm5333, %v5506, 0
        %5514 = vmatprep.subr.mxu0 0.0
        %5515 = vmatpush1.msra.mxu0 %v5509
        %5516 = vmatprep.subr.mxu0 0.0
        %5517 = vmatpush1.msra.mxu0 0.0
        %5518 = vmatprep.subr.mxu0 0.0
        %5519 = vmatpush1.msra.mxu0 0.0
        %5520 = vmatprep.subr.mxu0 0.0
        %5521 = vmatpush1.msra.mxu0 0.0
        %5522 = vmatprep.subr.mxu0 0.0
        %5523 = vmatpush1.msra.mxu0 0.0
        %5524 = vmatprep.subr.mxu0 0.0
        %5525 = vmatpush1.msra.mxu0 0.0
        %5526 = vmatprep.subr.mxu0 0.0
        %5527 = vmatpush1.msra.mxu0 0.0
        %5528 = vmatprep.subr.mxu0 0.0
        %5529 = vmatpush1.msra.mxu0 0.0
        %5530 = vmatprep.subr.mxu0 0.0
        %5531 = vmatpush1.msra.mxu0 0.0
        %5532 = vmatprep.subr.mxu0 0.0
        %5533 = vmatpush1.msra.mxu0 0.0
        %5534 = vmatprep.subr.mxu0 0.0
        %5535 = vmatpush1.msra.mxu0 0.0
        %5536 = vmatprep.subr.mxu0 0.0
        %5537 = vmatpush1.msra.mxu0 0.0
        %5538 = vmatprep.subr.mxu0 0.0
        %5539 = vmatpush1.msra.mxu0 0.0
        %5540 = vmatprep.subr.mxu0 0.0
        %5541 = vmatpush1.msra.mxu0 0.0
        %5542 = vmatprep.subr.mxu0 0.0
        %5543 = vmatpush1.msra.mxu0 0.0
        %5544 = vmatprep.subr.mxu0 0.0
        %5545 = vmatpush1.msra.mxu0 0.0
        %5546 = vmatprep.subr.mxu0 0.0
        %5547 = vmatpush1.msra.mxu0 0.0
        %5548 = vmatprep.subr.mxu0 0.0
        %5549 = vmatpush1.msra.mxu0 0.0
        %5550 = vmatprep.subr.mxu0 0.0
        %5551 = vmatpush1.msra.mxu0 0.0
        %5552 = vmatprep.subr.mxu0 0.0
        %5553 = vmatpush1.msra.mxu0 0.0
        %5554 = vmatprep.subr.mxu0 0.0
        %5555 = vmatpush1.msra.mxu0 0.0
        %5556 = vmatprep.subr.mxu0 0.0
        %5557 = vmatpush1.msra.mxu0 0.0
        %5558 = vmatprep.subr.mxu0 0.0
        %5559 = vmatpush1.msra.mxu0 0.0
        %5560 = vmatprep.subr.mxu0 0.0
        %5561 = vmatpush1.msra.mxu0 0.0
        %5562 = vmatprep.subr.mxu0 0.0
        %5563 = vmatpush1.msra.mxu0 0.0
        %5564 = vmatprep.subr.mxu0 0.0
        %5565 = vmatpush1.msra.mxu0 0.0
        %5566 = vmatprep.subr.mxu0 0.0
        %5567 = vmatpush1.msra.mxu0 0.0
        %5568 = vmatprep.subr.mxu0 0.0
        %5569 = vmatpush1.msra.mxu0 0.0
        %5570 = vmatprep.subr.mxu0 0.0
        %5571 = vmatpush1.msra.mxu0 0.0
        %5572 = vmatprep.subr.mxu0 0.0
        %5573 = vmatpush1.msra.mxu0 0.0
        %5574 = vmatprep.subr.mxu0 0.0
        %5575 = vmatpush1.msra.mxu0 0.0
        %5576 = vmatprep.subr.mxu0 0.0
        %5577 = vmatpush1.msra.mxu0 0.0
        %5578 = vmatprep.mubr.f32.mxu0 0.0
        %5579 = vmatmul.mubr.f32.gmra.mrb[0].mxu0 %v5512
        %v5580 = vpop.f32.mrb[0].mxu0
        %v5581 = vadd.f32 0.0, %v5580
        %v5582 = vpop.f32.mrb[0].mxu0
        %5583 = vdwg.mxu0
        %v5585 = vsel %vm5256, %v4637, 0
        %v5588 = vsel %vm5256, %v4883, 0
        %5590 = vmatprep.subr.mxu0 0.0
        %5591 = vmatpush1.xpose.msra.mxu0 %v5588
        %5592 = vmatprep.subr.mxu0 0.0
        %5593 = vmatpush1.xpose.msra.mxu0 0.0
        %5594 = vmatprep.subr.mxu0 0.0
        %5595 = vmatpush1.xpose.msra.mxu0 0.0
        %5596 = vmatprep.subr.mxu0 0.0
        %5597 = vmatpush1.xpose.msra.mxu0 0.0
        %5598 = vmatprep.subr.mxu0 0.0
        %5599 = vmatpush1.xpose.msra.mxu0 0.0
        %5600 = vmatprep.subr.mxu0 0.0
        %5601 = vmatpush1.xpose.msra.mxu0 0.0
        %5602 = vmatprep.subr.mxu0 0.0
        %5603 = vmatpush1.xpose.msra.mxu0 0.0
        %5604 = vmatprep.subr.mxu0 0.0
        %5605 = vmatpush1.xpose.msra.mxu0 0.0
        %5606 = vmatprep.subr.mxu0 0.0
        %5607 = vmatpush1.xpose.msra.mxu0 0.0
        %5608 = vmatprep.subr.mxu0 0.0
        %5609 = vmatpush1.xpose.msra.mxu0 0.0
        %5610 = vmatprep.subr.mxu0 0.0
        %5611 = vmatpush1.xpose.msra.mxu0 0.0
        %5612 = vmatprep.subr.mxu0 0.0
        %5613 = vmatpush1.xpose.msra.mxu0 0.0
        %5614 = vmatprep.subr.mxu0 0.0
        %5615 = vmatpush1.xpose.msra.mxu0 0.0
        %5616 = vmatprep.subr.mxu0 0.0
        %5617 = vmatpush1.xpose.msra.mxu0 0.0
        %5618 = vmatprep.subr.mxu0 0.0
        %5619 = vmatpush1.xpose.msra.mxu0 0.0
        %5620 = vmatprep.subr.mxu0 0.0
        %5621 = vmatpush1.xpose.msra.mxu0 0.0
        %5622 = vmatprep.subr.mxu0 0.0
        %5623 = vmatpush1.xpose.msra.mxu0 0.0
        %5624 = vmatprep.subr.mxu0 0.0
        %5625 = vmatpush1.xpose.msra.mxu0 0.0
        %5626 = vmatprep.subr.mxu0 0.0
        %5627 = vmatpush1.xpose.msra.mxu0 0.0
        %5628 = vmatprep.subr.mxu0 0.0
        %5629 = vmatpush1.xpose.msra.mxu0 0.0
        %5630 = vmatprep.subr.mxu0 0.0
        %5631 = vmatpush1.xpose.msra.mxu0 0.0
        %5632 = vmatprep.subr.mxu0 0.0
        %5633 = vmatpush1.xpose.msra.mxu0 0.0
        %5634 = vmatprep.subr.mxu0 0.0
        %5635 = vmatpush1.xpose.msra.mxu0 0.0
        %5636 = vmatprep.subr.mxu0 0.0
        %5637 = vmatpush1.xpose.msra.mxu0 0.0
        %5638 = vmatprep.subr.mxu0 0.0
        %5639 = vmatpush1.xpose.msra.mxu0 0.0
        %5640 = vmatprep.subr.mxu0 0.0
        %5641 = vmatpush1.xpose.msra.mxu0 0.0
        %5642 = vmatprep.subr.mxu0 0.0
        %5643 = vmatpush1.xpose.msra.mxu0 0.0
        %5644 = vmatprep.subr.mxu0 0.0
        %5645 = vmatpush1.xpose.msra.mxu0 0.0
        %5646 = vmatprep.subr.mxu0 0.0
        %5647 = vmatpush1.xpose.msra.mxu0 0.0
        %5648 = vmatprep.subr.mxu0 0.0
        %5649 = vmatpush1.xpose.msra.mxu0 0.0
        %5650 = vmatprep.subr.mxu0 0.0
        %5651 = vmatpush1.xpose.msra.mxu0 0.0
        %5652 = vmatprep.subr.mxu0 0.0
        %5653 = vmatpush1.xpose.msra.mxu0 0.0
        %5654 = vmatprep.mubr.f32.mxu0 0.0
        %5655 = vmatmul.mubr.f32.gmra.mrb[0].mxu0 %v5585
        %v5656 = vpop.f32.mrb[0].mxu0
        %v5657 = vadd.f32 0.0, %v5656
        %v5658 = vpop.f32.mrb[0].mxu0
        %5659 = vdwg.mxu0
        %v5660 = vsel %vm5333, %v5657, -inf
        %5661 = vmax.xlane.f32.xlu0 %v5660
        %v5662 = vpop.xlane.xlu0 %5661
        %v5663 = vsub.f32 %v5657, %v5662
        %v5664 = vmul.f32 %v5663, 1.442695
        %v5665 = vpow.pop %v5664
        %v5666 = vsel %vm5333, %v5665, 0.0
        %5667 = vadd.xlane.f32.xlu0 %v5666
        %v5668 = vpop.xlane.xlu0 %5667
        %v5669 = vrcp.pop %v5668
        %v5670 = vmul.f32 %v5665, %v5669
        %v5672 = vsel %vm5333, %v5670, 0
        %5674 = vmatprep.subr.mxu0 0.0
        %5675 = vmatpush1.msra.mxu0 %v5129
        %5676 = vmatprep.subr.mxu0 0.0
        %5677 = vmatpush1.msra.mxu0 0.0
        %5678 = vmatprep.subr.mxu0 0.0
        %5679 = vmatpush1.msra.mxu0 0.0
        %5680 = vmatprep.subr.mxu0 0.0
        %5681 = vmatpush1.msra.mxu0 0.0
        %5682 = vmatprep.subr.mxu0 0.0
        %5683 = vmatpush1.msra.mxu0 0.0
        %5684 = vmatprep.subr.mxu0 0.0
        %5685 = vmatpush1.msra.mxu0 0.0
        %5686 = vmatprep.subr.mxu0 0.0
        %5687 = vmatpush1.msra.mxu0 0.0
        %5688 = vmatprep.subr.mxu0 0.0
        %5689 = vmatpush1.msra.mxu0 0.0
        %5690 = vmatprep.subr.mxu0 0.0
        %5691 = vmatpush1.msra.mxu0 0.0
        %5692 = vmatprep.subr.mxu0 0.0
        %5693 = vmatpush1.msra.mxu0 0.0
        %5694 = vmatprep.subr.mxu0 0.0
        %5695 = vmatpush1.msra.mxu0 0.0
        %5696 = vmatprep.subr.mxu0 0.0
        %5697 = vmatpush1.msra.mxu0 0.0
        %5698 = vmatprep.subr.mxu0 0.0
        %5699 = vmatpush1.msra.mxu0 0.0
        %5700 = vmatprep.subr.mxu0 0.0
        %5701 = vmatpush1.msra.mxu0 0.0
        %5702 = vmatprep.subr.mxu0 0.0
        %5703 = vmatpush1.msra.mxu0 0.0
        %5704 = vmatprep.subr.mxu0 0.0
        %5705 = vmatpush1.msra.mxu0 0.0
        %5706 = vmatprep.subr.mxu0 0.0
        %5707 = vmatpush1.msra.mxu0 0.0
        %5708 = vmatprep.subr.mxu0 0.0
        %5709 = vmatpush1.msra.mxu0 0.0
        %5710 = vmatprep.subr.mxu0 0.0
        %5711 = vmatpush1.msra.mxu0 0.0
        %5712 = vmatprep.subr.mxu0 0.0
        %5713 = vmatpush1.msra.mxu0 0.0
        %5714 = vmatprep.subr.mxu0 0.0
        %5715 = vmatpush1.msra.mxu0 0.0
        %5716 = vmatprep.subr.mxu0 0.0
        %5717 = vmatpush1.msra.mxu0 0.0
        %5718 = vmatprep.subr.mxu0 0.0
        %5719 = vmatpush1.msra.mxu0 0.0
        %5720 = vmatprep.subr.mxu0 0.0
        %5721 = vmatpush1.msra.mxu0 0.0
        %5722 = vmatprep.subr.mxu0 0.0
        %5723 = vmatpush1.msra.mxu0 0.0
        %5724 = vmatprep.subr.mxu0 0.0
        %5725 = vmatpush1.msra.mxu0 0.0
        %5726 = vmatprep.subr.mxu0 0.0
        %5727 = vmatpush1.msra.mxu0 0.0
        %5728 = vmatprep.subr.mxu0 0.0
        %5729 = vmatpush1.msra.mxu0 0.0
        %5730 = vmatprep.subr.mxu0 0.0
        %5731 = vmatpush1.msra.mxu0 0.0
        %5732 = vmatprep.subr.mxu0 0.0
        %5733 = vmatpush1.msra.mxu0 0.0
        %5734 = vmatprep.subr.mxu0 0.0
        %5735 = vmatpush1.msra.mxu0 0.0
        %5736 = vmatprep.subr.mxu0 0.0
        %5737 = vmatpush1.msra.mxu0 0.0
        %5738 = vmatprep.mubr.f32.mxu0 0.0
        %5739 = vmatmul.mubr.f32.gmra.mrb[0].mxu0 %v5672
        %v5740 = vpop.f32.mrb[0].mxu0
        %v5741 = vadd.f32 0.0, %v5740
        %v5742 = vpop.f32.mrb[0].mxu0
        %5743 = vdwg.mxu0
        %5744 = vrot.lane.b32.xlu0 %v4637, 64
        %v5745 = vpop.permute.xlu0 %5744
        %5746 = vrot.lane.b32.xlu0 %v4883, 64
        %v5747 = vpop.permute.xlu0 %5746
        %v5748 = vsel %vm5256, %v5745, 0
        %v5750 = vsel %vm5256, %v5747, 0
        %5752 = vmatprep.subr.mxu0 0.0
        %5753 = vmatpush1.xpose.msra.mxu0 %v5750
        %5754 = vmatprep.subr.mxu0 0.0
        %5755 = vmatpush1.xpose.msra.mxu0 0.0
        %5756 = vmatprep.subr.mxu0 0.0
        %5757 = vmatpush1.xpose.msra.mxu0 0.0
        %5758 = vmatprep.subr.mxu0 0.0
        %5759 = vmatpush1.xpose.msra.mxu0 0.0
        %5760 = vmatprep.subr.mxu0 0.0
        %5761 = vmatpush1.xpose.msra.mxu0 0.0
        %5762 = vmatprep.subr.mxu0 0.0
        %5763 = vmatpush1.xpose.msra.mxu0 0.0
        %5764 = vmatprep.subr.mxu0 0.0
        %5765 = vmatpush1.xpose.msra.mxu0 0.0
        %5766 = vmatprep.subr.mxu0 0.0
        %5767 = vmatpush1.xpose.msra.mxu0 0.0
        %5768 = vmatprep.subr.mxu0 0.0
        %5769 = vmatpush1.xpose.msra.mxu0 0.0
        %5770 = vmatprep.subr.mxu0 0.0
        %5771 = vmatpush1.xpose.msra.mxu0 0.0
        %5772 = vmatprep.subr.mxu0 0.0
        %5773 = vmatpush1.xpose.msra.mxu0 0.0
        %5774 = vmatprep.subr.mxu0 0.0
        %5775 = vmatpush1.xpose.msra.mxu0 0.0
        %5776 = vmatprep.subr.mxu0 0.0
        %5777 = vmatpush1.xpose.msra.mxu0 0.0
        %5778 = vmatprep.subr.mxu0 0.0
        %5779 = vmatpush1.xpose.msra.mxu0 0.0
        %5780 = vmatprep.subr.mxu0 0.0
        %5781 = vmatpush1.xpose.msra.mxu0 0.0
        %5782 = vmatprep.subr.mxu0 0.0
        %5783 = vmatpush1.xpose.msra.mxu0 0.0
        %5784 = vmatprep.subr.mxu0 0.0
        %5785 = vmatpush1.xpose.msra.mxu0 0.0
        %5786 = vmatprep.subr.mxu0 0.0
        %5787 = vmatpush1.xpose.msra.mxu0 0.0
        %5788 = vmatprep.subr.mxu0 0.0
        %5789 = vmatpush1.xpose.msra.mxu0 0.0
        %5790 = vmatprep.subr.mxu0 0.0
        %5791 = vmatpush1.xpose.msra.mxu0 0.0
        %5792 = vmatprep.subr.mxu0 0.0
        %5793 = vmatpush1.xpose.msra.mxu0 0.0
        %5794 = vmatprep.subr.mxu0 0.0
        %5795 = vmatpush1.xpose.msra.mxu0 0.0
        %5796 = vmatprep.subr.mxu0 0.0
        %5797 = vmatpush1.xpose.msra.mxu0 0.0
        %5798 = vmatprep.subr.mxu0 0.0
        %5799 = vmatpush1.xpose.msra.mxu0 0.0
        %5800 = vmatprep.subr.mxu0 0.0
        %5801 = vmatpush1.xpose.msra.mxu0 0.0
        %5802 = vmatprep.subr.mxu0 0.0
        %5803 = vmatpush1.xpose.msra.mxu0 0.0
        %5804 = vmatprep.subr.mxu0 0.0
        %5805 = vmatpush1.xpose.msra.mxu0 0.0
        %5806 = vmatprep.subr.mxu0 0.0
        %5807 = vmatpush1.xpose.msra.mxu0 0.0
        %5808 = vmatprep.subr.mxu0 0.0
        %5809 = vmatpush1.xpose.msra.mxu0 0.0
        %5810 = vmatprep.subr.mxu0 0.0
        %5811 = vmatpush1.xpose.msra.mxu0 0.0
        %5812 = vmatprep.subr.mxu0 0.0
        %5813 = vmatpush1.xpose.msra.mxu0 0.0
        %5814 = vmatprep.subr.mxu0 0.0
        %5815 = vmatpush1.xpose.msra.mxu0 0.0
        %5816 = vmatprep.mubr.f32.mxu0 0.0
        %5817 = vmatmul.mubr.f32.gmra.mrb[0].mxu0 %v5748
        %v5818 = vpop.f32.mrb[0].mxu0
        %v5819 = vadd.f32 0.0, %v5818
        %v5820 = vpop.f32.mrb[0].mxu0
        %5821 = vdwg.mxu0
        %v5822 = vsel %vm5333, %v5819, -inf
        %5823 = vmax.xlane.f32.xlu0 %v5822
        %v5824 = vpop.xlane.xlu0 %5823
        %v5825 = vsub.f32 %v5819, %v5824
        %v5826 = vmul.f32 %v5825, 1.442695
        %v5827 = vpow.pop %v5826
        %v5828 = vsel %vm5333, %v5827, 0.0
        %5829 = vadd.xlane.f32.xlu0 %v5828
        %v5830 = vpop.xlane.xlu0 %5829
        %v5831 = vrcp.pop %v5830
        %v5832 = vmul.f32 %v5827, %v5831
        %5834 = vrot.lane.b32.xlu0 %v5129, 64
        %v5835 = vpop.permute.xlu0 %5834
        %v5838 = vsel %vm5333, %v5832, 0
        %5840 = vmatprep.subr.mxu0 0.0
        %5841 = vmatpush1.msra.mxu0 %v5835
        %5842 = vmatprep.subr.mxu0 0.0
        %5843 = vmatpush1.msra.mxu0 0.0
        %5844 = vmatprep.subr.mxu0 0.0
        %5845 = vmatpush1.msra.mxu0 0.0
        %5846 = vmatprep.subr.mxu0 0.0
        %5847 = vmatpush1.msra.mxu0 0.0
        %5848 = vmatprep.subr.mxu0 0.0
        %5849 = vmatpush1.msra.mxu0 0.0
        %5850 = vmatprep.subr.mxu0 0.0
        %5851 = vmatpush1.msra.mxu0 0.0
        %5852 = vmatprep.subr.mxu0 0.0
        %5853 = vmatpush1.msra.mxu0 0.0
        %5854 = vmatprep.subr.mxu0 0.0
        %5855 = vmatpush1.msra.mxu0 0.0
        %5856 = vmatprep.subr.mxu0 0.0
        %5857 = vmatpush1.msra.mxu0 0.0
        %5858 = vmatprep.subr.mxu0 0.0
        %5859 = vmatpush1.msra.mxu0 0.0
        %5860 = vmatprep.subr.mxu0 0.0
        %5861 = vmatpush1.msra.mxu0 0.0
        %5862 = vmatprep.subr.mxu0 0.0
        %5863 = vmatpush1.msra.mxu0 0.0
        %5864 = vmatprep.subr.mxu0 0.0
        %5865 = vmatpush1.msra.mxu0 0.0
        %5866 = vmatprep.subr.mxu0 0.0
        %5867 = vmatpush1.msra.mxu0 0.0
        %5868 = vmatprep.subr.mxu0 0.0
        %5869 = vmatpush1.msra.mxu0 0.0
        %5870 = vmatprep.subr.mxu0 0.0
        %5871 = vmatpush1.msra.mxu0 0.0
        %5872 = vmatprep.subr.mxu0 0.0
        %5873 = vmatpush1.msra.mxu0 0.0
        %5874 = vmatprep.subr.mxu0 0.0
        %5875 = vmatpush1.msra.mxu0 0.0
        %5876 = vmatprep.subr.mxu0 0.0
        %5877 = vmatpush1.msra.mxu0 0.0
        %5878 = vmatprep.subr.mxu0 0.0
        %5879 = vmatpush1.msra.mxu0 0.0
        %5880 = vmatprep.subr.mxu0 0.0
        %5881 = vmatpush1.msra.mxu0 0.0
        %5882 = vmatprep.subr.mxu0 0.0
        %5883 = vmatpush1.msra.mxu0 0.0
        %5884 = vmatprep.subr.mxu0 0.0
        %5885 = vmatpush1.msra.mxu0 0.0
        %5886 = vmatprep.subr.mxu0 0.0
        %5887 = vmatpush1.msra.mxu0 0.0
        %5888 = vmatprep.subr.mxu0 0.0
        %5889 = vmatpush1.msra.mxu0 0.0
        %5890 = vmatprep.subr.mxu0 0.0
        %5891 = vmatpush1.msra.mxu0 0.0
        %5892 = vmatprep.subr.mxu0 0.0
        %5893 = vmatpush1.msra.mxu0 0.0
        %5894 = vmatprep.subr.mxu0 0.0
        %5895 = vmatpush1.msra.mxu0 0.0
        %5896 = vmatprep.subr.mxu0 0.0
        %5897 = vmatpush1.msra.mxu0 0.0
        %5898 = vmatprep.subr.mxu0 0.0
        %5899 = vmatpush1.msra.mxu0 0.0
        %5900 = vmatprep.subr.mxu0 0.0
        %5901 = vmatpush1.msra.mxu0 0.0
        %5902 = vmatprep.subr.mxu0 0.0
        %5903 = vmatpush1.msra.mxu0 0.0
        %5904 = vmatprep.mubr.f32.mxu0 0.0
        %5905 = vmatmul.mubr.f32.gmra.mrb[0].mxu0 %v5838
        %v5906 = vpop.f32.mrb[0].mxu0
        %v5907 = vadd.f32 0.0, %v5906
        %v5908 = vpop.f32.mrb[0].mxu0
        %5909 = vdwg.mxu0
        %v5911 = vsel %vm5256, %v4758, 0
        %v5914 = vsel %vm5256, %v5004, 0
        %5916 = vmatprep.subr.mxu0 0.0
        %5917 = vmatpush1.xpose.msra.mxu0 %v5914
        %5918 = vmatprep.subr.mxu0 0.0
        %5919 = vmatpush1.xpose.msra.mxu0 0.0
        %5920 = vmatprep.subr.mxu0 0.0
        %5921 = vmatpush1.xpose.msra.mxu0 0.0
        %5922 = vmatprep.subr.mxu0 0.0
        %5923 = vmatpush1.xpose.msra.mxu0 0.0
        %5924 = vmatprep.subr.mxu0 0.0
        %5925 = vmatpush1.xpose.msra.mxu0 0.0
        %5926 = vmatprep.subr.mxu0 0.0
        %5927 = vmatpush1.xpose.msra.mxu0 0.0
        %5928 = vmatprep.subr.mxu0 0.0
        %5929 = vmatpush1.xpose.msra.mxu0 0.0
        %5930 = vmatprep.subr.mxu0 0.0
        %5931 = vmatpush1.xpose.msra.mxu0 0.0
        %5932 = vmatprep.subr.mxu0 0.0
        %5933 = vmatpush1.xpose.msra.mxu0 0.0
        %5934 = vmatprep.subr.mxu0 0.0
        %5935 = vmatpush1.xpose.msra.mxu0 0.0
        %5936 = vmatprep.subr.mxu0 0.0
        %5937 = vmatpush1.xpose.msra.mxu0 0.0
        %5938 = vmatprep.subr.mxu0 0.0
        %5939 = vmatpush1.xpose.msra.mxu0 0.0
        %5940 = vmatprep.subr.mxu0 0.0
        %5941 = vmatpush1.xpose.msra.mxu0 0.0
        %5942 = vmatprep.subr.mxu0 0.0
        %5943 = vmatpush1.xpose.msra.mxu0 0.0
        %5944 = vmatprep.subr.mxu0 0.0
        %5945 = vmatpush1.xpose.msra.mxu0 0.0
        %5946 = vmatprep.subr.mxu0 0.0
        %5947 = vmatpush1.xpose.msra.mxu0 0.0
        %5948 = vmatprep.subr.mxu0 0.0
        %5949 = vmatpush1.xpose.msra.mxu0 0.0
        %5950 = vmatprep.subr.mxu0 0.0
        %5951 = vmatpush1.xpose.msra.mxu0 0.0
        %5952 = vmatprep.subr.mxu0 0.0
        %5953 = vmatpush1.xpose.msra.mxu0 0.0
        %5954 = vmatprep.subr.mxu0 0.0
        %5955 = vmatpush1.xpose.msra.mxu0 0.0
        %5956 = vmatprep.subr.mxu0 0.0
        %5957 = vmatpush1.xpose.msra.mxu0 0.0
        %5958 = vmatprep.subr.mxu0 0.0
        %5959 = vmatpush1.xpose.msra.mxu0 0.0
        %5960 = vmatprep.subr.mxu0 0.0
        %5961 = vmatpush1.xpose.msra.mxu0 0.0
        %5962 = vmatprep.subr.mxu0 0.0
        %5963 = vmatpush1.xpose.msra.mxu0 0.0
        %5964 = vmatprep.subr.mxu0 0.0
        %5965 = vmatpush1.xpose.msra.mxu0 0.0
        %5966 = vmatprep.subr.mxu0 0.0
        %5967 = vmatpush1.xpose.msra.mxu0 0.0
        %5968 = vmatprep.subr.mxu0 0.0
        %5969 = vmatpush1.xpose.msra.mxu0 0.0
        %5970 = vmatprep.subr.mxu0 0.0
        %5971 = vmatpush1.xpose.msra.mxu0 0.0
        %5972 = vmatprep.subr.mxu0 0.0
        %5973 = vmatpush1.xpose.msra.mxu0 0.0
        %5974 = vmatprep.subr.mxu0 0.0
        %5975 = vmatpush1.xpose.msra.mxu0 0.0
        %5976 = vmatprep.subr.mxu0 0.0
        %5977 = vmatpush1.xpose.msra.mxu0 0.0
        %5978 = vmatprep.subr.mxu0 0.0
        %5979 = vmatpush1.xpose.msra.mxu0 0.0
        %5980 = vmatprep.mubr.f32.mxu0 0.0
        %5981 = vmatmul.mubr.f32.gmra.mrb[0].mxu0 %v5911
        %v5982 = vpop.f32.mrb[0].mxu0
        %v5983 = vadd.f32 0.0, %v5982
        %v5984 = vpop.f32.mrb[0].mxu0
        %5985 = vdwg.mxu0
        %v5986 = vsel %vm5333, %v5983, -inf
        %5987 = vmax.xlane.f32.xlu0 %v5986
        %v5988 = vpop.xlane.xlu0 %5987
        %v5989 = vsub.f32 %v5983, %v5988
        %v5990 = vmul.f32 %v5989, 1.442695
        %v5991 = vpow.pop %v5990
        %v5992 = vsel %vm5333, %v5991, 0.0
        %5993 = vadd.xlane.f32.xlu0 %v5992
        %v5994 = vpop.xlane.xlu0 %5993
        %v5995 = vrcp.pop %v5994
        %v5996 = vmul.f32 %v5991, %v5995
        %v5998 = vsel %vm5333, %v5996, 0
        %6000 = vmatprep.subr.mxu0 0.0
        %6001 = vmatpush1.msra.mxu0 %v5250
        %6002 = vmatprep.subr.mxu0 0.0
        %6003 = vmatpush1.msra.mxu0 0.0
        %6004 = vmatprep.subr.mxu0 0.0
        %6005 = vmatpush1.msra.mxu0 0.0
        %6006 = vmatprep.subr.mxu0 0.0
        %6007 = vmatpush1.msra.mxu0 0.0
        %6008 = vmatprep.subr.mxu0 0.0
        %6009 = vmatpush1.msra.mxu0 0.0
        %6010 = vmatprep.subr.mxu0 0.0
        %6011 = vmatpush1.msra.mxu0 0.0
        %6012 = vmatprep.subr.mxu0 0.0
        %6013 = vmatpush1.msra.mxu0 0.0
        %6014 = vmatprep.subr.mxu0 0.0
        %6015 = vmatpush1.msra.mxu0 0.0
        %6016 = vmatprep.subr.mxu0 0.0
        %6017 = vmatpush1.msra.mxu0 0.0
        %6018 = vmatprep.subr.mxu0 0.0
        %6019 = vmatpush1.msra.mxu0 0.0
        %6020 = vmatprep.subr.mxu0 0.0
        %6021 = vmatpush1.msra.mxu0 0.0
        %6022 = vmatprep.subr.mxu0 0.0
        %6023 = vmatpush1.msra.mxu0 0.0
        %6024 = vmatprep.subr.mxu0 0.0
        %6025 = vmatpush1.msra.mxu0 0.0
        %6026 = vmatprep.subr.mxu0 0.0
        %6027 = vmatpush1.msra.mxu0 0.0
        %6028 = vmatprep.subr.mxu0 0.0
        %6029 = vmatpush1.msra.mxu0 0.0
        %6030 = vmatprep.subr.mxu0 0.0
        %6031 = vmatpush1.msra.mxu0 0.0
        %6032 = vmatprep.subr.mxu0 0.0
        %6033 = vmatpush1.msra.mxu0 0.0
        %6034 = vmatprep.subr.mxu0 0.0
        %6035 = vmatpush1.msra.mxu0 0.0
        %6036 = vmatprep.subr.mxu0 0.0
        %6037 = vmatpush1.msra.mxu0 0.0
        %6038 = vmatprep.subr.mxu0 0.0
        %6039 = vmatpush1.msra.mxu0 0.0
        %6040 = vmatprep.subr.mxu0 0.0
        %6041 = vmatpush1.msra.mxu0 0.0
        %6042 = vmatprep.subr.mxu0 0.0
        %6043 = vmatpush1.msra.mxu0 0.0
        %6044 = vmatprep.subr.mxu0 0.0
        %6045 = vmatpush1.msra.mxu0 0.0
        %6046 = vmatprep.subr.mxu0 0.0
        %6047 = vmatpush1.msra.mxu0 0.0
        %6048 = vmatprep.subr.mxu0 0.0
        %6049 = vmatpush1.msra.mxu0 0.0
        %6050 = vmatprep.subr.mxu0 0.0
        %6051 = vmatpush1.msra.mxu0 0.0
        %6052 = vmatprep.subr.mxu0 0.0
        %6053 = vmatpush1.msra.mxu0 0.0
        %6054 = vmatprep.subr.mxu0 0.0
        %6055 = vmatpush1.msra.mxu0 0.0
        %6056 = vmatprep.subr.mxu0 0.0
        %6057 = vmatpush1.msra.mxu0 0.0
        %6058 = vmatprep.subr.mxu0 0.0
        %6059 = vmatpush1.msra.mxu0 0.0
        %6060 = vmatprep.subr.mxu0 0.0
        %6061 = vmatpush1.msra.mxu0 0.0
        %6062 = vmatprep.subr.mxu0 0.0
        %6063 = vmatpush1.msra.mxu0 0.0
        %6064 = vmatprep.mubr.f32.mxu0 0.0
        %6065 = vmatmul.mubr.f32.gmra.mrb[0].mxu0 %v5998
        %v6066 = vpop.f32.mrb[0].mxu0
        %v6067 = vadd.f32 0.0, %v6066
        %v6068 = vpop.f32.mrb[0].mxu0
        %6069 = vdwg.mxu0
        %6070 = vrot.lane.b32.xlu0 %v4758, 64
        %v6071 = vpop.permute.xlu0 %6070
        %6072 = vrot.lane.b32.xlu0 %v5004, 64
        %v6073 = vpop.permute.xlu0 %6072
        %v6074 = vsel %vm5256, %v6071, 0
        %v6076 = vsel %vm5256, %v6073, 0
        %6078 = vmatprep.subr.mxu0 0.0
        %6079 = vmatpush1.xpose.msra.mxu0 %v6076
        %6080 = vmatprep.subr.mxu0 0.0
        %6081 = vmatpush1.xpose.msra.mxu0 0.0
        %6082 = vmatprep.subr.mxu0 0.0
        %6083 = vmatpush1.xpose.msra.mxu0 0.0
        %6084 = vmatprep.subr.mxu0 0.0
        %6085 = vmatpush1.xpose.msra.mxu0 0.0
        %6086 = vmatprep.subr.mxu0 0.0
        %6087 = vmatpush1.xpose.msra.mxu0 0.0
        %6088 = vmatprep.subr.mxu0 0.0
        %6089 = vmatpush1.xpose.msra.mxu0 0.0
        %6090 = vmatprep.subr.mxu0 0.0
        %6091 = vmatpush1.xpose.msra.mxu0 0.0
        %6092 = vmatprep.subr.mxu0 0.0
        %6093 = vmatpush1.xpose.msra.mxu0 0.0
        %6094 = vmatprep.subr.mxu0 0.0
        %6095 = vmatpush1.xpose.msra.mxu0 0.0
        %6096 = vmatprep.subr.mxu0 0.0
        %6097 = vmatpush1.xpose.msra.mxu0 0.0
        %6098 = vmatprep.subr.mxu0 0.0
        %6099 = vmatpush1.xpose.msra.mxu0 0.0
        %6100 = vmatprep.subr.mxu0 0.0
        %6101 = vmatpush1.xpose.msra.mxu0 0.0
        %6102 = vmatprep.subr.mxu0 0.0
        %6103 = vmatpush1.xpose.msra.mxu0 0.0
        %6104 = vmatprep.subr.mxu0 0.0
        %6105 = vmatpush1.xpose.msra.mxu0 0.0
        %6106 = vmatprep.subr.mxu0 0.0
        %6107 = vmatpush1.xpose.msra.mxu0 0.0
        %6108 = vmatprep.subr.mxu0 0.0
        %6109 = vmatpush1.xpose.msra.mxu0 0.0
        %6110 = vmatprep.subr.mxu0 0.0
        %6111 = vmatpush1.xpose.msra.mxu0 0.0
        %6112 = vmatprep.subr.mxu0 0.0
        %6113 = vmatpush1.xpose.msra.mxu0 0.0
        %6114 = vmatprep.subr.mxu0 0.0
        %6115 = vmatpush1.xpose.msra.mxu0 0.0
        %6116 = vmatprep.subr.mxu0 0.0
        %6117 = vmatpush1.xpose.msra.mxu0 0.0
        %6118 = vmatprep.subr.mxu0 0.0
        %6119 = vmatpush1.xpose.msra.mxu0 0.0
        %6120 = vmatprep.subr.mxu0 0.0
        %6121 = vmatpush1.xpose.msra.mxu0 0.0
        %6122 = vmatprep.subr.mxu0 0.0
        %6123 = vmatpush1.xpose.msra.mxu0 0.0
        %6124 = vmatprep.subr.mxu0 0.0
        %6125 = vmatpush1.xpose.msra.mxu0 0.0
        %6126 = vmatprep.subr.mxu0 0.0
        %6127 = vmatpush1.xpose.msra.mxu0 0.0
        %6128 = vmatprep.subr.mxu0 0.0
        %6129 = vmatpush1.xpose.msra.mxu0 0.0
        %6130 = vmatprep.subr.mxu0 0.0
        %6131 = vmatpush1.xpose.msra.mxu0 0.0
        %6132 = vmatprep.subr.mxu0 0.0
        %6133 = vmatpush1.xpose.msra.mxu0 0.0
        %6134 = vmatprep.subr.mxu0 0.0
        %6135 = vmatpush1.xpose.msra.mxu0 0.0
        %6136 = vmatprep.subr.mxu0 0.0
        %6137 = vmatpush1.xpose.msra.mxu0 0.0
        %6138 = vmatprep.subr.mxu0 0.0
        %6139 = vmatpush1.xpose.msra.mxu0 0.0
        %6140 = vmatprep.subr.mxu0 0.0
        %6141 = vmatpush1.xpose.msra.mxu0 0.0
        %6142 = vmatprep.mubr.f32.mxu0 0.0
        %6143 = vmatmul.mubr.f32.gmra.mrb[0].mxu0 %v6074
        %v6144 = vpop.f32.mrb[0].mxu0
        %v6145 = vadd.f32 0.0, %v6144
        %v6146 = vpop.f32.mrb[0].mxu0
        %6147 = vdwg.mxu0
        %v6148 = vsel %vm5333, %v6145, -inf
        %6149 = vmax.xlane.f32.xlu0 %v6148
        %v6150 = vpop.xlane.xlu0 %6149
        %v6151 = vsub.f32 %v6145, %v6150
        %v6152 = vmul.f32 %v6151, 1.442695
        %v6153 = vpow.pop %v6152
        %v6154 = vsel %vm5333, %v6153, 0.0
        %6155 = vadd.xlane.f32.xlu0 %v6154
        %v6156 = vpop.xlane.xlu0 %6155
        %v6157 = vrcp.pop %v6156
        %v6158 = vmul.f32 %v6153, %v6157
        %6160 = vrot.lane.b32.xlu0 %v5250, 64
        %v6161 = vpop.permute.xlu0 %6160
        %v6164 = vsel %vm5333, %v6158, 0
        %6166 = vmatprep.subr.mxu0 0.0
        %6167 = vmatpush1.msra.mxu0 %v6161
        %6168 = vmatprep.subr.mxu0 0.0
        %6169 = vmatpush1.msra.mxu0 0.0
        %6170 = vmatprep.subr.mxu0 0.0
        %6171 = vmatpush1.msra.mxu0 0.0
        %6172 = vmatprep.subr.mxu0 0.0
        %6173 = vmatpush1.msra.mxu0 0.0
        %6174 = vmatprep.subr.mxu0 0.0
        %6175 = vmatpush1.msra.mxu0 0.0
        %6176 = vmatprep.subr.mxu0 0.0
        %6177 = vmatpush1.msra.mxu0 0.0
        %6178 = vmatprep.subr.mxu0 0.0
        %6179 = vmatpush1.msra.mxu0 0.0
        %6180 = vmatprep.subr.mxu0 0.0
        %6181 = vmatpush1.msra.mxu0 0.0
        %6182 = vmatprep.subr.mxu0 0.0
        %6183 = vmatpush1.msra.mxu0 0.0
        %6184 = vmatprep.subr.mxu0 0.0
        %6185 = vmatpush1.msra.mxu0 0.0
        %6186 = vmatprep.subr.mxu0 0.0
        %6187 = vmatpush1.msra.mxu0 0.0
        %6188 = vmatprep.subr.mxu0 0.0
        %6189 = vmatpush1.msra.mxu0 0.0
        %6190 = vmatprep.subr.mxu0 0.0
        %6191 = vmatpush1.msra.mxu0 0.0
        %6192 = vmatprep.subr.mxu0 0.0
        %6193 = vmatpush1.msra.mxu0 0.0
        %6194 = vmatprep.subr.mxu0 0.0
        %6195 = vmatpush1.msra.mxu0 0.0
        %6196 = vmatprep.subr.mxu0 0.0
        %6197 = vmatpush1.msra.mxu0 0.0
        %6198 = vmatprep.subr.mxu0 0.0
        %6199 = vmatpush1.msra.mxu0 0.0
        %6200 = vmatprep.subr.mxu0 0.0
        %6201 = vmatpush1.msra.mxu0 0.0
        %6202 = vmatprep.subr.mxu0 0.0
        %6203 = vmatpush1.msra.mxu0 0.0
        %6204 = vmatprep.subr.mxu0 0.0
        %6205 = vmatpush1.msra.mxu0 0.0
        %6206 = vmatprep.subr.mxu0 0.0
        %6207 = vmatpush1.msra.mxu0 0.0
        %6208 = vmatprep.subr.mxu0 0.0
        %6209 = vmatpush1.msra.mxu0 0.0
        %6210 = vmatprep.subr.mxu0 0.0
        %6211 = vmatpush1.msra.mxu0 0.0
        %6212 = vmatprep.subr.mxu0 0.0
        %6213 = vmatpush1.msra.mxu0 0.0
        %6214 = vmatprep.subr.mxu0 0.0
        %6215 = vmatpush1.msra.mxu0 0.0
        %6216 = vmatprep.subr.mxu0 0.0
        %6217 = vmatpush1.msra.mxu0 0.0
        %6218 = vmatprep.subr.mxu0 0.0
        %6219 = vmatpush1.msra.mxu0 0.0
        %6220 = vmatprep.subr.mxu0 0.0
        %6221 = vmatpush1.msra.mxu0 0.0
        %6222 = vmatprep.subr.mxu0 0.0
        %6223 = vmatpush1.msra.mxu0 0.0
        %6224 = vmatprep.subr.mxu0 0.0
        %6225 = vmatpush1.msra.mxu0 0.0
        %6226 = vmatprep.subr.mxu0 0.0
        %6227 = vmatpush1.msra.mxu0 0.0
        %6228 = vmatprep.subr.mxu0 0.0
        %6229 = vmatpush1.msra.mxu0 0.0
        %6230 = vmatprep.mubr.f32.mxu0 0.0
        %6231 = vmatmul.mubr.f32.gmra.mrb[0].mxu0 %v6164
        %v6232 = vpop.f32.mrb[0].mxu0
        %v6233 = vadd.f32 0.0, %v6232
        %v6234 = vpop.f32.mrb[0].mxu0
        %6235 = vdwg.mxu0
        %v6237 = vsel %vm5256, %v4760, 0
        %v6240 = vsel %vm5256, %v5006, 0
        %6242 = vmatprep.subr.mxu0 0.0
        %6243 = vmatpush1.xpose.msra.mxu0 %v6240
        %6244 = vmatprep.subr.mxu0 0.0
        %6245 = vmatpush1.xpose.msra.mxu0 0.0
        %6246 = vmatprep.subr.mxu0 0.0
        %6247 = vmatpush1.xpose.msra.mxu0 0.0
        %6248 = vmatprep.subr.mxu0 0.0
        %6249 = vmatpush1.xpose.msra.mxu0 0.0
        %6250 = vmatprep.subr.mxu0 0.0
        %6251 = vmatpush1.xpose.msra.mxu0 0.0
        %6252 = vmatprep.subr.mxu0 0.0
        %6253 = vmatpush1.xpose.msra.mxu0 0.0
        %6254 = vmatprep.subr.mxu0 0.0
        %6255 = vmatpush1.xpose.msra.mxu0 0.0
        %6256 = vmatprep.subr.mxu0 0.0
        %6257 = vmatpush1.xpose.msra.mxu0 0.0
        %6258 = vmatprep.subr.mxu0 0.0
        %6259 = vmatpush1.xpose.msra.mxu0 0.0
        %6260 = vmatprep.subr.mxu0 0.0
        %6261 = vmatpush1.xpose.msra.mxu0 0.0
        %6262 = vmatprep.subr.mxu0 0.0
        %6263 = vmatpush1.xpose.msra.mxu0 0.0
        %6264 = vmatprep.subr.mxu0 0.0
        %6265 = vmatpush1.xpose.msra.mxu0 0.0
        %6266 = vmatprep.subr.mxu0 0.0
        %6267 = vmatpush1.xpose.msra.mxu0 0.0
        %6268 = vmatprep.subr.mxu0 0.0
        %6269 = vmatpush1.xpose.msra.mxu0 0.0
        %6270 = vmatprep.subr.mxu0 0.0
        %6271 = vmatpush1.xpose.msra.mxu0 0.0
        %6272 = vmatprep.subr.mxu0 0.0
        %6273 = vmatpush1.xpose.msra.mxu0 0.0
        %6274 = vmatprep.subr.mxu0 0.0
        %6275 = vmatpush1.xpose.msra.mxu0 0.0
        %6276 = vmatprep.subr.mxu0 0.0
        %6277 = vmatpush1.xpose.msra.mxu0 0.0
        %6278 = vmatprep.subr.mxu0 0.0
        %6279 = vmatpush1.xpose.msra.mxu0 0.0
        %6280 = vmatprep.subr.mxu0 0.0
        %6281 = vmatpush1.xpose.msra.mxu0 0.0
        %6282 = vmatprep.subr.mxu0 0.0
        %6283 = vmatpush1.xpose.msra.mxu0 0.0
        %6284 = vmatprep.subr.mxu0 0.0
        %6285 = vmatpush1.xpose.msra.mxu0 0.0
        %6286 = vmatprep.subr.mxu0 0.0
        %6287 = vmatpush1.xpose.msra.mxu0 0.0
        %6288 = vmatprep.subr.mxu0 0.0
        %6289 = vmatpush1.xpose.msra.mxu0 0.0
        %6290 = vmatprep.subr.mxu0 0.0
        %6291 = vmatpush1.xpose.msra.mxu0 0.0
        %6292 = vmatprep.subr.mxu0 0.0
        %6293 = vmatpush1.xpose.msra.mxu0 0.0
        %6294 = vmatprep.subr.mxu0 0.0
        %6295 = vmatpush1.xpose.msra.mxu0 0.0
        %6296 = vmatprep.subr.mxu0 0.0
        %6297 = vmatpush1.xpose.msra.mxu0 0.0
        %6298 = vmatprep.subr.mxu0 0.0
        %6299 = vmatpush1.xpose.msra.mxu0 0.0
        %6300 = vmatprep.subr.mxu0 0.0
        %6301 = vmatpush1.xpose.msra.mxu0 0.0
        %6302 = vmatprep.subr.mxu0 0.0
        %6303 = vmatpush1.xpose.msra.mxu0 0.0
        %6304 = vmatprep.subr.mxu0 0.0
        %6305 = vmatpush1.xpose.msra.mxu0 0.0
        %6306 = vmatprep.mubr.f32.mxu0 0.0
        %6307 = vmatmul.mubr.f32.gmra.mrb[0].mxu0 %v6237
        %v6308 = vpop.f32.mrb[0].mxu0
        %v6309 = vadd.f32 0.0, %v6308
        %v6310 = vpop.f32.mrb[0].mxu0
        %6311 = vdwg.mxu0
        %v6312 = vsel %vm5333, %v6309, -inf
        %6313 = vmax.xlane.f32.xlu0 %v6312
        %v6314 = vpop.xlane.xlu0 %6313
        %v6315 = vsub.f32 %v6309, %v6314
        %v6316 = vmul.f32 %v6315, 1.442695
        %v6317 = vpow.pop %v6316
        %v6318 = vsel %vm5333, %v6317, 0.0
        %6319 = vadd.xlane.f32.xlu0 %v6318
        %v6320 = vpop.xlane.xlu0 %6319
        %v6321 = vrcp.pop %v6320
        %v6322 = vmul.f32 %v6317, %v6321
        %v6324 = vsel %vm5333, %v6322, 0
        %6326 = vmatprep.subr.mxu0 0.0
        %6327 = vmatpush1.msra.mxu0 %v5252
        %6328 = vmatprep.subr.mxu0 0.0
        %6329 = vmatpush1.msra.mxu0 0.0
        %6330 = vmatprep.subr.mxu0 0.0
        %6331 = vmatpush1.msra.mxu0 0.0
        %6332 = vmatprep.subr.mxu0 0.0
        %6333 = vmatpush1.msra.mxu0 0.0
        %6334 = vmatprep.subr.mxu0 0.0
        %6335 = vmatpush1.msra.mxu0 0.0
        %6336 = vmatprep.subr.mxu0 0.0
        %6337 = vmatpush1.msra.mxu0 0.0
        %6338 = vmatprep.subr.mxu0 0.0
        %6339 = vmatpush1.msra.mxu0 0.0
        %6340 = vmatprep.subr.mxu0 0.0
        %6341 = vmatpush1.msra.mxu0 0.0
        %6342 = vmatprep.subr.mxu0 0.0
        %6343 = vmatpush1.msra.mxu0 0.0
        %6344 = vmatprep.subr.mxu0 0.0
        %6345 = vmatpush1.msra.mxu0 0.0
        %6346 = vmatprep.subr.mxu0 0.0
        %6347 = vmatpush1.msra.mxu0 0.0
        %6348 = vmatprep.subr.mxu0 0.0
        %6349 = vmatpush1.msra.mxu0 0.0
        %6350 = vmatprep.subr.mxu0 0.0
        %6351 = vmatpush1.msra.mxu0 0.0
        %6352 = vmatprep.subr.mxu0 0.0
        %6353 = vmatpush1.msra.mxu0 0.0
        %6354 = vmatprep.subr.mxu0 0.0
        %6355 = vmatpush1.msra.mxu0 0.0
        %6356 = vmatprep.subr.mxu0 0.0
        %6357 = vmatpush1.msra.mxu0 0.0
        %6358 = vmatprep.subr.mxu0 0.0
        %6359 = vmatpush1.msra.mxu0 0.0
        %6360 = vmatprep.subr.mxu0 0.0
        %6361 = vmatpush1.msra.mxu0 0.0
        %6362 = vmatprep.subr.mxu0 0.0
        %6363 = vmatpush1.msra.mxu0 0.0
        %6364 = vmatprep.subr.mxu0 0.0
        %6365 = vmatpush1.msra.mxu0 0.0
        %6366 = vmatprep.subr.mxu0 0.0
        %6367 = vmatpush1.msra.mxu0 0.0
        %6368 = vmatprep.subr.mxu0 0.0
        %6369 = vmatpush1.msra.mxu0 0.0
        %6370 = vmatprep.subr.mxu0 0.0
        %6371 = vmatpush1.msra.mxu0 0.0
        %6372 = vmatprep.subr.mxu0 0.0
        %6373 = vmatpush1.msra.mxu0 0.0
        %6374 = vmatprep.subr.mxu0 0.0
        %6375 = vmatpush1.msra.mxu0 0.0
        %6376 = vmatprep.subr.mxu0 0.0
        %6377 = vmatpush1.msra.mxu0 0.0
        %6378 = vmatprep.subr.mxu0 0.0
        %6379 = vmatpush1.msra.mxu0 0.0
        %6380 = vmatprep.subr.mxu0 0.0
        %6381 = vmatpush1.msra.mxu0 0.0
        %6382 = vmatprep.subr.mxu0 0.0
        %6383 = vmatpush1.msra.mxu0 0.0
        %6384 = vmatprep.subr.mxu0 0.0
        %6385 = vmatpush1.msra.mxu0 0.0
        %6386 = vmatprep.subr.mxu0 0.0
        %6387 = vmatpush1.msra.mxu0 0.0
        %6388 = vmatprep.subr.mxu0 0.0
        %6389 = vmatpush1.msra.mxu0 0.0
        %6390 = vmatprep.mubr.f32.mxu0 0.0
        %6391 = vmatmul.mubr.f32.gmra.mrb[0].mxu0 %v6324
        %v6392 = vpop.f32.mrb[0].mxu0
        %v6393 = vadd.f32 0.0, %v6392
        %v6394 = vpop.f32.mrb[0].mxu0
        %6395 = vdwg.mxu0
        %6396 = vrot.lane.b32.xlu0 %v4760, 64
        %v6397 = vpop.permute.xlu0 %6396
        %6398 = vrot.lane.b32.xlu0 %v5006, 64
        %v6399 = vpop.permute.xlu0 %6398
        %v6400 = vsel %vm5256, %v6397, 0
        %v6402 = vsel %vm5256, %v6399, 0
        %6404 = vmatprep.subr.mxu0 0.0
        %6405 = vmatpush1.xpose.msra.mxu0 %v6402
        %6406 = vmatprep.subr.mxu0 0.0
        %6407 = vmatpush1.xpose.msra.mxu0 0.0
        %6408 = vmatprep.subr.mxu0 0.0
        %6409 = vmatpush1.xpose.msra.mxu0 0.0
        %6410 = vmatprep.subr.mxu0 0.0
        %6411 = vmatpush1.xpose.msra.mxu0 0.0
        %6412 = vmatprep.subr.mxu0 0.0
        %6413 = vmatpush1.xpose.msra.mxu0 0.0
        %6414 = vmatprep.subr.mxu0 0.0
        %6415 = vmatpush1.xpose.msra.mxu0 0.0
        %6416 = vmatprep.subr.mxu0 0.0
        %6417 = vmatpush1.xpose.msra.mxu0 0.0
        %6418 = vmatprep.subr.mxu0 0.0
        %6419 = vmatpush1.xpose.msra.mxu0 0.0
        %6420 = vmatprep.subr.mxu0 0.0
        %6421 = vmatpush1.xpose.msra.mxu0 0.0
        %6422 = vmatprep.subr.mxu0 0.0
        %6423 = vmatpush1.xpose.msra.mxu0 0.0
        %6424 = vmatprep.subr.mxu0 0.0
        %6425 = vmatpush1.xpose.msra.mxu0 0.0
        %6426 = vmatprep.subr.mxu0 0.0
        %6427 = vmatpush1.xpose.msra.mxu0 0.0
        %6428 = vmatprep.subr.mxu0 0.0
        %6429 = vmatpush1.xpose.msra.mxu0 0.0
        %6430 = vmatprep.subr.mxu0 0.0
        %6431 = vmatpush1.xpose.msra.mxu0 0.0
        %6432 = vmatprep.subr.mxu0 0.0
        %6433 = vmatpush1.xpose.msra.mxu0 0.0
        %6434 = vmatprep.subr.mxu0 0.0
        %6435 = vmatpush1.xpose.msra.mxu0 0.0
        %6436 = vmatprep.subr.mxu0 0.0
        %6437 = vmatpush1.xpose.msra.mxu0 0.0
        %6438 = vmatprep.subr.mxu0 0.0
        %6439 = vmatpush1.xpose.msra.mxu0 0.0
        %6440 = vmatprep.subr.mxu0 0.0
        %6441 = vmatpush1.xpose.msra.mxu0 0.0
        %6442 = vmatprep.subr.mxu0 0.0
        %6443 = vmatpush1.xpose.msra.mxu0 0.0
        %6444 = vmatprep.subr.mxu0 0.0
        %6445 = vmatpush1.xpose.msra.mxu0 0.0
        %6446 = vmatprep.subr.mxu0 0.0
        %6447 = vmatpush1.xpose.msra.mxu0 0.0
        %6448 = vmatprep.subr.mxu0 0.0
        %6449 = vmatpush1.xpose.msra.mxu0 0.0
        %6450 = vmatprep.subr.mxu0 0.0
        %6451 = vmatpush1.xpose.msra.mxu0 0.0
        %6452 = vmatprep.subr.mxu0 0.0
        %6453 = vmatpush1.xpose.msra.mxu0 0.0
        %6454 = vmatprep.subr.mxu0 0.0
        %6455 = vmatpush1.xpose.msra.mxu0 0.0
        %6456 = vmatprep.subr.mxu0 0.0
        %6457 = vmatpush1.xpose.msra.mxu0 0.0
        %6458 = vmatprep.subr.mxu0 0.0
        %6459 = vmatpush1.xpose.msra.mxu0 0.0
        %6460 = vmatprep.subr.mxu0 0.0
        %6461 = vmatpush1.xpose.msra.mxu0 0.0
        %6462 = vmatprep.subr.mxu0 0.0
        %6463 = vmatpush1.xpose.msra.mxu0 0.0
        %6464 = vmatprep.subr.mxu0 0.0
        %6465 = vmatpush1.xpose.msra.mxu0 0.0
        %6466 = vmatprep.subr.mxu0 0.0
        %6467 = vmatpush1.xpose.msra.mxu0 0.0
        %6468 = vmatprep.mubr.f32.mxu0 0.0
        %6469 = vmatmul.mubr.f32.gmra.mrb[0].mxu0 %v6400
        %v6470 = vpop.f32.mrb[0].mxu0
        %v6471 = vadd.f32 0.0, %v6470
        %v6472 = vpop.f32.mrb[0].mxu0
        %6473 = vdwg.mxu0
        %v6474 = vsel %vm5333, %v6471, -inf
        %6475 = vmax.xlane.f32.xlu0 %v6474
        %v6476 = vpop.xlane.xlu0 %6475
        %v6477 = vsub.f32 %v6471, %v6476
        %v6478 = vmul.f32 %v6477, 1.442695
        %v6479 = vpow.pop %v6478
        %v6480 = vsel %vm5333, %v6479, 0.0
        %6481 = vadd.xlane.f32.xlu0 %v6480
        %v6482 = vpop.xlane.xlu0 %6481
        %v6483 = vrcp.pop %v6482
        %v6484 = vmul.f32 %v6479, %v6483
        %6486 = vrot.lane.b32.xlu0 %v5252, 64
        %v6487 = vpop.permute.xlu0 %6486
        %v6490 = vsel %vm5333, %v6484, 0
        %6492 = vmatprep.subr.mxu0 0.0
        %6493 = vmatpush1.msra.mxu0 %v6487
        %6494 = vmatprep.subr.mxu0 0.0
        %6495 = vmatpush1.msra.mxu0 0.0
        %6496 = vmatprep.subr.mxu0 0.0
        %6497 = vmatpush1.msra.mxu0 0.0
        %6498 = vmatprep.subr.mxu0 0.0
        %6499 = vmatpush1.msra.mxu0 0.0
        %6500 = vmatprep.subr.mxu0 0.0
        %6501 = vmatpush1.msra.mxu0 0.0
        %6502 = vmatprep.subr.mxu0 0.0
        %6503 = vmatpush1.msra.mxu0 0.0
        %6504 = vmatprep.subr.mxu0 0.0
        %6505 = vmatpush1.msra.mxu0 0.0
        %6506 = vmatprep.subr.mxu0 0.0
        %6507 = vmatpush1.msra.mxu0 0.0
        %6508 = vmatprep.subr.mxu0 0.0
        %6509 = vmatpush1.msra.mxu0 0.0
        %6510 = vmatprep.subr.mxu0 0.0
        %6511 = vmatpush1.msra.mxu0 0.0
        %6512 = vmatprep.subr.mxu0 0.0
        %6513 = vmatpush1.msra.mxu0 0.0
        %6514 = vmatprep.subr.mxu0 0.0
        %6515 = vmatpush1.msra.mxu0 0.0
        %6516 = vmatprep.subr.mxu0 0.0
        %6517 = vmatpush1.msra.mxu0 0.0
        %6518 = vmatprep.subr.mxu0 0.0
        %6519 = vmatpush1.msra.mxu0 0.0
        %6520 = vmatprep.subr.mxu0 0.0
        %6521 = vmatpush1.msra.mxu0 0.0
        %6522 = vmatprep.subr.mxu0 0.0
        %6523 = vmatpush1.msra.mxu0 0.0
        %6524 = vmatprep.subr.mxu0 0.0
        %6525 = vmatpush1.msra.mxu0 0.0
        %6526 = vmatprep.subr.mxu0 0.0
        %6527 = vmatpush1.msra.mxu0 0.0
        %6528 = vmatprep.subr.mxu0 0.0
        %6529 = vmatpush1.msra.mxu0 0.0
        %6530 = vmatprep.subr.mxu0 0.0
        %6531 = vmatpush1.msra.mxu0 0.0
        %6532 = vmatprep.subr.mxu0 0.0
        %6533 = vmatpush1.msra.mxu0 0.0
        %6534 = vmatprep.subr.mxu0 0.0
        %6535 = vmatpush1.msra.mxu0 0.0
        %6536 = vmatprep.subr.mxu0 0.0
        %6537 = vmatpush1.msra.mxu0 0.0
        %6538 = vmatprep.subr.mxu0 0.0
        %6539 = vmatpush1.msra.mxu0 0.0
        %6540 = vmatprep.subr.mxu0 0.0
        %6541 = vmatpush1.msra.mxu0 0.0
        %6542 = vmatprep.subr.mxu0 0.0
        %6543 = vmatpush1.msra.mxu0 0.0
        %6544 = vmatprep.subr.mxu0 0.0
        %6545 = vmatpush1.msra.mxu0 0.0
        %6546 = vmatprep.subr.mxu0 0.0
        %6547 = vmatpush1.msra.mxu0 0.0
        %6548 = vmatprep.subr.mxu0 0.0
        %6549 = vmatpush1.msra.mxu0 0.0
        %6550 = vmatprep.subr.mxu0 0.0
        %6551 = vmatpush1.msra.mxu0 0.0
        %6552 = vmatprep.subr.mxu0 0.0
        %6553 = vmatpush1.msra.mxu0 0.0
        %6554 = vmatprep.subr.mxu0 0.0
        %6555 = vmatpush1.msra.mxu0 0.0
        %6556 = vmatprep.mubr.f32.mxu0 0.0
        %6557 = vmatmul.mubr.f32.gmra.mrb[0].mxu0 %v6490
        %v6558 = vpop.f32.mrb[0].mxu0
        %v6559 = vadd.f32 0.0, %v6558
        %v6560 = vpop.f32.mrb[0].mxu0
        %6561 = vdwg.mxu0
        %6563 = vrot.lane.b32.xlu0 %v5581, 64
        %v6564 = vpop.permute.xlu0 %6563
        %6567 = vrot.lane.b32.xlu0 %v5907, 64
        %v6568 = vpop.permute.xlu0 %6567
        %6571 = vrot.lane.b32.xlu0 %v6233, 64
        %v6572 = vpop.permute.xlu0 %6571
        %6575 = vrot.lane.b32.xlu0 %v6559, 64
        %v6576 = vpop.permute.xlu0 %6575
        %v6578 = vsel %vm5256, %v5415, %v6564
        %v6579 = vsel %vm5256, %v5741, %v6568
        %v6580 = vsel %vm5256, %v6067, %v6572
        %v6581 = vsel %vm5256, %v6393, %v6576
        %v6582 = vpack.c.bf16 %v6578, %v6578
        %v6583 = vpack.c.bf16 %v6579, %v6579
        %v6584 = vpack.c.bf16 %v6580, %v6580
        %v6585 = vpack.c.bf16 %v6581, %v6581
        %v6586 = vld [vmem:[#allocation11] sm:$0xff]
        %v6587 = vld [vmem:[#allocation11 + $0x8] sm:$0xff]
        %v6588 = vld [vmem:[#allocation11 + $0x10] sm:$0xff]
        %v6589 = vld [vmem:[#allocation11 + $0x18] sm:$0xff]
        %v6590 = vld [vmem:[#allocation11 + $0x20] sm:$0xff]
        %v6591 = vld [vmem:[#allocation11 + $0x28] sm:$0xff]
        %v6592 = vld [vmem:[#allocation11 + $0x30] sm:$0xff]
        %v6593 = vld [vmem:[#allocation11 + $0x38] sm:$0xff]
        %v6594 = vld [vmem:[#allocation11 + $0x40] sm:$0xff]
        %v6595 = vld [vmem:[#allocation11 + $0x48] sm:$0xff]
        %v6596 = vld [vmem:[#allocation11 + $0x50] sm:$0xff]
        %v6597 = vld [vmem:[#allocation11 + $0x58] sm:$0xff]
        %v6598 = vld [vmem:[#allocation11 + $0x60] sm:$0xff]
        %v6599 = vld [vmem:[#allocation11 + $0x68] sm:$0xff]
        %v6600 = vld [vmem:[#allocation11 + $0x70] sm:$0xff]
        %v6601 = vld [vmem:[#allocation11 + $0x78] sm:$0xff]
        %v6602 = vld [vmem:[#allocation11 + $0x80] sm:$0xff]
        %v6603 = vld [vmem:[#allocation11 + $0x88] sm:$0xff]
        %v6604 = vld [vmem:[#allocation11 + $0x90] sm:$0xff]
        %v6605 = vld [vmem:[#allocation11 + $0x98] sm:$0xff]
        %v6606 = vld [vmem:[#allocation11 + $0xa0] sm:$0xff]
        %v6607 = vld [vmem:[#allocation11 + $0xa8] sm:$0xff]
        %v6608 = vld [vmem:[#allocation11 + $0xb0] sm:$0xff]
        %v6609 = vld [vmem:[#allocation11 + $0xb8] sm:$0xff]
        %v6610 = vld [vmem:[#allocation11 + $0xc0] sm:$0xff]
        %v6611 = vld [vmem:[#allocation11 + $0xc8] sm:$0xff]
        %v6612 = vld [vmem:[#allocation11 + $0xd0] sm:$0xff]
        %v6613 = vld [vmem:[#allocation11 + $0xd8] sm:$0xff]
        %v6614 = vld [vmem:[#allocation11 + $0xe0] sm:$0xff]
        %v6615 = vld [vmem:[#allocation11 + $0xe8] sm:$0xff]
        %v6616 = vld [vmem:[#allocation11 + $0xf0] sm:$0xff]
        %v6617 = vld [vmem:[#allocation11 + $0xf8] sm:$0xff]
        %v6618 = vld [vmem:[#allocation11 + $0x100] sm:$0xff]
        %v6619 = vld [vmem:[#allocation11 + $0x108] sm:$0xff]
        %v6620 = vld [vmem:[#allocation11 + $0x110] sm:$0xff]
        %v6621 = vld [vmem:[#allocation11 + $0x118] sm:$0xff]
        %v6622 = vld [vmem:[#allocation11 + $0x120] sm:$0xff]
        %v6623 = vld [vmem:[#allocation11 + $0x128] sm:$0xff]
        %v6624 = vld [vmem:[#allocation11 + $0x130] sm:$0xff]
        %v6625 = vld [vmem:[#allocation11 + $0x138] sm:$0xff]
        %v6626 = vld [vmem:[#allocation11 + $0x140] sm:$0xff]
        %v6627 = vld [vmem:[#allocation11 + $0x148] sm:$0xff]
        %v6628 = vld [vmem:[#allocation11 + $0x150] sm:$0xff]
        %v6629 = vld [vmem:[#allocation11 + $0x158] sm:$0xff]
        %v6630 = vld [vmem:[#allocation11 + $0x160] sm:$0xff]
        %v6631 = vld [vmem:[#allocation11 + $0x168] sm:$0xff]
        %v6632 = vld [vmem:[#allocation11 + $0x170] sm:$0xff]
        %v6633 = vld [vmem:[#allocation11 + $0x178] sm:$0xff]
        %v6634 = vld [vmem:[#allocation11 + $0x180] sm:$0xff]
        %v6635 = vld [vmem:[#allocation11 + $0x188] sm:$0xff]
        %v6636 = vld [vmem:[#allocation11 + $0x190] sm:$0xff]
        %v6637 = vld [vmem:[#allocation11 + $0x198] sm:$0xff]
        %v6638 = vld [vmem:[#allocation11 + $0x1a0] sm:$0xff]
        %v6639 = vld [vmem:[#allocation11 + $0x1a8] sm:$0xff]
        %v6640 = vld [vmem:[#allocation11 + $0x1b0] sm:$0xff]
        %v6641 = vld [vmem:[#allocation11 + $0x1b8] sm:$0xff]
        %v6642 = vld [vmem:[#allocation11 + $0x1c0] sm:$0xff]
        %v6643 = vld [vmem:[#allocation11 + $0x1c8] sm:$0xff]
        %v6644 = vld [vmem:[#allocation11 + $0x1d0] sm:$0xff]
        %v6645 = vld [vmem:[#allocation11 + $0x1d8] sm:$0xff]
        %v6646 = vld [vmem:[#allocation11 + $0x1e0] sm:$0xff]
        %v6647 = vld [vmem:[#allocation11 + $0x1e8] sm:$0xff]
        %v6648 = vld [vmem:[#allocation11 + $0x1f0] sm:$0xff]
        %v6649 = vld [vmem:[#allocation11 + $0x1f8] sm:$0xff]
        %v6650 = vld [vmem:[#allocation11 + $0x200] sm:$0xff]
        %v6651 = vld [vmem:[#allocation11 + $0x208] sm:$0xff]
        %v6652 = vld [vmem:[#allocation11 + $0x210] sm:$0xff]
        %v6653 = vld [vmem:[#allocation11 + $0x218] sm:$0xff]
        %v6654 = vld [vmem:[#allocation11 + $0x220] sm:$0xff]
        %v6655 = vld [vmem:[#allocation11 + $0x228] sm:$0xff]
        %v6656 = vld [vmem:[#allocation11 + $0x230] sm:$0xff]
        %v6657 = vld [vmem:[#allocation11 + $0x238] sm:$0xff]
        %v6658 = vld [vmem:[#allocation11 + $0x240] sm:$0xff]
        %v6659 = vld [vmem:[#allocation11 + $0x248] sm:$0xff]
        %v6660 = vld [vmem:[#allocation11 + $0x250] sm:$0xff]
        %v6661 = vld [vmem:[#allocation11 + $0x258] sm:$0xff]
        %v6662 = vld [vmem:[#allocation11 + $0x260] sm:$0xff]
        %v6663 = vld [vmem:[#allocation11 + $0x268] sm:$0xff]
        %v6664 = vld [vmem:[#allocation11 + $0x270] sm:$0xff]
        %v6665 = vld [vmem:[#allocation11 + $0x278] sm:$0xff]
        %v6666 = vld [vmem:[#allocation11 + $0x280] sm:$0xff]
        %v6667 = vld [vmem:[#allocation11 + $0x288] sm:$0xff]
        %v6668 = vld [vmem:[#allocation11 + $0x290] sm:$0xff]
        %v6669 = vld [vmem:[#allocation11 + $0x298] sm:$0xff]
        %v6670 = vld [vmem:[#allocation11 + $0x2a0] sm:$0xff]
        %v6671 = vld [vmem:[#allocation11 + $0x2a8] sm:$0xff]
        %v6672 = vld [vmem:[#allocation11 + $0x2b0] sm:$0xff]
        %v6673 = vld [vmem:[#allocation11 + $0x2b8] sm:$0xff]
        %v6674 = vld [vmem:[#allocation11 + $0x2c0] sm:$0xff]
        %v6675 = vld [vmem:[#allocation11 + $0x2c8] sm:$0xff]
        %v6676 = vld [vmem:[#allocation11 + $0x2d0] sm:$0xff]
        %v6677 = vld [vmem:[#allocation11 + $0x2d8] sm:$0xff]
        %v6678 = vld [vmem:[#allocation11 + $0x2e0] sm:$0xff]
        %v6679 = vld [vmem:[#allocation11 + $0x2e8] sm:$0xff]
        %v6680 = vld [vmem:[#allocation11 + $0x2f0] sm:$0xff]
        %v6681 = vld [vmem:[#allocation11 + $0x2f8] sm:$0xff]
        %v6682 = vld [vmem:[#allocation11 + $0x300] sm:$0xff]
        %v6683 = vld [vmem:[#allocation11 + $0x308] sm:$0xff]
        %v6684 = vld [vmem:[#allocation11 + $0x310] sm:$0xff]
        %v6685 = vld [vmem:[#allocation11 + $0x318] sm:$0xff]
        %v6686 = vld [vmem:[#allocation11 + $0x320] sm:$0xff]
        %v6687 = vld [vmem:[#allocation11 + $0x328] sm:$0xff]
        %v6688 = vld [vmem:[#allocation11 + $0x330] sm:$0xff]
        %v6689 = vld [vmem:[#allocation11 + $0x338] sm:$0xff]
        %v6690 = vld [vmem:[#allocation11 + $0x340] sm:$0xff]
        %v6691 = vld [vmem:[#allocation11 + $0x348] sm:$0xff]
        %v6692 = vld [vmem:[#allocation11 + $0x350] sm:$0xff]
        %v6693 = vld [vmem:[#allocation11 + $0x358] sm:$0xff]
        %v6694 = vld [vmem:[#allocation11 + $0x360] sm:$0xff]
        %v6695 = vld [vmem:[#allocation11 + $0x368] sm:$0xff]
        %v6696 = vld [vmem:[#allocation11 + $0x370] sm:$0xff]
        %v6697 = vld [vmem:[#allocation11 + $0x378] sm:$0xff]
        %v6698 = vld [vmem:[#allocation11 + $0x380] sm:$0xff]
        %v6699 = vld [vmem:[#allocation11 + $0x388] sm:$0xff]
        %v6700 = vld [vmem:[#allocation11 + $0x390] sm:$0xff]
        %v6701 = vld [vmem:[#allocation11 + $0x398] sm:$0xff]
        %v6702 = vld [vmem:[#allocation11 + $0x3a0] sm:$0xff]
        %v6703 = vld [vmem:[#allocation11 + $0x3a8] sm:$0xff]
        %v6704 = vld [vmem:[#allocation11 + $0x3b0] sm:$0xff]
        %v6705 = vld [vmem:[#allocation11 + $0x3b8] sm:$0xff]
        %v6706 = vld [vmem:[#allocation11 + $0x3c0] sm:$0xff]
        %v6707 = vld [vmem:[#allocation11 + $0x3c8] sm:$0xff]
        %v6708 = vld [vmem:[#allocation11 + $0x3d0] sm:$0xff]
        %v6709 = vld [vmem:[#allocation11 + $0x3d8] sm:$0xff]
        %v6710 = vld [vmem:[#allocation11 + $0x3e0] sm:$0xff]
        %v6711 = vld [vmem:[#allocation11 + $0x3e8] sm:$0xff]
        %v6712 = vld [vmem:[#allocation11 + $0x3f0] sm:$0xff]
        %v6713 = vld [vmem:[#allocation11 + $0x3f8] sm:$0xff]
        %v6714 = vld [vmem:[#allocation11 + $0x400] sm:$0xff]
        %v6715 = vld [vmem:[#allocation11 + $0x408] sm:$0xff]
        %v6716 = vld [vmem:[#allocation11 + $0x410] sm:$0xff]
        %v6717 = vld [vmem:[#allocation11 + $0x418] sm:$0xff]
        %v6718 = vld [vmem:[#allocation11 + $0x420] sm:$0xff]
        %v6719 = vld [vmem:[#allocation11 + $0x428] sm:$0xff]
        %v6720 = vld [vmem:[#allocation11 + $0x430] sm:$0xff]
        %v6721 = vld [vmem:[#allocation11 + $0x438] sm:$0xff]
        %v6722 = vld [vmem:[#allocation11 + $0x440] sm:$0xff]
        %v6723 = vld [vmem:[#allocation11 + $0x448] sm:$0xff]
        %v6724 = vld [vmem:[#allocation11 + $0x450] sm:$0xff]
        %v6725 = vld [vmem:[#allocation11 + $0x458] sm:$0xff]
        %v6726 = vld [vmem:[#allocation11 + $0x460] sm:$0xff]
        %v6727 = vld [vmem:[#allocation11 + $0x468] sm:$0xff]
        %v6728 = vld [vmem:[#allocation11 + $0x470] sm:$0xff]
        %v6729 = vld [vmem:[#allocation11 + $0x478] sm:$0xff]
        %v6730 = vld [vmem:[#allocation11 + $0x480] sm:$0xff]
        %v6731 = vld [vmem:[#allocation11 + $0x488] sm:$0xff]
        %v6732 = vld [vmem:[#allocation11 + $0x490] sm:$0xff]
        %v6733 = vld [vmem:[#allocation11 + $0x498] sm:$0xff]
        %v6734 = vld [vmem:[#allocation11 + $0x4a0] sm:$0xff]
        %v6735 = vld [vmem:[#allocation11 + $0x4a8] sm:$0xff]
        %v6736 = vld [vmem:[#allocation11 + $0x4b0] sm:$0xff]
        %v6737 = vld [vmem:[#allocation11 + $0x4b8] sm:$0xff]
        %v6738 = vld [vmem:[#allocation11 + $0x4c0] sm:$0xff]
        %v6739 = vld [vmem:[#allocation11 + $0x4c8] sm:$0xff]
        %v6740 = vld [vmem:[#allocation11 + $0x4d0] sm:$0xff]
        %v6741 = vld [vmem:[#allocation11 + $0x4d8] sm:$0xff]
        %v6742 = vld [vmem:[#allocation11 + $0x4e0] sm:$0xff]
        %v6743 = vld [vmem:[#allocation11 + $0x4e8] sm:$0xff]
        %v6744 = vld [vmem:[#allocation11 + $0x4f0] sm:$0xff]
        %v6745 = vld [vmem:[#allocation11 + $0x4f8] sm:$0xff]
        %v6746 = vld [vmem:[#allocation11 + $0x500] sm:$0xff]
        %v6747 = vld [vmem:[#allocation11 + $0x508] sm:$0xff]
        %v6748 = vld [vmem:[#allocation11 + $0x510] sm:$0xff]
        %v6749 = vld [vmem:[#allocation11 + $0x518] sm:$0xff]
        %v6750 = vld [vmem:[#allocation11 + $0x520] sm:$0xff]
        %v6751 = vld [vmem:[#allocation11 + $0x528] sm:$0xff]
        %v6752 = vld [vmem:[#allocation11 + $0x530] sm:$0xff]
        %v6753 = vld [vmem:[#allocation11 + $0x538] sm:$0xff]
        %v6754 = vld [vmem:[#allocation11 + $0x540] sm:$0xff]
        %v6755 = vld [vmem:[#allocation11 + $0x548] sm:$0xff]
        %v6756 = vld [vmem:[#allocation11 + $0x550] sm:$0xff]
        %v6757 = vld [vmem:[#allocation11 + $0x558] sm:$0xff]
        %v6758 = vld [vmem:[#allocation11 + $0x560] sm:$0xff]
        %v6759 = vld [vmem:[#allocation11 + $0x568] sm:$0xff]
        %v6760 = vld [vmem:[#allocation11 + $0x570] sm:$0xff]
        %v6761 = vld [vmem:[#allocation11 + $0x578] sm:$0xff]
        %v6762 = vld [vmem:[#allocation11 + $0x580] sm:$0xff]
        %v6763 = vld [vmem:[#allocation11 + $0x588] sm:$0xff]
        %v6764 = vld [vmem:[#allocation11 + $0x590] sm:$0xff]
        %v6765 = vld [vmem:[#allocation11 + $0x598] sm:$0xff]
        %v6766 = vld [vmem:[#allocation11 + $0x5a0] sm:$0xff]
        %v6767 = vld [vmem:[#allocation11 + $0x5a8] sm:$0xff]
        %v6768 = vld [vmem:[#allocation11 + $0x5b0] sm:$0xff]
        %v6769 = vld [vmem:[#allocation11 + $0x5b8] sm:$0xff]
        %v6770 = vld [vmem:[#allocation11 + $0x5c0] sm:$0xff]
        %v6771 = vld [vmem:[#allocation11 + $0x5c8] sm:$0xff]
        %v6772 = vld [vmem:[#allocation11 + $0x5d0] sm:$0xff]
        %v6773 = vld [vmem:[#allocation11 + $0x5d8] sm:$0xff]
        %v6774 = vld [vmem:[#allocation11 + $0x5e0] sm:$0xff]
        %v6775 = vld [vmem:[#allocation11 + $0x5e8] sm:$0xff]
        %v6776 = vld [vmem:[#allocation11 + $0x5f0] sm:$0xff]
        %v6777 = vld [vmem:[#allocation11 + $0x5f8] sm:$0xff]
        %v6970 = vunpack.c.l.b16 %v6586
        %v6971 = vunpack.c.h.b16 %v6586
        %v6972 = vunpack.c.l.b16 %v6587
        %v6973 = vunpack.c.h.b16 %v6587
        %v6974 = vunpack.c.l.b16 %v6588
        %v6975 = vunpack.c.h.b16 %v6588
        %v6976 = vunpack.c.l.b16 %v6589
        %v6977 = vunpack.c.h.b16 %v6589
        %v6978 = vunpack.c.l.b16 %v6590
        %v6979 = vunpack.c.h.b16 %v6590
        %v6980 = vunpack.c.l.b16 %v6591
        %v6981 = vunpack.c.h.b16 %v6591
        %v6982 = vunpack.c.l.b16 %v6592
        %v6983 = vunpack.c.h.b16 %v6592
        %v6984 = vunpack.c.l.b16 %v6593
        %v6985 = vunpack.c.h.b16 %v6593
        %v6986 = vunpack.c.l.b16 %v6594
        %v6987 = vunpack.c.h.b16 %v6594
        %v6988 = vunpack.c.l.b16 %v6595
        %v6989 = vunpack.c.h.b16 %v6595
        %v6990 = vunpack.c.l.b16 %v6596
        %v6991 = vunpack.c.h.b16 %v6596
        %v6992 = vunpack.c.l.b16 %v6597
        %v6993 = vunpack.c.h.b16 %v6597
        %v6994 = vunpack.c.l.b16 %v6598
        %v6995 = vunpack.c.h.b16 %v6598
        %v6996 = vunpack.c.l.b16 %v6599
        %v6997 = vunpack.c.h.b16 %v6599
        %v6998 = vunpack.c.l.b16 %v6600
        %v6999 = vunpack.c.h.b16 %v6600
        %v7000 = vunpack.c.l.b16 %v6601
        %v7001 = vunpack.c.h.b16 %v6601
        %v7002 = vunpack.c.l.b16 %v6602
        %v7003 = vunpack.c.h.b16 %v6602
        %v7004 = vunpack.c.l.b16 %v6603
        %v7005 = vunpack.c.h.b16 %v6603
        %v7006 = vunpack.c.l.b16 %v6604
        %v7007 = vunpack.c.h.b16 %v6604
        %v7008 = vunpack.c.l.b16 %v6605
        %v7009 = vunpack.c.h.b16 %v6605
        %v7010 = vunpack.c.l.b16 %v6606
        %v7011 = vunpack.c.h.b16 %v6606
        %v7012 = vunpack.c.l.b16 %v6607
        %v7013 = vunpack.c.h.b16 %v6607
        %v7014 = vunpack.c.l.b16 %v6608
        %v7015 = vunpack.c.h.b16 %v6608
        %v7016 = vunpack.c.l.b16 %v6609
        %v7017 = vunpack.c.h.b16 %v6609
        %v7018 = vunpack.c.l.b16 %v6610
        %v7019 = vunpack.c.h.b16 %v6610
        %v7020 = vunpack.c.l.b16 %v6611
        %v7021 = vunpack.c.h.b16 %v6611
        %v7022 = vunpack.c.l.b16 %v6612
        %v7023 = vunpack.c.h.b16 %v6612
        %v7024 = vunpack.c.l.b16 %v6613
        %v7025 = vunpack.c.h.b16 %v6613
        %v7026 = vunpack.c.l.b16 %v6614
        %v7027 = vunpack.c.h.b16 %v6614
        %v7028 = vunpack.c.l.b16 %v6615
        %v7029 = vunpack.c.h.b16 %v6615
        %v7030 = vunpack.c.l.b16 %v6616
        %v7031 = vunpack.c.h.b16 %v6616
        %v7032 = vunpack.c.l.b16 %v6617
        %v7033 = vunpack.c.h.b16 %v6617
        %v7034 = vunpack.c.l.b16 %v6618
        %v7035 = vunpack.c.h.b16 %v6618
        %v7036 = vunpack.c.l.b16 %v6619
        %v7037 = vunpack.c.h.b16 %v6619
        %v7038 = vunpack.c.l.b16 %v6620
        %v7039 = vunpack.c.h.b16 %v6620
        %v7040 = vunpack.c.l.b16 %v6621
        %v7041 = vunpack.c.h.b16 %v6621
        %v7042 = vunpack.c.l.b16 %v6622
        %v7043 = vunpack.c.h.b16 %v6622
        %v7044 = vunpack.c.l.b16 %v6623
        %v7045 = vunpack.c.h.b16 %v6623
        %v7046 = vunpack.c.l.b16 %v6624
        %v7047 = vunpack.c.h.b16 %v6624
        %v7048 = vunpack.c.l.b16 %v6625
        %v7049 = vunpack.c.h.b16 %v6625
        %v7050 = vunpack.c.l.b16 %v6626
        %v7051 = vunpack.c.h.b16 %v6626
        %v7052 = vunpack.c.l.b16 %v6627
        %v7053 = vunpack.c.h.b16 %v6627
        %v7054 = vunpack.c.l.b16 %v6628
        %v7055 = vunpack.c.h.b16 %v6628
        %v7056 = vunpack.c.l.b16 %v6629
        %v7057 = vunpack.c.h.b16 %v6629
        %v7058 = vunpack.c.l.b16 %v6630
        %v7059 = vunpack.c.h.b16 %v6630
        %v7060 = vunpack.c.l.b16 %v6631
        %v7061 = vunpack.c.h.b16 %v6631
        %v7062 = vunpack.c.l.b16 %v6632
        %v7063 = vunpack.c.h.b16 %v6632
        %v7064 = vunpack.c.l.b16 %v6633
        %v7065 = vunpack.c.h.b16 %v6633
        %v7066 = vunpack.c.l.b16 %v6634
        %v7067 = vunpack.c.h.b16 %v6634
        %v7068 = vunpack.c.l.b16 %v6635
        %v7069 = vunpack.c.h.b16 %v6635
        %v7070 = vunpack.c.l.b16 %v6636
        %v7071 = vunpack.c.h.b16 %v6636
        %v7072 = vunpack.c.l.b16 %v6637
        %v7073 = vunpack.c.h.b16 %v6637
        %v7074 = vunpack.c.l.b16 %v6638
        %v7075 = vunpack.c.h.b16 %v6638
        %v7076 = vunpack.c.l.b16 %v6639
        %v7077 = vunpack.c.h.b16 %v6639
        %v7078 = vunpack.c.l.b16 %v6640
        %v7079 = vunpack.c.h.b16 %v6640
        %v7080 = vunpack.c.l.b16 %v6641
        %v7081 = vunpack.c.h.b16 %v6641
        %v7082 = vunpack.c.l.b16 %v6642
        %v7083 = vunpack.c.h.b16 %v6642
        %v7084 = vunpack.c.l.b16 %v6643
        %v7085 = vunpack.c.h.b16 %v6643
        %v7086 = vunpack.c.l.b16 %v6644
        %v7087 = vunpack.c.h.b16 %v6644
        %v7088 = vunpack.c.l.b16 %v6645
        %v7089 = vunpack.c.h.b16 %v6645
        %v7090 = vunpack.c.l.b16 %v6646
        %v7091 = vunpack.c.h.b16 %v6646
        %v7092 = vunpack.c.l.b16 %v6647
        %v7093 = vunpack.c.h.b16 %v6647
        %v7094 = vunpack.c.l.b16 %v6648
        %v7095 = vunpack.c.h.b16 %v6648
        %v7096 = vunpack.c.l.b16 %v6649
        %v7097 = vunpack.c.h.b16 %v6649
        %v7098 = vunpack.c.l.b16 %v6650
        %v7099 = vunpack.c.h.b16 %v6650
        %v7100 = vunpack.c.l.b16 %v6651
        %v7101 = vunpack.c.h.b16 %v6651
        %v7102 = vunpack.c.l.b16 %v6652
        %v7103 = vunpack.c.h.b16 %v6652
        %v7104 = vunpack.c.l.b16 %v6653
        %v7105 = vunpack.c.h.b16 %v6653
        %v7106 = vunpack.c.l.b16 %v6654
        %v7107 = vunpack.c.h.b16 %v6654
        %v7108 = vunpack.c.l.b16 %v6655
        %v7109 = vunpack.c.h.b16 %v6655
        %v7110 = vunpack.c.l.b16 %v6656
        %v7111 = vunpack.c.h.b16 %v6656
        %v7112 = vunpack.c.l.b16 %v6657
        %v7113 = vunpack.c.h.b16 %v6657
        %v7114 = vunpack.c.l.b16 %v6658
        %v7115 = vunpack.c.h.b16 %v6658
        %v7116 = vunpack.c.l.b16 %v6659
        %v7117 = vunpack.c.h.b16 %v6659
        %v7118 = vunpack.c.l.b16 %v6660
        %v7119 = vunpack.c.h.b16 %v6660
        %v7120 = vunpack.c.l.b16 %v6661
        %v7121 = vunpack.c.h.b16 %v6661
        %v7122 = vunpack.c.l.b16 %v6662
        %v7123 = vunpack.c.h.b16 %v6662
        %v7124 = vunpack.c.l.b16 %v6663
        %v7125 = vunpack.c.h.b16 %v6663
        %v7126 = vunpack.c.l.b16 %v6664
        %v7127 = vunpack.c.h.b16 %v6664
        %v7128 = vunpack.c.l.b16 %v6665
        %v7129 = vunpack.c.h.b16 %v6665
        %v7130 = vunpack.c.l.b16 %v6666
        %v7131 = vunpack.c.h.b16 %v6666
        %v7132 = vunpack.c.l.b16 %v6667
        %v7133 = vunpack.c.h.b16 %v6667
        %v7134 = vunpack.c.l.b16 %v6668
        %v7135 = vunpack.c.h.b16 %v6668
        %v7136 = vunpack.c.l.b16 %v6669
        %v7137 = vunpack.c.h.b16 %v6669
        %v7138 = vunpack.c.l.b16 %v6670
        %v7139 = vunpack.c.h.b16 %v6670
        %v7140 = vunpack.c.l.b16 %v6671
        %v7141 = vunpack.c.h.b16 %v6671
        %v7142 = vunpack.c.l.b16 %v6672
        %v7143 = vunpack.c.h.b16 %v6672
        %v7144 = vunpack.c.l.b16 %v6673
        %v7145 = vunpack.c.h.b16 %v6673
        %v7146 = vunpack.c.l.b16 %v6674
        %v7147 = vunpack.c.h.b16 %v6674
        %v7148 = vunpack.c.l.b16 %v6675
        %v7149 = vunpack.c.h.b16 %v6675
        %v7150 = vunpack.c.l.b16 %v6676
        %v7151 = vunpack.c.h.b16 %v6676
        %v7152 = vunpack.c.l.b16 %v6677
        %v7153 = vunpack.c.h.b16 %v6677
        %v7154 = vunpack.c.l.b16 %v6678
        %v7155 = vunpack.c.h.b16 %v6678
        %v7156 = vunpack.c.l.b16 %v6679
        %v7157 = vunpack.c.h.b16 %v6679
        %v7158 = vunpack.c.l.b16 %v6680
        %v7159 = vunpack.c.h.b16 %v6680
        %v7160 = vunpack.c.l.b16 %v6681
        %v7161 = vunpack.c.h.b16 %v6681
        %v7162 = vunpack.c.l.b16 %v6682
        %v7163 = vunpack.c.h.b16 %v6682
        %v7164 = vunpack.c.l.b16 %v6683
        %v7165 = vunpack.c.h.b16 %v6683
        %v7166 = vunpack.c.l.b16 %v6684
        %v7167 = vunpack.c.h.b16 %v6684
        %v7168 = vunpack.c.l.b16 %v6685
        %v7169 = vunpack.c.h.b16 %v6685
        %v7170 = vunpack.c.l.b16 %v6686
        %v7171 = vunpack.c.h.b16 %v6686
        %v7172 = vunpack.c.l.b16 %v6687
        %v7173 = vunpack.c.h.b16 %v6687
        %v7174 = vunpack.c.l.b16 %v6688
        %v7175 = vunpack.c.h.b16 %v6688
        %v7176 = vunpack.c.l.b16 %v6689
        %v7177 = vunpack.c.h.b16 %v6689
        %v7178 = vunpack.c.l.b16 %v6690
        %v7179 = vunpack.c.h.b16 %v6690
        %v7180 = vunpack.c.l.b16 %v6691
        %v7181 = vunpack.c.h.b16 %v6691
        %v7182 = vunpack.c.l.b16 %v6692
        %v7183 = vunpack.c.h.b16 %v6692
        %v7184 = vunpack.c.l.b16 %v6693
        %v7185 = vunpack.c.h.b16 %v6693
        %v7186 = vunpack.c.l.b16 %v6694
        %v7187 = vunpack.c.h.b16 %v6694
        %v7188 = vunpack.c.l.b16 %v6695
        %v7189 = vunpack.c.h.b16 %v6695
        %v7190 = vunpack.c.l.b16 %v6696
        %v7191 = vunpack.c.h.b16 %v6696
        %v7192 = vunpack.c.l.b16 %v6697
        %v7193 = vunpack.c.h.b16 %v6697
        %v7194 = vunpack.c.l.b16 %v6698
        %v7195 = vunpack.c.h.b16 %v6698
        %v7196 = vunpack.c.l.b16 %v6699
        %v7197 = vunpack.c.h.b16 %v6699
        %v7198 = vunpack.c.l.b16 %v6700
        %v7199 = vunpack.c.h.b16 %v6700
        %v7200 = vunpack.c.l.b16 %v6701
        %v7201 = vunpack.c.h.b16 %v6701
        %v7202 = vunpack.c.l.b16 %v6702
        %v7203 = vunpack.c.h.b16 %v6702
        %v7204 = vunpack.c.l.b16 %v6703
        %v7205 = vunpack.c.h.b16 %v6703
        %v7206 = vunpack.c.l.b16 %v6704
        %v7207 = vunpack.c.h.b16 %v6704
        %v7208 = vunpack.c.l.b16 %v6705
        %v7209 = vunpack.c.h.b16 %v6705
        %v7210 = vunpack.c.l.b16 %v6706
        %v7211 = vunpack.c.h.b16 %v6706
        %v7212 = vunpack.c.l.b16 %v6707
        %v7213 = vunpack.c.h.b16 %v6707
        %v7214 = vunpack.c.l.b16 %v6708
        %v7215 = vunpack.c.h.b16 %v6708
        %v7216 = vunpack.c.l.b16 %v6709
        %v7217 = vunpack.c.h.b16 %v6709
        %v7218 = vunpack.c.l.b16 %v6710
        %v7219 = vunpack.c.h.b16 %v6710
        %v7220 = vunpack.c.l.b16 %v6711
        %v7221 = vunpack.c.h.b16 %v6711
        %v7222 = vunpack.c.l.b16 %v6712
        %v7223 = vunpack.c.h.b16 %v6712
        %v7224 = vunpack.c.l.b16 %v6713
        %v7225 = vunpack.c.h.b16 %v6713
        %v7226 = vunpack.c.l.b16 %v6714
        %v7227 = vunpack.c.h.b16 %v6714
        %v7228 = vunpack.c.l.b16 %v6715
        %v7229 = vunpack.c.h.b16 %v6715
        %v7230 = vunpack.c.l.b16 %v6716
        %v7231 = vunpack.c.h.b16 %v6716
        %v7232 = vunpack.c.l.b16 %v6717
        %v7233 = vunpack.c.h.b16 %v6717
        %v7234 = vunpack.c.l.b16 %v6718
        %v7235 = vunpack.c.h.b16 %v6718
        %v7236 = vunpack.c.l.b16 %v6719
        %v7237 = vunpack.c.h.b16 %v6719
        %v7238 = vunpack.c.l.b16 %v6720
        %v7239 = vunpack.c.h.b16 %v6720
        %v7240 = vunpack.c.l.b16 %v6721
        %v7241 = vunpack.c.h.b16 %v6721
        %v7242 = vunpack.c.l.b16 %v6722
        %v7243 = vunpack.c.h.b16 %v6722
        %v7244 = vunpack.c.l.b16 %v6723
        %v7245 = vunpack.c.h.b16 %v6723
        %v7246 = vunpack.c.l.b16 %v6724
        %v7247 = vunpack.c.h.b16 %v6724
        %v7248 = vunpack.c.l.b16 %v6725
        %v7249 = vunpack.c.h.b16 %v6725
        %v7250 = vunpack.c.l.b16 %v6726
        %v7251 = vunpack.c.h.b16 %v6726
        %v7252 = vunpack.c.l.b16 %v6727
        %v7253 = vunpack.c.h.b16 %v6727
        %v7254 = vunpack.c.l.b16 %v6728
        %v7255 = vunpack.c.h.b16 %v6728
        %v7256 = vunpack.c.l.b16 %v6729
        %v7257 = vunpack.c.h.b16 %v6729
        %v7258 = vunpack.c.l.b16 %v6730
        %v7259 = vunpack.c.h.b16 %v6730
        %v7260 = vunpack.c.l.b16 %v6731
        %v7261 = vunpack.c.h.b16 %v6731
        %v7262 = vunpack.c.l.b16 %v6732
        %v7263 = vunpack.c.h.b16 %v6732
        %v7264 = vunpack.c.l.b16 %v6733
        %v7265 = vunpack.c.h.b16 %v6733
        %v7266 = vunpack.c.l.b16 %v6734
        %v7267 = vunpack.c.h.b16 %v6734
        %v7268 = vunpack.c.l.b16 %v6735
        %v7269 = vunpack.c.h.b16 %v6735
        %v7270 = vunpack.c.l.b16 %v6736
        %v7271 = vunpack.c.h.b16 %v6736
        %v7272 = vunpack.c.l.b16 %v6737
        %v7273 = vunpack.c.h.b16 %v6737
        %v7274 = vunpack.c.l.b16 %v6738
        %v7275 = vunpack.c.h.b16 %v6738
        %v7276 = vunpack.c.l.b16 %v6739
        %v7277 = vunpack.c.h.b16 %v6739
        %v7278 = vunpack.c.l.b16 %v6740
        %v7279 = vunpack.c.h.b16 %v6740
        %v7280 = vunpack.c.l.b16 %v6741
        %v7281 = vunpack.c.h.b16 %v6741
        %v7282 = vunpack.c.l.b16 %v6742
        %v7283 = vunpack.c.h.b16 %v6742
        %v7284 = vunpack.c.l.b16 %v6743
        %v7285 = vunpack.c.h.b16 %v6743
        %v7286 = vunpack.c.l.b16 %v6744
        %v7287 = vunpack.c.h.b16 %v6744
        %v7288 = vunpack.c.l.b16 %v6745
        %v7289 = vunpack.c.h.b16 %v6745
        %v7290 = vunpack.c.l.b16 %v6746
        %v7291 = vunpack.c.h.b16 %v6746
        %v7292 = vunpack.c.l.b16 %v6747
        %v7293 = vunpack.c.h.b16 %v6747
        %v7294 = vunpack.c.l.b16 %v6748
        %v7295 = vunpack.c.h.b16 %v6748
        %v7296 = vunpack.c.l.b16 %v6749
        %v7297 = vunpack.c.h.b16 %v6749
        %v7298 = vunpack.c.l.b16 %v6750
        %v7299 = vunpack.c.h.b16 %v6750
        %v7300 = vunpack.c.l.b16 %v6751
        %v7301 = vunpack.c.h.b16 %v6751
        %v7302 = vunpack.c.l.b16 %v6752
        %v7303 = vunpack.c.h.b16 %v6752
        %v7304 = vunpack.c.l.b16 %v6753
        %v7305 = vunpack.c.h.b16 %v6753
        %v7306 = vunpack.c.l.b16 %v6754
        %v7307 = vunpack.c.h.b16 %v6754
        %v7308 = vunpack.c.l.b16 %v6755
        %v7309 = vunpack.c.h.b16 %v6755
        %v7310 = vunpack.c.l.b16 %v6756
        %v7311 = vunpack.c.h.b16 %v6756
        %v7312 = vunpack.c.l.b16 %v6757
        %v7313 = vunpack.c.h.b16 %v6757
        %v7314 = vunpack.c.l.b16 %v6758
        %v7315 = vunpack.c.h.b16 %v6758
        %v7316 = vunpack.c.l.b16 %v6759
        %v7317 = vunpack.c.h.b16 %v6759
        %v7318 = vunpack.c.l.b16 %v6760
        %v7319 = vunpack.c.h.b16 %v6760
        %v7320 = vunpack.c.l.b16 %v6761
        %v7321 = vunpack.c.h.b16 %v6761
        %v7322 = vunpack.c.l.b16 %v6762
        %v7323 = vunpack.c.h.b16 %v6762
        %v7324 = vunpack.c.l.b16 %v6763
        %v7325 = vunpack.c.h.b16 %v6763
        %v7326 = vunpack.c.l.b16 %v6764
        %v7327 = vunpack.c.h.b16 %v6764
        %v7328 = vunpack.c.l.b16 %v6765
        %v7329 = vunpack.c.h.b16 %v6765
        %v7330 = vunpack.c.l.b16 %v6766
        %v7331 = vunpack.c.h.b16 %v6766
        %v7332 = vunpack.c.l.b16 %v6767
        %v7333 = vunpack.c.h.b16 %v6767
        %v7334 = vunpack.c.l.b16 %v6768
        %v7335 = vunpack.c.h.b16 %v6768
        %v7336 = vunpack.c.l.b16 %v6769
        %v7337 = vunpack.c.h.b16 %v6769
        %v7338 = vunpack.c.l.b16 %v6770
        %v7339 = vunpack.c.h.b16 %v6770
        %v7340 = vunpack.c.l.b16 %v6771
        %v7341 = vunpack.c.h.b16 %v6771
        %v7342 = vunpack.c.l.b16 %v6772
        %v7343 = vunpack.c.h.b16 %v6772
        %v7344 = vunpack.c.l.b16 %v6773
        %v7345 = vunpack.c.h.b16 %v6773
        %v7346 = vunpack.c.l.b16 %v6774
        %v7347 = vunpack.c.h.b16 %v6774
        %v7348 = vunpack.c.l.b16 %v6775
        %v7349 = vunpack.c.h.b16 %v6775
        %v7350 = vunpack.c.l.b16 %v6776
        %v7351 = vunpack.c.h.b16 %v6776
        %v7352 = vunpack.c.l.b16 %v6777
        %v7353 = vunpack.c.h.b16 %v6777
        %v7354 = vpack.c.b16 %v6976, %v6970
        %v7355 = vpack.c.b16 %v6977, %v6971
        %v7356 = vpack.c.b16 %v6978, %v6972
        %v7357 = vpack.c.b16 %v6979, %v6973
        %v7358 = vpack.c.b16 %v6980, %v6974
        %v7359 = vpack.c.b16 %v6981, %v6975
        %v7360 = vpack.c.b16 %v6988, %v6982
        %v7361 = vpack.c.b16 %v6989, %v6983
        %v7362 = vpack.c.b16 %v6990, %v6984
        %v7363 = vpack.c.b16 %v6991, %v6985
        %v7364 = vpack.c.b16 %v6992, %v6986
        %v7365 = vpack.c.b16 %v6993, %v6987
        %v7366 = vpack.c.b16 %v7000, %v6994
        %v7367 = vpack.c.b16 %v7001, %v6995
        %v7368 = vpack.c.b16 %v7002, %v6996
        %v7369 = vpack.c.b16 %v7003, %v6997
        %v7370 = vpack.c.b16 %v7004, %v6998
        %v7371 = vpack.c.b16 %v7005, %v6999
        %v7372 = vpack.c.b16 %v7012, %v7006
        %v7373 = vpack.c.b16 %v7013, %v7007
        %v7374 = vpack.c.b16 %v7014, %v7008
        %v7375 = vpack.c.b16 %v7015, %v7009
        %v7376 = vpack.c.b16 %v7016, %v7010
        %v7377 = vpack.c.b16 %v7017, %v7011
        %v7378 = vpack.c.b16 %v7024, %v7018
        %v7379 = vpack.c.b16 %v7025, %v7019
        %v7380 = vpack.c.b16 %v7026, %v7020
        %v7381 = vpack.c.b16 %v7027, %v7021
        %v7382 = vpack.c.b16 %v7028, %v7022
        %v7383 = vpack.c.b16 %v7029, %v7023
        %v7384 = vpack.c.b16 %v7036, %v7030
        %v7385 = vpack.c.b16 %v7037, %v7031
        %v7386 = vpack.c.b16 %v7038, %v7032
        %v7387 = vpack.c.b16 %v7039, %v7033
        %v7388 = vpack.c.b16 %v7040, %v7034
        %v7389 = vpack.c.b16 %v7041, %v7035
        %v7390 = vpack.c.b16 %v7048, %v7042
        %v7391 = vpack.c.b16 %v7049, %v7043
        %v7392 = vpack.c.b16 %v7050, %v7044
        %v7393 = vpack.c.b16 %v7051, %v7045
        %v7394 = vpack.c.b16 %v7052, %v7046
        %v7395 = vpack.c.b16 %v7053, %v7047
        %v7396 = vpack.c.b16 %v7060, %v7054
        %v7397 = vpack.c.b16 %v7061, %v7055
        %v7398 = vpack.c.b16 %v7062, %v7056
        %v7399 = vpack.c.b16 %v7063, %v7057
        %v7400 = vpack.c.b16 %v7064, %v7058
        %v7401 = vpack.c.b16 %v7065, %v7059
        %v7402 = vpack.c.b16 %v7072, %v7066
        %v7403 = vpack.c.b16 %v7073, %v7067
        %v7404 = vpack.c.b16 %v7074, %v7068
        %v7405 = vpack.c.b16 %v7075, %v7069
        %v7406 = vpack.c.b16 %v7076, %v7070
        %v7407 = vpack.c.b16 %v7077, %v7071
        %v7408 = vpack.c.b16 %v7084, %v7078
        %v7409 = vpack.c.b16 %v7085, %v7079
        %v7410 = vpack.c.b16 %v7086, %v7080
        %v7411 = vpack.c.b16 %v7087, %v7081
        %v7412 = vpack.c.b16 %v7088, %v7082
        %v7413 = vpack.c.b16 %v7089, %v7083
        %v7414 = vpack.c.b16 %v7096, %v7090
        %v7415 = vpack.c.b16 %v7097, %v7091
        %v7416 = vpack.c.b16 %v7098, %v7092
        %v7417 = vpack.c.b16 %v7099, %v7093
        %v7418 = vpack.c.b16 %v7100, %v7094
        %v7419 = vpack.c.b16 %v7101, %v7095
        %v7420 = vpack.c.b16 %v7108, %v7102
        %v7421 = vpack.c.b16 %v7109, %v7103
        %v7422 = vpack.c.b16 %v7110, %v7104
        %v7423 = vpack.c.b16 %v7111, %v7105
        %v7424 = vpack.c.b16 %v7112, %v7106
        %v7425 = vpack.c.b16 %v7113, %v7107
        %v7426 = vpack.c.b16 %v7120, %v7114
        %v7427 = vpack.c.b16 %v7121, %v7115
        %v7428 = vpack.c.b16 %v7122, %v7116
        %v7429 = vpack.c.b16 %v7123, %v7117
        %v7430 = vpack.c.b16 %v7124, %v7118
        %v7431 = vpack.c.b16 %v7125, %v7119
        %v7432 = vpack.c.b16 %v7132, %v7126
        %v7433 = vpack.c.b16 %v7133, %v7127
        %v7434 = vpack.c.b16 %v7134, %v7128
        %v7435 = vpack.c.b16 %v7135, %v7129
        %v7436 = vpack.c.b16 %v7136, %v7130
        %v7437 = vpack.c.b16 %v7137, %v7131
        %v7438 = vpack.c.b16 %v7144, %v7138
        %v7439 = vpack.c.b16 %v7145, %v7139
        %v7440 = vpack.c.b16 %v7146, %v7140
        %v7441 = vpack.c.b16 %v7147, %v7141
        %v7442 = vpack.c.b16 %v7148, %v7142
        %v7443 = vpack.c.b16 %v7149, %v7143
        %v7444 = vpack.c.b16 %v7156, %v7150
        %v7445 = vpack.c.b16 %v7157, %v7151
        %v7446 = vpack.c.b16 %v7158, %v7152
        %v7447 = vpack.c.b16 %v7159, %v7153
        %v7448 = vpack.c.b16 %v7160, %v7154
        %v7449 = vpack.c.b16 %v7161, %v7155
        %v7450 = vpack.c.b16 %v7168, %v7162
        %v7451 = vpack.c.b16 %v7169, %v7163
        %v7452 = vpack.c.b16 %v7170, %v7164
        %v7453 = vpack.c.b16 %v7171, %v7165
        %v7454 = vpack.c.b16 %v7172, %v7166
        %v7455 = vpack.c.b16 %v7173, %v7167
        %v7456 = vpack.c.b16 %v7180, %v7174
        %v7457 = vpack.c.b16 %v7181, %v7175
        %v7458 = vpack.c.b16 %v7182, %v7176
        %v7459 = vpack.c.b16 %v7183, %v7177
        %v7460 = vpack.c.b16 %v7184, %v7178
        %v7461 = vpack.c.b16 %v7185, %v7179
        %v7462 = vpack.c.b16 %v7192, %v7186
        %v7463 = vpack.c.b16 %v7193, %v7187
        %v7464 = vpack.c.b16 %v7194, %v7188
        %v7465 = vpack.c.b16 %v7195, %v7189
        %v7466 = vpack.c.b16 %v7196, %v7190
        %v7467 = vpack.c.b16 %v7197, %v7191
        %v7468 = vpack.c.b16 %v7204, %v7198
        %v7469 = vpack.c.b16 %v7205, %v7199
        %v7470 = vpack.c.b16 %v7206, %v7200
        %v7471 = vpack.c.b16 %v7207, %v7201
        %v7472 = vpack.c.b16 %v7208, %v7202
        %v7473 = vpack.c.b16 %v7209, %v7203
        %v7474 = vpack.c.b16 %v7216, %v7210
        %v7475 = vpack.c.b16 %v7217, %v7211
        %v7476 = vpack.c.b16 %v7218, %v7212
        %v7477 = vpack.c.b16 %v7219, %v7213
        %v7478 = vpack.c.b16 %v7220, %v7214
        %v7479 = vpack.c.b16 %v7221, %v7215
        %v7480 = vpack.c.b16 %v7228, %v7222
        %v7481 = vpack.c.b16 %v7229, %v7223
        %v7482 = vpack.c.b16 %v7230, %v7224
        %v7483 = vpack.c.b16 %v7231, %v7225
        %v7484 = vpack.c.b16 %v7232, %v7226
        %v7485 = vpack.c.b16 %v7233, %v7227
        %v7486 = vpack.c.b16 %v7240, %v7234
        %v7487 = vpack.c.b16 %v7241, %v7235
        %v7488 = vpack.c.b16 %v7242, %v7236
        %v7489 = vpack.c.b16 %v7243, %v7237
        %v7490 = vpack.c.b16 %v7244, %v7238
        %v7491 = vpack.c.b16 %v7245, %v7239
        %v7492 = vpack.c.b16 %v7252, %v7246
        %v7493 = vpack.c.b16 %v7253, %v7247
        %v7494 = vpack.c.b16 %v7254, %v7248
        %v7495 = vpack.c.b16 %v7255, %v7249
        %v7496 = vpack.c.b16 %v7256, %v7250
        %v7497 = vpack.c.b16 %v7257, %v7251
        %v7498 = vpack.c.b16 %v7264, %v7258
        %v7499 = vpack.c.b16 %v7265, %v7259
        %v7500 = vpack.c.b16 %v7266, %v7260
        %v7501 = vpack.c.b16 %v7267, %v7261
        %v7502 = vpack.c.b16 %v7268, %v7262
        %v7503 = vpack.c.b16 %v7269, %v7263
        %v7504 = vpack.c.b16 %v7276, %v7270
        %v7505 = vpack.c.b16 %v7277, %v7271
        %v7506 = vpack.c.b16 %v7278, %v7272
        %v7507 = vpack.c.b16 %v7279, %v7273
        %v7508 = vpack.c.b16 %v7280, %v7274
        %v7509 = vpack.c.b16 %v7281, %v7275
        %v7510 = vpack.c.b16 %v7288, %v7282
        %v7511 = vpack.c.b16 %v7289, %v7283
        %v7512 = vpack.c.b16 %v7290, %v7284
        %v7513 = vpack.c.b16 %v7291, %v7285
        %v7514 = vpack.c.b16 %v7292, %v7286
        %v7515 = vpack.c.b16 %v7293, %v7287
        %v7516 = vpack.c.b16 %v7300, %v7294
        %v7517 = vpack.c.b16 %v7301, %v7295
        %v7518 = vpack.c.b16 %v7302, %v7296
        %v7519 = vpack.c.b16 %v7303, %v7297
        %v7520 = vpack.c.b16 %v7304, %v7298
        %v7521 = vpack.c.b16 %v7305, %v7299
        %v7522 = vpack.c.b16 %v7312, %v7306
        %v7523 = vpack.c.b16 %v7313, %v7307
        %v7524 = vpack.c.b16 %v7314, %v7308
        %v7525 = vpack.c.b16 %v7315, %v7309
        %v7526 = vpack.c.b16 %v7316, %v7310
        %v7527 = vpack.c.b16 %v7317, %v7311
        %v7528 = vpack.c.b16 %v7324, %v7318
        %v7529 = vpack.c.b16 %v7325, %v7319
        %v7530 = vpack.c.b16 %v7326, %v7320
        %v7531 = vpack.c.b16 %v7327, %v7321
        %v7532 = vpack.c.b16 %v7328, %v7322
        %v7533 = vpack.c.b16 %v7329, %v7323
        %v7534 = vpack.c.b16 %v7336, %v7330
        %v7535 = vpack.c.b16 %v7337, %v7331
        %v7536 = vpack.c.b16 %v7338, %v7332
        %v7537 = vpack.c.b16 %v7339, %v7333
        %v7538 = vpack.c.b16 %v7340, %v7334
        %v7539 = vpack.c.b16 %v7341, %v7335
        %v7540 = vpack.c.b16 %v7348, %v7342
        %v7541 = vpack.c.b16 %v7349, %v7343
        %v7542 = vpack.c.b16 %v7350, %v7344
        %v7543 = vpack.c.b16 %v7351, %v7345
        %v7544 = vpack.c.b16 %v7352, %v7346
        %v7545 = vpack.c.b16 %v7353, %v7347
        %7738 = vmatprep.subr.bf16.mxu0 %v7355
        %7739 = vmatpush1.bf16.msra.mxu0 %v7354
        %7740 = vmatprep.subr.bf16.mxu0 %v7361
        %7741 = vmatpush1.bf16.msra.mxu0 %v7360
        %7742 = vmatprep.subr.bf16.mxu0 %v7367
        %7743 = vmatpush1.bf16.msra.mxu0 %v7366
        %7744 = vmatprep.subr.bf16.mxu0 %v7373
        %7745 = vmatpush1.bf16.msra.mxu0 %v7372
        %7746 = vmatprep.subr.bf16.mxu0 %v7379
        %7747 = vmatpush1.bf16.msra.mxu0 %v7378
        %7748 = vmatprep.subr.bf16.mxu0 %v7385
        %7749 = vmatpush1.bf16.msra.mxu0 %v7384
        %7750 = vmatprep.subr.bf16.mxu0 %v7391
        %7751 = vmatpush1.bf16.msra.mxu0 %v7390
        %7752 = vmatprep.subr.bf16.mxu0 %v7397
        %7753 = vmatpush1.bf16.msra.mxu0 %v7396
        %7754 = vmatprep.subr.bf16.mxu0 %v7403
        %7755 = vmatpush1.bf16.msra.mxu0 %v7402
        %7756 = vmatprep.subr.bf16.mxu0 %v7409
        %7757 = vmatpush1.bf16.msra.mxu0 %v7408
        %7758 = vmatprep.subr.bf16.mxu0 %v7415
        %7759 = vmatpush1.bf16.msra.mxu0 %v7414
        %7760 = vmatprep.subr.bf16.mxu0 %v7421
        %7761 = vmatpush1.bf16.msra.mxu0 %v7420
        %7762 = vmatprep.subr.bf16.mxu0 %v7427
        %7763 = vmatpush1.bf16.msra.mxu0 %v7426
        %7764 = vmatprep.subr.bf16.mxu0 %v7433
        %7765 = vmatpush1.bf16.msra.mxu0 %v7432
        %7766 = vmatprep.subr.bf16.mxu0 %v7439
        %7767 = vmatpush1.bf16.msra.mxu0 %v7438
        %7768 = vmatprep.subr.bf16.mxu0 %v7445
        %7769 = vmatpush1.bf16.msra.mxu0 %v7444
        %7770 = vmatprep.mubr.bf16.mxu0 %v6583
        %7771 = vmatmul.mubr.bf16.gmra.mrb[0].mxu0 %v6582
        %v7772 = vpop.f32.mrb[0].mxu0
        %v7773 = vadd.f32 %v1050, %v7772
        %v7774 = vpop.f32.mrb[0].mxu0
        %v7775 = vadd.f32 %v1051, %v7774
        %v7776 = vpop.f32.mrb[0].mxu0
        %v7777 = vpop.f32.mrb[0].mxu0
        %7778 = vdwg.mxu0
        %7779 = vmatprep.subr.bf16.mxu0 %v7451
        %7780 = vmatpush1.bf16.msra.mxu0 %v7450
        %7781 = vmatprep.subr.bf16.mxu0 %v7457
        %7782 = vmatpush1.bf16.msra.mxu0 %v7456
        %7783 = vmatprep.subr.bf16.mxu0 %v7463
        %7784 = vmatpush1.bf16.msra.mxu0 %v7462
        %7785 = vmatprep.subr.bf16.mxu0 %v7469
        %7786 = vmatpush1.bf16.msra.mxu0 %v7468
        %7787 = vmatprep.subr.bf16.mxu0 %v7475
        %7788 = vmatpush1.bf16.msra.mxu0 %v7474
        %7789 = vmatprep.subr.bf16.mxu0 %v7481
        %7790 = vmatpush1.bf16.msra.mxu0 %v7480
        %7791 = vmatprep.subr.bf16.mxu0 %v7487
        %7792 = vmatpush1.bf16.msra.mxu0 %v7486
        %7793 = vmatprep.subr.bf16.mxu0 %v7493
        %7794 = vmatpush1.bf16.msra.mxu0 %v7492
        %7795 = vmatprep.subr.bf16.mxu0 %v7499
        %7796 = vmatpush1.bf16.msra.mxu0 %v7498
        %7797 = vmatprep.subr.bf16.mxu0 %v7505
        %7798 = vmatpush1.bf16.msra.mxu0 %v7504
        %7799 = vmatprep.subr.bf16.mxu0 %v7511
        %7800 = vmatpush1.bf16.msra.mxu0 %v7510
        %7801 = vmatprep.subr.bf16.mxu0 %v7517
        %7802 = vmatpush1.bf16.msra.mxu0 %v7516
        %7803 = vmatprep.subr.bf16.mxu0 %v7523
        %7804 = vmatpush1.bf16.msra.mxu0 %v7522
        %7805 = vmatprep.subr.bf16.mxu0 %v7529
        %7806 = vmatpush1.bf16.msra.mxu0 %v7528
        %7807 = vmatprep.subr.bf16.mxu0 %v7535
        %7808 = vmatpush1.bf16.msra.mxu0 %v7534
        %7809 = vmatprep.subr.bf16.mxu0 %v7541
        %7810 = vmatpush1.bf16.msra.mxu0 %v7540
        %7811 = vmatprep.mubr.bf16.mxu0 %v6585
        %7812 = vmatmul.mubr.bf16.gmra.mrb[0].mxu0 %v6584
        %v7813 = vpop.f32.mrb[0].mxu0
        %v7814 = vadd.f32 %v7773, %v7813
        %v7815 = vpop.f32.mrb[0].mxu0
        %v7816 = vadd.f32 %v7775, %v7815
        %v7817 = vpop.f32.mrb[0].mxu0
        %v7818 = vpop.f32.mrb[0].mxu0
        %7819 = vdwg.mxu0
        %7820 = vmatprep.subr.bf16.mxu0 %v7357
        %7821 = vmatpush1.bf16.msra.mxu0 %v7356
        %7822 = vmatprep.subr.bf16.mxu0 %v7363
        %7823 = vmatpush1.bf16.msra.mxu0 %v7362
        %7824 = vmatprep.subr.bf16.mxu0 %v7369
        %7825 = vmatpush1.bf16.msra.mxu0 %v7368
        %7826 = vmatprep.subr.bf16.mxu0 %v7375
        %7827 = vmatpush1.bf16.msra.mxu0 %v7374
        %7828 = vmatprep.subr.bf16.mxu0 %v7381
        %7829 = vmatpush1.bf16.msra.mxu0 %v7380
        %7830 = vmatprep.subr.bf16.mxu0 %v7387
        %7831 = vmatpush1.bf16.msra.mxu0 %v7386
        %7832 = vmatprep.subr.bf16.mxu0 %v7393
        %7833 = vmatpush1.bf16.msra.mxu0 %v7392
        %7834 = vmatprep.subr.bf16.mxu0 %v7399
        %7835 = vmatpush1.bf16.msra.mxu0 %v7398
        %7836 = vmatprep.subr.bf16.mxu0 %v7405
        %7837 = vmatpush1.bf16.msra.mxu0 %v7404
        %7838 = vmatprep.subr.bf16.mxu0 %v7411
        %7839 = vmatpush1.bf16.msra.mxu0 %v7410
        %7840 = vmatprep.subr.bf16.mxu0 %v7417
        %7841 = vmatpush1.bf16.msra.mxu0 %v7416
        %7842 = vmatprep.subr.bf16.mxu0 %v7423
        %7843 = vmatpush1.bf16.msra.mxu0 %v7422
        %7844 = vmatprep.subr.bf16.mxu0 %v7429
        %7845 = vmatpush1.bf16.msra.mxu0 %v7428
        %7846 = vmatprep.subr.bf16.mxu0 %v7435
        %7847 = vmatpush1.bf16.msra.mxu0 %v7434
        %7848 = vmatprep.subr.bf16.mxu0 %v7441
        %7849 = vmatpush1.bf16.msra.mxu0 %v7440
        %7850 = vmatprep.subr.bf16.mxu0 %v7447
        %7851 = vmatpush1.bf16.msra.mxu0 %v7446
        %7852 = vmatprep.mubr.bf16.mxu0 %v6583
        %7853 = vmatmul.mubr.bf16.gmra.mrb[0].mxu0 %v6582
        %v7854 = vpop.f32.mrb[0].mxu0
        %v7855 = vadd.f32 %v1052, %v7854
        %v7856 = vpop.f32.mrb[0].mxu0
        %v7857 = vadd.f32 %v1053, %v7856
        %v7858 = vpop.f32.mrb[0].mxu0
        %v7859 = vpop.f32.mrb[0].mxu0
        %7860 = vdwg.mxu0
        %7861 = vmatprep.subr.bf16.mxu0 %v7453
        %7862 = vmatpush1.bf16.msra.mxu0 %v7452
        %7863 = vmatprep.subr.bf16.mxu0 %v7459
        %7864 = vmatpush1.bf16.msra.mxu0 %v7458
        %7865 = vmatprep.subr.bf16.mxu0 %v7465
        %7866 = vmatpush1.bf16.msra.mxu0 %v7464
        %7867 = vmatprep.subr.bf16.mxu0 %v7471
        %7868 = vmatpush1.bf16.msra.mxu0 %v7470
        %7869 = vmatprep.subr.bf16.mxu0 %v7477
        %7870 = vmatpush1.bf16.msra.mxu0 %v7476
        %7871 = vmatprep.subr.bf16.mxu0 %v7483
        %7872 = vmatpush1.bf16.msra.mxu0 %v7482
        %7873 = vmatprep.subr.bf16.mxu0 %v7489
        %7874 = vmatpush1.bf16.msra.mxu0 %v7488
        %7875 = vmatprep.subr.bf16.mxu0 %v7495
        %7876 = vmatpush1.bf16.msra.mxu0 %v7494
        %7877 = vmatprep.subr.bf16.mxu0 %v7501
        %7878 = vmatpush1.bf16.msra.mxu0 %v7500
        %7879 = vmatprep.subr.bf16.mxu0 %v7507
        %7880 = vmatpush1.bf16.msra.mxu0 %v7506
        %7881 = vmatprep.subr.bf16.mxu0 %v7513
        %7882 = vmatpush1.bf16.msra.mxu0 %v7512
        %7883 = vmatprep.subr.bf16.mxu0 %v7519
        %7884 = vmatpush1.bf16.msra.mxu0 %v7518
        %7885 = vmatprep.subr.bf16.mxu0 %v7525
        %7886 = vmatpush1.bf16.msra.mxu0 %v7524
        %7887 = vmatprep.subr.bf16.mxu0 %v7531
        %7888 = vmatpush1.bf16.msra.mxu0 %v7530
        %7889 = vmatprep.subr.bf16.mxu0 %v7537
        %7890 = vmatpush1.bf16.msra.mxu0 %v7536
        %7891 = vmatprep.subr.bf16.mxu0 %v7543
        %7892 = vmatpush1.bf16.msra.mxu0 %v7542
        %7893 = vmatprep.mubr.bf16.mxu0 %v6585
        %7894 = vmatmul.mubr.bf16.gmra.mrb[0].mxu0 %v6584
        %v7895 = vpop.f32.mrb[0].mxu0
        %v7896 = vadd.f32 %v7855, %v7895
        %v7897 = vpop.f32.mrb[0].mxu0
        %v7898 = vadd.f32 %v7857, %v7897
        %v7899 = vpop.f32.mrb[0].mxu0
        %v7900 = vpop.f32.mrb[0].mxu0
        %7901 = vdwg.mxu0
        %7902 = vmatprep.subr.bf16.mxu0 %v7359
        %7903 = vmatpush1.bf16.msra.mxu0 %v7358
        %7904 = vmatprep.subr.bf16.mxu0 %v7365
        %7905 = vmatpush1.bf16.msra.mxu0 %v7364
        %7906 = vmatprep.subr.bf16.mxu0 %v7371
        %7907 = vmatpush1.bf16.msra.mxu0 %v7370
        %7908 = vmatprep.subr.bf16.mxu0 %v7377
        %7909 = vmatpush1.bf16.msra.mxu0 %v7376
        %7910 = vmatprep.subr.bf16.mxu0 %v7383
        %7911 = vmatpush1.bf16.msra.mxu0 %v7382
        %7912 = vmatprep.subr.bf16.mxu0 %v7389
        %7913 = vmatpush1.bf16.msra.mxu0 %v7388
        %7914 = vmatprep.subr.bf16.mxu0 %v7395
        %7915 = vmatpush1.bf16.msra.mxu0 %v7394
        %7916 = vmatprep.subr.bf16.mxu0 %v7401
        %7917 = vmatpush1.bf16.msra.mxu0 %v7400
        %7918 = vmatprep.subr.bf16.mxu0 %v7407
        %7919 = vmatpush1.bf16.msra.mxu0 %v7406
        %7920 = vmatprep.subr.bf16.mxu0 %v7413
        %7921 = vmatpush1.bf16.msra.mxu0 %v7412
        %7922 = vmatprep.subr.bf16.mxu0 %v7419
        %7923 = vmatpush1.bf16.msra.mxu0 %v7418
        %7924 = vmatprep.subr.bf16.mxu0 %v7425
        %7925 = vmatpush1.bf16.msra.mxu0 %v7424
        %7926 = vmatprep.subr.bf16.mxu0 %v7431
        %7927 = vmatpush1.bf16.msra.mxu0 %v7430
        %7928 = vmatprep.subr.bf16.mxu0 %v7437
        %7929 = vmatpush1.bf16.msra.mxu0 %v7436
        %7930 = vmatprep.subr.bf16.mxu0 %v7443
        %7931 = vmatpush1.bf16.msra.mxu0 %v7442
        %7932 = vmatprep.subr.bf16.mxu0 %v7449
        %7933 = vmatpush1.bf16.msra.mxu0 %v7448
        %7934 = vmatprep.mubr.bf16.mxu0 %v6583
        %7935 = vmatmul.mubr.bf16.gmra.mrb[0].mxu0 %v6582
        %v7936 = vpop.f32.mrb[0].mxu0
        %v7937 = vadd.f32 %v1054, %v7936
        %v7938 = vpop.f32.mrb[0].mxu0
        %v7939 = vadd.f32 %v1055, %v7938
        %v7940 = vpop.f32.mrb[0].mxu0
        %v7941 = vpop.f32.mrb[0].mxu0
        %7942 = vdwg.mxu0
        %7943 = vmatprep.subr.bf16.mxu0 %v7455
        %7944 = vmatpush1.bf16.msra.mxu0 %v7454
        %7945 = vmatprep.subr.bf16.mxu0 %v7461
        %7946 = vmatpush1.bf16.msra.mxu0 %v7460
        %7947 = vmatprep.subr.bf16.mxu0 %v7467
        %7948 = vmatpush1.bf16.msra.mxu0 %v7466
        %7949 = vmatprep.subr.bf16.mxu0 %v7473
        %7950 = vmatpush1.bf16.msra.mxu0 %v7472
        %7951 = vmatprep.subr.bf16.mxu0 %v7479
        %7952 = vmatpush1.bf16.msra.mxu0 %v7478
        %7953 = vmatprep.subr.bf16.mxu0 %v7485
        %7954 = vmatpush1.bf16.msra.mxu0 %v7484
        %7955 = vmatprep.subr.bf16.mxu0 %v7491
        %7956 = vmatpush1.bf16.msra.mxu0 %v7490
        %7957 = vmatprep.subr.bf16.mxu0 %v7497
        %7958 = vmatpush1.bf16.msra.mxu0 %v7496
        %7959 = vmatprep.subr.bf16.mxu0 %v7503
        %7960 = vmatpush1.bf16.msra.mxu0 %v7502
        %7961 = vmatprep.subr.bf16.mxu0 %v7509
        %7962 = vmatpush1.bf16.msra.mxu0 %v7508
        %7963 = vmatprep.subr.bf16.mxu0 %v7515
        %7964 = vmatpush1.bf16.msra.mxu0 %v7514
        %7965 = vmatprep.subr.bf16.mxu0 %v7521
        %7966 = vmatpush1.bf16.msra.mxu0 %v7520
        %7967 = vmatprep.subr.bf16.mxu0 %v7527
        %7968 = vmatpush1.bf16.msra.mxu0 %v7526
        %7969 = vmatprep.subr.bf16.mxu0 %v7533
        %7970 = vmatpush1.bf16.msra.mxu0 %v7532
        %7971 = vmatprep.subr.bf16.mxu0 %v7539
        %7972 = vmatpush1.bf16.msra.mxu0 %v7538
        %7973 = vmatprep.subr.bf16.mxu0 %v7545
        %7974 = vmatpush1.bf16.msra.mxu0 %v7544
        %7975 = vmatprep.mubr.bf16.mxu0 %v6585
        %7976 = vmatmul.mubr.bf16.gmra.mrb[0].mxu0 %v6584
        %v7977 = vpop.f32.mrb[0].mxu0
        %v7978 = vadd.f32 %v7937, %v7977
        %v7979 = vpop.f32.mrb[0].mxu0
        %v7980 = vadd.f32 %v7939, %v7979
        %v7981 = vpop.f32.mrb[0].mxu0
        %v7982 = vpop.f32.mrb[0].mxu0
        %7983 = vdwg.mxu0
        %v7984 = vld [vmem:[#allocation13] sm:$0x3f]
        %v7985 = vld [vmem:[#allocation14] sm:$0x3f]
        %v7986 = vadd.f32 %v7814, %v7816
        %v7987 = vadd.f32 %v7986, %v7896
        %v7988 = vadd.f32 %v7987, %v7898
        %v7989 = vadd.f32 %v7988, %v7978
        %v7990 = vadd.f32 %v7989, %v7980
        %7991 = vadd.xlane.f32.xlu0 %v7990
        %v7992 = vpop.xlane.xlu0 %7991
        %v7993 = vmul.f32 %v7992, %v952
        %v7994 = vsub.f32 %v7814, %v7993
        %v7995 = vsub.f32 %v7816, %v7993
        %v7996 = vsub.f32 %v7896, %v7993
        %v7997 = vsub.f32 %v7898, %v7993
        %v7998 = vsub.f32 %v7978, %v7993
        %v7999 = vsub.f32 %v7980, %v7993
        %v8000 = vmul.f32 %v7994, %v7994
        %v8001 = vmul.f32 %v7995, %v7995
        %v8002 = vmul.f32 %v7996, %v7996
        %v8003 = vmul.f32 %v7997, %v7997
        %v8004 = vmul.f32 %v7998, %v7998
        %v8005 = vmul.f32 %v7999, %v7999
        %v8006 = vadd.f32 %v8000, %v8001
        %v8007 = vadd.f32 %v8006, %v8002
        %v8008 = vadd.f32 %v8007, %v8003
        %v8009 = vadd.f32 %v8008, %v8004
        %v8010 = vadd.f32 %v8009, %v8005
        %8011 = vadd.xlane.f32.xlu0 %v8010
        %v8012 = vpop.xlane.xlu0 %8011
        %v8013 = vmul.f32 %v8012, %v952
        %v8014 = vadd.f32 %v8013, 1e-06
        %v8015 = vrsqrt.pop %v8014
        %v8016 = vmul.f32 %v7994, %v8015
        %v8017 = vmul.f32 %v7995, %v8015
        %v8018 = vmul.f32 %v7996, %v8015
        %v8019 = vmul.f32 %v7997, %v8015
        %v8020 = vmul.f32 %v7998, %v8015
        %v8021 = vmul.f32 %v7999, %v8015
        %v8023 = vlaneseq
        %v8024 = vshrl.u32 %v8023, 7
        %v8025 = vsub.s32 0, %v8024
        %v8026 = vrot.slane %v7984, %v8025
        %v8027 = vlaneseq
        %v8028 = vshrl.u32 %v8027, 7
        %v8029 = vsub.s32 1, %v8028
        %v8030 = vrot.slane %v7984, %v8029
        %v8031 = vlaneseq
        %v8032 = vshrl.u32 %v8031, 7
        %v8033 = vsub.s32 2, %v8032
        %v8034 = vrot.slane %v7984, %v8033
        %v8035 = vlaneseq
        %v8036 = vshrl.u32 %v8035, 7
        %v8037 = vsub.s32 3, %v8036
        %v8038 = vrot.slane %v7984, %v8037
        %v8039 = vlaneseq
        %v8040 = vshrl.u32 %v8039, 7
        %v8041 = vsub.s32 4, %v8040
        %v8042 = vrot.slane %v7984, %v8041
        %v8043 = vlaneseq
        %v8044 = vshrl.u32 %v8043, 7
        %v8045 = vsub.s32 5, %v8044
        %v8046 = vrot.slane %v7984, %v8045
        %v8053 = vmul.f32 %v8016, %v8026
        %v8054 = vmul.f32 %v8017, %v8030
        %v8055 = vmul.f32 %v8018, %v8034
        %v8056 = vmul.f32 %v8019, %v8038
        %v8057 = vmul.f32 %v8020, %v8042
        %v8058 = vmul.f32 %v8021, %v8046
        %v8060 = vlaneseq
        %v8061 = vshrl.u32 %v8060, 7
        %v8062 = vsub.s32 0, %v8061
        %v8063 = vrot.slane %v7985, %v8062
        %v8064 = vlaneseq
        %v8065 = vshrl.u32 %v8064, 7
        %v8066 = vsub.s32 1, %v8065
        %v8067 = vrot.slane %v7985, %v8066
        %v8068 = vlaneseq
        %v8069 = vshrl.u32 %v8068, 7
        %v8070 = vsub.s32 2, %v8069
        %v8071 = vrot.slane %v7985, %v8070
        %v8072 = vlaneseq
        %v8073 = vshrl.u32 %v8072, 7
        %v8074 = vsub.s32 3, %v8073
        %v8075 = vrot.slane %v7985, %v8074
        %v8076 = vlaneseq
        %v8077 = vshrl.u32 %v8076, 7
        %v8078 = vsub.s32 4, %v8077
        %v8079 = vrot.slane %v7985, %v8078
        %v8080 = vlaneseq
        %v8081 = vshrl.u32 %v8080, 7
        %v8082 = vsub.s32 5, %v8081
        %v8083 = vrot.slane %v7985, %v8082
        %v8090 = vadd.f32 %v8053, %v8063
        %v8091 = vadd.f32 %v8054, %v8067
        %v8092 = vadd.f32 %v8055, %v8071
        %v8093 = vadd.f32 %v8056, %v8075
        %v8094 = vadd.f32 %v8057, %v8079
        %v8095 = vadd.f32 %v8058, %v8083
        %v8096 = vrot.slane %v8090, 4
        %v8097 = vadd.f32 %v8090, %v8096
        %v8098 = vrot.slane %v8097, 2
        %v8099 = vadd.f32 %v8097, %v8098
        %v8100 = vrot.slane %v8099, 1
        %v8101 = vadd.f32 %v8099, %v8100
        %v8102 = vrot.slane %v8091, 4
        %v8103 = vadd.f32 %v8091, %v8102
        %v8104 = vrot.slane %v8103, 2
        %v8105 = vadd.f32 %v8103, %v8104
        %v8106 = vrot.slane %v8105, 1
        %v8107 = vadd.f32 %v8105, %v8106
        %v8108 = vrot.slane %v8092, 4
        %v8109 = vadd.f32 %v8092, %v8108
        %v8110 = vrot.slane %v8109, 2
        %v8111 = vadd.f32 %v8109, %v8110
        %v8112 = vrot.slane %v8111, 1
        %v8113 = vadd.f32 %v8111, %v8112
        %v8114 = vrot.slane %v8093, 4
        %v8115 = vadd.f32 %v8093, %v8114
        %v8116 = vrot.slane %v8115, 2
        %v8117 = vadd.f32 %v8115, %v8116
        %v8118 = vrot.slane %v8117, 1
        %v8119 = vadd.f32 %v8117, %v8118
        %v8120 = vrot.slane %v8094, 4
        %v8121 = vadd.f32 %v8094, %v8120
        %v8122 = vrot.slane %v8121, 2
        %v8123 = vadd.f32 %v8121, %v8122
        %v8124 = vrot.slane %v8123, 1
        %v8125 = vadd.f32 %v8123, %v8124
        %v8126 = vrot.slane %v8095, 4
        %v8127 = vadd.f32 %v8095, %v8126
        %v8128 = vrot.slane %v8127, 2
        %v8129 = vadd.f32 %v8127, %v8128
        %v8130 = vrot.slane %v8129, 1
        %v8131 = vadd.f32 %v8129, %v8130
        %v8132 = vmax.f32 %v8101, 0.0
        %v8133 = vmax.f32 %v8107, 0.0
        %v8134 = vmax.f32 %v8113, 0.0
        %v8135 = vmax.f32 %v8119, 0.0
        %v8136 = vmax.f32 %v8125, 0.0
        %v8137 = vmax.f32 %v8131, 0.0
        %v8138 = vld [vmem:[#allocation16] sm:$0xff]
        %v8139 = vld [vmem:[#allocation16 + $0x8] sm:$0xff]
        %v8140 = vld [vmem:[#allocation16 + $0x10] sm:$0xff]
        %v8141 = vld [vmem:[#allocation16 + $0x18] sm:$0xff]
        %v8142 = vld [vmem:[#allocation16 + $0x20] sm:$0xff]
        %v8143 = vld [vmem:[#allocation16 + $0x28] sm:$0xff]
        %v8144 = vld [vmem:[#allocation16 + $0x30] sm:$0xff]
        %v8145 = vld [vmem:[#allocation16 + $0x38] sm:$0xff]
        %v8146 = vld [vmem:[#allocation16 + $0x40] sm:$0xff]
        %v8147 = vld [vmem:[#allocation16 + $0x48] sm:$0xff]
        %v8148 = vld [vmem:[#allocation16 + $0x50] sm:$0xff]
        %v8149 = vld [vmem:[#allocation16 + $0x58] sm:$0xff]
        %v8150 = vld [vmem:[#allocation16 + $0x60] sm:$0xff]
        %v8151 = vld [vmem:[#allocation16 + $0x68] sm:$0xff]
        %v8152 = vld [vmem:[#allocation16 + $0x70] sm:$0xff]
        %v8153 = vld [vmem:[#allocation16 + $0x78] sm:$0xff]
        %v8154 = vld [vmem:[#allocation16 + $0x80] sm:$0xff]
        %v8155 = vld [vmem:[#allocation16 + $0x88] sm:$0xff]
        %v8156 = vld [vmem:[#allocation16 + $0x90] sm:$0xff]
        %v8157 = vld [vmem:[#allocation16 + $0x98] sm:$0xff]
        %v8158 = vld [vmem:[#allocation16 + $0xa0] sm:$0xff]
        %v8159 = vld [vmem:[#allocation16 + $0xa8] sm:$0xff]
        %v8160 = vld [vmem:[#allocation16 + $0xb0] sm:$0xff]
        %v8161 = vld [vmem:[#allocation16 + $0xb8] sm:$0xff]
        %v8162 = vld [vmem:[#allocation16 + $0xc0] sm:$0xff]
        %v8163 = vld [vmem:[#allocation16 + $0xc8] sm:$0xff]
        %v8164 = vld [vmem:[#allocation16 + $0xd0] sm:$0xff]
        %v8165 = vld [vmem:[#allocation16 + $0xd8] sm:$0xff]
        %v8166 = vld [vmem:[#allocation16 + $0xe0] sm:$0xff]
        %v8167 = vld [vmem:[#allocation16 + $0xe8] sm:$0xff]
        %v8168 = vld [vmem:[#allocation16 + $0xf0] sm:$0xff]
        %v8169 = vld [vmem:[#allocation16 + $0xf8] sm:$0xff]
        %v8170 = vld [vmem:[#allocation16 + $0x100] sm:$0xff]
        %v8171 = vld [vmem:[#allocation16 + $0x108] sm:$0xff]
        %v8172 = vld [vmem:[#allocation16 + $0x110] sm:$0xff]
        %v8173 = vld [vmem:[#allocation16 + $0x118] sm:$0xff]
        %v8174 = vld [vmem:[#allocation16 + $0x120] sm:$0xff]
        %v8175 = vld [vmem:[#allocation16 + $0x128] sm:$0xff]
        %v8176 = vld [vmem:[#allocation16 + $0x130] sm:$0xff]
        %v8177 = vld [vmem:[#allocation16 + $0x138] sm:$0xff]
        %v8178 = vld [vmem:[#allocation16 + $0x140] sm:$0xff]
        %v8179 = vld [vmem:[#allocation16 + $0x148] sm:$0xff]
        %v8180 = vld [vmem:[#allocation16 + $0x150] sm:$0xff]
        %v8181 = vld [vmem:[#allocation16 + $0x158] sm:$0xff]
        %v8182 = vld [vmem:[#allocation16 + $0x160] sm:$0xff]
        %v8183 = vld [vmem:[#allocation16 + $0x168] sm:$0xff]
        %v8184 = vld [vmem:[#allocation16 + $0x170] sm:$0xff]
        %v8185 = vld [vmem:[#allocation16 + $0x178] sm:$0xff]
        %v8186 = vld [vmem:[#allocation16 + $0x180] sm:$0xff]
        %v8187 = vld [vmem:[#allocation16 + $0x188] sm:$0xff]
        %v8188 = vld [vmem:[#allocation16 + $0x190] sm:$0xff]
        %v8189 = vld [vmem:[#allocation16 + $0x198] sm:$0xff]
        %v8190 = vld [vmem:[#allocation16 + $0x1a0] sm:$0xff]
        %v8191 = vld [vmem:[#allocation16 + $0x1a8] sm:$0xff]
        %v8192 = vld [vmem:[#allocation16 + $0x1b0] sm:$0xff]
        %v8193 = vld [vmem:[#allocation16 + $0x1b8] sm:$0xff]
        %v8194 = vld [vmem:[#allocation16 + $0x1c0] sm:$0xff]
        %v8195 = vld [vmem:[#allocation16 + $0x1c8] sm:$0xff]
        %v8196 = vld [vmem:[#allocation16 + $0x1d0] sm:$0xff]
        %v8197 = vld [vmem:[#allocation16 + $0x1d8] sm:$0xff]
        %v8198 = vld [vmem:[#allocation16 + $0x1e0] sm:$0xff]
        %v8199 = vld [vmem:[#allocation16 + $0x1e8] sm:$0xff]
        %v8200 = vld [vmem:[#allocation16 + $0x1f0] sm:$0xff]
        %v8201 = vld [vmem:[#allocation16 + $0x1f8] sm:$0xff]
        %v8202 = vld [vmem:[#allocation16 + $0x200] sm:$0xff]
        %v8203 = vld [vmem:[#allocation16 + $0x208] sm:$0xff]
        %v8204 = vld [vmem:[#allocation16 + $0x210] sm:$0xff]
        %v8205 = vld [vmem:[#allocation16 + $0x218] sm:$0xff]
        %v8206 = vld [vmem:[#allocation16 + $0x220] sm:$0xff]
        %v8207 = vld [vmem:[#allocation16 + $0x228] sm:$0xff]
        %v8208 = vld [vmem:[#allocation16 + $0x230] sm:$0xff]
        %v8209 = vld [vmem:[#allocation16 + $0x238] sm:$0xff]
        %v8210 = vld [vmem:[#allocation16 + $0x240] sm:$0xff]
        %v8211 = vld [vmem:[#allocation16 + $0x248] sm:$0xff]
        %v8212 = vld [vmem:[#allocation16 + $0x250] sm:$0xff]
        %v8213 = vld [vmem:[#allocation16 + $0x258] sm:$0xff]
        %v8214 = vld [vmem:[#allocation16 + $0x260] sm:$0xff]
        %v8215 = vld [vmem:[#allocation16 + $0x268] sm:$0xff]
        %v8216 = vld [vmem:[#allocation16 + $0x270] sm:$0xff]
        %v8217 = vld [vmem:[#allocation16 + $0x278] sm:$0xff]
        %v8218 = vld [vmem:[#allocation16 + $0x280] sm:$0xff]
        %v8219 = vld [vmem:[#allocation16 + $0x288] sm:$0xff]
        %v8220 = vld [vmem:[#allocation16 + $0x290] sm:$0xff]
        %v8221 = vld [vmem:[#allocation16 + $0x298] sm:$0xff]
        %v8222 = vld [vmem:[#allocation16 + $0x2a0] sm:$0xff]
        %v8223 = vld [vmem:[#allocation16 + $0x2a8] sm:$0xff]
        %v8224 = vld [vmem:[#allocation16 + $0x2b0] sm:$0xff]
        %v8225 = vld [vmem:[#allocation16 + $0x2b8] sm:$0xff]
        %v8226 = vld [vmem:[#allocation16 + $0x2c0] sm:$0xff]
        %v8227 = vld [vmem:[#allocation16 + $0x2c8] sm:$0xff]
        %v8228 = vld [vmem:[#allocation16 + $0x2d0] sm:$0xff]
        %v8229 = vld [vmem:[#allocation16 + $0x2d8] sm:$0xff]
        %v8230 = vld [vmem:[#allocation16 + $0x2e0] sm:$0xff]
        %v8231 = vld [vmem:[#allocation16 + $0x2e8] sm:$0xff]
        %v8232 = vld [vmem:[#allocation16 + $0x2f0] sm:$0xff]
        %v8233 = vld [vmem:[#allocation16 + $0x2f8] sm:$0xff]
        %v8234 = vld [vmem:[#allocation17] sm:$0x1]
        %8235 = vmatprep.subr.mxu0 0.0
        %8236 = vmatpush1.msra.mxu0 %v8138
        %8237 = vmatprep.subr.mxu0 0.0
        %8238 = vmatpush1.msra.mxu0 %v8139
        %8239 = vmatprep.subr.mxu0 0.0
        %8240 = vmatpush1.msra.mxu0 %v8140
        %8241 = vmatprep.subr.mxu0 0.0
        %8242 = vmatpush1.msra.mxu0 %v8141
        %8243 = vmatprep.subr.mxu0 0.0
        %8244 = vmatpush1.msra.mxu0 %v8142
        %8245 = vmatprep.subr.mxu0 0.0
        %8246 = vmatpush1.msra.mxu0 %v8143
        %8247 = vmatprep.subr.mxu0 0.0
        %8248 = vmatpush1.msra.mxu0 %v8144
        %8249 = vmatprep.subr.mxu0 0.0
        %8250 = vmatpush1.msra.mxu0 %v8145
        %8251 = vmatprep.subr.mxu0 0.0
        %8252 = vmatpush1.msra.mxu0 %v8146
        %8253 = vmatprep.subr.mxu0 0.0
        %8254 = vmatpush1.msra.mxu0 %v8147
        %8255 = vmatprep.subr.mxu0 0.0
        %8256 = vmatpush1.msra.mxu0 %v8148
        %8257 = vmatprep.subr.mxu0 0.0
        %8258 = vmatpush1.msra.mxu0 %v8149
        %8259 = vmatprep.subr.mxu0 0.0
        %8260 = vmatpush1.msra.mxu0 %v8150
        %8261 = vmatprep.subr.mxu0 0.0
        %8262 = vmatpush1.msra.mxu0 %v8151
        %8263 = vmatprep.subr.mxu0 0.0
        %8264 = vmatpush1.msra.mxu0 %v8152
        %8265 = vmatprep.subr.mxu0 0.0
        %8266 = vmatpush1.msra.mxu0 %v8153
        %8267 = vmatprep.subr.mxu0 0.0
        %8268 = vmatpush1.msra.mxu0 %v8154
        %8269 = vmatprep.subr.mxu0 0.0
        %8270 = vmatpush1.msra.mxu0 %v8155
        %8271 = vmatprep.subr.mxu0 0.0
        %8272 = vmatpush1.msra.mxu0 %v8156
        %8273 = vmatprep.subr.mxu0 0.0
        %8274 = vmatpush1.msra.mxu0 %v8157
        %8275 = vmatprep.subr.mxu0 0.0
        %8276 = vmatpush1.msra.mxu0 %v8158
        %8277 = vmatprep.subr.mxu0 0.0
        %8278 = vmatpush1.msra.mxu0 %v8159
        %8279 = vmatprep.subr.mxu0 0.0
        %8280 = vmatpush1.msra.mxu0 %v8160
        %8281 = vmatprep.subr.mxu0 0.0
        %8282 = vmatpush1.msra.mxu0 %v8161
        %8283 = vmatprep.subr.mxu0 0.0
        %8284 = vmatpush1.msra.mxu0 %v8162
        %8285 = vmatprep.subr.mxu0 0.0
        %8286 = vmatpush1.msra.mxu0 %v8163
        %8287 = vmatprep.subr.mxu0 0.0
        %8288 = vmatpush1.msra.mxu0 %v8164
        %8289 = vmatprep.subr.mxu0 0.0
        %8290 = vmatpush1.msra.mxu0 %v8165
        %8291 = vmatprep.subr.mxu0 0.0
        %8292 = vmatpush1.msra.mxu0 %v8166
        %8293 = vmatprep.subr.mxu0 0.0
        %8294 = vmatpush1.msra.mxu0 %v8167
        %8295 = vmatprep.subr.mxu0 0.0
        %8296 = vmatpush1.msra.mxu0 %v8168
        %8297 = vmatprep.subr.mxu0 0.0
        %8298 = vmatpush1.msra.mxu0 %v8169
        %8299 = vmatprep.mubr.f32.mxu0 %v8133
        %8300 = vmatmul.mubr.f32.gmra.mrb[0].mxu0 %v8132
        %v8301 = vpop.f32.mrb[0].mxu0
        %v8302 = vadd.f32 %v8234, %v8301
        %v8303 = vpop.f32.mrb[0].mxu0
        %8304 = vdwg.mxu0
        %8305 = vmatprep.subr.mxu0 0.0
        %8306 = vmatpush1.msra.mxu0 %v8170
        %8307 = vmatprep.subr.mxu0 0.0
        %8308 = vmatpush1.msra.mxu0 %v8171
        %8309 = vmatprep.subr.mxu0 0.0
        %8310 = vmatpush1.msra.mxu0 %v8172
        %8311 = vmatprep.subr.mxu0 0.0
        %8312 = vmatpush1.msra.mxu0 %v8173
        %8313 = vmatprep.subr.mxu0 0.0
        %8314 = vmatpush1.msra.mxu0 %v8174
        %8315 = vmatprep.subr.mxu0 0.0
        %8316 = vmatpush1.msra.mxu0 %v8175
        %8317 = vmatprep.subr.mxu0 0.0
        %8318 = vmatpush1.msra.mxu0 %v8176
        %8319 = vmatprep.subr.mxu0 0.0
        %8320 = vmatpush1.msra.mxu0 %v8177
        %8321 = vmatprep.subr.mxu0 0.0
        %8322 = vmatpush1.msra.mxu0 %v8178
        %8323 = vmatprep.subr.mxu0 0.0
        %8324 = vmatpush1.msra.mxu0 %v8179
        %8325 = vmatprep.subr.mxu0 0.0
        %8326 = vmatpush1.msra.mxu0 %v8180
        %8327 = vmatprep.subr.mxu0 0.0
        %8328 = vmatpush1.msra.mxu0 %v8181
        %8329 = vmatprep.subr.mxu0 0.0
        %8330 = vmatpush1.msra.mxu0 %v8182
        %8331 = vmatprep.subr.mxu0 0.0
        %8332 = vmatpush1.msra.mxu0 %v8183
        %8333 = vmatprep.subr.mxu0 0.0
        %8334 = vmatpush1.msra.mxu0 %v8184
        %8335 = vmatprep.subr.mxu0 0.0
        %8336 = vmatpush1.msra.mxu0 %v8185
        %8337 = vmatprep.subr.mxu0 0.0
        %8338 = vmatpush1.msra.mxu0 %v8186
        %8339 = vmatprep.subr.mxu0 0.0
        %8340 = vmatpush1.msra.mxu0 %v8187
        %8341 = vmatprep.subr.mxu0 0.0
        %8342 = vmatpush1.msra.mxu0 %v8188
        %8343 = vmatprep.subr.mxu0 0.0
        %8344 = vmatpush1.msra.mxu0 %v8189
        %8345 = vmatprep.subr.mxu0 0.0
        %8346 = vmatpush1.msra.mxu0 %v8190
        %8347 = vmatprep.subr.mxu0 0.0
        %8348 = vmatpush1.msra.mxu0 %v8191
        %8349 = vmatprep.subr.mxu0 0.0
        %8350 = vmatpush1.msra.mxu0 %v8192
        %8351 = vmatprep.subr.mxu0 0.0
        %8352 = vmatpush1.msra.mxu0 %v8193
        %8353 = vmatprep.subr.mxu0 0.0
        %8354 = vmatpush1.msra.mxu0 %v8194
        %8355 = vmatprep.subr.mxu0 0.0
        %8356 = vmatpush1.msra.mxu0 %v8195
        %8357 = vmatprep.subr.mxu0 0.0
        %8358 = vmatpush1.msra.mxu0 %v8196
        %8359 = vmatprep.subr.mxu0 0.0
        %8360 = vmatpush1.msra.mxu0 %v8197
        %8361 = vmatprep.subr.mxu0 0.0
        %8362 = vmatpush1.msra.mxu0 %v8198
        %8363 = vmatprep.subr.mxu0 0.0
        %8364 = vmatpush1.msra.mxu0 %v8199
        %8365 = vmatprep.subr.mxu0 0.0
        %8366 = vmatpush1.msra.mxu0 %v8200
        %8367 = vmatprep.subr.mxu0 0.0
        %8368 = vmatpush1.msra.mxu0 %v8201
        %8369 = vmatprep.mubr.f32.mxu0 %v8135
        %8370 = vmatmul.mubr.f32.gmra.mrb[0].mxu0 %v8134
        %v8371 = vpop.f32.mrb[0].mxu0
        %v8372 = vadd.f32 %v8302, %v8371
        %v8373 = vpop.f32.mrb[0].mxu0
        %8374 = vdwg.mxu0
        %8375 = vmatprep.subr.mxu0 0.0
        %8376 = vmatpush1.msra.mxu0 %v8202
        %8377 = vmatprep.subr.mxu0 0.0
        %8378 = vmatpush1.msra.mxu0 %v8203
        %8379 = vmatprep.subr.mxu0 0.0
        %8380 = vmatpush1.msra.mxu0 %v8204
        %8381 = vmatprep.subr.mxu0 0.0
        %8382 = vmatpush1.msra.mxu0 %v8205
        %8383 = vmatprep.subr.mxu0 0.0
        %8384 = vmatpush1.msra.mxu0 %v8206
        %8385 = vmatprep.subr.mxu0 0.0
        %8386 = vmatpush1.msra.mxu0 %v8207
        %8387 = vmatprep.subr.mxu0 0.0
        %8388 = vmatpush1.msra.mxu0 %v8208
        %8389 = vmatprep.subr.mxu0 0.0
        %8390 = vmatpush1.msra.mxu0 %v8209
        %8391 = vmatprep.subr.mxu0 0.0
        %8392 = vmatpush1.msra.mxu0 %v8210
        %8393 = vmatprep.subr.mxu0 0.0
        %8394 = vmatpush1.msra.mxu0 %v8211
        %8395 = vmatprep.subr.mxu0 0.0
        %8396 = vmatpush1.msra.mxu0 %v8212
        %8397 = vmatprep.subr.mxu0 0.0
        %8398 = vmatpush1.msra.mxu0 %v8213
        %8399 = vmatprep.subr.mxu0 0.0
        %8400 = vmatpush1.msra.mxu0 %v8214
        %8401 = vmatprep.subr.mxu0 0.0
        %8402 = vmatpush1.msra.mxu0 %v8215
        %8403 = vmatprep.subr.mxu0 0.0
        %8404 = vmatpush1.msra.mxu0 %v8216
        %8405 = vmatprep.subr.mxu0 0.0
        %8406 = vmatpush1.msra.mxu0 %v8217
        %8407 = vmatprep.subr.mxu0 0.0
        %8408 = vmatpush1.msra.mxu0 %v8218
        %8409 = vmatprep.subr.mxu0 0.0
        %8410 = vmatpush1.msra.mxu0 %v8219
        %8411 = vmatprep.subr.mxu0 0.0
        %8412 = vmatpush1.msra.mxu0 %v8220
        %8413 = vmatprep.subr.mxu0 0.0
        %8414 = vmatpush1.msra.mxu0 %v8221
        %8415 = vmatprep.subr.mxu0 0.0
        %8416 = vmatpush1.msra.mxu0 %v8222
        %8417 = vmatprep.subr.mxu0 0.0
        %8418 = vmatpush1.msra.mxu0 %v8223
        %8419 = vmatprep.subr.mxu0 0.0
        %8420 = vmatpush1.msra.mxu0 %v8224
        %8421 = vmatprep.subr.mxu0 0.0
        %8422 = vmatpush1.msra.mxu0 %v8225
        %8423 = vmatprep.subr.mxu0 0.0
        %8424 = vmatpush1.msra.mxu0 %v8226
        %8425 = vmatprep.subr.mxu0 0.0
        %8426 = vmatpush1.msra.mxu0 %v8227
        %8427 = vmatprep.subr.mxu0 0.0
        %8428 = vmatpush1.msra.mxu0 %v8228
        %8429 = vmatprep.subr.mxu0 0.0
        %8430 = vmatpush1.msra.mxu0 %v8229
        %8431 = vmatprep.subr.mxu0 0.0
        %8432 = vmatpush1.msra.mxu0 %v8230
        %8433 = vmatprep.subr.mxu0 0.0
        %8434 = vmatpush1.msra.mxu0 %v8231
        %8435 = vmatprep.subr.mxu0 0.0
        %8436 = vmatpush1.msra.mxu0 %v8232
        %8437 = vmatprep.subr.mxu0 0.0
        %8438 = vmatpush1.msra.mxu0 %v8233
        %8439 = vmatprep.mubr.f32.mxu0 %v8137
        %8440 = vmatmul.mubr.f32.gmra.mrb[0].mxu0 %v8136
        %v8441 = vpop.f32.mrb[0].mxu0
        %v8442 = vadd.f32 %v8372, %v8441
        %v8443 = vpop.f32.mrb[0].mxu0
        %8444 = vdwg.mxu0
        %8445 = vst [vmem:[%s510] sm:$0x1] %v8442
        %s8446 = sand.u32 %s275, 1
        %s8447 = scalar_lea.sflag [#allocation4], %s8446
        %s8448 = sand.u32 %s275, 1
        %s8449 = scalar_lea.vmem [#allocation19], %s8448
        // Predicated region
        $region105: #{tpu_custom_call.1} parent=63 // pred_check
          %p8450 = pneg %p285
        $region106: #{tpu_custom_call.1} parent=63 // pred_check_branch
          %8452 = sbr.rel (%p8450) target = $region108
        $region107: #{tpu_custom_call.1} parent=63 // pred_region
          %s8454 = ssub.s32 16, 16
          %8455 = vsyncadd %s8447, %s8454
          %s8456 = smul.addr %s31, 16
          %s8457 = scalar_lea.hbm %s11, %s8456
          %s8459 = sshll.u32 %s8449, 4
          %s8460 = int_to_ptr.vmem [resolvable:$true] %s8459
          %8462 = dma.vmem_to_hbm [thread:$0]  %s8460, 16, %s8457, %s8447
        $region108: #{tpu_custom_call.1} parent=63 // pred_fallthru
          _
      $region64: #{tpu_custom_call.1} parent=5 // pred_fallthru
        _
      %p8463 = scmp.le.s32.totalorder 2, %s26
      // Predicated region
      $region109: #{tpu_custom_call.1} parent=5 // pred_check
        %p8464 = pneg %p8463
      $region110: #{tpu_custom_call.1} parent=5 // pred_check_branch
        %8466 = sbr.rel (%p8464) target = $region112
      $region111: #{tpu_custom_call.1} parent=5 // pred_region
        %s8467 = ssub.s32 %s26, 2
        // Predicated region
        $region113: #{tpu_custom_call.1} parent=111 // pred_check
          %p8468 = pneg %p291
        $region114: #{tpu_custom_call.1} parent=111 // pred_check_branch
          %8470 = sbr.rel (%p8468) target = $region116
        $region115: #{tpu_custom_call.1} parent=111 // pred_region
          %s8471 = sand.u32 %s276, 1
          %s8472 = scalar_lea.sflag [#allocation4], %s8471
          %s8473 = sand.u32 %s276, 1
          %s8474 = scalar_lea.vmem [#allocation19], %s8473
          %8475 = dma.done %s8472, 16
        $region116: #{tpu_custom_call.1} parent=111 // pred_fallthru
          _
      $region112: #{tpu_custom_call.1} parent=5 // pred_fallthru
        _
    $region6: #{tpu_custom_call.1} parent=1 // loop_footer
      %s30 = sadd.s32 1, %s26
    $region7: #{tpu_custom_call.1} parent=1 // loop_footer_branch
      %25 = sbr.rel target = $region3
    $region8: #{tpu_custom_call.1} parent=1 // loop_exit
      _
    %8476 = vsyncpa [#allocation3], 1
    %s8477 = scalar_lea.sflag [#allocation3], 1
    %8478 = vsyncpa %s8477, 1
    %8479 = vsyncpa [#allocation6], 1
    %8480 = vsyncpa [#allocation9], 1
    %8481 = vsyncpa [#allocation12], 1
    %8482 = vsyncpa [#allocation15], 1
    %8483 = vsyncpa [#allocation18], 1
    %8484 = vsyncpa [#allocation4], 1
    %s8485 = scalar_lea.sflag [#allocation4], 1
    %8486 = vsyncpa %s8485, 1

</llo_original>
